<compile_context>
chip_gen: v6e
topology: v6e:2x2x1
jax: 0.10.0
libtpu: 0.0.40
codegen_flags: <defaults>
</compile_context>

<pallas_src>
import functools

import jax
import jax.numpy as jnp
from jax.experimental import pallas as pl
from jax.experimental.pallas import tpu as pltpu

_VMEM = pltpu.MemorySpace.VMEM
_SMEM = pltpu.MemorySpace.SMEM

NP = 128          # lane-dense channel padding (native lane width / v5e MXU width)
_BN_EPS = 1e-5


# ------------------------------- fused kernel --------------------------------


def _fused_forward_kernel(xin_ref, w1_ref, b1_ref, w2_ref, b2_ref,
                          fcw_ref, fcb_ref,
                          inter_ref, idx_ref, pad_ref,
                          *, B, H, W, num_classes, halo, extract):
    """Entire IntermediateRep forward, all activations VMEM-resident.

    stage1: conv1(3x3,s1,p1)+bn1+relu     (9-tap matmul accumulation, BN pre-folded)
    stage2: layer1 = conv+bn +identity +relu
    head  : global average pool + fc + flat argmax (softmax dropped: argmax-invariant)
    """
    M = B * H * W

    # ---- im2col boundary masks (computed once, reused by both conv stages) ----
    r = jax.lax.broadcasted_iota(jnp.int32, (M, NP), 0)
    if (W & (W - 1)) == 0 and (H & (H - 1)) == 0:
        ww = jnp.bitwise_and(r, W - 1)
        hh = jnp.bitwise_and(jnp.right_shift(r, W.bit_length() - 1), H - 1)
    else:
        # TODO(synk): non power-of-two H/W relies on vector int div/rem lowering.
        ww = r % W
        hh = (r // W) % H
    vmask = (hh >= 1, None, hh <= H - 2)     # source row h+dh-1 must be in [0, H)
    hmask = (ww >= 1, None, ww <= W - 2)     # source col w+dw-1 must be in [0, W)
    taps = [(dh, dw) for dh in range(3) for dw in range(3)]

    def conv3x3(w_taps_ref, b_ref):
        """3x3 stride-1 pad-1 conv of the slab currently stored in pad_ref.

        Weights are BN-folded bf16 with K padded to NP=128; returns (M, NP) f32
        pre-activation.  9 shifted slab reads + boundary mask + MXU accumulate.
        """
        acc = jnp.zeros((M, NP), jnp.float32)
        for t, (dh, dw) in enumerate(taps):
            start = halo + (dh - 1) * W + (dw - 1)
            sh = pad_ref[start:start + M, :]                 # shifted rows (static slice)
            vm, hm = vmask[dh], hmask[dw]
            if vm is None and hm is None:
                x_tap = sh                                   # center tap: no mask needed
            else:
                m = vm if hm is None else (hm if vm is None else jnp.logical_and(vm, hm))
                x_tap = jnp.where(m, sh, 0.0)
            acc = acc + jnp.dot(x_tap.astype(jnp.bfloat16), w_taps_ref[t],
                                preferred_element_type=jnp.float32)
        return acc + b_ref[...]

    # ---- zero the halo'd scratch once (halo rows stay zero for both stages) ----
    pad_ref[...] = jnp.zeros((M + 2 * halo, NP), jnp.float32)
    pad_ref[halo:halo + M, :] = xin_ref[...]

    # ---- stage 1: conv1 + bn1 + relu ----
    pre1 = conv3x3(w1_ref, b1_ref)
    a1 = jnp.maximum(pre1, 0.0)

    # ---- stage 2: layer1 = conv + bn + residual + relu ----
    pad_ref[halo:halo + M, :] = a1
    a2 = jnp.maximum(conv3x3(w2_ref, b2_ref) + a1, 0.0)

    # ---- intermediate activation output (lane-dense f32 slab, padded cols are 0) ----
    if extract == "layer1":
        inter_ref[...] = a2
    elif extract == "relu":
        inter_ref[...] = a1
    elif extract == "bn1":
        inter_ref[...] = pre1
    else:
        raise NotImplementedError(extract)

    # ---- head: global average pool + fc + flat argmax (torch.argmax with no dim) ----
    HW = H * W
    pooled = jnp.concatenate(
        [jnp.sum(a2[b * HW:(b + 1) * HW, :], axis=0, keepdims=True) for b in range(B)],
        axis=0) * (1.0 / HW)                                  # (B, NP) f32
    logits = jnp.dot(pooled.astype(jnp.bfloat16), fcw_ref[...],
                     preferred_element_type=jnp.float32) + fcb_ref[...]   # (B, NP)
    # argmax(softmax(x)) == argmax(x): softmax dropped.  Padded class columns carry a
    # -1e30 bias and are additionally excluded by the col < num_classes guard.
    row = jax.lax.broadcasted_iota(jnp.int32, (B, NP), 0)
    col = jax.lax.broadcasted_iota(jnp.int32, (B, NP), 1)
    flat = row * num_classes + col
    gmax = jnp.max(logits, axis=(0, 1), keepdims=True)
    cand = jnp.where(jnp.logical_and(logits >= gmax, col < num_classes),
                     flat, jnp.int32(B * num_classes))
    idx = jnp.min(cand, axis=(0, 1), keepdims=True)           # first max on ties
    idx_ref[0, 0] = idx[0, 0]


# ------------------------------ module wrapper --------------------------------


def make_intermediate_rep(c1, num_classes, layer_to_extract="layer1"):
    """Build the jitted forward.  Mirrors IntermediateRep(resnet, layer_to_extract):
    weights are frozen (pre-folded, pre-padded, bf16) and layer_to_extract is static."""
    if layer_to_extract not in ("layer1", "relu", "bn1"):
        # TODO(synk): "conv1" needs unfolded (pre-BN) weights; "avgpool"/"fc" would need
        #             unfused head outputs.
        raise NotImplementedError(layer_to_extract)

    def forward(x_nchw, params):
        B, Cin, H, W = x_nchw.shape
        M = B * H * W
        halo = ((W + 1 + 7) // 8) * 8          # >= W+1 zero halo rows, 8-row aligned
        # NCHW -> lane-dense (B*H*W, 128) channels-last slab (only wrapper-side glue).
        x_slab = jnp.transpose(x_nchw, (0, 2, 3, 1)).reshape(M, Cin).astype(jnp.float32)
        xin = jnp.pad(x_slab, ((0, 0), (0, NP - Cin)))

        kernel = functools.partial(
            _fused_forward_kernel, B=B, H=H, W=W,
            num_classes=num_classes, halo=halo, extract=layer_to_extract)
        inter_slab, idx = pl.pallas_call(
            kernel,
            out_shape=(jax.ShapeDtypeStruct((M, NP), jnp.float32),
                       jax.ShapeDtypeStruct((1, 1), jnp.int32)),
            in_specs=[pl.BlockSpec(memory_space=_VMEM)] * 7,
            out_specs=(pl.BlockSpec(memory_space=_VMEM),
                       pl.BlockSpec(memory_space=_SMEM)),
            scratch_shapes=[pltpu.VMEM((M + 2 * halo, NP), jnp.float32)],
        )(xin, params["w1"], params["b1"], params["w2"], params["b2"],
          params["fc_w"], params["fc_b"])

        inter = jnp.transpose(inter_slab[:, :c1].reshape(B, H, W, c1), (0, 3, 1, 2))
        return inter, idx[0, 0]                 # (NCHW activation, 0-dim int32 class idx)

    return jax.jit(forward)


# ------------------------- synthetic frozen "resnet" --------------------------


def init_params(key, cin=4, c1=8, num_classes=10):
    """Synthetic frozen weights, pre-folded (BN), pre-padded to 128 lanes and pre-cast
    to bf16 so the forward jit does no parameter preparation (hoisted per review)."""
    ks = jax.random.split(key, 10)

    def fold_pad_conv(w_hwio, conv_b, gamma, beta, mean, var):
        cin_, cout = w_hwio.shape[2], w_hwio.shape[3]
        scale = gamma * jax.lax.rsqrt(var + _BN_EPS)
        shift = beta - mean * scale
        w_fold = (w_hwio * scale.reshape(1, 1, 1, cout)).reshape(9, cin_, cout)
        b_fold = conv_b * scale + shift
        w_taps = jnp.pad(w_fold, ((0, 0), (0, NP - cin_), (0, NP - cout)))
        bias = jnp.pad(b_fold, (0, NP - cout)).reshape(1, NP)
        return w_taps.astype(jnp.bfloat16), bias.astype(jnp.float32)

    conv1_w = 0.2 * jax.random.normal(ks[0], (3, 3, cin, c1), jnp.float32)
    conv1_b = jnp.zeros((c1,), jnp.float32)          # resnet convs have bias=False
    g1 = 1.0 + 0.1 * jax.random.normal(ks[1], (c1,), jnp.float32)
    be1 = 0.1 * jax.random.normal(ks[2], (c1,), jnp.float32)
    m1 = 0.05 * jax.random.normal(ks[3], (c1,), jnp.float32)
    v1 = 0.5 + jnp.abs(jax.random.normal(ks[4], (c1,), jnp.float32))
    w1, b1 = fold_pad_conv(conv1_w, conv1_b, g1, be1, m1, v1)

    l1_w = 0.2 * jax.random.normal(ks[5], (3, 3, c1, c1), jnp.float32)
    g2 = 1.0 + 0.1 * jax.random.normal(ks[6], (c1,), jnp.float32)
    be2 = 0.1 * jax.random.normal(ks[7], (c1,), jnp.float32)
    m2 = 0.05 * jax.random.normal(ks[8], (c1,), jnp.float32)
    v2 = 0.5 + jnp.abs(jax.random.normal(ks[9], (c1,), jnp.float32))
    w2, b2 = fold_pad_conv(l1_w, jnp.zeros((c1,), jnp.float32), g2, be2, m2, v2)

    kf = jax.random.split(ks[0], 2)
    fc_w = 0.3 * jax.random.normal(kf[0], (c1, num_classes), jnp.float32)
    fc_b = 0.1 * jax.random.normal(kf[1], (num_classes,), jnp.float32)
    fc_wp = jnp.pad(fc_w, ((0, NP - c1), (0, NP - num_classes))).astype(jnp.bfloat16)
    # Padded class columns get a -1e30 bias so they can never win the argmax.
    fc_bp = jnp.full((1, NP), -1e30, jnp.float32).at[0, :num_classes].set(fc_b)

    return dict(w1=w1, b1=b1, w2=w2, b2=b2, fc_w=fc_wp, fc_b=fc_bp)


# ----------------------------------- main --------------------------------------

if __name__ == "__main__":
    key = jax.random.PRNGKey(0)
    x = jax.random.normal(key, (2, 4, 16, 16), jnp.float32)      # NCHW, like PyTorch
    params = init_params(jax.random.PRNGKey(42), cin=4, c1=8, num_classes=10)

    forward = make_intermediate_rep(c1=8, num_classes=10, layer_to_extract="layer1")
    feat, cls_idx = forward(x, params)
    jax.block_until_ready((feat, cls_idx))

    assert feat.shape == (2, 8, 16, 16)
    assert cls_idx.shape == () and cls_idx.dtype == jnp.int32
    print("KERNEL_OK")
</pallas_src>

<mosaic_0001>
module attributes {stable_mosaic.version = 11 : i64} {
  func.func @_fused_forward_kernel(%arg0: memref<512x128xf32, #tpu.memory_space<vmem>>, %arg1: memref<9x128x128xbf16, #tpu.memory_space<vmem>>, %arg2: memref<1x128xf32, #tpu.memory_space<vmem>>, %arg3: memref<9x128x128xbf16, #tpu.memory_space<vmem>>, %arg4: memref<1x128xf32, #tpu.memory_space<vmem>>, %arg5: memref<128x128xbf16, #tpu.memory_space<vmem>>, %arg6: memref<1x128xf32, #tpu.memory_space<vmem>>, %arg7: memref<512x128xf32, #tpu.memory_space<vmem>>, %arg8: memref<1x1xi32, #tpu.memory_space<smem>>, %arg9: memref<560x128xf32, #tpu.memory_space<vmem>>) attributes {dimension_semantics = [], scalar_prefetch = 0 : i64, scratch_operands = 1 : i64, tpu.core_type = #tpu.core_type<tc>} {
    %0 = tpu.iota {dimensions = array<i32: 0>} : vector<512x128xi32>
    %c15_i32 = arith.constant 15 : i32
    %1 = vector.broadcast %c15_i32 : i32 to vector<512x128xi32>
    %2 = arith.andi %0, %1 : vector<512x128xi32>
    %c4_i32 = arith.constant 4 : i32
    %3 = vector.broadcast %c4_i32 : i32 to vector<512x128xi32>
    %4 = arith.shrsi %0, %3 : vector<512x128xi32>
    %c15_i32_0 = arith.constant 15 : i32
    %5 = vector.broadcast %c15_i32_0 : i32 to vector<512x128xi32>
    %6 = arith.andi %4, %5 : vector<512x128xi32>
    %c1_i32 = arith.constant 1 : i32
    %7 = vector.broadcast %c1_i32 : i32 to vector<512x128xi32>
    %8 = arith.cmpi sge, %6, %7 : vector<512x128xi32>
    %c14_i32 = arith.constant 14 : i32
    %9 = vector.broadcast %c14_i32 : i32 to vector<512x128xi32>
    %10 = arith.cmpi sle, %6, %9 : vector<512x128xi32>
    %c1_i32_1 = arith.constant 1 : i32
    %11 = vector.broadcast %c1_i32_1 : i32 to vector<512x128xi32>
    %12 = arith.cmpi sge, %2, %11 : vector<512x128xi32>
    %c14_i32_2 = arith.constant 14 : i32
    %13 = vector.broadcast %c14_i32_2 : i32 to vector<512x128xi32>
    %14 = arith.cmpi sle, %2, %13 : vector<512x128xi32>
    %cst = arith.constant 0.000000e+00 : f32
    %15 = vector.broadcast %cst : f32 to vector<560x128xf32>
    %c0 = arith.constant 0 : index
    %c0_3 = arith.constant 0 : index
    %16 = vector.load %arg9[%c0, %c0_3] : memref<560x128xf32, #tpu.memory_space<vmem>>, vector<560x128xf32>
    tpu.vector_store %arg9[%c0, %c0_3], %15 {strides = array<i32>} : memref<560x128xf32, #tpu.memory_space<vmem>>, vector<560x128xf32>,
    %c0_4 = arith.constant 0 : index
    %c0_5 = arith.constant 0 : index
    %17 = vector.load %arg0[%c0_4, %c0_5] : memref<512x128xf32, #tpu.memory_space<vmem>>, vector<512x128xf32>
    %c24 = arith.constant 24 : index
    %c0_6 = arith.constant 0 : index
    %18 = vector.load %arg9[%c24, %c0_6] : memref<560x128xf32, #tpu.memory_space<vmem>>, vector<512x128xf32>
    tpu.vector_store %arg9[%c24, %c0_6], %17 {strides = array<i32>} : memref<560x128xf32, #tpu.memory_space<vmem>>, vector<512x128xf32>,
    %cst_7 = arith.constant 0.000000e+00 : f32
    %19 = vector.broadcast %cst_7 : f32 to vector<512x128xf32>
    %c7 = arith.constant 7 : index
    %c0_8 = arith.constant 0 : index
    %20 = vector.load %arg9[%c7, %c0_8] : memref<560x128xf32, #tpu.memory_space<vmem>>, vector<512x128xf32>
    %21 = arith.andi %8, %12 : vector<512x128xi1>
    %cst_9 = arith.constant 0.000000e+00 : f32
    %22 = vector.broadcast %cst_9 : f32 to vector<512x128xf32>
    %23 = arith.select %21, %20, %22 : vector<512x128xi1>, vector<512x128xf32>
    %24 = arith.truncf %23 : vector<512x128xf32> to vector<512x128xbf16>
    %c0_10 = arith.constant 0 : index
    %c0_11 = arith.constant 0 : index
    %c0_12 = arith.constant 0 : index
    %25 = vector.load %arg1[%c0_10, %c0_11, %c0_12] : memref<9x128x128xbf16, #tpu.memory_space<vmem>>, vector<1x128x128xbf16>
    %26 = vector.shape_cast %25 : vector<1x128x128xbf16> to vector<128x128xbf16>
    %cst_13 = arith.constant dense<0.000000e+00> : vector<512x128xf32>
    %27 = tpu.matmul %24, %26, %cst_13 {dimension_numbers = #tpu.dot_dimension_numbers<[1], [0], [0], [1], [0, 0, 1, 1], [], []>} : vector<512x128xbf16>, vector<128x128xbf16>, vector<512x128xf32> -> vector<512x128xf32>
    %28 = arith.addf %19, %27 : vector<512x128xf32>
    %c8 = arith.constant 8 : index
    %c0_14 = arith.constant 0 : index
    %29 = vector.load %arg9[%c8, %c0_14] : memref<560x128xf32, #tpu.memory_space<vmem>>, vector<512x128xf32>
    %cst_15 = arith.constant 0.000000e+00 : f32
    %30 = vector.broadcast %cst_15 : f32 to vector<512x128xf32>
    %31 = arith.select %8, %29, %30 : vector<512x128xi1>, vector<512x128xf32>
    %32 = arith.truncf %31 : vector<512x128xf32> to vector<512x128xbf16>
    %c1 = arith.constant 1 : index
    %c0_16 = arith.constant 0 : index
    %c0_17 = arith.constant 0 : index
    %33 = vector.load %arg1[%c1, %c0_16, %c0_17] : memref<9x128x128xbf16, #tpu.memory_space<vmem>>, vector<1x128x128xbf16>
    %34 = vector.shape_cast %33 : vector<1x128x128xbf16> to vector<128x128xbf16>
    %cst_18 = arith.constant dense<0.000000e+00> : vector<512x128xf32>
    %35 = tpu.matmul %32, %34, %cst_18 {dimension_numbers = #tpu.dot_dimension_numbers<[1], [0], [0], [1], [0, 0, 1, 1], [], []>} : vector<512x128xbf16>, vector<128x128xbf16>, vector<512x128xf32> -> vector<512x128xf32>
    %36 = arith.addf %28, %35 : vector<512x128xf32>
    %c9 = arith.constant 9 : index
    %c0_19 = arith.constant 0 : index
    %37 = vector.load %arg9[%c9, %c0_19] : memref<560x128xf32, #tpu.memory_space<vmem>>, vector<512x128xf32>
    %38 = arith.andi %8, %14 : vector<512x128xi1>
    %cst_20 = arith.constant 0.000000e+00 : f32
    %39 = vector.broadcast %cst_20 : f32 to vector<512x128xf32>
    %40 = arith.select %38, %37, %39 : vector<512x128xi1>, vector<512x128xf32>
    %41 = arith.truncf %40 : vector<512x128xf32> to vector<512x128xbf16>
    %c2 = arith.constant 2 : index
    %c0_21 = arith.constant 0 : index
    %c0_22 = arith.constant 0 : index
    %42 = vector.load %arg1[%c2, %c0_21, %c0_22] : memref<9x128x128xbf16, #tpu.memory_space<vmem>>, vector<1x128x128xbf16>
    %43 = vector.shape_cast %42 : vector<1x128x128xbf16> to vector<128x128xbf16>
    %cst_23 = arith.constant dense<0.000000e+00> : vector<512x128xf32>
    %44 = tpu.matmul %41, %43, %cst_23 {dimension_numbers = #tpu.dot_dimension_numbers<[1], [0], [0], [1], [0, 0, 1, 1], [], []>} : vector<512x128xbf16>, vector<128x128xbf16>, vector<512x128xf32> -> vector<512x128xf32>
    %45 = arith.addf %36, %44 : vector<512x128xf32>
    %c23 = arith.constant 23 : index
    %c0_24 = arith.constant 0 : index
    %46 = vector.load %arg9[%c23, %c0_24] : memref<560x128xf32, #tpu.memory_space<vmem>>, vector<512x128xf32>
    %cst_25 = arith.constant 0.000000e+00 : f32
    %47 = vector.broadcast %cst_25 : f32 to vector<512x128xf32>
    %48 = arith.select %12, %46, %47 : vector<512x128xi1>, vector<512x128xf32>
    %49 = arith.truncf %48 : vector<512x128xf32> to vector<512x128xbf16>
    %c3 = arith.constant 3 : index
    %c0_26 = arith.constant 0 : index
    %c0_27 = arith.constant 0 : index
    %50 = vector.load %arg1[%c3, %c0_26, %c0_27] : memref<9x128x128xbf16, #tpu.memory_space<vmem>>, vector<1x128x128xbf16>
    %51 = vector.shape_cast %50 : vector<1x128x128xbf16> to vector<128x128xbf16>
    %cst_28 = arith.constant dense<0.000000e+00> : vector<512x128xf32>
    %52 = tpu.matmul %49, %51, %cst_28 {dimension_numbers = #tpu.dot_dimension_numbers<[1], [0], [0], [1], [0, 0, 1, 1], [], []>} : vector<512x128xbf16>, vector<128x128xbf16>, vector<512x128xf32> -> vector<512x128xf32>
    %53 = arith.addf %45, %52 : vector<512x128xf32>
    %c24_29 = arith.constant 24 : index
    %c0_30 = arith.constant 0 : index
    %54 = vector.load %arg9[%c24_29, %c0_30] : memref<560x128xf32, #tpu.memory_space<vmem>>, vector<512x128xf32>
    %55 = arith.truncf %54 : vector<512x128xf32> to vector<512x128xbf16>
    %c4 = arith.constant 4 : index
    %c0_31 = arith.constant 0 : index
    %c0_32 = arith.constant 0 : index
    %56 = vector.load %arg1[%c4, %c0_31, %c0_32] : memref<9x128x128xbf16, #tpu.memory_space<vmem>>, vector<1x128x128xbf16>
    %57 = vector.shape_cast %56 : vector<1x128x128xbf16> to vector<128x128xbf16>
    %cst_33 = arith.constant dense<0.000000e+00> : vector<512x128xf32>
    %58 = tpu.matmul %55, %57, %cst_33 {dimension_numbers = #tpu.dot_dimension_numbers<[1], [0], [0], [1], [0, 0, 1, 1], [], []>} : vector<512x128xbf16>, vector<128x128xbf16>, vector<512x128xf32> -> vector<512x128xf32>
    %59 = arith.addf %53, %58 : vector<512x128xf32>
    %c25 = arith.constant 25 : index
    %c0_34 = arith.constant 0 : index
    %60 = vector.load %arg9[%c25, %c0_34] : memref<560x128xf32, #tpu.memory_space<vmem>>, vector<512x128xf32>
    %cst_35 = arith.constant 0.000000e+00 : f32
    %61 = vector.broadcast %cst_35 : f32 to vector<512x128xf32>
    %62 = arith.select %14, %60, %61 : vector<512x128xi1>, vector<512x128xf32>
    %63 = arith.truncf %62 : vector<512x128xf32> to vector<512x128xbf16>
    %c5 = arith.constant 5 : index
    %c0_36 = arith.constant 0 : index
    %c0_37 = arith.constant 0 : index
    %64 = vector.load %arg1[%c5, %c0_36, %c0_37] : memref<9x128x128xbf16, #tpu.memory_space<vmem>>, vector<1x128x128xbf16>
    %65 = vector.shape_cast %64 : vector<1x128x128xbf16> to vector<128x128xbf16>
    %cst_38 = arith.constant dense<0.000000e+00> : vector<512x128xf32>
    %66 = tpu.matmul %63, %65, %cst_38 {dimension_numbers = #tpu.dot_dimension_numbers<[1], [0], [0], [1], [0, 0, 1, 1], [], []>} : vector<512x128xbf16>, vector<128x128xbf16>, vector<512x128xf32> -> vector<512x128xf32>
    %67 = arith.addf %59, %66 : vector<512x128xf32>
    %c39 = arith.constant 39 : index
    %c0_39 = arith.constant 0 : index
    %68 = vector.load %arg9[%c39, %c0_39] : memref<560x128xf32, #tpu.memory_space<vmem>>, vector<512x128xf32>
    %69 = arith.andi %10, %12 : vector<512x128xi1>
    %cst_40 = arith.constant 0.000000e+00 : f32
    %70 = vector.broadcast %cst_40 : f32 to vector<512x128xf32>
    %71 = arith.select %69, %68, %70 : vector<512x128xi1>, vector<512x128xf32>
    %72 = arith.truncf %71 : vector<512x128xf32> to vector<512x128xbf16>
    %c6 = arith.constant 6 : index
    %c0_41 = arith.constant 0 : index
    %c0_42 = arith.constant 0 : index
    %73 = vector.load %arg1[%c6, %c0_41, %c0_42] : memref<9x128x128xbf16, #tpu.memory_space<vmem>>, vector<1x128x128xbf16>
    %74 = vector.shape_cast %73 : vector<1x128x128xbf16> to vector<128x128xbf16>
    %cst_43 = arith.constant dense<0.000000e+00> : vector<512x128xf32>
    %75 = tpu.matmul %72, %74, %cst_43 {dimension_numbers = #tpu.dot_dimension_numbers<[1], [0], [0], [1], [0, 0, 1, 1], [], []>} : vector<512x128xbf16>, vector<128x128xbf16>, vector<512x128xf32> -> vector<512x128xf32>
    %76 = arith.addf %67, %75 : vector<512x128xf32>
    %c40 = arith.constant 40 : index
    %c0_44 = arith.constant 0 : index
    %77 = vector.load %arg9[%c40, %c0_44] : memref<560x128xf32, #tpu.memory_space<vmem>>, vector<512x128xf32>
    %cst_45 = arith.constant 0.000000e+00 : f32
    %78 = vector.broadcast %cst_45 : f32 to vector<512x128xf32>
    %79 = arith.select %10, %77, %78 : vector<512x128xi1>, vector<512x128xf32>
    %80 = arith.truncf %79 : vector<512x128xf32> to vector<512x128xbf16>
    %c7_46 = arith.constant 7 : index
    %c0_47 = arith.constant 0 : index
    %c0_48 = arith.constant 0 : index
    %81 = vector.load %arg1[%c7_46, %c0_47, %c0_48] : memref<9x128x128xbf16, #tpu.memory_space<vmem>>, vector<1x128x128xbf16>
    %82 = vector.shape_cast %81 : vector<1x128x128xbf16> to vector<128x128xbf16>
    %cst_49 = arith.constant dense<0.000000e+00> : vector<512x128xf32>
    %83 = tpu.matmul %80, %82, %cst_49 {dimension_numbers = #tpu.dot_dimension_numbers<[1], [0], [0], [1], [0, 0, 1, 1], [], []>} : vector<512x128xbf16>, vector<128x128xbf16>, vector<512x128xf32> -> vector<512x128xf32>
    %84 = arith.addf %76, %83 : vector<512x128xf32>
    %c41 = arith.constant 41 : index
    %c0_50 = arith.constant 0 : index
    %85 = vector.load %arg9[%c41, %c0_50] : memref<560x128xf32, #tpu.memory_space<vmem>>, vector<512x128xf32>
    %86 = arith.andi %10, %14 : vector<512x128xi1>
    %cst_51 = arith.constant 0.000000e+00 : f32
    %87 = vector.broadcast %cst_51 : f32 to vector<512x128xf32>
    %88 = arith.select %86, %85, %87 : vector<512x128xi1>, vector<512x128xf32>
    %89 = arith.truncf %88 : vector<512x128xf32> to vector<512x128xbf16>
    %c8_52 = arith.constant 8 : index
    %c0_53 = arith.constant 0 : index
    %c0_54 = arith.constant 0 : index
    %90 = vector.load %arg1[%c8_52, %c0_53, %c0_54] : memref<9x128x128xbf16, #tpu.memory_space<vmem>>, vector<1x128x128xbf16>
    %91 = vector.shape_cast %90 : vector<1x128x128xbf16> to vector<128x128xbf16>
    %cst_55 = arith.constant dense<0.000000e+00> : vector<512x128xf32>
    %92 = tpu.matmul %89, %91, %cst_55 {dimension_numbers = #tpu.dot_dimension_numbers<[1], [0], [0], [1], [0, 0, 1, 1], [], []>} : vector<512x128xbf16>, vector<128x128xbf16>, vector<512x128xf32> -> vector<512x128xf32>
    %93 = arith.addf %84, %92 : vector<512x128xf32>
    %c0_56 = arith.constant 0 : index
    %c0_57 = arith.constant 0 : index
    %94 = vector.load %arg2[%c0_56, %c0_57] : memref<1x128xf32, #tpu.memory_space<vmem>>, vector<1x128xf32>
    %95 = vector.broadcast %94 : vector<1x128xf32> to vector<512x128xf32>
    %96 = arith.addf %93, %95 : vector<512x128xf32>
    %cst_58 = arith.constant 0.000000e+00 : f32
    %97 = vector.broadcast %cst_58 : f32 to vector<512x128xf32>
    %98 = arith.maximumf %96, %97 : vector<512x128xf32>
    %c24_59 = arith.constant 24 : index
    %c0_60 = arith.constant 0 : index
    %99 = vector.load %arg9[%c24_59, %c0_60] : memref<560x128xf32, #tpu.memory_space<vmem>>, vector<512x128xf32>
    tpu.vector_store %arg9[%c24_59, %c0_60], %98 {strides = array<i32>} : memref<560x128xf32, #tpu.memory_space<vmem>>, vector<512x128xf32>,
    %cst_61 = arith.constant 0.000000e+00 : f32
    %100 = vector.broadcast %cst_61 : f32 to vector<512x128xf32>
    %c7_62 = arith.constant 7 : index
    %c0_63 = arith.constant 0 : index
    %101 = vector.load %arg9[%c7_62, %c0_63] : memref<560x128xf32, #tpu.memory_space<vmem>>, vector<512x128xf32>
    %102 = arith.andi %8, %12 : vector<512x128xi1>
    %cst_64 = arith.constant 0.000000e+00 : f32
    %103 = vector.broadcast %cst_64 : f32 to vector<512x128xf32>
    %104 = arith.select %102, %101, %103 : vector<512x128xi1>, vector<512x128xf32>
    %105 = arith.truncf %104 : vector<512x128xf32> to vector<512x128xbf16>
    %c0_65 = arith.constant 0 : index
    %c0_66 = arith.constant 0 : index
    %c0_67 = arith.constant 0 : index
    %106 = vector.load %arg3[%c0_65, %c0_66, %c0_67] : memref<9x128x128xbf16, #tpu.memory_space<vmem>>, vector<1x128x128xbf16>
    %107 = vector.shape_cast %106 : vector<1x128x128xbf16> to vector<128x128xbf16>
    %cst_68 = arith.constant dense<0.000000e+00> : vector<512x128xf32>
    %108 = tpu.matmul %105, %107, %cst_68 {dimension_numbers = #tpu.dot_dimension_numbers<[1], [0], [0], [1], [0, 0, 1, 1], [], []>} : vector<512x128xbf16>, vector<128x128xbf16>, vector<512x128xf32> -> vector<512x128xf32>
    %109 = arith.addf %100, %108 : vector<512x128xf32>
    %c8_69 = arith.constant 8 : index
    %c0_70 = arith.constant 0 : index
    %110 = vector.load %arg9[%c8_69, %c0_70] : memref<560x128xf32, #tpu.memory_space<vmem>>, vector<512x128xf32>
    %cst_71 = arith.constant 0.000000e+00 : f32
    %111 = vector.broadcast %cst_71 : f32 to vector<512x128xf32>
    %112 = arith.select %8, %110, %111 : vector<512x128xi1>, vector<512x128xf32>
    %113 = arith.truncf %112 : vector<512x128xf32> to vector<512x128xbf16>
    %c1_72 = arith.constant 1 : index
    %c0_73 = arith.constant 0 : index
    %c0_74 = arith.constant 0 : index
    %114 = vector.load %arg3[%c1_72, %c0_73, %c0_74] : memref<9x128x128xbf16, #tpu.memory_space<vmem>>, vector<1x128x128xbf16>
    %115 = vector.shape_cast %114 : vector<1x128x128xbf16> to vector<128x128xbf16>
    %cst_75 = arith.constant dense<0.000000e+00> : vector<512x128xf32>
    %116 = tpu.matmul %113, %115, %cst_75 {dimension_numbers = #tpu.dot_dimension_numbers<[1], [0], [0], [1], [0, 0, 1, 1], [], []>} : vector<512x128xbf16>, vector<128x128xbf16>, vector<512x128xf32> -> vector<512x128xf32>
    %117 = arith.addf %109, %116 : vector<512x128xf32>
    %c9_76 = arith.constant 9 : index
    %c0_77 = arith.constant 0 : index
    %118 = vector.load %arg9[%c9_76, %c0_77] : memref<560x128xf32, #tpu.memory_space<vmem>>, vector<512x128xf32>
    %119 = arith.andi %8, %14 : vector<512x128xi1>
    %cst_78 = arith.constant 0.000000e+00 : f32
    %120 = vector.broadcast %cst_78 : f32 to vector<512x128xf32>
    %121 = arith.select %119, %118, %120 : vector<512x128xi1>, vector<512x128xf32>
    %122 = arith.truncf %121 : vector<512x128xf32> to vector<512x128xbf16>
    %c2_79 = arith.constant 2 : index
    %c0_80 = arith.constant 0 : index
    %c0_81 = arith.constant 0 : index
    %123 = vector.load %arg3[%c2_79, %c0_80, %c0_81] : memref<9x128x128xbf16, #tpu.memory_space<vmem>>, vector<1x128x128xbf16>
    %124 = vector.shape_cast %123 : vector<1x128x128xbf16> to vector<128x128xbf16>
    %cst_82 = arith.constant dense<0.000000e+00> : vector<512x128xf32>
    %125 = tpu.matmul %122, %124, %cst_82 {dimension_numbers = #tpu.dot_dimension_numbers<[1], [0], [0], [1], [0, 0, 1, 1], [], []>} : vector<512x128xbf16>, vector<128x128xbf16>, vector<512x128xf32> -> vector<512x128xf32>
    %126 = arith.addf %117, %125 : vector<512x128xf32>
    %c23_83 = arith.constant 23 : index
    %c0_84 = arith.constant 0 : index
    %127 = vector.load %arg9[%c23_83, %c0_84] : memref<560x128xf32, #tpu.memory_space<vmem>>, vector<512x128xf32>
    %cst_85 = arith.constant 0.000000e+00 : f32
    %128 = vector.broadcast %cst_85 : f32 to vector<512x128xf32>
    %129 = arith.select %12, %127, %128 : vector<512x128xi1>, vector<512x128xf32>
    %130 = arith.truncf %129 : vector<512x128xf32> to vector<512x128xbf16>
    %c3_86 = arith.constant 3 : index
    %c0_87 = arith.constant 0 : index
    %c0_88 = arith.constant 0 : index
    %131 = vector.load %arg3[%c3_86, %c0_87, %c0_88] : memref<9x128x128xbf16, #tpu.memory_space<vmem>>, vector<1x128x128xbf16>
    %132 = vector.shape_cast %131 : vector<1x128x128xbf16> to vector<128x128xbf16>
    %cst_89 = arith.constant dense<0.000000e+00> : vector<512x128xf32>
    %133 = tpu.matmul %130, %132, %cst_89 {dimension_numbers = #tpu.dot_dimension_numbers<[1], [0], [0], [1], [0, 0, 1, 1], [], []>} : vector<512x128xbf16>, vector<128x128xbf16>, vector<512x128xf32> -> vector<512x128xf32>
    %134 = arith.addf %126, %133 : vector<512x128xf32>
    %c24_90 = arith.constant 24 : index
    %c0_91 = arith.constant 0 : index
    %135 = vector.load %arg9[%c24_90, %c0_91] : memref<560x128xf32, #tpu.memory_space<vmem>>, vector<512x128xf32>
    %136 = arith.truncf %135 : vector<512x128xf32> to vector<512x128xbf16>
    %c4_92 = arith.constant 4 : index
    %c0_93 = arith.constant 0 : index
    %c0_94 = arith.constant 0 : index
    %137 = vector.load %arg3[%c4_92, %c0_93, %c0_94] : memref<9x128x128xbf16, #tpu.memory_space<vmem>>, vector<1x128x128xbf16>
    %138 = vector.shape_cast %137 : vector<1x128x128xbf16> to vector<128x128xbf16>
    %cst_95 = arith.constant dense<0.000000e+00> : vector<512x128xf32>
    %139 = tpu.matmul %136, %138, %cst_95 {dimension_numbers = #tpu.dot_dimension_numbers<[1], [0], [0], [1], [0, 0, 1, 1], [], []>} : vector<512x128xbf16>, vector<128x128xbf16>, vector<512x128xf32> -> vector<512x128xf32>
    %140 = arith.addf %134, %139 : vector<512x128xf32>
    %c25_96 = arith.constant 25 : index
    %c0_97 = arith.constant 0 : index
    %141 = vector.load %arg9[%c25_96, %c0_97] : memref<560x128xf32, #tpu.memory_space<vmem>>, vector<512x128xf32>
    %cst_98 = arith.constant 0.000000e+00 : f32
    %142 = vector.broadcast %cst_98 : f32 to vector<512x128xf32>
    %143 = arith.select %14, %141, %142 : vector<512x128xi1>, vector<512x128xf32>
    %144 = arith.truncf %143 : vector<512x128xf32> to vector<512x128xbf16>
    %c5_99 = arith.constant 5 : index
    %c0_100 = arith.constant 0 : index
    %c0_101 = arith.constant 0 : index
    %145 = vector.load %arg3[%c5_99, %c0_100, %c0_101] : memref<9x128x128xbf16, #tpu.memory_space<vmem>>, vector<1x128x128xbf16>
    %146 = vector.shape_cast %145 : vector<1x128x128xbf16> to vector<128x128xbf16>
    %cst_102 = arith.constant dense<0.000000e+00> : vector<512x128xf32>
    %147 = tpu.matmul %144, %146, %cst_102 {dimension_numbers = #tpu.dot_dimension_numbers<[1], [0], [0], [1], [0, 0, 1, 1], [], []>} : vector<512x128xbf16>, vector<128x128xbf16>, vector<512x128xf32> -> vector<512x128xf32>
    %148 = arith.addf %140, %147 : vector<512x128xf32>
    %c39_103 = arith.constant 39 : index
    %c0_104 = arith.constant 0 : index
    %149 = vector.load %arg9[%c39_103, %c0_104] : memref<560x128xf32, #tpu.memory_space<vmem>>, vector<512x128xf32>
    %150 = arith.andi %10, %12 : vector<512x128xi1>
    %cst_105 = arith.constant 0.000000e+00 : f32
    %151 = vector.broadcast %cst_105 : f32 to vector<512x128xf32>
    %152 = arith.select %150, %149, %151 : vector<512x128xi1>, vector<512x128xf32>
    %153 = arith.truncf %152 : vector<512x128xf32> to vector<512x128xbf16>
    %c6_106 = arith.constant 6 : index
    %c0_107 = arith.constant 0 : index
    %c0_108 = arith.constant 0 : index
    %154 = vector.load %arg3[%c6_106, %c0_107, %c0_108] : memref<9x128x128xbf16, #tpu.memory_space<vmem>>, vector<1x128x128xbf16>
    %155 = vector.shape_cast %154 : vector<1x128x128xbf16> to vector<128x128xbf16>
    %cst_109 = arith.constant dense<0.000000e+00> : vector<512x128xf32>
    %156 = tpu.matmul %153, %155, %cst_109 {dimension_numbers = #tpu.dot_dimension_numbers<[1], [0], [0], [1], [0, 0, 1, 1], [], []>} : vector<512x128xbf16>, vector<128x128xbf16>, vector<512x128xf32> -> vector<512x128xf32>
    %157 = arith.addf %148, %156 : vector<512x128xf32>
    %c40_110 = arith.constant 40 : index
    %c0_111 = arith.constant 0 : index
    %158 = vector.load %arg9[%c40_110, %c0_111] : memref<560x128xf32, #tpu.memory_space<vmem>>, vector<512x128xf32>
    %cst_112 = arith.constant 0.000000e+00 : f32
    %159 = vector.broadcast %cst_112 : f32 to vector<512x128xf32>
    %160 = arith.select %10, %158, %159 : vector<512x128xi1>, vector<512x128xf32>
    %161 = arith.truncf %160 : vector<512x128xf32> to vector<512x128xbf16>
    %c7_113 = arith.constant 7 : index
    %c0_114 = arith.constant 0 : index
    %c0_115 = arith.constant 0 : index
    %162 = vector.load %arg3[%c7_113, %c0_114, %c0_115] : memref<9x128x128xbf16, #tpu.memory_space<vmem>>, vector<1x128x128xbf16>
    %163 = vector.shape_cast %162 : vector<1x128x128xbf16> to vector<128x128xbf16>
    %cst_116 = arith.constant dense<0.000000e+00> : vector<512x128xf32>
    %164 = tpu.matmul %161, %163, %cst_116 {dimension_numbers = #tpu.dot_dimension_numbers<[1], [0], [0], [1], [0, 0, 1, 1], [], []>} : vector<512x128xbf16>, vector<128x128xbf16>, vector<512x128xf32> -> vector<512x128xf32>
    %165 = arith.addf %157, %164 : vector<512x128xf32>
    %c41_117 = arith.constant 41 : index
    %c0_118 = arith.constant 0 : index
    %166 = vector.load %arg9[%c41_117, %c0_118] : memref<560x128xf32, #tpu.memory_space<vmem>>, vector<512x128xf32>
    %167 = arith.andi %10, %14 : vector<512x128xi1>
    %cst_119 = arith.constant 0.000000e+00 : f32
    %168 = vector.broadcast %cst_119 : f32 to vector<512x128xf32>
    %169 = arith.select %167, %166, %168 : vector<512x128xi1>, vector<512x128xf32>
    %170 = arith.truncf %169 : vector<512x128xf32> to vector<512x128xbf16>
    %c8_120 = arith.constant 8 : index
    %c0_121 = arith.constant 0 : index
    %c0_122 = arith.constant 0 : index
    %171 = vector.load %arg3[%c8_120, %c0_121, %c0_122] : memref<9x128x128xbf16, #tpu.memory_space<vmem>>, vector<1x128x128xbf16>
    %172 = vector.shape_cast %171 : vector<1x128x128xbf16> to vector<128x128xbf16>
    %cst_123 = arith.constant dense<0.000000e+00> : vector<512x128xf32>
    %173 = tpu.matmul %170, %172, %cst_123 {dimension_numbers = #tpu.dot_dimension_numbers<[1], [0], [0], [1], [0, 0, 1, 1], [], []>} : vector<512x128xbf16>, vector<128x128xbf16>, vector<512x128xf32> -> vector<512x128xf32>
    %174 = arith.addf %165, %173 : vector<512x128xf32>
    %c0_124 = arith.constant 0 : index
    %c0_125 = arith.constant 0 : index
    %175 = vector.load %arg4[%c0_124, %c0_125] : memref<1x128xf32, #tpu.memory_space<vmem>>, vector<1x128xf32>
    %176 = vector.broadcast %175 : vector<1x128xf32> to vector<512x128xf32>
    %177 = arith.addf %174, %176 : vector<512x128xf32>
    %178 = arith.addf %177, %98 : vector<512x128xf32>
    %cst_126 = arith.constant 0.000000e+00 : f32
    %179 = vector.broadcast %cst_126 : f32 to vector<512x128xf32>
    %180 = arith.maximumf %178, %179 : vector<512x128xf32>
    %c0_127 = arith.constant 0 : index
    %c0_128 = arith.constant 0 : index
    %181 = vector.load %arg7[%c0_127, %c0_128] : memref<512x128xf32, #tpu.memory_space<vmem>>, vector<512x128xf32>
    tpu.vector_store %arg7[%c0_127, %c0_128], %180 {strides = array<i32>} : memref<512x128xf32, #tpu.memory_space<vmem>>, vector<512x128xf32>,
    %182 = vector.extract_strided_slice %180 {offsets = [0, 0], sizes = [256, 128], strides = [1, 1]} : vector<512x128xf32> to vector<256x128xf32>
    %cst_129 = arith.constant dense<0.000000e+00> : vector<128xf32>
    %183 = vector.multi_reduction <add>, %182, %cst_129 [0] : vector<256x128xf32> to vector<128xf32>
    %184 = vector.shape_cast %183 : vector<128xf32> to vector<1x128xf32>
    %185 = vector.extract_strided_slice %180 {offsets = [256, 0], sizes = [256, 128], strides = [1, 1]} : vector<512x128xf32> to vector<256x128xf32>
    %cst_130 = arith.constant dense<0.000000e+00> : vector<128xf32>
    %186 = vector.multi_reduction <add>, %185, %cst_130 [0] : vector<256x128xf32> to vector<128xf32>
    %187 = vector.shape_cast %186 : vector<128xf32> to vector<1x128xf32>
    %188 = tpu.concatenate %184, %187 in 0 : vector<1x128xf32>, vector<1x128xf32> -> vector<2x128xf32>
    %cst_131 = arith.constant 3.906250e-03 : f32
    %189 = vector.broadcast %cst_131 : f32 to vector<2x128xf32>
    %190 = arith.mulf %188, %189 : vector<2x128xf32>
    %191 = arith.truncf %190 : vector<2x128xf32> to vector<2x128xbf16>
    %c0_132 = arith.constant 0 : index
    %c0_133 = arith.constant 0 : index
    %192 = vector.load %arg5[%c0_132, %c0_133] : memref<128x128xbf16, #tpu.memory_space<vmem>>, vector<128x128xbf16>
    %cst_134 = arith.constant dense<0.000000e+00> : vector<2x128xf32>
    %193 = tpu.matmul %191, %192, %cst_134 {dimension_numbers = #tpu.dot_dimension_numbers<[1], [0], [0], [1], [0, 0, 1, 1], [], []>} : vector<2x128xbf16>, vector<128x128xbf16>, vector<2x128xf32> -> vector<2x128xf32>
    %c0_135 = arith.constant 0 : index
    %c0_136 = arith.constant 0 : index
    %194 = vector.load %arg6[%c0_135, %c0_136] : memref<1x128xf32, #tpu.memory_space<vmem>>, vector<1x128xf32>
    %195 = vector.broadcast %194 : vector<1x128xf32> to vector<2x128xf32>
    %196 = arith.addf %193, %195 : vector<2x128xf32>
    %197 = tpu.iota {dimensions = array<i32: 0>} : vector<2x128xi32>
    %198 = tpu.iota {dimensions = array<i32: 1>} : vector<2x128xi32>
    %c10_i32 = arith.constant 10 : i32
    %199 = vector.broadcast %c10_i32 : i32 to vector<2x128xi32>
    %200 = arith.muli %197, %199 : vector<2x128xi32>
    %201 = arith.addi %200, %198 : vector<2x128xi32>
    %202 = vector.shape_cast %196 : vector<2x128xf32> to vector<1x2x128xf32>
    %cst_137 = arith.constant dense<0xFF800000> : vector<1xf32>
    %203 = vector.multi_reduction <maximumf>, %202, %cst_137 [1, 2] : vector<1x2x128xf32> to vector<1xf32>
    %204 = vector.shape_cast %203 : vector<1xf32> to vector<1x1x1xf32>
    %205 = vector.extract %204[0, 0, 0] : f32 from vector<1x1x1xf32>
    %206 = vector.broadcast %205 : f32 to vector<1x1xf32>
    %207 = vector.broadcast %206 : vector<1x1xf32> to vector<2x128xf32>
    %208 = arith.cmpf oge, %196, %207 : vector<2x128xf32>
    %c10_i32_138 = arith.constant 10 : i32
    %209 = vector.broadcast %c10_i32_138 : i32 to vector<2x128xi32>
    %210 = arith.cmpi slt, %198, %209 : vector<2x128xi32>
    %211 = arith.andi %208, %210 : vector<2x128xi1>
    %c20_i32 = arith.constant 20 : i32
    %212 = vector.broadcast %c20_i32 : i32 to vector<2x128xi32>
    %213 = arith.select %211, %201, %212 : vector<2x128xi1>, vector<2x128xi32>
    %214 = vector.shape_cast %213 : vector<2x128xi32> to vector<1x2x128xi32>
    %cst_139 = arith.constant dense<2147483647> : vector<1xi32>
    %215 = vector.multi_reduction <minsi>, %214, %cst_139 [1, 2] : vector<1x2x128xi32> to vector<1xi32>
    %216 = vector.shape_cast %215 : vector<1xi32> to vector<1x1x1xi32>
    %217 = vector.extract %216[0, 0, 0] : i32 from vector<1x1x1xi32>
    %218 = vector.broadcast %217 : i32 to vector<1x1xi32>
    %219 = vector.extract %218[0, 0] : i32 from vector<1x1xi32>
    %c0_140 = arith.constant 0 : index
    %c0_141 = arith.constant 0 : index
    %220 = memref.load %arg8[%c0_140, %c0_141] : memref<1x1xi32, #tpu.memory_space<smem>>
    memref.store %219, %arg8[%c0_140, %c0_141] : memref<1x1xi32, #tpu.memory_space<smem>>
    return
  }
}

</mosaic_0001>

<llo_original>
// kernel: forward.1
$region0: #{forward.1}
  #allocation0 [shape = 'u32[]', space=smem, size = 0x4, offset = 0x4, fixed_abs, tag = 'smem constant byte address 0x4 - core index']
  #allocation1 [shape = 'u32[144,128]{1,0:T(1,128)}', space=vmem, size = 0x12000, scoped, tag = 'internal scratch']
  #allocation2 [shape = 'f32[560,128]{1,0:T(8,128)}', space=vmem, size = 0x46000, scoped, tag = 'scratch operand']
  %s0 = inlined_call_operand.vmem [shape: f32[512,128], index: 0, kind: input, shape index: {}]
  %s1 = inlined_call_operand.vmem [shape: bf16[9,128,128], index: 1, kind: input, shape index: {}]
  %s2 = inlined_call_operand.vmem [shape: f32[1,128], index: 2, kind: input, shape index: {}]
  %s3 = inlined_call_operand.vmem [shape: bf16[9,128,128], index: 3, kind: input, shape index: {}]
  %s4 = inlined_call_operand.vmem [shape: f32[1,128], index: 4, kind: input, shape index: {}]
  %s5 = inlined_call_operand.vmem [shape: bf16[128,128], index: 5, kind: input, shape index: {}]
  %s6 = inlined_call_operand.vmem [shape: f32[1,128], index: 6, kind: input, shape index: {}]
  %s7 = inlined_call_operand.vmem [shape: f32[512,128], index: 7, kind: output, shape index: {0}]
  %s8 = inlined_call_operand.hbm [shape: s32[1,1], index: 8, kind: output, shape index: {1}]
  %9 = xla_tuple %s7, %s8
  %s10 = sld [smem:[#allocation0]]
  $region46: #{forward.1} parent=0
    _
  %s12 = ssub.s32 1, %s10
  %s13 = scalar_select 0, %s12, %s10
  $region1: #{forward.1} parent=0
    #allocation3 [shape = 'u8[512]{0}', space=smem, size = 0x200, scoped, tag = 'output window, operand 1, single buffered']
    #allocation4 [shape = 's32[1]{0}', space=sflag, size = 0x4, scoped, tag = 'scoped memory for forward.1']
    %14 = vsyncpa [#allocation4], 0
    // Predicated region
    $region2: #{forward.1} parent=1 // pred_check
      _
    $region3: #{forward.1} parent=1 // pred_check_branch
      %16 = sbr.rel (0) target = $region5
    $region4: #{forward.1} parent=1 // pred_region
      _
    $region5: #{forward.1} parent=1 // pred_fallthru
      _
    // Predicated region
    $region6: #{forward.1} parent=1 // pred_check
      _
    $region7: #{forward.1} parent=1 // pred_check_branch
      %18 = sbr.rel (0) target = $region9
    $region8: #{forward.1} parent=1 // pred_region
      _
    $region9: #{forward.1} parent=1 // pred_fallthru
      _
    // Predicated region
    $region10: #{forward.1} parent=1 // pred_check
      _
    $region11: #{forward.1} parent=1 // pred_check_branch
      %20 = sbr.rel (0) target = $region13
    $region12: #{forward.1} parent=1 // pred_region
      _
    $region13: #{forward.1} parent=1 // pred_fallthru
      _
    // Predicated region
    $region14: #{forward.1} parent=1 // pred_check
      _
    $region15: #{forward.1} parent=1 // pred_check_branch
      %22 = sbr.rel (0) target = $region17
    $region16: #{forward.1} parent=1 // pred_region
      _
    $region17: #{forward.1} parent=1 // pred_fallthru
      _
    // Predicated region
    $region18: #{forward.1} parent=1 // pred_check
      _
    $region19: #{forward.1} parent=1 // pred_check_branch
      %24 = sbr.rel (0) target = $region21
    $region20: #{forward.1} parent=1 // pred_region
      _
    $region21: #{forward.1} parent=1 // pred_fallthru
      _
    // Predicated region
    $region22: #{forward.1} parent=1 // pred_check
      _
    $region23: #{forward.1} parent=1 // pred_check_branch
      %26 = sbr.rel (0) target = $region25
    $region24: #{forward.1} parent=1 // pred_region
      _
    $region25: #{forward.1} parent=1 // pred_fallthru
      _
    // Predicated region
    $region26: #{forward.1} parent=1 // pred_check
      _
    $region27: #{forward.1} parent=1 // pred_check_branch
      %28 = sbr.rel (0) target = $region29
    $region28: #{forward.1} parent=1 // pred_region
      _
    $region29: #{forward.1} parent=1 // pred_fallthru
      _
    %v30 = vlaneseq
    %v31 = vshrl.u32 %v30, 7
    %v32 = vadd.s32 %v31, 8
    %v33 = vadd.s32 %v31, 16
    %v34 = vadd.s32 %v31, 24
    %v35 = vadd.s32 %v31, 32
    %v36 = vadd.s32 %v31, 40
    %v37 = vadd.s32 %v31, 48
    %v38 = vadd.s32 %v31, 56
    %v39 = vadd.s32 %v31, 64
    %v40 = vadd.s32 %v31, 72
    %v41 = vadd.s32 %v31, 80
    %v42 = vadd.s32 %v31, 88
    %v43 = vadd.s32 %v31, 96
    %v44 = vadd.s32 %v31, 104
    %v45 = vadd.s32 %v31, 112
    %v46 = vadd.s32 %v31, 120
    %v47 = vadd.s32 %v31, 128
    %v48 = vadd.s32 %v31, 136
    %v49 = vadd.s32 %v31, 144
    %v50 = vadd.s32 %v31, 152
    %v51 = vadd.s32 %v31, 160
    %v52 = vadd.s32 %v31, 168
    %v53 = vadd.s32 %v31, 176
    %v54 = vadd.s32 %v31, 184
    %v55 = vadd.s32 %v31, 192
    %v56 = vadd.s32 %v31, 200
    %v57 = vadd.s32 %v31, 208
    %v58 = vadd.s32 %v31, 216
    %v59 = vadd.s32 %v31, 224
    %v60 = vadd.s32 %v31, 232
    %v61 = vadd.s32 %v31, 240
    %v62 = vadd.s32 %v31, 248
    %v63 = vadd.s32 %v31, 256
    %v64 = vadd.s32 %v31, 264
    %v65 = vadd.s32 %v31, 272
    %v66 = vadd.s32 %v31, 280
    %v67 = vadd.s32 %v31, 288
    %v68 = vadd.s32 %v31, 296
    %v69 = vadd.s32 %v31, 304
    %v70 = vadd.s32 %v31, 312
    %v71 = vadd.s32 %v31, 320
    %v72 = vadd.s32 %v31, 328
    %v73 = vadd.s32 %v31, 336
    %v74 = vadd.s32 %v31, 344
    %v75 = vadd.s32 %v31, 352
    %v76 = vadd.s32 %v31, 360
    %v77 = vadd.s32 %v31, 368
    %v78 = vadd.s32 %v31, 376
    %v79 = vadd.s32 %v31, 384
    %v80 = vadd.s32 %v31, 392
    %v81 = vadd.s32 %v31, 400
    %v82 = vadd.s32 %v31, 408
    %v83 = vadd.s32 %v31, 416
    %v84 = vadd.s32 %v31, 424
    %v85 = vadd.s32 %v31, 432
    %v86 = vadd.s32 %v31, 440
    %v87 = vadd.s32 %v31, 448
    %v88 = vadd.s32 %v31, 456
    %v89 = vadd.s32 %v31, 464
    %v90 = vadd.s32 %v31, 472
    %v91 = vadd.s32 %v31, 480
    %v92 = vadd.s32 %v31, 488
    %v93 = vadd.s32 %v31, 496
    %v94 = vadd.s32 %v31, 504
    %v95 = vand.u32 %v31, 15
    %v96 = vand.u32 %v32, 15
    %v97 = vand.u32 %v33, 15
    %v98 = vand.u32 %v34, 15
    %v99 = vand.u32 %v35, 15
    %v100 = vand.u32 %v36, 15
    %v101 = vand.u32 %v37, 15
    %v102 = vand.u32 %v38, 15
    %v103 = vand.u32 %v39, 15
    %v104 = vand.u32 %v40, 15
    %v105 = vand.u32 %v41, 15
    %v106 = vand.u32 %v42, 15
    %v107 = vand.u32 %v43, 15
    %v108 = vand.u32 %v44, 15
    %v109 = vand.u32 %v45, 15
    %v110 = vand.u32 %v46, 15
    %v111 = vand.u32 %v47, 15
    %v112 = vand.u32 %v48, 15
    %v113 = vand.u32 %v49, 15
    %v114 = vand.u32 %v50, 15
    %v115 = vand.u32 %v51, 15
    %v116 = vand.u32 %v52, 15
    %v117 = vand.u32 %v53, 15
    %v118 = vand.u32 %v54, 15
    %v119 = vand.u32 %v55, 15
    %v120 = vand.u32 %v56, 15
    %v121 = vand.u32 %v57, 15
    %v122 = vand.u32 %v58, 15
    %v123 = vand.u32 %v59, 15
    %v124 = vand.u32 %v60, 15
    %v125 = vand.u32 %v61, 15
    %v126 = vand.u32 %v62, 15
    %v127 = vand.u32 %v63, 15
    %v128 = vand.u32 %v64, 15
    %v129 = vand.u32 %v65, 15
    %v130 = vand.u32 %v66, 15
    %v131 = vand.u32 %v67, 15
    %v132 = vand.u32 %v68, 15
    %v133 = vand.u32 %v69, 15
    %v134 = vand.u32 %v70, 15
    %v135 = vand.u32 %v71, 15
    %v136 = vand.u32 %v72, 15
    %v137 = vand.u32 %v73, 15
    %v138 = vand.u32 %v74, 15
    %v139 = vand.u32 %v75, 15
    %v140 = vand.u32 %v76, 15
    %v141 = vand.u32 %v77, 15
    %v142 = vand.u32 %v78, 15
    %v143 = vand.u32 %v79, 15
    %v144 = vand.u32 %v80, 15
    %v145 = vand.u32 %v81, 15
    %v146 = vand.u32 %v82, 15
    %v147 = vand.u32 %v83, 15
    %v148 = vand.u32 %v84, 15
    %v149 = vand.u32 %v85, 15
    %v150 = vand.u32 %v86, 15
    %v151 = vand.u32 %v87, 15
    %v152 = vand.u32 %v88, 15
    %v153 = vand.u32 %v89, 15
    %v154 = vand.u32 %v90, 15
    %v155 = vand.u32 %v91, 15
    %v156 = vand.u32 %v92, 15
    %v157 = vand.u32 %v93, 15
    %v158 = vand.u32 %v94, 15
    %v159 = vshra.s32 %v31, 4
    %v160 = vshra.s32 %v32, 4
    %v161 = vshra.s32 %v33, 4
    %v162 = vshra.s32 %v34, 4
    %v163 = vshra.s32 %v35, 4
    %v164 = vshra.s32 %v36, 4
    %v165 = vshra.s32 %v37, 4
    %v166 = vshra.s32 %v38, 4
    %v167 = vshra.s32 %v39, 4
    %v168 = vshra.s32 %v40, 4
    %v169 = vshra.s32 %v41, 4
    %v170 = vshra.s32 %v42, 4
    %v171 = vshra.s32 %v43, 4
    %v172 = vshra.s32 %v44, 4
    %v173 = vshra.s32 %v45, 4
    %v174 = vshra.s32 %v46, 4
    %v175 = vshra.s32 %v47, 4
    %v176 = vshra.s32 %v48, 4
    %v177 = vshra.s32 %v49, 4
    %v178 = vshra.s32 %v50, 4
    %v179 = vshra.s32 %v51, 4
    %v180 = vshra.s32 %v52, 4
    %v181 = vshra.s32 %v53, 4
    %v182 = vshra.s32 %v54, 4
    %v183 = vshra.s32 %v55, 4
    %v184 = vshra.s32 %v56, 4
    %v185 = vshra.s32 %v57, 4
    %v186 = vshra.s32 %v58, 4
    %v187 = vshra.s32 %v59, 4
    %v188 = vshra.s32 %v60, 4
    %v189 = vshra.s32 %v61, 4
    %v190 = vshra.s32 %v62, 4
    %v191 = vshra.s32 %v63, 4
    %v192 = vshra.s32 %v64, 4
    %v193 = vshra.s32 %v65, 4
    %v194 = vshra.s32 %v66, 4
    %v195 = vshra.s32 %v67, 4
    %v196 = vshra.s32 %v68, 4
    %v197 = vshra.s32 %v69, 4
    %v198 = vshra.s32 %v70, 4
    %v199 = vshra.s32 %v71, 4
    %v200 = vshra.s32 %v72, 4
    %v201 = vshra.s32 %v73, 4
    %v202 = vshra.s32 %v74, 4
    %v203 = vshra.s32 %v75, 4
    %v204 = vshra.s32 %v76, 4
    %v205 = vshra.s32 %v77, 4
    %v206 = vshra.s32 %v78, 4
    %v207 = vshra.s32 %v79, 4
    %v208 = vshra.s32 %v80, 4
    %v209 = vshra.s32 %v81, 4
    %v210 = vshra.s32 %v82, 4
    %v211 = vshra.s32 %v83, 4
    %v212 = vshra.s32 %v84, 4
    %v213 = vshra.s32 %v85, 4
    %v214 = vshra.s32 %v86, 4
    %v215 = vshra.s32 %v87, 4
    %v216 = vshra.s32 %v88, 4
    %v217 = vshra.s32 %v89, 4
    %v218 = vshra.s32 %v90, 4
    %v219 = vshra.s32 %v91, 4
    %v220 = vshra.s32 %v92, 4
    %v221 = vshra.s32 %v93, 4
    %v222 = vshra.s32 %v94, 4
    %v223 = vand.u32 %v159, 15
    %v224 = vand.u32 %v160, 15
    %v225 = vand.u32 %v161, 15
    %v226 = vand.u32 %v162, 15
    %v227 = vand.u32 %v163, 15
    %v228 = vand.u32 %v164, 15
    %v229 = vand.u32 %v165, 15
    %v230 = vand.u32 %v166, 15
    %v231 = vand.u32 %v167, 15
    %v232 = vand.u32 %v168, 15
    %v233 = vand.u32 %v169, 15
    %v234 = vand.u32 %v170, 15
    %v235 = vand.u32 %v171, 15
    %v236 = vand.u32 %v172, 15
    %v237 = vand.u32 %v173, 15
    %v238 = vand.u32 %v174, 15
    %v239 = vand.u32 %v175, 15
    %v240 = vand.u32 %v176, 15
    %v241 = vand.u32 %v177, 15
    %v242 = vand.u32 %v178, 15
    %v243 = vand.u32 %v179, 15
    %v244 = vand.u32 %v180, 15
    %v245 = vand.u32 %v181, 15
    %v246 = vand.u32 %v182, 15
    %v247 = vand.u32 %v183, 15
    %v248 = vand.u32 %v184, 15
    %v249 = vand.u32 %v185, 15
    %v250 = vand.u32 %v186, 15
    %v251 = vand.u32 %v187, 15
    %v252 = vand.u32 %v188, 15
    %v253 = vand.u32 %v189, 15
    %v254 = vand.u32 %v190, 15
    %v255 = vand.u32 %v191, 15
    %v256 = vand.u32 %v192, 15
    %v257 = vand.u32 %v193, 15
    %v258 = vand.u32 %v194, 15
    %v259 = vand.u32 %v195, 15
    %v260 = vand.u32 %v196, 15
    %v261 = vand.u32 %v197, 15
    %v262 = vand.u32 %v198, 15
    %v263 = vand.u32 %v199, 15
    %v264 = vand.u32 %v200, 15
    %v265 = vand.u32 %v201, 15
    %v266 = vand.u32 %v202, 15
    %v267 = vand.u32 %v203, 15
    %v268 = vand.u32 %v204, 15
    %v269 = vand.u32 %v205, 15
    %v270 = vand.u32 %v206, 15
    %v271 = vand.u32 %v207, 15
    %v272 = vand.u32 %v208, 15
    %v273 = vand.u32 %v209, 15
    %v274 = vand.u32 %v210, 15
    %v275 = vand.u32 %v211, 15
    %v276 = vand.u32 %v212, 15
    %v277 = vand.u32 %v213, 15
    %v278 = vand.u32 %v214, 15
    %v279 = vand.u32 %v215, 15
    %v280 = vand.u32 %v216, 15
    %v281 = vand.u32 %v217, 15
    %v282 = vand.u32 %v218, 15
    %v283 = vand.u32 %v219, 15
    %v284 = vand.u32 %v220, 15
    %v285 = vand.u32 %v221, 15
    %v286 = vand.u32 %v222, 15
    %vm287 = vcmp.ge.s32.totalorder %v223, 1
    %vm288 = vcmp.ge.s32.totalorder %v224, 1
    %vm289 = vcmp.ge.s32.totalorder %v225, 1
    %vm290 = vcmp.ge.s32.totalorder %v226, 1
    %vm291 = vcmp.ge.s32.totalorder %v227, 1
    %vm292 = vcmp.ge.s32.totalorder %v228, 1
    %vm293 = vcmp.ge.s32.totalorder %v229, 1
    %vm294 = vcmp.ge.s32.totalorder %v230, 1
    %vm295 = vcmp.ge.s32.totalorder %v231, 1
    %vm296 = vcmp.ge.s32.totalorder %v232, 1
    %vm297 = vcmp.ge.s32.totalorder %v233, 1
    %vm298 = vcmp.ge.s32.totalorder %v234, 1
    %vm299 = vcmp.ge.s32.totalorder %v235, 1
    %vm300 = vcmp.ge.s32.totalorder %v236, 1
    %vm301 = vcmp.ge.s32.totalorder %v237, 1
    %vm302 = vcmp.ge.s32.totalorder %v238, 1
    %vm303 = vcmp.ge.s32.totalorder %v239, 1
    %vm304 = vcmp.ge.s32.totalorder %v240, 1
    %vm305 = vcmp.ge.s32.totalorder %v241, 1
    %vm306 = vcmp.ge.s32.totalorder %v242, 1
    %vm307 = vcmp.ge.s32.totalorder %v243, 1
    %vm308 = vcmp.ge.s32.totalorder %v244, 1
    %vm309 = vcmp.ge.s32.totalorder %v245, 1
    %vm310 = vcmp.ge.s32.totalorder %v246, 1
    %vm311 = vcmp.ge.s32.totalorder %v247, 1
    %vm312 = vcmp.ge.s32.totalorder %v248, 1
    %vm313 = vcmp.ge.s32.totalorder %v249, 1
    %vm314 = vcmp.ge.s32.totalorder %v250, 1
    %vm315 = vcmp.ge.s32.totalorder %v251, 1
    %vm316 = vcmp.ge.s32.totalorder %v252, 1
    %vm317 = vcmp.ge.s32.totalorder %v253, 1
    %vm318 = vcmp.ge.s32.totalorder %v254, 1
    %vm319 = vcmp.ge.s32.totalorder %v255, 1
    %vm320 = vcmp.ge.s32.totalorder %v256, 1
    %vm321 = vcmp.ge.s32.totalorder %v257, 1
    %vm322 = vcmp.ge.s32.totalorder %v258, 1
    %vm323 = vcmp.ge.s32.totalorder %v259, 1
    %vm324 = vcmp.ge.s32.totalorder %v260, 1
    %vm325 = vcmp.ge.s32.totalorder %v261, 1
    %vm326 = vcmp.ge.s32.totalorder %v262, 1
    %vm327 = vcmp.ge.s32.totalorder %v263, 1
    %vm328 = vcmp.ge.s32.totalorder %v264, 1
    %vm329 = vcmp.ge.s32.totalorder %v265, 1
    %vm330 = vcmp.ge.s32.totalorder %v266, 1
    %vm331 = vcmp.ge.s32.totalorder %v267, 1
    %vm332 = vcmp.ge.s32.totalorder %v268, 1
    %vm333 = vcmp.ge.s32.totalorder %v269, 1
    %vm334 = vcmp.ge.s32.totalorder %v270, 1
    %vm335 = vcmp.ge.s32.totalorder %v271, 1
    %vm336 = vcmp.ge.s32.totalorder %v272, 1
    %vm337 = vcmp.ge.s32.totalorder %v273, 1
    %vm338 = vcmp.ge.s32.totalorder %v274, 1
    %vm339 = vcmp.ge.s32.totalorder %v275, 1
    %vm340 = vcmp.ge.s32.totalorder %v276, 1
    %vm341 = vcmp.ge.s32.totalorder %v277, 1
    %vm342 = vcmp.ge.s32.totalorder %v278, 1
    %vm343 = vcmp.ge.s32.totalorder %v279, 1
    %vm344 = vcmp.ge.s32.totalorder %v280, 1
    %vm345 = vcmp.ge.s32.totalorder %v281, 1
    %vm346 = vcmp.ge.s32.totalorder %v282, 1
    %vm347 = vcmp.ge.s32.totalorder %v283, 1
    %vm348 = vcmp.ge.s32.totalorder %v284, 1
    %vm349 = vcmp.ge.s32.totalorder %v285, 1
    %vm350 = vcmp.ge.s32.totalorder %v286, 1
    %vm351 = vcmp.le.s32.totalorder %v223, 14
    %vm352 = vcmp.le.s32.totalorder %v224, 14
    %vm353 = vcmp.le.s32.totalorder %v225, 14
    %vm354 = vcmp.le.s32.totalorder %v226, 14
    %vm355 = vcmp.le.s32.totalorder %v227, 14
    %vm356 = vcmp.le.s32.totalorder %v228, 14
    %vm357 = vcmp.le.s32.totalorder %v229, 14
    %vm358 = vcmp.le.s32.totalorder %v230, 14
    %vm359 = vcmp.le.s32.totalorder %v231, 14
    %vm360 = vcmp.le.s32.totalorder %v232, 14
    %vm361 = vcmp.le.s32.totalorder %v233, 14
    %vm362 = vcmp.le.s32.totalorder %v234, 14
    %vm363 = vcmp.le.s32.totalorder %v235, 14
    %vm364 = vcmp.le.s32.totalorder %v236, 14
    %vm365 = vcmp.le.s32.totalorder %v237, 14
    %vm366 = vcmp.le.s32.totalorder %v238, 14
    %vm367 = vcmp.le.s32.totalorder %v239, 14
    %vm368 = vcmp.le.s32.totalorder %v240, 14
    %vm369 = vcmp.le.s32.totalorder %v241, 14
    %vm370 = vcmp.le.s32.totalorder %v242, 14
    %vm371 = vcmp.le.s32.totalorder %v243, 14
    %vm372 = vcmp.le.s32.totalorder %v244, 14
    %vm373 = vcmp.le.s32.totalorder %v245, 14
    %vm374 = vcmp.le.s32.totalorder %v246, 14
    %vm375 = vcmp.le.s32.totalorder %v247, 14
    %vm376 = vcmp.le.s32.totalorder %v248, 14
    %vm377 = vcmp.le.s32.totalorder %v249, 14
    %vm378 = vcmp.le.s32.totalorder %v250, 14
    %vm379 = vcmp.le.s32.totalorder %v251, 14
    %vm380 = vcmp.le.s32.totalorder %v252, 14
    %vm381 = vcmp.le.s32.totalorder %v253, 14
    %vm382 = vcmp.le.s32.totalorder %v254, 14
    %vm383 = vcmp.le.s32.totalorder %v255, 14
    %vm384 = vcmp.le.s32.totalorder %v256, 14
    %vm385 = vcmp.le.s32.totalorder %v257, 14
    %vm386 = vcmp.le.s32.totalorder %v258, 14
    %vm387 = vcmp.le.s32.totalorder %v259, 14
    %vm388 = vcmp.le.s32.totalorder %v260, 14
    %vm389 = vcmp.le.s32.totalorder %v261, 14
    %vm390 = vcmp.le.s32.totalorder %v262, 14
    %vm391 = vcmp.le.s32.totalorder %v263, 14
    %vm392 = vcmp.le.s32.totalorder %v264, 14
    %vm393 = vcmp.le.s32.totalorder %v265, 14
    %vm394 = vcmp.le.s32.totalorder %v266, 14
    %vm395 = vcmp.le.s32.totalorder %v267, 14
    %vm396 = vcmp.le.s32.totalorder %v268, 14
    %vm397 = vcmp.le.s32.totalorder %v269, 14
    %vm398 = vcmp.le.s32.totalorder %v270, 14
    %vm399 = vcmp.le.s32.totalorder %v271, 14
    %vm400 = vcmp.le.s32.totalorder %v272, 14
    %vm401 = vcmp.le.s32.totalorder %v273, 14
    %vm402 = vcmp.le.s32.totalorder %v274, 14
    %vm403 = vcmp.le.s32.totalorder %v275, 14
    %vm404 = vcmp.le.s32.totalorder %v276, 14
    %vm405 = vcmp.le.s32.totalorder %v277, 14
    %vm406 = vcmp.le.s32.totalorder %v278, 14
    %vm407 = vcmp.le.s32.totalorder %v279, 14
    %vm408 = vcmp.le.s32.totalorder %v280, 14
    %vm409 = vcmp.le.s32.totalorder %v281, 14
    %vm410 = vcmp.le.s32.totalorder %v282, 14
    %vm411 = vcmp.le.s32.totalorder %v283, 14
    %vm412 = vcmp.le.s32.totalorder %v284, 14
    %vm413 = vcmp.le.s32.totalorder %v285, 14
    %vm414 = vcmp.le.s32.totalorder %v286, 14
    %vm415 = vcmp.ge.s32.totalorder %v95, 1
    %vm416 = vcmp.ge.s32.totalorder %v96, 1
    %vm417 = vcmp.ge.s32.totalorder %v97, 1
    %vm418 = vcmp.ge.s32.totalorder %v98, 1
    %vm419 = vcmp.ge.s32.totalorder %v99, 1
    %vm420 = vcmp.ge.s32.totalorder %v100, 1
    %vm421 = vcmp.ge.s32.totalorder %v101, 1
    %vm422 = vcmp.ge.s32.totalorder %v102, 1
    %vm423 = vcmp.ge.s32.totalorder %v103, 1
    %vm424 = vcmp.ge.s32.totalorder %v104, 1
    %vm425 = vcmp.ge.s32.totalorder %v105, 1
    %vm426 = vcmp.ge.s32.totalorder %v106, 1
    %vm427 = vcmp.ge.s32.totalorder %v107, 1
    %vm428 = vcmp.ge.s32.totalorder %v108, 1
    %vm429 = vcmp.ge.s32.totalorder %v109, 1
    %vm430 = vcmp.ge.s32.totalorder %v110, 1
    %vm431 = vcmp.ge.s32.totalorder %v111, 1
    %vm432 = vcmp.ge.s32.totalorder %v112, 1
    %vm433 = vcmp.ge.s32.totalorder %v113, 1
    %vm434 = vcmp.ge.s32.totalorder %v114, 1
    %vm435 = vcmp.ge.s32.totalorder %v115, 1
    %vm436 = vcmp.ge.s32.totalorder %v116, 1
    %vm437 = vcmp.ge.s32.totalorder %v117, 1
    %vm438 = vcmp.ge.s32.totalorder %v118, 1
    %vm439 = vcmp.ge.s32.totalorder %v119, 1
    %vm440 = vcmp.ge.s32.totalorder %v120, 1
    %vm441 = vcmp.ge.s32.totalorder %v121, 1
    %vm442 = vcmp.ge.s32.totalorder %v122, 1
    %vm443 = vcmp.ge.s32.totalorder %v123, 1
    %vm444 = vcmp.ge.s32.totalorder %v124, 1
    %vm445 = vcmp.ge.s32.totalorder %v125, 1
    %vm446 = vcmp.ge.s32.totalorder %v126, 1
    %vm447 = vcmp.ge.s32.totalorder %v127, 1
    %vm448 = vcmp.ge.s32.totalorder %v128, 1
    %vm449 = vcmp.ge.s32.totalorder %v129, 1
    %vm450 = vcmp.ge.s32.totalorder %v130, 1
    %vm451 = vcmp.ge.s32.totalorder %v131, 1
    %vm452 = vcmp.ge.s32.totalorder %v132, 1
    %vm453 = vcmp.ge.s32.totalorder %v133, 1
    %vm454 = vcmp.ge.s32.totalorder %v134, 1
    %vm455 = vcmp.ge.s32.totalorder %v135, 1
    %vm456 = vcmp.ge.s32.totalorder %v136, 1
    %vm457 = vcmp.ge.s32.totalorder %v137, 1
    %vm458 = vcmp.ge.s32.totalorder %v138, 1
    %vm459 = vcmp.ge.s32.totalorder %v139, 1
    %vm460 = vcmp.ge.s32.totalorder %v140, 1
    %vm461 = vcmp.ge.s32.totalorder %v141, 1
    %vm462 = vcmp.ge.s32.totalorder %v142, 1
    %vm463 = vcmp.ge.s32.totalorder %v143, 1
    %vm464 = vcmp.ge.s32.totalorder %v144, 1
    %vm465 = vcmp.ge.s32.totalorder %v145, 1
    %vm466 = vcmp.ge.s32.totalorder %v146, 1
    %vm467 = vcmp.ge.s32.totalorder %v147, 1
    %vm468 = vcmp.ge.s32.totalorder %v148, 1
    %vm469 = vcmp.ge.s32.totalorder %v149, 1
    %vm470 = vcmp.ge.s32.totalorder %v150, 1
    %vm471 = vcmp.ge.s32.totalorder %v151, 1
    %vm472 = vcmp.ge.s32.totalorder %v152, 1
    %vm473 = vcmp.ge.s32.totalorder %v153, 1
    %vm474 = vcmp.ge.s32.totalorder %v154, 1
    %vm475 = vcmp.ge.s32.totalorder %v155, 1
    %vm476 = vcmp.ge.s32.totalorder %v156, 1
    %vm477 = vcmp.ge.s32.totalorder %v157, 1
    %vm478 = vcmp.ge.s32.totalorder %v158, 1
    %vm479 = vcmp.le.s32.totalorder %v95, 14
    %vm480 = vcmp.le.s32.totalorder %v96, 14
    %vm481 = vcmp.le.s32.totalorder %v97, 14
    %vm482 = vcmp.le.s32.totalorder %v98, 14
    %vm483 = vcmp.le.s32.totalorder %v99, 14
    %vm484 = vcmp.le.s32.totalorder %v100, 14
    %vm485 = vcmp.le.s32.totalorder %v101, 14
    %vm486 = vcmp.le.s32.totalorder %v102, 14
    %vm487 = vcmp.le.s32.totalorder %v103, 14
    %vm488 = vcmp.le.s32.totalorder %v104, 14
    %vm489 = vcmp.le.s32.totalorder %v105, 14
    %vm490 = vcmp.le.s32.totalorder %v106, 14
    %vm491 = vcmp.le.s32.totalorder %v107, 14
    %vm492 = vcmp.le.s32.totalorder %v108, 14
    %vm493 = vcmp.le.s32.totalorder %v109, 14
    %vm494 = vcmp.le.s32.totalorder %v110, 14
    %vm495 = vcmp.le.s32.totalorder %v111, 14
    %vm496 = vcmp.le.s32.totalorder %v112, 14
    %vm497 = vcmp.le.s32.totalorder %v113, 14
    %vm498 = vcmp.le.s32.totalorder %v114, 14
    %vm499 = vcmp.le.s32.totalorder %v115, 14
    %vm500 = vcmp.le.s32.totalorder %v116, 14
    %vm501 = vcmp.le.s32.totalorder %v117, 14
    %vm502 = vcmp.le.s32.totalorder %v118, 14
    %vm503 = vcmp.le.s32.totalorder %v119, 14
    %vm504 = vcmp.le.s32.totalorder %v120, 14
    %vm505 = vcmp.le.s32.totalorder %v121, 14
    %vm506 = vcmp.le.s32.totalorder %v122, 14
    %vm507 = vcmp.le.s32.totalorder %v123, 14
    %vm508 = vcmp.le.s32.totalorder %v124, 14
    %vm509 = vcmp.le.s32.totalorder %v125, 14
    %vm510 = vcmp.le.s32.totalorder %v126, 14
    %vm511 = vcmp.le.s32.totalorder %v127, 14
    %vm512 = vcmp.le.s32.totalorder %v128, 14
    %vm513 = vcmp.le.s32.totalorder %v129, 14
    %vm514 = vcmp.le.s32.totalorder %v130, 14
    %vm515 = vcmp.le.s32.totalorder %v131, 14
    %vm516 = vcmp.le.s32.totalorder %v132, 14
    %vm517 = vcmp.le.s32.totalorder %v133, 14
    %vm518 = vcmp.le.s32.totalorder %v134, 14
    %vm519 = vcmp.le.s32.totalorder %v135, 14
    %vm520 = vcmp.le.s32.totalorder %v136, 14
    %vm521 = vcmp.le.s32.totalorder %v137, 14
    %vm522 = vcmp.le.s32.totalorder %v138, 14
    %vm523 = vcmp.le.s32.totalorder %v139, 14
    %vm524 = vcmp.le.s32.totalorder %v140, 14
    %vm525 = vcmp.le.s32.totalorder %v141, 14
    %vm526 = vcmp.le.s32.totalorder %v142, 14
    %vm527 = vcmp.le.s32.totalorder %v143, 14
    %vm528 = vcmp.le.s32.totalorder %v144, 14
    %vm529 = vcmp.le.s32.totalorder %v145, 14
    %vm530 = vcmp.le.s32.totalorder %v146, 14
    %vm531 = vcmp.le.s32.totalorder %v147, 14
    %vm532 = vcmp.le.s32.totalorder %v148, 14
    %vm533 = vcmp.le.s32.totalorder %v149, 14
    %vm534 = vcmp.le.s32.totalorder %v150, 14
    %vm535 = vcmp.le.s32.totalorder %v151, 14
    %vm536 = vcmp.le.s32.totalorder %v152, 14
    %vm537 = vcmp.le.s32.totalorder %v153, 14
    %vm538 = vcmp.le.s32.totalorder %v154, 14
    %vm539 = vcmp.le.s32.totalorder %v155, 14
    %vm540 = vcmp.le.s32.totalorder %v156, 14
    %vm541 = vcmp.le.s32.totalorder %v157, 14
    %vm542 = vcmp.le.s32.totalorder %v158, 14
    %543 = vst [vmem:[#allocation2] sm:$0xff] 0.0
    %544 = vst [vmem:[#allocation2 + $0x8] sm:$0xff] 0.0
    %545 = vst [vmem:[#allocation2 + $0x10] sm:$0xff] 0.0
    %546 = vst [vmem:[#allocation2 + $0x18] sm:$0xff] 0.0
    %547 = vst [vmem:[#allocation2 + $0x20] sm:$0xff] 0.0
    %548 = vst [vmem:[#allocation2 + $0x28] sm:$0xff] 0.0
    %549 = vst [vmem:[#allocation2 + $0x30] sm:$0xff] 0.0
    %550 = vst [vmem:[#allocation2 + $0x38] sm:$0xff] 0.0
    %551 = vst [vmem:[#allocation2 + $0x40] sm:$0xff] 0.0
    %552 = vst [vmem:[#allocation2 + $0x48] sm:$0xff] 0.0
    %553 = vst [vmem:[#allocation2 + $0x50] sm:$0xff] 0.0
    %554 = vst [vmem:[#allocation2 + $0x58] sm:$0xff] 0.0
    %555 = vst [vmem:[#allocation2 + $0x60] sm:$0xff] 0.0
    %556 = vst [vmem:[#allocation2 + $0x68] sm:$0xff] 0.0
    %557 = vst [vmem:[#allocation2 + $0x70] sm:$0xff] 0.0
    %558 = vst [vmem:[#allocation2 + $0x78] sm:$0xff] 0.0
    %559 = vst [vmem:[#allocation2 + $0x80] sm:$0xff] 0.0
    %560 = vst [vmem:[#allocation2 + $0x88] sm:$0xff] 0.0
    %561 = vst [vmem:[#allocation2 + $0x90] sm:$0xff] 0.0
    %562 = vst [vmem:[#allocation2 + $0x98] sm:$0xff] 0.0
    %563 = vst [vmem:[#allocation2 + $0xa0] sm:$0xff] 0.0
    %564 = vst [vmem:[#allocation2 + $0xa8] sm:$0xff] 0.0
    %565 = vst [vmem:[#allocation2 + $0xb0] sm:$0xff] 0.0
    %566 = vst [vmem:[#allocation2 + $0xb8] sm:$0xff] 0.0
    %567 = vst [vmem:[#allocation2 + $0xc0] sm:$0xff] 0.0
    %568 = vst [vmem:[#allocation2 + $0xc8] sm:$0xff] 0.0
    %569 = vst [vmem:[#allocation2 + $0xd0] sm:$0xff] 0.0
    %570 = vst [vmem:[#allocation2 + $0xd8] sm:$0xff] 0.0
    %571 = vst [vmem:[#allocation2 + $0xe0] sm:$0xff] 0.0
    %572 = vst [vmem:[#allocation2 + $0xe8] sm:$0xff] 0.0
    %573 = vst [vmem:[#allocation2 + $0xf0] sm:$0xff] 0.0
    %574 = vst [vmem:[#allocation2 + $0xf8] sm:$0xff] 0.0
    %575 = vst [vmem:[#allocation2 + $0x100] sm:$0xff] 0.0
    %576 = vst [vmem:[#allocation2 + $0x108] sm:$0xff] 0.0
    %577 = vst [vmem:[#allocation2 + $0x110] sm:$0xff] 0.0
    %578 = vst [vmem:[#allocation2 + $0x118] sm:$0xff] 0.0
    %579 = vst [vmem:[#allocation2 + $0x120] sm:$0xff] 0.0
    %580 = vst [vmem:[#allocation2 + $0x128] sm:$0xff] 0.0
    %581 = vst [vmem:[#allocation2 + $0x130] sm:$0xff] 0.0
    %582 = vst [vmem:[#allocation2 + $0x138] sm:$0xff] 0.0
    %583 = vst [vmem:[#allocation2 + $0x140] sm:$0xff] 0.0
    %584 = vst [vmem:[#allocation2 + $0x148] sm:$0xff] 0.0
    %585 = vst [vmem:[#allocation2 + $0x150] sm:$0xff] 0.0
    %586 = vst [vmem:[#allocation2 + $0x158] sm:$0xff] 0.0
    %587 = vst [vmem:[#allocation2 + $0x160] sm:$0xff] 0.0
    %588 = vst [vmem:[#allocation2 + $0x168] sm:$0xff] 0.0
    %589 = vst [vmem:[#allocation2 + $0x170] sm:$0xff] 0.0
    %590 = vst [vmem:[#allocation2 + $0x178] sm:$0xff] 0.0
    %591 = vst [vmem:[#allocation2 + $0x180] sm:$0xff] 0.0
    %592 = vst [vmem:[#allocation2 + $0x188] sm:$0xff] 0.0
    %593 = vst [vmem:[#allocation2 + $0x190] sm:$0xff] 0.0
    %594 = vst [vmem:[#allocation2 + $0x198] sm:$0xff] 0.0
    %595 = vst [vmem:[#allocation2 + $0x1a0] sm:$0xff] 0.0
    %596 = vst [vmem:[#allocation2 + $0x1a8] sm:$0xff] 0.0
    %597 = vst [vmem:[#allocation2 + $0x1b0] sm:$0xff] 0.0
    %598 = vst [vmem:[#allocation2 + $0x1b8] sm:$0xff] 0.0
    %599 = vst [vmem:[#allocation2 + $0x1c0] sm:$0xff] 0.0
    %600 = vst [vmem:[#allocation2 + $0x1c8] sm:$0xff] 0.0
    %601 = vst [vmem:[#allocation2 + $0x1d0] sm:$0xff] 0.0
    %602 = vst [vmem:[#allocation2 + $0x1d8] sm:$0xff] 0.0
    %603 = vst [vmem:[#allocation2 + $0x1e0] sm:$0xff] 0.0
    %604 = vst [vmem:[#allocation2 + $0x1e8] sm:$0xff] 0.0
    %605 = vst [vmem:[#allocation2 + $0x1f0] sm:$0xff] 0.0
    %606 = vst [vmem:[#allocation2 + $0x1f8] sm:$0xff] 0.0
    %607 = vst [vmem:[#allocation2 + $0x200] sm:$0xff] 0.0
    %608 = vst [vmem:[#allocation2 + $0x208] sm:$0xff] 0.0
    %609 = vst [vmem:[#allocation2 + $0x210] sm:$0xff] 0.0
    %610 = vst [vmem:[#allocation2 + $0x218] sm:$0xff] 0.0
    %611 = vst [vmem:[#allocation2 + $0x220] sm:$0xff] 0.0
    %612 = vst [vmem:[#allocation2 + $0x228] sm:$0xff] 0.0
    %v613 = vld [vmem:[%s0] sm:$0xff]
    %v614 = vld [vmem:[%s0 + $0x8] sm:$0xff]
    %v615 = vld [vmem:[%s0 + $0x10] sm:$0xff]
    %v616 = vld [vmem:[%s0 + $0x18] sm:$0xff]
    %v617 = vld [vmem:[%s0 + $0x20] sm:$0xff]
    %v618 = vld [vmem:[%s0 + $0x28] sm:$0xff]
    %v619 = vld [vmem:[%s0 + $0x30] sm:$0xff]
    %v620 = vld [vmem:[%s0 + $0x38] sm:$0xff]
    %v621 = vld [vmem:[%s0 + $0x40] sm:$0xff]
    %v622 = vld [vmem:[%s0 + $0x48] sm:$0xff]
    %v623 = vld [vmem:[%s0 + $0x50] sm:$0xff]
    %v624 = vld [vmem:[%s0 + $0x58] sm:$0xff]
    %v625 = vld [vmem:[%s0 + $0x60] sm:$0xff]
    %v626 = vld [vmem:[%s0 + $0x68] sm:$0xff]
    %v627 = vld [vmem:[%s0 + $0x70] sm:$0xff]
    %v628 = vld [vmem:[%s0 + $0x78] sm:$0xff]
    %v629 = vld [vmem:[%s0 + $0x80] sm:$0xff]
    %v630 = vld [vmem:[%s0 + $0x88] sm:$0xff]
    %v631 = vld [vmem:[%s0 + $0x90] sm:$0xff]
    %v632 = vld [vmem:[%s0 + $0x98] sm:$0xff]
    %v633 = vld [vmem:[%s0 + $0xa0] sm:$0xff]
    %v634 = vld [vmem:[%s0 + $0xa8] sm:$0xff]
    %v635 = vld [vmem:[%s0 + $0xb0] sm:$0xff]
    %v636 = vld [vmem:[%s0 + $0xb8] sm:$0xff]
    %v637 = vld [vmem:[%s0 + $0xc0] sm:$0xff]
    %v638 = vld [vmem:[%s0 + $0xc8] sm:$0xff]
    %v639 = vld [vmem:[%s0 + $0xd0] sm:$0xff]
    %v640 = vld [vmem:[%s0 + $0xd8] sm:$0xff]
    %v641 = vld [vmem:[%s0 + $0xe0] sm:$0xff]
    %v642 = vld [vmem:[%s0 + $0xe8] sm:$0xff]
    %v643 = vld [vmem:[%s0 + $0xf0] sm:$0xff]
    %v644 = vld [vmem:[%s0 + $0xf8] sm:$0xff]
    %v645 = vld [vmem:[%s0 + $0x100] sm:$0xff]
    %v646 = vld [vmem:[%s0 + $0x108] sm:$0xff]
    %v647 = vld [vmem:[%s0 + $0x110] sm:$0xff]
    %v648 = vld [vmem:[%s0 + $0x118] sm:$0xff]
    %v649 = vld [vmem:[%s0 + $0x120] sm:$0xff]
    %v650 = vld [vmem:[%s0 + $0x128] sm:$0xff]
    %v651 = vld [vmem:[%s0 + $0x130] sm:$0xff]
    %v652 = vld [vmem:[%s0 + $0x138] sm:$0xff]
    %v653 = vld [vmem:[%s0 + $0x140] sm:$0xff]
    %v654 = vld [vmem:[%s0 + $0x148] sm:$0xff]
    %v655 = vld [vmem:[%s0 + $0x150] sm:$0xff]
    %v656 = vld [vmem:[%s0 + $0x158] sm:$0xff]
    %v657 = vld [vmem:[%s0 + $0x160] sm:$0xff]
    %v658 = vld [vmem:[%s0 + $0x168] sm:$0xff]
    %v659 = vld [vmem:[%s0 + $0x170] sm:$0xff]
    %v660 = vld [vmem:[%s0 + $0x178] sm:$0xff]
    %v661 = vld [vmem:[%s0 + $0x180] sm:$0xff]
    %v662 = vld [vmem:[%s0 + $0x188] sm:$0xff]
    %v663 = vld [vmem:[%s0 + $0x190] sm:$0xff]
    %v664 = vld [vmem:[%s0 + $0x198] sm:$0xff]
    %v665 = vld [vmem:[%s0 + $0x1a0] sm:$0xff]
    %v666 = vld [vmem:[%s0 + $0x1a8] sm:$0xff]
    %v667 = vld [vmem:[%s0 + $0x1b0] sm:$0xff]
    %v668 = vld [vmem:[%s0 + $0x1b8] sm:$0xff]
    %v669 = vld [vmem:[%s0 + $0x1c0] sm:$0xff]
    %v670 = vld [vmem:[%s0 + $0x1c8] sm:$0xff]
    %v671 = vld [vmem:[%s0 + $0x1d0] sm:$0xff]
    %v672 = vld [vmem:[%s0 + $0x1d8] sm:$0xff]
    %v673 = vld [vmem:[%s0 + $0x1e0] sm:$0xff]
    %v674 = vld [vmem:[%s0 + $0x1e8] sm:$0xff]
    %v675 = vld [vmem:[%s0 + $0x1f0] sm:$0xff]
    %v676 = vld [vmem:[%s0 + $0x1f8] sm:$0xff]
    %677 = vst [vmem:[#allocation2 + $0x18] sm:$0xff] %v613
    %678 = vst [vmem:[#allocation2 + $0x20] sm:$0xff] %v614
    %679 = vst [vmem:[#allocation2 + $0x28] sm:$0xff] %v615
    %680 = vst [vmem:[#allocation2 + $0x30] sm:$0xff] %v616
    %681 = vst [vmem:[#allocation2 + $0x38] sm:$0xff] %v617
    %682 = vst [vmem:[#allocation2 + $0x40] sm:$0xff] %v618
    %683 = vst [vmem:[#allocation2 + $0x48] sm:$0xff] %v619
    %684 = vst [vmem:[#allocation2 + $0x50] sm:$0xff] %v620
    %685 = vst [vmem:[#allocation2 + $0x58] sm:$0xff] %v621
    %686 = vst [vmem:[#allocation2 + $0x60] sm:$0xff] %v622
    %687 = vst [vmem:[#allocation2 + $0x68] sm:$0xff] %v623
    %688 = vst [vmem:[#allocation2 + $0x70] sm:$0xff] %v624
    %689 = vst [vmem:[#allocation2 + $0x78] sm:$0xff] %v625
    %690 = vst [vmem:[#allocation2 + $0x80] sm:$0xff] %v626
    %691 = vst [vmem:[#allocation2 + $0x88] sm:$0xff] %v627
    %692 = vst [vmem:[#allocation2 + $0x90] sm:$0xff] %v628
    %693 = vst [vmem:[#allocation2 + $0x98] sm:$0xff] %v629
    %694 = vst [vmem:[#allocation2 + $0xa0] sm:$0xff] %v630
    %695 = vst [vmem:[#allocation2 + $0xa8] sm:$0xff] %v631
    %696 = vst [vmem:[#allocation2 + $0xb0] sm:$0xff] %v632
    %697 = vst [vmem:[#allocation2 + $0xb8] sm:$0xff] %v633
    %698 = vst [vmem:[#allocation2 + $0xc0] sm:$0xff] %v634
    %699 = vst [vmem:[#allocation2 + $0xc8] sm:$0xff] %v635
    %700 = vst [vmem:[#allocation2 + $0xd0] sm:$0xff] %v636
    %701 = vst [vmem:[#allocation2 + $0xd8] sm:$0xff] %v637
    %702 = vst [vmem:[#allocation2 + $0xe0] sm:$0xff] %v638
    %703 = vst [vmem:[#allocation2 + $0xe8] sm:$0xff] %v639
    %704 = vst [vmem:[#allocation2 + $0xf0] sm:$0xff] %v640
    %705 = vst [vmem:[#allocation2 + $0xf8] sm:$0xff] %v641
    %706 = vst [vmem:[#allocation2 + $0x100] sm:$0xff] %v642
    %707 = vst [vmem:[#allocation2 + $0x108] sm:$0xff] %v643
    %708 = vst [vmem:[#allocation2 + $0x110] sm:$0xff] %v644
    %709 = vst [vmem:[#allocation2 + $0x118] sm:$0xff] %v645
    %710 = vst [vmem:[#allocation2 + $0x120] sm:$0xff] %v646
    %711 = vst [vmem:[#allocation2 + $0x128] sm:$0xff] %v647
    %712 = vst [vmem:[#allocation2 + $0x130] sm:$0xff] %v648
    %713 = vst [vmem:[#allocation2 + $0x138] sm:$0xff] %v649
    %714 = vst [vmem:[#allocation2 + $0x140] sm:$0xff] %v650
    %715 = vst [vmem:[#allocation2 + $0x148] sm:$0xff] %v651
    %716 = vst [vmem:[#allocation2 + $0x150] sm:$0xff] %v652
    %717 = vst [vmem:[#allocation2 + $0x158] sm:$0xff] %v653
    %718 = vst [vmem:[#allocation2 + $0x160] sm:$0xff] %v654
    %719 = vst [vmem:[#allocation2 + $0x168] sm:$0xff] %v655
    %720 = vst [vmem:[#allocation2 + $0x170] sm:$0xff] %v656
    %721 = vst [vmem:[#allocation2 + $0x178] sm:$0xff] %v657
    %722 = vst [vmem:[#allocation2 + $0x180] sm:$0xff] %v658
    %723 = vst [vmem:[#allocation2 + $0x188] sm:$0xff] %v659
    %724 = vst [vmem:[#allocation2 + $0x190] sm:$0xff] %v660
    %725 = vst [vmem:[#allocation2 + $0x198] sm:$0xff] %v661
    %726 = vst [vmem:[#allocation2 + $0x1a0] sm:$0xff] %v662
    %727 = vst [vmem:[#allocation2 + $0x1a8] sm:$0xff] %v663
    %728 = vst [vmem:[#allocation2 + $0x1b0] sm:$0xff] %v664
    %729 = vst [vmem:[#allocation2 + $0x1b8] sm:$0xff] %v665
    %730 = vst [vmem:[#allocation2 + $0x1c0] sm:$0xff] %v666
    %731 = vst [vmem:[#allocation2 + $0x1c8] sm:$0xff] %v667
    %732 = vst [vmem:[#allocation2 + $0x1d0] sm:$0xff] %v668
    %733 = vst [vmem:[#allocation2 + $0x1d8] sm:$0xff] %v669
    %734 = vst [vmem:[#allocation2 + $0x1e0] sm:$0xff] %v670
    %735 = vst [vmem:[#allocation2 + $0x1e8] sm:$0xff] %v671
    %736 = vst [vmem:[#allocation2 + $0x1f0] sm:$0xff] %v672
    %737 = vst [vmem:[#allocation2 + $0x1f8] sm:$0xff] %v673
    %738 = vst [vmem:[#allocation2 + $0x200] sm:$0xff] %v674
    %739 = vst [vmem:[#allocation2 + $0x208] sm:$0xff] %v675
    %740 = vst [vmem:[#allocation2 + $0x210] sm:$0xff] %v676
    %v741 = vld [vmem:[#allocation2 + $0x7] sm:$0xff]
    %v742 = vld [vmem:[#allocation2 + $0xf] sm:$0xff]
    %v743 = vld [vmem:[#allocation2 + $0x17] sm:$0xff]
    %v744 = vld [vmem:[#allocation2 + $0x1f] sm:$0xff]
    %v745 = vld [vmem:[#allocation2 + $0x27] sm:$0xff]
    %v746 = vld [vmem:[#allocation2 + $0x2f] sm:$0xff]
    %v747 = vld [vmem:[#allocation2 + $0x37] sm:$0xff]
    %v748 = vld [vmem:[#allocation2 + $0x3f] sm:$0xff]
    %v749 = vld [vmem:[#allocation2 + $0x47] sm:$0xff]
    %v750 = vld [vmem:[#allocation2 + $0x4f] sm:$0xff]
    %v751 = vld [vmem:[#allocation2 + $0x57] sm:$0xff]
    %v752 = vld [vmem:[#allocation2 + $0x5f] sm:$0xff]
    %v753 = vld [vmem:[#allocation2 + $0x67] sm:$0xff]
    %v754 = vld [vmem:[#allocation2 + $0x6f] sm:$0xff]
    %v755 = vld [vmem:[#allocation2 + $0x77] sm:$0xff]
    %v756 = vld [vmem:[#allocation2 + $0x7f] sm:$0xff]
    %v757 = vld [vmem:[#allocation2 + $0x87] sm:$0xff]
    %v758 = vld [vmem:[#allocation2 + $0x8f] sm:$0xff]
    %v759 = vld [vmem:[#allocation2 + $0x97] sm:$0xff]
    %v760 = vld [vmem:[#allocation2 + $0x9f] sm:$0xff]
    %v761 = vld [vmem:[#allocation2 + $0xa7] sm:$0xff]
    %v762 = vld [vmem:[#allocation2 + $0xaf] sm:$0xff]
    %v763 = vld [vmem:[#allocation2 + $0xb7] sm:$0xff]
    %v764 = vld [vmem:[#allocation2 + $0xbf] sm:$0xff]
    %v765 = vld [vmem:[#allocation2 + $0xc7] sm:$0xff]
    %v766 = vld [vmem:[#allocation2 + $0xcf] sm:$0xff]
    %v767 = vld [vmem:[#allocation2 + $0xd7] sm:$0xff]
    %v768 = vld [vmem:[#allocation2 + $0xdf] sm:$0xff]
    %v769 = vld [vmem:[#allocation2 + $0xe7] sm:$0xff]
    %v770 = vld [vmem:[#allocation2 + $0xef] sm:$0xff]
    %v771 = vld [vmem:[#allocation2 + $0xf7] sm:$0xff]
    %v772 = vld [vmem:[#allocation2 + $0xff] sm:$0xff]
    %v773 = vld [vmem:[#allocation2 + $0x107] sm:$0xff]
    %v774 = vld [vmem:[#allocation2 + $0x10f] sm:$0xff]
    %v775 = vld [vmem:[#allocation2 + $0x117] sm:$0xff]
    %v776 = vld [vmem:[#allocation2 + $0x11f] sm:$0xff]
    %v777 = vld [vmem:[#allocation2 + $0x127] sm:$0xff]
    %v778 = vld [vmem:[#allocation2 + $0x12f] sm:$0xff]
    %v779 = vld [vmem:[#allocation2 + $0x137] sm:$0xff]
    %v780 = vld [vmem:[#allocation2 + $0x13f] sm:$0xff]
    %v781 = vld [vmem:[#allocation2 + $0x147] sm:$0xff]
    %v782 = vld [vmem:[#allocation2 + $0x14f] sm:$0xff]
    %v783 = vld [vmem:[#allocation2 + $0x157] sm:$0xff]
    %v784 = vld [vmem:[#allocation2 + $0x15f] sm:$0xff]
    %v785 = vld [vmem:[#allocation2 + $0x167] sm:$0xff]
    %v786 = vld [vmem:[#allocation2 + $0x16f] sm:$0xff]
    %v787 = vld [vmem:[#allocation2 + $0x177] sm:$0xff]
    %v788 = vld [vmem:[#allocation2 + $0x17f] sm:$0xff]
    %v789 = vld [vmem:[#allocation2 + $0x187] sm:$0xff]
    %v790 = vld [vmem:[#allocation2 + $0x18f] sm:$0xff]
    %v791 = vld [vmem:[#allocation2 + $0x197] sm:$0xff]
    %v792 = vld [vmem:[#allocation2 + $0x19f] sm:$0xff]
    %v793 = vld [vmem:[#allocation2 + $0x1a7] sm:$0xff]
    %v794 = vld [vmem:[#allocation2 + $0x1af] sm:$0xff]
    %v795 = vld [vmem:[#allocation2 + $0x1b7] sm:$0xff]
    %v796 = vld [vmem:[#allocation2 + $0x1bf] sm:$0xff]
    %v797 = vld [vmem:[#allocation2 + $0x1c7] sm:$0xff]
    %v798 = vld [vmem:[#allocation2 + $0x1cf] sm:$0xff]
    %v799 = vld [vmem:[#allocation2 + $0x1d7] sm:$0xff]
    %v800 = vld [vmem:[#allocation2 + $0x1df] sm:$0xff]
    %v801 = vld [vmem:[#allocation2 + $0x1e7] sm:$0xff]
    %v802 = vld [vmem:[#allocation2 + $0x1ef] sm:$0xff]
    %v803 = vld [vmem:[#allocation2 + $0x1f7] sm:$0xff]
    %v804 = vld [vmem:[#allocation2 + $0x1ff] sm:$0xff]
    %vm805 = vmand %vm287, %vm415
    %vm806 = vmand %vm288, %vm416
    %vm807 = vmand %vm289, %vm417
    %vm808 = vmand %vm290, %vm418
    %vm809 = vmand %vm291, %vm419
    %vm810 = vmand %vm292, %vm420
    %vm811 = vmand %vm293, %vm421
    %vm812 = vmand %vm294, %vm422
    %vm813 = vmand %vm295, %vm423
    %vm814 = vmand %vm296, %vm424
    %vm815 = vmand %vm297, %vm425
    %vm816 = vmand %vm298, %vm426
    %vm817 = vmand %vm299, %vm427
    %vm818 = vmand %vm300, %vm428
    %vm819 = vmand %vm301, %vm429
    %vm820 = vmand %vm302, %vm430
    %vm821 = vmand %vm303, %vm431
    %vm822 = vmand %vm304, %vm432
    %vm823 = vmand %vm305, %vm433
    %vm824 = vmand %vm306, %vm434
    %vm825 = vmand %vm307, %vm435
    %vm826 = vmand %vm308, %vm436
    %vm827 = vmand %vm309, %vm437
    %vm828 = vmand %vm310, %vm438
    %vm829 = vmand %vm311, %vm439
    %vm830 = vmand %vm312, %vm440
    %vm831 = vmand %vm313, %vm441
    %vm832 = vmand %vm314, %vm442
    %vm833 = vmand %vm315, %vm443
    %vm834 = vmand %vm316, %vm444
    %vm835 = vmand %vm317, %vm445
    %vm836 = vmand %vm318, %vm446
    %vm837 = vmand %vm319, %vm447
    %vm838 = vmand %vm320, %vm448
    %vm839 = vmand %vm321, %vm449
    %vm840 = vmand %vm322, %vm450
    %vm841 = vmand %vm323, %vm451
    %vm842 = vmand %vm324, %vm452
    %vm843 = vmand %vm325, %vm453
    %vm844 = vmand %vm326, %vm454
    %vm845 = vmand %vm327, %vm455
    %vm846 = vmand %vm328, %vm456
    %vm847 = vmand %vm329, %vm457
    %vm848 = vmand %vm330, %vm458
    %vm849 = vmand %vm331, %vm459
    %vm850 = vmand %vm332, %vm460
    %vm851 = vmand %vm333, %vm461
    %vm852 = vmand %vm334, %vm462
    %vm853 = vmand %vm335, %vm463
    %vm854 = vmand %vm336, %vm464
    %vm855 = vmand %vm337, %vm465
    %vm856 = vmand %vm338, %vm466
    %vm857 = vmand %vm339, %vm467
    %vm858 = vmand %vm340, %vm468
    %vm859 = vmand %vm341, %vm469
    %vm860 = vmand %vm342, %vm470
    %vm861 = vmand %vm343, %vm471
    %vm862 = vmand %vm344, %vm472
    %vm863 = vmand %vm345, %vm473
    %vm864 = vmand %vm346, %vm474
    %vm865 = vmand %vm347, %vm475
    %vm866 = vmand %vm348, %vm476
    %vm867 = vmand %vm349, %vm477
    %vm868 = vmand %vm350, %vm478
    %v869 = vsel %vm805, %v741, 0.0
    %v870 = vsel %vm806, %v742, 0.0
    %v871 = vsel %vm807, %v743, 0.0
    %v872 = vsel %vm808, %v744, 0.0
    %v873 = vsel %vm809, %v745, 0.0
    %v874 = vsel %vm810, %v746, 0.0
    %v875 = vsel %vm811, %v747, 0.0
    %v876 = vsel %vm812, %v748, 0.0
    %v877 = vsel %vm813, %v749, 0.0
    %v878 = vsel %vm814, %v750, 0.0
    %v879 = vsel %vm815, %v751, 0.0
    %v880 = vsel %vm816, %v752, 0.0
    %v881 = vsel %vm817, %v753, 0.0
    %v882 = vsel %vm818, %v754, 0.0
    %v883 = vsel %vm819, %v755, 0.0
    %v884 = vsel %vm820, %v756, 0.0
    %v885 = vsel %vm821, %v757, 0.0
    %v886 = vsel %vm822, %v758, 0.0
    %v887 = vsel %vm823, %v759, 0.0
    %v888 = vsel %vm824, %v760, 0.0
    %v889 = vsel %vm825, %v761, 0.0
    %v890 = vsel %vm826, %v762, 0.0
    %v891 = vsel %vm827, %v763, 0.0
    %v892 = vsel %vm828, %v764, 0.0
    %v893 = vsel %vm829, %v765, 0.0
    %v894 = vsel %vm830, %v766, 0.0
    %v895 = vsel %vm831, %v767, 0.0
    %v896 = vsel %vm832, %v768, 0.0
    %v897 = vsel %vm833, %v769, 0.0
    %v898 = vsel %vm834, %v770, 0.0
    %v899 = vsel %vm835, %v771, 0.0
    %v900 = vsel %vm836, %v772, 0.0
    %v901 = vsel %vm837, %v773, 0.0
    %v902 = vsel %vm838, %v774, 0.0
    %v903 = vsel %vm839, %v775, 0.0
    %v904 = vsel %vm840, %v776, 0.0
    %v905 = vsel %vm841, %v777, 0.0
    %v906 = vsel %vm842, %v778, 0.0
    %v907 = vsel %vm843, %v779, 0.0
    %v908 = vsel %vm844, %v780, 0.0
    %v909 = vsel %vm845, %v781, 0.0
    %v910 = vsel %vm846, %v782, 0.0
    %v911 = vsel %vm847, %v783, 0.0
    %v912 = vsel %vm848, %v784, 0.0
    %v913 = vsel %vm849, %v785, 0.0
    %v914 = vsel %vm850, %v786, 0.0
    %v915 = vsel %vm851, %v787, 0.0
    %v916 = vsel %vm852, %v788, 0.0
    %v917 = vsel %vm853, %v789, 0.0
    %v918 = vsel %vm854, %v790, 0.0
    %v919 = vsel %vm855, %v791, 0.0
    %v920 = vsel %vm856, %v792, 0.0
    %v921 = vsel %vm857, %v793, 0.0
    %v922 = vsel %vm858, %v794, 0.0
    %v923 = vsel %vm859, %v795, 0.0
    %v924 = vsel %vm860, %v796, 0.0
    %v925 = vsel %vm861, %v797, 0.0
    %v926 = vsel %vm862, %v798, 0.0
    %v927 = vsel %vm863, %v799, 0.0
    %v928 = vsel %vm864, %v800, 0.0
    %v929 = vsel %vm865, %v801, 0.0
    %v930 = vsel %vm866, %v802, 0.0
    %v931 = vsel %vm867, %v803, 0.0
    %v932 = vsel %vm868, %v804, 0.0
    %v933 = vpack.c.bf16 %v870, %v869
    %v934 = vpack.c.bf16 %v872, %v871
    %v935 = vpack.c.bf16 %v874, %v873
    %v936 = vpack.c.bf16 %v876, %v875
    %v937 = vpack.c.bf16 %v878, %v877
    %v938 = vpack.c.bf16 %v880, %v879
    %v939 = vpack.c.bf16 %v882, %v881
    %v940 = vpack.c.bf16 %v884, %v883
    %v941 = vpack.c.bf16 %v886, %v885
    %v942 = vpack.c.bf16 %v888, %v887
    %v943 = vpack.c.bf16 %v890, %v889
    %v944 = vpack.c.bf16 %v892, %v891
    %v945 = vpack.c.bf16 %v894, %v893
    %v946 = vpack.c.bf16 %v896, %v895
    %v947 = vpack.c.bf16 %v898, %v897
    %v948 = vpack.c.bf16 %v900, %v899
    %v949 = vpack.c.bf16 %v902, %v901
    %v950 = vpack.c.bf16 %v904, %v903
    %v951 = vpack.c.bf16 %v906, %v905
    %v952 = vpack.c.bf16 %v908, %v907
    %v953 = vpack.c.bf16 %v910, %v909
    %v954 = vpack.c.bf16 %v912, %v911
    %v955 = vpack.c.bf16 %v914, %v913
    %v956 = vpack.c.bf16 %v916, %v915
    %v957 = vpack.c.bf16 %v918, %v917
    %v958 = vpack.c.bf16 %v920, %v919
    %v959 = vpack.c.bf16 %v922, %v921
    %v960 = vpack.c.bf16 %v924, %v923
    %v961 = vpack.c.bf16 %v926, %v925
    %v962 = vpack.c.bf16 %v928, %v927
    %v963 = vpack.c.bf16 %v930, %v929
    %v964 = vpack.c.bf16 %v932, %v931
    %v965 = vld [vmem:[%s1] sm:$0xf]
    %v966 = vld [vmem:[%s1 + $0x4] sm:$0xf]
    %v967 = vld [vmem:[%s1 + $0x8] sm:$0xf]
    %v968 = vld [vmem:[%s1 + $0xc] sm:$0xf]
    %v969 = vld [vmem:[%s1 + $0x10] sm:$0xf]
    %v970 = vld [vmem:[%s1 + $0x14] sm:$0xf]
    %v971 = vld [vmem:[%s1 + $0x18] sm:$0xf]
    %v972 = vld [vmem:[%s1 + $0x1c] sm:$0xf]
    %v973 = vld [vmem:[%s1 + $0x20] sm:$0xf]
    %v974 = vld [vmem:[%s1 + $0x24] sm:$0xf]
    %v975 = vld [vmem:[%s1 + $0x28] sm:$0xf]
    %v976 = vld [vmem:[%s1 + $0x2c] sm:$0xf]
    %v977 = vld [vmem:[%s1 + $0x30] sm:$0xf]
    %v978 = vld [vmem:[%s1 + $0x34] sm:$0xf]
    %v979 = vld [vmem:[%s1 + $0x38] sm:$0xf]
    %v980 = vld [vmem:[%s1 + $0x3c] sm:$0xf]
    %v981 = vld [vmem:[#allocation2 + $0x8] sm:$0xff]
    %v982 = vld [vmem:[#allocation2 + $0x10] sm:$0xff]
    %v983 = vld [vmem:[#allocation2 + $0x18] sm:$0xff]
    %v984 = vld [vmem:[#allocation2 + $0x20] sm:$0xff]
    %v985 = vld [vmem:[#allocation2 + $0x28] sm:$0xff]
    %v986 = vld [vmem:[#allocation2 + $0x30] sm:$0xff]
    %v987 = vld [vmem:[#allocation2 + $0x38] sm:$0xff]
    %v988 = vld [vmem:[#allocation2 + $0x40] sm:$0xff]
    %v989 = vld [vmem:[#allocation2 + $0x48] sm:$0xff]
    %v990 = vld [vmem:[#allocation2 + $0x50] sm:$0xff]
    %v991 = vld [vmem:[#allocation2 + $0x58] sm:$0xff]
    %v992 = vld [vmem:[#allocation2 + $0x60] sm:$0xff]
    %v993 = vld [vmem:[#allocation2 + $0x68] sm:$0xff]
    %v994 = vld [vmem:[#allocation2 + $0x70] sm:$0xff]
    %v995 = vld [vmem:[#allocation2 + $0x78] sm:$0xff]
    %v996 = vld [vmem:[#allocation2 + $0x80] sm:$0xff]
    %v997 = vld [vmem:[#allocation2 + $0x88] sm:$0xff]
    %v998 = vld [vmem:[#allocation2 + $0x90] sm:$0xff]
    %v999 = vld [vmem:[#allocation2 + $0x98] sm:$0xff]
    %v1000 = vld [vmem:[#allocation2 + $0xa0] sm:$0xff]
    %v1001 = vld [vmem:[#allocation2 + $0xa8] sm:$0xff]
    %v1002 = vld [vmem:[#allocation2 + $0xb0] sm:$0xff]
    %v1003 = vld [vmem:[#allocation2 + $0xb8] sm:$0xff]
    %v1004 = vld [vmem:[#allocation2 + $0xc0] sm:$0xff]
    %v1005 = vld [vmem:[#allocation2 + $0xc8] sm:$0xff]
    %v1006 = vld [vmem:[#allocation2 + $0xd0] sm:$0xff]
    %v1007 = vld [vmem:[#allocation2 + $0xd8] sm:$0xff]
    %v1008 = vld [vmem:[#allocation2 + $0xe0] sm:$0xff]
    %v1009 = vld [vmem:[#allocation2 + $0xe8] sm:$0xff]
    %v1010 = vld [vmem:[#allocation2 + $0xf0] sm:$0xff]
    %v1011 = vld [vmem:[#allocation2 + $0xf8] sm:$0xff]
    %v1012 = vld [vmem:[#allocation2 + $0x100] sm:$0xff]
    %v1013 = vld [vmem:[#allocation2 + $0x108] sm:$0xff]
    %v1014 = vld [vmem:[#allocation2 + $0x110] sm:$0xff]
    %v1015 = vld [vmem:[#allocation2 + $0x118] sm:$0xff]
    %v1016 = vld [vmem:[#allocation2 + $0x120] sm:$0xff]
    %v1017 = vld [vmem:[#allocation2 + $0x128] sm:$0xff]
    %v1018 = vld [vmem:[#allocation2 + $0x130] sm:$0xff]
    %v1019 = vld [vmem:[#allocation2 + $0x138] sm:$0xff]
    %v1020 = vld [vmem:[#allocation2 + $0x140] sm:$0xff]
    %v1021 = vld [vmem:[#allocation2 + $0x148] sm:$0xff]
    %v1022 = vld [vmem:[#allocation2 + $0x150] sm:$0xff]
    %v1023 = vld [vmem:[#allocation2 + $0x158] sm:$0xff]
    %v1024 = vld [vmem:[#allocation2 + $0x160] sm:$0xff]
    %v1025 = vld [vmem:[#allocation2 + $0x168] sm:$0xff]
    %v1026 = vld [vmem:[#allocation2 + $0x170] sm:$0xff]
    %v1027 = vld [vmem:[#allocation2 + $0x178] sm:$0xff]
    %v1028 = vld [vmem:[#allocation2 + $0x180] sm:$0xff]
    %v1029 = vld [vmem:[#allocation2 + $0x188] sm:$0xff]
    %v1030 = vld [vmem:[#allocation2 + $0x190] sm:$0xff]
    %v1031 = vld [vmem:[#allocation2 + $0x198] sm:$0xff]
    %v1032 = vld [vmem:[#allocation2 + $0x1a0] sm:$0xff]
    %v1033 = vld [vmem:[#allocation2 + $0x1a8] sm:$0xff]
    %v1034 = vld [vmem:[#allocation2 + $0x1b0] sm:$0xff]
    %v1035 = vld [vmem:[#allocation2 + $0x1b8] sm:$0xff]
    %v1036 = vld [vmem:[#allocation2 + $0x1c0] sm:$0xff]
    %v1037 = vld [vmem:[#allocation2 + $0x1c8] sm:$0xff]
    %v1038 = vld [vmem:[#allocation2 + $0x1d0] sm:$0xff]
    %v1039 = vld [vmem:[#allocation2 + $0x1d8] sm:$0xff]
    %v1040 = vld [vmem:[#allocation2 + $0x1e0] sm:$0xff]
    %v1041 = vld [vmem:[#allocation2 + $0x1e8] sm:$0xff]
    %v1042 = vld [vmem:[#allocation2 + $0x1f0] sm:$0xff]
    %v1043 = vld [vmem:[#allocation2 + $0x1f8] sm:$0xff]
    %v1044 = vld [vmem:[#allocation2 + $0x200] sm:$0xff]
    %v1045 = vsel %vm287, %v981, 0.0
    %v1046 = vsel %vm288, %v982, 0.0
    %v1047 = vsel %vm289, %v983, 0.0
    %v1048 = vsel %vm290, %v984, 0.0
    %v1049 = vsel %vm291, %v985, 0.0
    %v1050 = vsel %vm292, %v986, 0.0
    %v1051 = vsel %vm293, %v987, 0.0
    %v1052 = vsel %vm294, %v988, 0.0
    %v1053 = vsel %vm295, %v989, 0.0
    %v1054 = vsel %vm296, %v990, 0.0
    %v1055 = vsel %vm297, %v991, 0.0
    %v1056 = vsel %vm298, %v992, 0.0
    %v1057 = vsel %vm299, %v993, 0.0
    %v1058 = vsel %vm300, %v994, 0.0
    %v1059 = vsel %vm301, %v995, 0.0
    %v1060 = vsel %vm302, %v996, 0.0
    %v1061 = vsel %vm303, %v997, 0.0
    %v1062 = vsel %vm304, %v998, 0.0
    %v1063 = vsel %vm305, %v999, 0.0
    %v1064 = vsel %vm306, %v1000, 0.0
    %v1065 = vsel %vm307, %v1001, 0.0
    %v1066 = vsel %vm308, %v1002, 0.0
    %v1067 = vsel %vm309, %v1003, 0.0
    %v1068 = vsel %vm310, %v1004, 0.0
    %v1069 = vsel %vm311, %v1005, 0.0
    %v1070 = vsel %vm312, %v1006, 0.0
    %v1071 = vsel %vm313, %v1007, 0.0
    %v1072 = vsel %vm314, %v1008, 0.0
    %v1073 = vsel %vm315, %v1009, 0.0
    %v1074 = vsel %vm316, %v1010, 0.0
    %v1075 = vsel %vm317, %v1011, 0.0
    %v1076 = vsel %vm318, %v1012, 0.0
    %v1077 = vsel %vm319, %v1013, 0.0
    %v1078 = vsel %vm320, %v1014, 0.0
    %v1079 = vsel %vm321, %v1015, 0.0
    %v1080 = vsel %vm322, %v1016, 0.0
    %v1081 = vsel %vm323, %v1017, 0.0
    %v1082 = vsel %vm324, %v1018, 0.0
    %v1083 = vsel %vm325, %v1019, 0.0
    %v1084 = vsel %vm326, %v1020, 0.0
    %v1085 = vsel %vm327, %v1021, 0.0
    %v1086 = vsel %vm328, %v1022, 0.0
    %v1087 = vsel %vm329, %v1023, 0.0
    %v1088 = vsel %vm330, %v1024, 0.0
    %v1089 = vsel %vm331, %v1025, 0.0
    %v1090 = vsel %vm332, %v1026, 0.0
    %v1091 = vsel %vm333, %v1027, 0.0
    %v1092 = vsel %vm334, %v1028, 0.0
    %v1093 = vsel %vm335, %v1029, 0.0
    %v1094 = vsel %vm336, %v1030, 0.0
    %v1095 = vsel %vm337, %v1031, 0.0
    %v1096 = vsel %vm338, %v1032, 0.0
    %v1097 = vsel %vm339, %v1033, 0.0
    %v1098 = vsel %vm340, %v1034, 0.0
    %v1099 = vsel %vm341, %v1035, 0.0
    %v1100 = vsel %vm342, %v1036, 0.0
    %v1101 = vsel %vm343, %v1037, 0.0
    %v1102 = vsel %vm344, %v1038, 0.0
    %v1103 = vsel %vm345, %v1039, 0.0
    %v1104 = vsel %vm346, %v1040, 0.0
    %v1105 = vsel %vm347, %v1041, 0.0
    %v1106 = vsel %vm348, %v1042, 0.0
    %v1107 = vsel %vm349, %v1043, 0.0
    %v1108 = vsel %vm350, %v1044, 0.0
    %v1109 = vpack.c.bf16 %v1046, %v1045
    %v1110 = vpack.c.bf16 %v1048, %v1047
    %v1111 = vpack.c.bf16 %v1050, %v1049
    %v1112 = vpack.c.bf16 %v1052, %v1051
    %v1113 = vpack.c.bf16 %v1054, %v1053
    %v1114 = vpack.c.bf16 %v1056, %v1055
    %v1115 = vpack.c.bf16 %v1058, %v1057
    %v1116 = vpack.c.bf16 %v1060, %v1059
    %v1117 = vpack.c.bf16 %v1062, %v1061
    %v1118 = vpack.c.bf16 %v1064, %v1063
    %v1119 = vpack.c.bf16 %v1066, %v1065
    %v1120 = vpack.c.bf16 %v1068, %v1067
    %v1121 = vpack.c.bf16 %v1070, %v1069
    %v1122 = vpack.c.bf16 %v1072, %v1071
    %v1123 = vpack.c.bf16 %v1074, %v1073
    %v1124 = vpack.c.bf16 %v1076, %v1075
    %v1125 = vpack.c.bf16 %v1078, %v1077
    %v1126 = vpack.c.bf16 %v1080, %v1079
    %v1127 = vpack.c.bf16 %v1082, %v1081
    %v1128 = vpack.c.bf16 %v1084, %v1083
    %v1129 = vpack.c.bf16 %v1086, %v1085
    %v1130 = vpack.c.bf16 %v1088, %v1087
    %v1131 = vpack.c.bf16 %v1090, %v1089
    %v1132 = vpack.c.bf16 %v1092, %v1091
    %v1133 = vpack.c.bf16 %v1094, %v1093
    %v1134 = vpack.c.bf16 %v1096, %v1095
    %v1135 = vpack.c.bf16 %v1098, %v1097
    %v1136 = vpack.c.bf16 %v1100, %v1099
    %v1137 = vpack.c.bf16 %v1102, %v1101
    %v1138 = vpack.c.bf16 %v1104, %v1103
    %v1139 = vpack.c.bf16 %v1106, %v1105
    %v1140 = vpack.c.bf16 %v1108, %v1107
    %s1141 = scalar_lea.vmem %s1, 64
    %v1142 = vld [vmem:[%s1141] sm:$0xf]
    %v1143 = vld [vmem:[%s1141 + $0x4] sm:$0xf]
    %v1144 = vld [vmem:[%s1141 + $0x8] sm:$0xf]
    %v1145 = vld [vmem:[%s1141 + $0xc] sm:$0xf]
    %v1146 = vld [vmem:[%s1141 + $0x10] sm:$0xf]
    %v1147 = vld [vmem:[%s1141 + $0x14] sm:$0xf]
    %v1148 = vld [vmem:[%s1141 + $0x18] sm:$0xf]
    %v1149 = vld [vmem:[%s1141 + $0x1c] sm:$0xf]
    %v1150 = vld [vmem:[%s1141 + $0x20] sm:$0xf]
    %v1151 = vld [vmem:[%s1141 + $0x24] sm:$0xf]
    %v1152 = vld [vmem:[%s1141 + $0x28] sm:$0xf]
    %v1153 = vld [vmem:[%s1141 + $0x2c] sm:$0xf]
    %v1154 = vld [vmem:[%s1141 + $0x30] sm:$0xf]
    %v1155 = vld [vmem:[%s1141 + $0x34] sm:$0xf]
    %v1156 = vld [vmem:[%s1141 + $0x38] sm:$0xf]
    %v1157 = vld [vmem:[%s1141 + $0x3c] sm:$0xf]
    %v1174 = vunpack.c.l.b16 %v1142
    %v1175 = vunpack.c.l.b16 %v1143
    %v1176 = vunpack.c.l.b16 %v1144
    %v1177 = vunpack.c.l.b16 %v1145
    %v1178 = vunpack.c.l.b16 %v1146
    %v1179 = vunpack.c.l.b16 %v1147
    %v1180 = vunpack.c.l.b16 %v1148
    %v1181 = vunpack.c.l.b16 %v1149
    %v1182 = vunpack.c.l.b16 %v1150
    %v1183 = vunpack.c.l.b16 %v1151
    %v1184 = vunpack.c.l.b16 %v1152
    %v1185 = vunpack.c.l.b16 %v1153
    %v1186 = vunpack.c.l.b16 %v1154
    %v1187 = vunpack.c.l.b16 %v1155
    %v1188 = vunpack.c.l.b16 %v1156
    %v1189 = vunpack.c.l.b16 %v1157
    %v1190 = vpack.c.b16 %v1175, %v1174
    %v1191 = vpack.c.b16 %v1177, %v1176
    %v1192 = vpack.c.b16 %v1179, %v1178
    %v1193 = vpack.c.b16 %v1181, %v1180
    %v1194 = vpack.c.b16 %v1183, %v1182
    %v1195 = vpack.c.b16 %v1185, %v1184
    %v1196 = vpack.c.b16 %v1187, %v1186
    %v1197 = vpack.c.b16 %v1189, %v1188
    %1206 = vmatprep.subr.bf16.mxu0 0
    %1207 = vmatpush1.bf16.msra.mxu0 %v1197
    %1208 = vmatprep.subr.bf16.mxu0 0
    %1209 = vmatpush1.bf16.msra.mxu0 %v1196
    %1210 = vmatprep.subr.bf16.mxu0 0
    %1211 = vmatpush1.bf16.msra.mxu0 %v1195
    %1212 = vmatprep.subr.bf16.mxu0 0
    %1213 = vmatpush1.bf16.msra.mxu0 %v1194
    %1214 = vmatprep.subr.bf16.mxu0 0
    %1215 = vmatpush1.bf16.msra.mxu0 %v1193
    %1216 = vmatprep.subr.bf16.mxu0 0
    %1217 = vmatpush1.bf16.msra.mxu0 %v1192
    %1218 = vmatprep.subr.bf16.mxu0 0
    %1219 = vmatpush1.bf16.msra.mxu0 %v1191
    %1220 = vmatprep.subr.bf16.mxu0 0
    %1221 = vmatpush1.bf16.msra.mxu0 %v1190
    %1222 = vmatprep.subr.bf16.mxu0 0
    %1223 = vmatpush2.bf16.msra.mxu0 0
    %1224 = vmatprep.subr.bf16.mxu0 0
    %1225 = vmatpush2.bf16.msra.mxu0 0
    %1226 = vmatprep.subr.bf16.mxu0 0
    %1227 = vmatpush2.bf16.msra.mxu0 0
    %1228 = vmatprep.subr.bf16.mxu0 0
    %1229 = vmatpush2.bf16.msra.mxu0 0
    %1230 = vmatprep.subr.bf16.mxu0 0
    %1231 = vmatpush2.bf16.msra.mxu0 0
    %1232 = vmatprep.subr.bf16.mxu0 0
    %1233 = vmatpush2.bf16.msra.mxu0 0
    %1234 = vmatprep.subr.bf16.mxu0 0
    %1235 = vmatpush2.bf16.msra.mxu0 0
    %1236 = vmatprep.subr.bf16.mxu0 0
    %1237 = vmatpush2.bf16.msra.mxu0 0
    %1238 = vmatprep.mubr.bf16.mxu0 0
    %1239 = vmatmul.mubr.bf16.gmra.mxu0 %v1109
    %v1240 = vpop.f32.mrf.mxu0
    %v1241 = vadd.f32 0.0, %v1240
    %v1242 = vpop.f32.mrf.mxu0
    %v1243 = vpop.f32.mrf.mxu0
    %v1244 = vadd.f32 0.0, %v1243
    %v1245 = vpop.f32.mrf.mxu0
    %1246 = vmatprep.mubr.bf16.mxu0 0
    %1247 = vmatmul.mubr.bf16.gmra.mxu0 %v1110
    %v1248 = vpop.f32.mrf.mxu0
    %v1249 = vadd.f32 0.0, %v1248
    %v1250 = vpop.f32.mrf.mxu0
    %v1251 = vpop.f32.mrf.mxu0
    %v1252 = vadd.f32 0.0, %v1251
    %v1253 = vpop.f32.mrf.mxu0
    %1254 = vmatprep.mubr.bf16.mxu0 0
    %1255 = vmatmul.mubr.bf16.gmra.mxu0 %v1111
    %v1256 = vpop.f32.mrf.mxu0
    %v1257 = vadd.f32 0.0, %v1256
    %v1258 = vpop.f32.mrf.mxu0
    %v1259 = vpop.f32.mrf.mxu0
    %v1260 = vadd.f32 0.0, %v1259
    %v1261 = vpop.f32.mrf.mxu0
    %1262 = vmatprep.mubr.bf16.mxu0 0
    %1263 = vmatmul.mubr.bf16.gmra.mxu0 %v1112
    %v1264 = vpop.f32.mrf.mxu0
    %v1265 = vadd.f32 0.0, %v1264
    %v1266 = vpop.f32.mrf.mxu0
    %v1267 = vpop.f32.mrf.mxu0
    %v1268 = vadd.f32 0.0, %v1267
    %v1269 = vpop.f32.mrf.mxu0
    %1270 = vmatprep.mubr.bf16.mxu0 0
    %1271 = vmatmul.mubr.bf16.gmra.mxu0 %v1113
    %v1272 = vpop.f32.mrf.mxu0
    %v1273 = vadd.f32 0.0, %v1272
    %v1274 = vpop.f32.mrf.mxu0
    %v1275 = vpop.f32.mrf.mxu0
    %v1276 = vadd.f32 0.0, %v1275
    %v1277 = vpop.f32.mrf.mxu0
    %1278 = vmatprep.mubr.bf16.mxu0 0
    %1279 = vmatmul.mubr.bf16.gmra.mxu0 %v1114
    %v1280 = vpop.f32.mrf.mxu0
    %v1281 = vadd.f32 0.0, %v1280
    %v1282 = vpop.f32.mrf.mxu0
    %v1283 = vpop.f32.mrf.mxu0
    %v1284 = vadd.f32 0.0, %v1283
    %v1285 = vpop.f32.mrf.mxu0
    %1286 = vmatprep.mubr.bf16.mxu0 0
    %1287 = vmatmul.mubr.bf16.gmra.mxu0 %v1115
    %v1288 = vpop.f32.mrf.mxu0
    %v1289 = vadd.f32 0.0, %v1288
    %v1290 = vpop.f32.mrf.mxu0
    %v1291 = vpop.f32.mrf.mxu0
    %v1292 = vadd.f32 0.0, %v1291
    %v1293 = vpop.f32.mrf.mxu0
    %1294 = vmatprep.mubr.bf16.mxu0 0
    %1295 = vmatmul.mubr.bf16.gmra.mxu0 %v1116
    %v1296 = vpop.f32.mrf.mxu0
    %v1297 = vadd.f32 0.0, %v1296
    %v1298 = vpop.f32.mrf.mxu0
    %v1299 = vpop.f32.mrf.mxu0
    %v1300 = vadd.f32 0.0, %v1299
    %v1301 = vpop.f32.mrf.mxu0
    %1302 = vmatprep.mubr.bf16.mxu0 0
    %1303 = vmatmul.mubr.bf16.gmra.mxu0 %v1117
    %v1304 = vpop.f32.mrf.mxu0
    %v1305 = vadd.f32 0.0, %v1304
    %v1306 = vpop.f32.mrf.mxu0
    %v1307 = vpop.f32.mrf.mxu0
    %v1308 = vadd.f32 0.0, %v1307
    %v1309 = vpop.f32.mrf.mxu0
    %1310 = vmatprep.mubr.bf16.mxu0 0
    %1311 = vmatmul.mubr.bf16.gmra.mxu0 %v1118
    %v1312 = vpop.f32.mrf.mxu0
    %v1313 = vadd.f32 0.0, %v1312
    %v1314 = vpop.f32.mrf.mxu0
    %v1315 = vpop.f32.mrf.mxu0
    %v1316 = vadd.f32 0.0, %v1315
    %v1317 = vpop.f32.mrf.mxu0
    %1318 = vmatprep.mubr.bf16.mxu0 0
    %1319 = vmatmul.mubr.bf16.gmra.mxu0 %v1119
    %v1320 = vpop.f32.mrf.mxu0
    %v1321 = vadd.f32 0.0, %v1320
    %v1322 = vpop.f32.mrf.mxu0
    %v1323 = vpop.f32.mrf.mxu0
    %v1324 = vadd.f32 0.0, %v1323
    %v1325 = vpop.f32.mrf.mxu0
    %1326 = vmatprep.mubr.bf16.mxu0 0
    %1327 = vmatmul.mubr.bf16.gmra.mxu0 %v1120
    %v1328 = vpop.f32.mrf.mxu0
    %v1329 = vadd.f32 0.0, %v1328
    %v1330 = vpop.f32.mrf.mxu0
    %v1331 = vpop.f32.mrf.mxu0
    %v1332 = vadd.f32 0.0, %v1331
    %v1333 = vpop.f32.mrf.mxu0
    %1334 = vmatprep.mubr.bf16.mxu0 0
    %1335 = vmatmul.mubr.bf16.gmra.mxu0 %v1121
    %v1336 = vpop.f32.mrf.mxu0
    %v1337 = vadd.f32 0.0, %v1336
    %v1338 = vpop.f32.mrf.mxu0
    %v1339 = vpop.f32.mrf.mxu0
    %v1340 = vadd.f32 0.0, %v1339
    %v1341 = vpop.f32.mrf.mxu0
    %1342 = vmatprep.mubr.bf16.mxu0 0
    %1343 = vmatmul.mubr.bf16.gmra.mxu0 %v1122
    %v1344 = vpop.f32.mrf.mxu0
    %v1345 = vadd.f32 0.0, %v1344
    %v1346 = vpop.f32.mrf.mxu0
    %v1347 = vpop.f32.mrf.mxu0
    %v1348 = vadd.f32 0.0, %v1347
    %v1349 = vpop.f32.mrf.mxu0
    %1350 = vmatprep.mubr.bf16.mxu0 0
    %1351 = vmatmul.mubr.bf16.gmra.mxu0 %v1123
    %v1352 = vpop.f32.mrf.mxu0
    %v1353 = vadd.f32 0.0, %v1352
    %v1354 = vpop.f32.mrf.mxu0
    %v1355 = vpop.f32.mrf.mxu0
    %v1356 = vadd.f32 0.0, %v1355
    %v1357 = vpop.f32.mrf.mxu0
    %1358 = vmatprep.mubr.bf16.mxu0 0
    %1359 = vmatmul.mubr.bf16.gmra.mxu0 %v1124
    %v1360 = vpop.f32.mrf.mxu0
    %v1361 = vadd.f32 0.0, %v1360
    %v1362 = vpop.f32.mrf.mxu0
    %v1363 = vpop.f32.mrf.mxu0
    %v1364 = vadd.f32 0.0, %v1363
    %v1365 = vpop.f32.mrf.mxu0
    %1366 = vmatprep.mubr.bf16.mxu0 0
    %1367 = vmatmul.mubr.bf16.gmra.mxu0 %v1125
    %v1368 = vpop.f32.mrf.mxu0
    %v1369 = vadd.f32 0.0, %v1368
    %v1370 = vpop.f32.mrf.mxu0
    %v1371 = vpop.f32.mrf.mxu0
    %v1372 = vadd.f32 0.0, %v1371
    %v1373 = vpop.f32.mrf.mxu0
    %1374 = vmatprep.mubr.bf16.mxu0 0
    %1375 = vmatmul.mubr.bf16.gmra.mxu0 %v1126
    %v1376 = vpop.f32.mrf.mxu0
    %v1377 = vadd.f32 0.0, %v1376
    %v1378 = vpop.f32.mrf.mxu0
    %v1379 = vpop.f32.mrf.mxu0
    %v1380 = vadd.f32 0.0, %v1379
    %v1381 = vpop.f32.mrf.mxu0
    %1382 = vmatprep.mubr.bf16.mxu0 0
    %1383 = vmatmul.mubr.bf16.gmra.mxu0 %v1127
    %v1384 = vpop.f32.mrf.mxu0
    %v1385 = vadd.f32 0.0, %v1384
    %v1386 = vpop.f32.mrf.mxu0
    %v1387 = vpop.f32.mrf.mxu0
    %v1388 = vadd.f32 0.0, %v1387
    %v1389 = vpop.f32.mrf.mxu0
    %1390 = vmatprep.mubr.bf16.mxu0 0
    %1391 = vmatmul.mubr.bf16.gmra.mxu0 %v1128
    %v1392 = vpop.f32.mrf.mxu0
    %v1393 = vadd.f32 0.0, %v1392
    %v1394 = vpop.f32.mrf.mxu0
    %v1395 = vpop.f32.mrf.mxu0
    %v1396 = vadd.f32 0.0, %v1395
    %v1397 = vpop.f32.mrf.mxu0
    %1398 = vmatprep.mubr.bf16.mxu0 0
    %1399 = vmatmul.mubr.bf16.gmra.mxu0 %v1129
    %v1400 = vpop.f32.mrf.mxu0
    %v1401 = vadd.f32 0.0, %v1400
    %v1402 = vpop.f32.mrf.mxu0
    %v1403 = vpop.f32.mrf.mxu0
    %v1404 = vadd.f32 0.0, %v1403
    %v1405 = vpop.f32.mrf.mxu0
    %1406 = vmatprep.mubr.bf16.mxu0 0
    %1407 = vmatmul.mubr.bf16.gmra.mxu0 %v1130
    %v1408 = vpop.f32.mrf.mxu0
    %v1409 = vadd.f32 0.0, %v1408
    %v1410 = vpop.f32.mrf.mxu0
    %v1411 = vpop.f32.mrf.mxu0
    %v1412 = vadd.f32 0.0, %v1411
    %v1413 = vpop.f32.mrf.mxu0
    %1414 = vmatprep.mubr.bf16.mxu0 0
    %1415 = vmatmul.mubr.bf16.gmra.mxu0 %v1131
    %v1416 = vpop.f32.mrf.mxu0
    %v1417 = vadd.f32 0.0, %v1416
    %v1418 = vpop.f32.mrf.mxu0
    %v1419 = vpop.f32.mrf.mxu0
    %v1420 = vadd.f32 0.0, %v1419
    %v1421 = vpop.f32.mrf.mxu0
    %1422 = vmatprep.mubr.bf16.mxu0 0
    %1423 = vmatmul.mubr.bf16.gmra.mxu0 %v1132
    %v1424 = vpop.f32.mrf.mxu0
    %v1425 = vadd.f32 0.0, %v1424
    %v1426 = vpop.f32.mrf.mxu0
    %v1427 = vpop.f32.mrf.mxu0
    %v1428 = vadd.f32 0.0, %v1427
    %v1429 = vpop.f32.mrf.mxu0
    %1430 = vmatprep.mubr.bf16.mxu0 0
    %1431 = vmatmul.mubr.bf16.gmra.mxu0 %v1133
    %v1432 = vpop.f32.mrf.mxu0
    %v1433 = vadd.f32 0.0, %v1432
    %v1434 = vpop.f32.mrf.mxu0
    %v1435 = vpop.f32.mrf.mxu0
    %v1436 = vadd.f32 0.0, %v1435
    %v1437 = vpop.f32.mrf.mxu0
    %1438 = vmatprep.mubr.bf16.mxu0 0
    %1439 = vmatmul.mubr.bf16.gmra.mxu0 %v1134
    %v1440 = vpop.f32.mrf.mxu0
    %v1441 = vadd.f32 0.0, %v1440
    %v1442 = vpop.f32.mrf.mxu0
    %v1443 = vpop.f32.mrf.mxu0
    %v1444 = vadd.f32 0.0, %v1443
    %v1445 = vpop.f32.mrf.mxu0
    %1446 = vmatprep.mubr.bf16.mxu0 0
    %1447 = vmatmul.mubr.bf16.gmra.mxu0 %v1135
    %v1448 = vpop.f32.mrf.mxu0
    %v1449 = vadd.f32 0.0, %v1448
    %v1450 = vpop.f32.mrf.mxu0
    %v1451 = vpop.f32.mrf.mxu0
    %v1452 = vadd.f32 0.0, %v1451
    %v1453 = vpop.f32.mrf.mxu0
    %1454 = vmatprep.mubr.bf16.mxu0 0
    %1455 = vmatmul.mubr.bf16.gmra.mxu0 %v1136
    %v1456 = vpop.f32.mrf.mxu0
    %v1457 = vadd.f32 0.0, %v1456
    %v1458 = vpop.f32.mrf.mxu0
    %v1459 = vpop.f32.mrf.mxu0
    %v1460 = vadd.f32 0.0, %v1459
    %v1461 = vpop.f32.mrf.mxu0
    %1462 = vmatprep.mubr.bf16.mxu0 0
    %1463 = vmatmul.mubr.bf16.gmra.mxu0 %v1137
    %v1464 = vpop.f32.mrf.mxu0
    %v1465 = vadd.f32 0.0, %v1464
    %v1466 = vpop.f32.mrf.mxu0
    %v1467 = vpop.f32.mrf.mxu0
    %v1468 = vadd.f32 0.0, %v1467
    %v1469 = vpop.f32.mrf.mxu0
    %1470 = vmatprep.mubr.bf16.mxu0 0
    %1471 = vmatmul.mubr.bf16.gmra.mxu0 %v1138
    %v1472 = vpop.f32.mrf.mxu0
    %v1473 = vadd.f32 0.0, %v1472
    %v1474 = vpop.f32.mrf.mxu0
    %v1475 = vpop.f32.mrf.mxu0
    %v1476 = vadd.f32 0.0, %v1475
    %v1477 = vpop.f32.mrf.mxu0
    %1478 = vmatprep.mubr.bf16.mxu0 0
    %1479 = vmatmul.mubr.bf16.gmra.mxu0 %v1139
    %v1480 = vpop.f32.mrf.mxu0
    %v1481 = vadd.f32 0.0, %v1480
    %v1482 = vpop.f32.mrf.mxu0
    %v1483 = vpop.f32.mrf.mxu0
    %v1484 = vadd.f32 0.0, %v1483
    %v1485 = vpop.f32.mrf.mxu0
    %1486 = vmatprep.mubr.bf16.mxu0 0
    %1487 = vmatmul.mubr.bf16.gmra.mxu0 %v1140
    %v1488 = vpop.f32.mrf.mxu0
    %v1489 = vadd.f32 0.0, %v1488
    %v1490 = vpop.f32.mrf.mxu0
    %v1491 = vpop.f32.mrf.mxu0
    %v1492 = vadd.f32 0.0, %v1491
    %v1493 = vpop.f32.mrf.mxu0
    %1494 = vdwg.mxu0
    %v1511 = vunpack.c.l.b16 %v965
    %v1512 = vunpack.c.l.b16 %v966
    %v1513 = vunpack.c.l.b16 %v967
    %v1514 = vunpack.c.l.b16 %v968
    %v1515 = vunpack.c.l.b16 %v969
    %v1516 = vunpack.c.l.b16 %v970
    %v1517 = vunpack.c.l.b16 %v971
    %v1518 = vunpack.c.l.b16 %v972
    %v1519 = vunpack.c.l.b16 %v973
    %v1520 = vunpack.c.l.b16 %v974
    %v1521 = vunpack.c.l.b16 %v975
    %v1522 = vunpack.c.l.b16 %v976
    %v1523 = vunpack.c.l.b16 %v977
    %v1524 = vunpack.c.l.b16 %v978
    %v1525 = vunpack.c.l.b16 %v979
    %v1526 = vunpack.c.l.b16 %v980
    %v1527 = vpack.c.b16 %v1512, %v1511
    %v1528 = vpack.c.b16 %v1514, %v1513
    %v1529 = vpack.c.b16 %v1516, %v1515
    %v1530 = vpack.c.b16 %v1518, %v1517
    %v1531 = vpack.c.b16 %v1520, %v1519
    %v1532 = vpack.c.b16 %v1522, %v1521
    %v1533 = vpack.c.b16 %v1524, %v1523
    %v1534 = vpack.c.b16 %v1526, %v1525
    %1543 = vmatprep.subr.bf16.mxu0 0
    %1544 = vmatpush1.bf16.msra.mxu0 %v1534
    %1545 = vmatprep.subr.bf16.mxu0 0
    %1546 = vmatpush1.bf16.msra.mxu0 %v1533
    %1547 = vmatprep.subr.bf16.mxu0 0
    %1548 = vmatpush1.bf16.msra.mxu0 %v1532
    %1549 = vmatprep.subr.bf16.mxu0 0
    %1550 = vmatpush1.bf16.msra.mxu0 %v1531
    %1551 = vmatprep.subr.bf16.mxu0 0
    %1552 = vmatpush1.bf16.msra.mxu0 %v1530
    %1553 = vmatprep.subr.bf16.mxu0 0
    %1554 = vmatpush1.bf16.msra.mxu0 %v1529
    %1555 = vmatprep.subr.bf16.mxu0 0
    %1556 = vmatpush1.bf16.msra.mxu0 %v1528
    %1557 = vmatprep.subr.bf16.mxu0 0
    %1558 = vmatpush1.bf16.msra.mxu0 %v1527
    %1559 = vmatprep.subr.bf16.mxu0 0
    %1560 = vmatpush2.bf16.msra.mxu0 0
    %1561 = vmatprep.subr.bf16.mxu0 0
    %1562 = vmatpush2.bf16.msra.mxu0 0
    %1563 = vmatprep.subr.bf16.mxu0 0
    %1564 = vmatpush2.bf16.msra.mxu0 0
    %1565 = vmatprep.subr.bf16.mxu0 0
    %1566 = vmatpush2.bf16.msra.mxu0 0
    %1567 = vmatprep.subr.bf16.mxu0 0
    %1568 = vmatpush2.bf16.msra.mxu0 0
    %1569 = vmatprep.subr.bf16.mxu0 0
    %1570 = vmatpush2.bf16.msra.mxu0 0
    %1571 = vmatprep.subr.bf16.mxu0 0
    %1572 = vmatpush2.bf16.msra.mxu0 0
    %1573 = vmatprep.subr.bf16.mxu0 0
    %1574 = vmatpush2.bf16.msra.mxu0 0
    %1575 = vmatprep.mubr.bf16.mxu0 0
    %1576 = vmatmul.mubr.bf16.gmra.mxu0 %v933
    %v1577 = vpop.f32.mrf.mxu0
    %v1578 = vadd.f32 %v1241, %v1577
    %v1579 = vpop.f32.mrf.mxu0
    %v1580 = vpop.f32.mrf.mxu0
    %v1581 = vadd.f32 %v1244, %v1580
    %v1582 = vpop.f32.mrf.mxu0
    %1583 = vmatprep.mubr.bf16.mxu0 0
    %1584 = vmatmul.mubr.bf16.gmra.mxu0 %v934
    %v1585 = vpop.f32.mrf.mxu0
    %v1586 = vadd.f32 %v1249, %v1585
    %v1587 = vpop.f32.mrf.mxu0
    %v1588 = vpop.f32.mrf.mxu0
    %v1589 = vadd.f32 %v1252, %v1588
    %v1590 = vpop.f32.mrf.mxu0
    %1591 = vmatprep.mubr.bf16.mxu0 0
    %1592 = vmatmul.mubr.bf16.gmra.mxu0 %v935
    %v1593 = vpop.f32.mrf.mxu0
    %v1594 = vadd.f32 %v1257, %v1593
    %v1595 = vpop.f32.mrf.mxu0
    %v1596 = vpop.f32.mrf.mxu0
    %v1597 = vadd.f32 %v1260, %v1596
    %v1598 = vpop.f32.mrf.mxu0
    %1599 = vmatprep.mubr.bf16.mxu0 0
    %1600 = vmatmul.mubr.bf16.gmra.mxu0 %v936
    %v1601 = vpop.f32.mrf.mxu0
    %v1602 = vadd.f32 %v1265, %v1601
    %v1603 = vpop.f32.mrf.mxu0
    %v1604 = vpop.f32.mrf.mxu0
    %v1605 = vadd.f32 %v1268, %v1604
    %v1606 = vpop.f32.mrf.mxu0
    %1607 = vmatprep.mubr.bf16.mxu0 0
    %1608 = vmatmul.mubr.bf16.gmra.mxu0 %v937
    %v1609 = vpop.f32.mrf.mxu0
    %v1610 = vadd.f32 %v1273, %v1609
    %v1611 = vpop.f32.mrf.mxu0
    %v1612 = vpop.f32.mrf.mxu0
    %v1613 = vadd.f32 %v1276, %v1612
    %v1614 = vpop.f32.mrf.mxu0
    %1615 = vmatprep.mubr.bf16.mxu0 0
    %1616 = vmatmul.mubr.bf16.gmra.mxu0 %v938
    %v1617 = vpop.f32.mrf.mxu0
    %v1618 = vadd.f32 %v1281, %v1617
    %v1619 = vpop.f32.mrf.mxu0
    %v1620 = vpop.f32.mrf.mxu0
    %v1621 = vadd.f32 %v1284, %v1620
    %v1622 = vpop.f32.mrf.mxu0
    %1623 = vmatprep.mubr.bf16.mxu0 0
    %1624 = vmatmul.mubr.bf16.gmra.mxu0 %v939
    %v1625 = vpop.f32.mrf.mxu0
    %v1626 = vadd.f32 %v1289, %v1625
    %v1627 = vpop.f32.mrf.mxu0
    %v1628 = vpop.f32.mrf.mxu0
    %v1629 = vadd.f32 %v1292, %v1628
    %v1630 = vpop.f32.mrf.mxu0
    %1631 = vmatprep.mubr.bf16.mxu0 0
    %1632 = vmatmul.mubr.bf16.gmra.mxu0 %v940
    %v1633 = vpop.f32.mrf.mxu0
    %v1634 = vadd.f32 %v1297, %v1633
    %v1635 = vpop.f32.mrf.mxu0
    %v1636 = vpop.f32.mrf.mxu0
    %v1637 = vadd.f32 %v1300, %v1636
    %v1638 = vpop.f32.mrf.mxu0
    %1639 = vmatprep.mubr.bf16.mxu0 0
    %1640 = vmatmul.mubr.bf16.gmra.mxu0 %v941
    %v1641 = vpop.f32.mrf.mxu0
    %v1642 = vadd.f32 %v1305, %v1641
    %v1643 = vpop.f32.mrf.mxu0
    %v1644 = vpop.f32.mrf.mxu0
    %v1645 = vadd.f32 %v1308, %v1644
    %v1646 = vpop.f32.mrf.mxu0
    %1647 = vmatprep.mubr.bf16.mxu0 0
    %1648 = vmatmul.mubr.bf16.gmra.mxu0 %v942
    %v1649 = vpop.f32.mrf.mxu0
    %v1650 = vadd.f32 %v1313, %v1649
    %v1651 = vpop.f32.mrf.mxu0
    %v1652 = vpop.f32.mrf.mxu0
    %v1653 = vadd.f32 %v1316, %v1652
    %v1654 = vpop.f32.mrf.mxu0
    %1655 = vmatprep.mubr.bf16.mxu0 0
    %1656 = vmatmul.mubr.bf16.gmra.mxu0 %v943
    %v1657 = vpop.f32.mrf.mxu0
    %v1658 = vadd.f32 %v1321, %v1657
    %v1659 = vpop.f32.mrf.mxu0
    %v1660 = vpop.f32.mrf.mxu0
    %v1661 = vadd.f32 %v1324, %v1660
    %v1662 = vpop.f32.mrf.mxu0
    %1663 = vmatprep.mubr.bf16.mxu0 0
    %1664 = vmatmul.mubr.bf16.gmra.mxu0 %v944
    %v1665 = vpop.f32.mrf.mxu0
    %v1666 = vadd.f32 %v1329, %v1665
    %v1667 = vpop.f32.mrf.mxu0
    %v1668 = vpop.f32.mrf.mxu0
    %v1669 = vadd.f32 %v1332, %v1668
    %v1670 = vpop.f32.mrf.mxu0
    %1671 = vmatprep.mubr.bf16.mxu0 0
    %1672 = vmatmul.mubr.bf16.gmra.mxu0 %v945
    %v1673 = vpop.f32.mrf.mxu0
    %v1674 = vadd.f32 %v1337, %v1673
    %v1675 = vpop.f32.mrf.mxu0
    %v1676 = vpop.f32.mrf.mxu0
    %v1677 = vadd.f32 %v1340, %v1676
    %v1678 = vpop.f32.mrf.mxu0
    %1679 = vmatprep.mubr.bf16.mxu0 0
    %1680 = vmatmul.mubr.bf16.gmra.mxu0 %v946
    %v1681 = vpop.f32.mrf.mxu0
    %v1682 = vadd.f32 %v1345, %v1681
    %v1683 = vpop.f32.mrf.mxu0
    %v1684 = vpop.f32.mrf.mxu0
    %v1685 = vadd.f32 %v1348, %v1684
    %v1686 = vpop.f32.mrf.mxu0
    %1687 = vmatprep.mubr.bf16.mxu0 0
    %1688 = vmatmul.mubr.bf16.gmra.mxu0 %v947
    %v1689 = vpop.f32.mrf.mxu0
    %v1690 = vadd.f32 %v1353, %v1689
    %v1691 = vpop.f32.mrf.mxu0
    %v1692 = vpop.f32.mrf.mxu0
    %v1693 = vadd.f32 %v1356, %v1692
    %v1694 = vpop.f32.mrf.mxu0
    %1695 = vmatprep.mubr.bf16.mxu0 0
    %1696 = vmatmul.mubr.bf16.gmra.mxu0 %v948
    %v1697 = vpop.f32.mrf.mxu0
    %v1698 = vadd.f32 %v1361, %v1697
    %v1699 = vpop.f32.mrf.mxu0
    %v1700 = vpop.f32.mrf.mxu0
    %v1701 = vadd.f32 %v1364, %v1700
    %v1702 = vpop.f32.mrf.mxu0
    %1703 = vmatprep.mubr.bf16.mxu0 0
    %1704 = vmatmul.mubr.bf16.gmra.mxu0 %v949
    %v1705 = vpop.f32.mrf.mxu0
    %v1706 = vadd.f32 %v1369, %v1705
    %v1707 = vpop.f32.mrf.mxu0
    %v1708 = vpop.f32.mrf.mxu0
    %v1709 = vadd.f32 %v1372, %v1708
    %v1710 = vpop.f32.mrf.mxu0
    %1711 = vmatprep.mubr.bf16.mxu0 0
    %1712 = vmatmul.mubr.bf16.gmra.mxu0 %v950
    %v1713 = vpop.f32.mrf.mxu0
    %v1714 = vadd.f32 %v1377, %v1713
    %v1715 = vpop.f32.mrf.mxu0
    %v1716 = vpop.f32.mrf.mxu0
    %v1717 = vadd.f32 %v1380, %v1716
    %v1718 = vpop.f32.mrf.mxu0
    %1719 = vmatprep.mubr.bf16.mxu0 0
    %1720 = vmatmul.mubr.bf16.gmra.mxu0 %v951
    %v1721 = vpop.f32.mrf.mxu0
    %v1722 = vadd.f32 %v1385, %v1721
    %v1723 = vpop.f32.mrf.mxu0
    %v1724 = vpop.f32.mrf.mxu0
    %v1725 = vadd.f32 %v1388, %v1724
    %v1726 = vpop.f32.mrf.mxu0
    %1727 = vmatprep.mubr.bf16.mxu0 0
    %1728 = vmatmul.mubr.bf16.gmra.mxu0 %v952
    %v1729 = vpop.f32.mrf.mxu0
    %v1730 = vadd.f32 %v1393, %v1729
    %v1731 = vpop.f32.mrf.mxu0
    %v1732 = vpop.f32.mrf.mxu0
    %v1733 = vadd.f32 %v1396, %v1732
    %v1734 = vpop.f32.mrf.mxu0
    %1735 = vmatprep.mubr.bf16.mxu0 0
    %1736 = vmatmul.mubr.bf16.gmra.mxu0 %v953
    %v1737 = vpop.f32.mrf.mxu0
    %v1738 = vadd.f32 %v1401, %v1737
    %v1739 = vpop.f32.mrf.mxu0
    %v1740 = vpop.f32.mrf.mxu0
    %v1741 = vadd.f32 %v1404, %v1740
    %v1742 = vpop.f32.mrf.mxu0
    %1743 = vmatprep.mubr.bf16.mxu0 0
    %1744 = vmatmul.mubr.bf16.gmra.mxu0 %v954
    %v1745 = vpop.f32.mrf.mxu0
    %v1746 = vadd.f32 %v1409, %v1745
    %v1747 = vpop.f32.mrf.mxu0
    %v1748 = vpop.f32.mrf.mxu0
    %v1749 = vadd.f32 %v1412, %v1748
    %v1750 = vpop.f32.mrf.mxu0
    %1751 = vmatprep.mubr.bf16.mxu0 0
    %1752 = vmatmul.mubr.bf16.gmra.mxu0 %v955
    %v1753 = vpop.f32.mrf.mxu0
    %v1754 = vadd.f32 %v1417, %v1753
    %v1755 = vpop.f32.mrf.mxu0
    %v1756 = vpop.f32.mrf.mxu0
    %v1757 = vadd.f32 %v1420, %v1756
    %v1758 = vpop.f32.mrf.mxu0
    %1759 = vmatprep.mubr.bf16.mxu0 0
    %1760 = vmatmul.mubr.bf16.gmra.mxu0 %v956
    %v1761 = vpop.f32.mrf.mxu0
    %v1762 = vadd.f32 %v1425, %v1761
    %v1763 = vpop.f32.mrf.mxu0
    %v1764 = vpop.f32.mrf.mxu0
    %v1765 = vadd.f32 %v1428, %v1764
    %v1766 = vpop.f32.mrf.mxu0
    %1767 = vmatprep.mubr.bf16.mxu0 0
    %1768 = vmatmul.mubr.bf16.gmra.mxu0 %v957
    %v1769 = vpop.f32.mrf.mxu0
    %v1770 = vadd.f32 %v1433, %v1769
    %v1771 = vpop.f32.mrf.mxu0
    %v1772 = vpop.f32.mrf.mxu0
    %v1773 = vadd.f32 %v1436, %v1772
    %v1774 = vpop.f32.mrf.mxu0
    %1775 = vmatprep.mubr.bf16.mxu0 0
    %1776 = vmatmul.mubr.bf16.gmra.mxu0 %v958
    %v1777 = vpop.f32.mrf.mxu0
    %v1778 = vadd.f32 %v1441, %v1777
    %v1779 = vpop.f32.mrf.mxu0
    %v1780 = vpop.f32.mrf.mxu0
    %v1781 = vadd.f32 %v1444, %v1780
    %v1782 = vpop.f32.mrf.mxu0
    %1783 = vmatprep.mubr.bf16.mxu0 0
    %1784 = vmatmul.mubr.bf16.gmra.mxu0 %v959
    %v1785 = vpop.f32.mrf.mxu0
    %v1786 = vadd.f32 %v1449, %v1785
    %v1787 = vpop.f32.mrf.mxu0
    %v1788 = vpop.f32.mrf.mxu0
    %v1789 = vadd.f32 %v1452, %v1788
    %v1790 = vpop.f32.mrf.mxu0
    %1791 = vmatprep.mubr.bf16.mxu0 0
    %1792 = vmatmul.mubr.bf16.gmra.mxu0 %v960
    %v1793 = vpop.f32.mrf.mxu0
    %v1794 = vadd.f32 %v1457, %v1793
    %v1795 = vpop.f32.mrf.mxu0
    %v1796 = vpop.f32.mrf.mxu0
    %v1797 = vadd.f32 %v1460, %v1796
    %v1798 = vpop.f32.mrf.mxu0
    %1799 = vmatprep.mubr.bf16.mxu0 0
    %1800 = vmatmul.mubr.bf16.gmra.mxu0 %v961
    %v1801 = vpop.f32.mrf.mxu0
    %v1802 = vadd.f32 %v1465, %v1801
    %v1803 = vpop.f32.mrf.mxu0
    %v1804 = vpop.f32.mrf.mxu0
    %v1805 = vadd.f32 %v1468, %v1804
    %v1806 = vpop.f32.mrf.mxu0
    %1807 = vmatprep.mubr.bf16.mxu0 0
    %1808 = vmatmul.mubr.bf16.gmra.mxu0 %v962
    %v1809 = vpop.f32.mrf.mxu0
    %v1810 = vadd.f32 %v1473, %v1809
    %v1811 = vpop.f32.mrf.mxu0
    %v1812 = vpop.f32.mrf.mxu0
    %v1813 = vadd.f32 %v1476, %v1812
    %v1814 = vpop.f32.mrf.mxu0
    %1815 = vmatprep.mubr.bf16.mxu0 0
    %1816 = vmatmul.mubr.bf16.gmra.mxu0 %v963
    %v1817 = vpop.f32.mrf.mxu0
    %v1818 = vadd.f32 %v1481, %v1817
    %v1819 = vpop.f32.mrf.mxu0
    %v1820 = vpop.f32.mrf.mxu0
    %v1821 = vadd.f32 %v1484, %v1820
    %v1822 = vpop.f32.mrf.mxu0
    %1823 = vmatprep.mubr.bf16.mxu0 0
    %1824 = vmatmul.mubr.bf16.gmra.mxu0 %v964
    %v1825 = vpop.f32.mrf.mxu0
    %v1826 = vadd.f32 %v1489, %v1825
    %v1827 = vpop.f32.mrf.mxu0
    %v1828 = vpop.f32.mrf.mxu0
    %v1829 = vadd.f32 %v1492, %v1828
    %v1830 = vpop.f32.mrf.mxu0
    %1831 = vdwg.mxu0
    %v1832 = vld [vmem:[#allocation2 + $0x9] sm:$0xff]
    %v1833 = vld [vmem:[#allocation2 + $0x11] sm:$0xff]
    %v1834 = vld [vmem:[#allocation2 + $0x19] sm:$0xff]
    %v1835 = vld [vmem:[#allocation2 + $0x21] sm:$0xff]
    %v1836 = vld [vmem:[#allocation2 + $0x29] sm:$0xff]
    %v1837 = vld [vmem:[#allocation2 + $0x31] sm:$0xff]
    %v1838 = vld [vmem:[#allocation2 + $0x39] sm:$0xff]
    %v1839 = vld [vmem:[#allocation2 + $0x41] sm:$0xff]
    %v1840 = vld [vmem:[#allocation2 + $0x49] sm:$0xff]
    %v1841 = vld [vmem:[#allocation2 + $0x51] sm:$0xff]
    %v1842 = vld [vmem:[#allocation2 + $0x59] sm:$0xff]
    %v1843 = vld [vmem:[#allocation2 + $0x61] sm:$0xff]
    %v1844 = vld [vmem:[#allocation2 + $0x69] sm:$0xff]
    %v1845 = vld [vmem:[#allocation2 + $0x71] sm:$0xff]
    %v1846 = vld [vmem:[#allocation2 + $0x79] sm:$0xff]
    %v1847 = vld [vmem:[#allocation2 + $0x81] sm:$0xff]
    %v1848 = vld [vmem:[#allocation2 + $0x89] sm:$0xff]
    %v1849 = vld [vmem:[#allocation2 + $0x91] sm:$0xff]
    %v1850 = vld [vmem:[#allocation2 + $0x99] sm:$0xff]
    %v1851 = vld [vmem:[#allocation2 + $0xa1] sm:$0xff]
    %v1852 = vld [vmem:[#allocation2 + $0xa9] sm:$0xff]
    %v1853 = vld [vmem:[#allocation2 + $0xb1] sm:$0xff]
    %v1854 = vld [vmem:[#allocation2 + $0xb9] sm:$0xff]
    %v1855 = vld [vmem:[#allocation2 + $0xc1] sm:$0xff]
    %v1856 = vld [vmem:[#allocation2 + $0xc9] sm:$0xff]
    %v1857 = vld [vmem:[#allocation2 + $0xd1] sm:$0xff]
    %v1858 = vld [vmem:[#allocation2 + $0xd9] sm:$0xff]
    %v1859 = vld [vmem:[#allocation2 + $0xe1] sm:$0xff]
    %v1860 = vld [vmem:[#allocation2 + $0xe9] sm:$0xff]
    %v1861 = vld [vmem:[#allocation2 + $0xf1] sm:$0xff]
    %v1862 = vld [vmem:[#allocation2 + $0xf9] sm:$0xff]
    %v1863 = vld [vmem:[#allocation2 + $0x101] sm:$0xff]
    %v1864 = vld [vmem:[#allocation2 + $0x109] sm:$0xff]
    %v1865 = vld [vmem:[#allocation2 + $0x111] sm:$0xff]
    %v1866 = vld [vmem:[#allocation2 + $0x119] sm:$0xff]
    %v1867 = vld [vmem:[#allocation2 + $0x121] sm:$0xff]
    %v1868 = vld [vmem:[#allocation2 + $0x129] sm:$0xff]
    %v1869 = vld [vmem:[#allocation2 + $0x131] sm:$0xff]
    %v1870 = vld [vmem:[#allocation2 + $0x139] sm:$0xff]
    %v1871 = vld [vmem:[#allocation2 + $0x141] sm:$0xff]
    %v1872 = vld [vmem:[#allocation2 + $0x149] sm:$0xff]
    %v1873 = vld [vmem:[#allocation2 + $0x151] sm:$0xff]
    %v1874 = vld [vmem:[#allocation2 + $0x159] sm:$0xff]
    %v1875 = vld [vmem:[#allocation2 + $0x161] sm:$0xff]
    %v1876 = vld [vmem:[#allocation2 + $0x169] sm:$0xff]
    %v1877 = vld [vmem:[#allocation2 + $0x171] sm:$0xff]
    %v1878 = vld [vmem:[#allocation2 + $0x179] sm:$0xff]
    %v1879 = vld [vmem:[#allocation2 + $0x181] sm:$0xff]
    %v1880 = vld [vmem:[#allocation2 + $0x189] sm:$0xff]
    %v1881 = vld [vmem:[#allocation2 + $0x191] sm:$0xff]
    %v1882 = vld [vmem:[#allocation2 + $0x199] sm:$0xff]
    %v1883 = vld [vmem:[#allocation2 + $0x1a1] sm:$0xff]
    %v1884 = vld [vmem:[#allocation2 + $0x1a9] sm:$0xff]
    %v1885 = vld [vmem:[#allocation2 + $0x1b1] sm:$0xff]
    %v1886 = vld [vmem:[#allocation2 + $0x1b9] sm:$0xff]
    %v1887 = vld [vmem:[#allocation2 + $0x1c1] sm:$0xff]
    %v1888 = vld [vmem:[#allocation2 + $0x1c9] sm:$0xff]
    %v1889 = vld [vmem:[#allocation2 + $0x1d1] sm:$0xff]
    %v1890 = vld [vmem:[#allocation2 + $0x1d9] sm:$0xff]
    %v1891 = vld [vmem:[#allocation2 + $0x1e1] sm:$0xff]
    %v1892 = vld [vmem:[#allocation2 + $0x1e9] sm:$0xff]
    %v1893 = vld [vmem:[#allocation2 + $0x1f1] sm:$0xff]
    %v1894 = vld [vmem:[#allocation2 + $0x1f9] sm:$0xff]
    %v1895 = vld [vmem:[#allocation2 + $0x201] sm:$0xff]
    %vm1896 = vmand %vm287, %vm479
    %vm1897 = vmand %vm288, %vm480
    %vm1898 = vmand %vm289, %vm481
    %vm1899 = vmand %vm290, %vm482
    %vm1900 = vmand %vm291, %vm483
    %vm1901 = vmand %vm292, %vm484
    %vm1902 = vmand %vm293, %vm485
    %vm1903 = vmand %vm294, %vm486
    %vm1904 = vmand %vm295, %vm487
    %vm1905 = vmand %vm296, %vm488
    %vm1906 = vmand %vm297, %vm489
    %vm1907 = vmand %vm298, %vm490
    %vm1908 = vmand %vm299, %vm491
    %vm1909 = vmand %vm300, %vm492
    %vm1910 = vmand %vm301, %vm493
    %vm1911 = vmand %vm302, %vm494
    %vm1912 = vmand %vm303, %vm495
    %vm1913 = vmand %vm304, %vm496
    %vm1914 = vmand %vm305, %vm497
    %vm1915 = vmand %vm306, %vm498
    %vm1916 = vmand %vm307, %vm499
    %vm1917 = vmand %vm308, %vm500
    %vm1918 = vmand %vm309, %vm501
    %vm1919 = vmand %vm310, %vm502
    %vm1920 = vmand %vm311, %vm503
    %vm1921 = vmand %vm312, %vm504
    %vm1922 = vmand %vm313, %vm505
    %vm1923 = vmand %vm314, %vm506
    %vm1924 = vmand %vm315, %vm507
    %vm1925 = vmand %vm316, %vm508
    %vm1926 = vmand %vm317, %vm509
    %vm1927 = vmand %vm318, %vm510
    %vm1928 = vmand %vm319, %vm511
    %vm1929 = vmand %vm320, %vm512
    %vm1930 = vmand %vm321, %vm513
    %vm1931 = vmand %vm322, %vm514
    %vm1932 = vmand %vm323, %vm515
    %vm1933 = vmand %vm324, %vm516
    %vm1934 = vmand %vm325, %vm517
    %vm1935 = vmand %vm326, %vm518
    %vm1936 = vmand %vm327, %vm519
    %vm1937 = vmand %vm328, %vm520
    %vm1938 = vmand %vm329, %vm521
    %vm1939 = vmand %vm330, %vm522
    %vm1940 = vmand %vm331, %vm523
    %vm1941 = vmand %vm332, %vm524
    %vm1942 = vmand %vm333, %vm525
    %vm1943 = vmand %vm334, %vm526
    %vm1944 = vmand %vm335, %vm527
    %vm1945 = vmand %vm336, %vm528
    %vm1946 = vmand %vm337, %vm529
    %vm1947 = vmand %vm338, %vm530
    %vm1948 = vmand %vm339, %vm531
    %vm1949 = vmand %vm340, %vm532
    %vm1950 = vmand %vm341, %vm533
    %vm1951 = vmand %vm342, %vm534
    %vm1952 = vmand %vm343, %vm535
    %vm1953 = vmand %vm344, %vm536
    %vm1954 = vmand %vm345, %vm537
    %vm1955 = vmand %vm346, %vm538
    %vm1956 = vmand %vm347, %vm539
    %vm1957 = vmand %vm348, %vm540
    %vm1958 = vmand %vm349, %vm541
    %vm1959 = vmand %vm350, %vm542
    %v1960 = vsel %vm1896, %v1832, 0.0
    %v1961 = vsel %vm1897, %v1833, 0.0
    %v1962 = vsel %vm1898, %v1834, 0.0
    %v1963 = vsel %vm1899, %v1835, 0.0
    %v1964 = vsel %vm1900, %v1836, 0.0
    %v1965 = vsel %vm1901, %v1837, 0.0
    %v1966 = vsel %vm1902, %v1838, 0.0
    %v1967 = vsel %vm1903, %v1839, 0.0
    %v1968 = vsel %vm1904, %v1840, 0.0
    %v1969 = vsel %vm1905, %v1841, 0.0
    %v1970 = vsel %vm1906, %v1842, 0.0
    %v1971 = vsel %vm1907, %v1843, 0.0
    %v1972 = vsel %vm1908, %v1844, 0.0
    %v1973 = vsel %vm1909, %v1845, 0.0
    %v1974 = vsel %vm1910, %v1846, 0.0
    %v1975 = vsel %vm1911, %v1847, 0.0
    %v1976 = vsel %vm1912, %v1848, 0.0
    %v1977 = vsel %vm1913, %v1849, 0.0
    %v1978 = vsel %vm1914, %v1850, 0.0
    %v1979 = vsel %vm1915, %v1851, 0.0
    %v1980 = vsel %vm1916, %v1852, 0.0
    %v1981 = vsel %vm1917, %v1853, 0.0
    %v1982 = vsel %vm1918, %v1854, 0.0
    %v1983 = vsel %vm1919, %v1855, 0.0
    %v1984 = vsel %vm1920, %v1856, 0.0
    %v1985 = vsel %vm1921, %v1857, 0.0
    %v1986 = vsel %vm1922, %v1858, 0.0
    %v1987 = vsel %vm1923, %v1859, 0.0
    %v1988 = vsel %vm1924, %v1860, 0.0
    %v1989 = vsel %vm1925, %v1861, 0.0
    %v1990 = vsel %vm1926, %v1862, 0.0
    %v1991 = vsel %vm1927, %v1863, 0.0
    %v1992 = vsel %vm1928, %v1864, 0.0
    %v1993 = vsel %vm1929, %v1865, 0.0
    %v1994 = vsel %vm1930, %v1866, 0.0
    %v1995 = vsel %vm1931, %v1867, 0.0
    %v1996 = vsel %vm1932, %v1868, 0.0
    %v1997 = vsel %vm1933, %v1869, 0.0
    %v1998 = vsel %vm1934, %v1870, 0.0
    %v1999 = vsel %vm1935, %v1871, 0.0
    %v2000 = vsel %vm1936, %v1872, 0.0
    %v2001 = vsel %vm1937, %v1873, 0.0
    %v2002 = vsel %vm1938, %v1874, 0.0
    %v2003 = vsel %vm1939, %v1875, 0.0
    %v2004 = vsel %vm1940, %v1876, 0.0
    %v2005 = vsel %vm1941, %v1877, 0.0
    %v2006 = vsel %vm1942, %v1878, 0.0
    %v2007 = vsel %vm1943, %v1879, 0.0
    %v2008 = vsel %vm1944, %v1880, 0.0
    %v2009 = vsel %vm1945, %v1881, 0.0
    %v2010 = vsel %vm1946, %v1882, 0.0
    %v2011 = vsel %vm1947, %v1883, 0.0
    %v2012 = vsel %vm1948, %v1884, 0.0
    %v2013 = vsel %vm1949, %v1885, 0.0
    %v2014 = vsel %vm1950, %v1886, 0.0
    %v2015 = vsel %vm1951, %v1887, 0.0
    %v2016 = vsel %vm1952, %v1888, 0.0
    %v2017 = vsel %vm1953, %v1889, 0.0
    %v2018 = vsel %vm1954, %v1890, 0.0
    %v2019 = vsel %vm1955, %v1891, 0.0
    %v2020 = vsel %vm1956, %v1892, 0.0
    %v2021 = vsel %vm1957, %v1893, 0.0
    %v2022 = vsel %vm1958, %v1894, 0.0
    %v2023 = vsel %vm1959, %v1895, 0.0
    %v2024 = vpack.c.bf16 %v1961, %v1960
    %v2025 = vpack.c.bf16 %v1963, %v1962
    %v2026 = vpack.c.bf16 %v1965, %v1964
    %v2027 = vpack.c.bf16 %v1967, %v1966
    %v2028 = vpack.c.bf16 %v1969, %v1968
    %v2029 = vpack.c.bf16 %v1971, %v1970
    %v2030 = vpack.c.bf16 %v1973, %v1972
    %v2031 = vpack.c.bf16 %v1975, %v1974
    %v2032 = vpack.c.bf16 %v1977, %v1976
    %v2033 = vpack.c.bf16 %v1979, %v1978
    %v2034 = vpack.c.bf16 %v1981, %v1980
    %v2035 = vpack.c.bf16 %v1983, %v1982
    %v2036 = vpack.c.bf16 %v1985, %v1984
    %v2037 = vpack.c.bf16 %v1987, %v1986
    %v2038 = vpack.c.bf16 %v1989, %v1988
    %v2039 = vpack.c.bf16 %v1991, %v1990
    %v2040 = vpack.c.bf16 %v1993, %v1992
    %v2041 = vpack.c.bf16 %v1995, %v1994
    %v2042 = vpack.c.bf16 %v1997, %v1996
    %v2043 = vpack.c.bf16 %v1999, %v1998
    %v2044 = vpack.c.bf16 %v2001, %v2000
    %v2045 = vpack.c.bf16 %v2003, %v2002
    %v2046 = vpack.c.bf16 %v2005, %v2004
    %v2047 = vpack.c.bf16 %v2007, %v2006
    %v2048 = vpack.c.bf16 %v2009, %v2008
    %v2049 = vpack.c.bf16 %v2011, %v2010
    %v2050 = vpack.c.bf16 %v2013, %v2012
    %v2051 = vpack.c.bf16 %v2015, %v2014
    %v2052 = vpack.c.bf16 %v2017, %v2016
    %v2053 = vpack.c.bf16 %v2019, %v2018
    %v2054 = vpack.c.bf16 %v2021, %v2020
    %v2055 = vpack.c.bf16 %v2023, %v2022
    %s2056 = scalar_lea.vmem %s1, 128
    %v2057 = vld [vmem:[%s2056] sm:$0xf]
    %v2058 = vld [vmem:[%s2056 + $0x4] sm:$0xf]
    %v2059 = vld [vmem:[%s2056 + $0x8] sm:$0xf]
    %v2060 = vld [vmem:[%s2056 + $0xc] sm:$0xf]
    %v2061 = vld [vmem:[%s2056 + $0x10] sm:$0xf]
    %v2062 = vld [vmem:[%s2056 + $0x14] sm:$0xf]
    %v2063 = vld [vmem:[%s2056 + $0x18] sm:$0xf]
    %v2064 = vld [vmem:[%s2056 + $0x1c] sm:$0xf]
    %v2065 = vld [vmem:[%s2056 + $0x20] sm:$0xf]
    %v2066 = vld [vmem:[%s2056 + $0x24] sm:$0xf]
    %v2067 = vld [vmem:[%s2056 + $0x28] sm:$0xf]
    %v2068 = vld [vmem:[%s2056 + $0x2c] sm:$0xf]
    %v2069 = vld [vmem:[%s2056 + $0x30] sm:$0xf]
    %v2070 = vld [vmem:[%s2056 + $0x34] sm:$0xf]
    %v2071 = vld [vmem:[%s2056 + $0x38] sm:$0xf]
    %v2072 = vld [vmem:[%s2056 + $0x3c] sm:$0xf]
    %v2089 = vunpack.c.l.b16 %v2057
    %v2090 = vunpack.c.l.b16 %v2058
    %v2091 = vunpack.c.l.b16 %v2059
    %v2092 = vunpack.c.l.b16 %v2060
    %v2093 = vunpack.c.l.b16 %v2061
    %v2094 = vunpack.c.l.b16 %v2062
    %v2095 = vunpack.c.l.b16 %v2063
    %v2096 = vunpack.c.l.b16 %v2064
    %v2097 = vunpack.c.l.b16 %v2065
    %v2098 = vunpack.c.l.b16 %v2066
    %v2099 = vunpack.c.l.b16 %v2067
    %v2100 = vunpack.c.l.b16 %v2068
    %v2101 = vunpack.c.l.b16 %v2069
    %v2102 = vunpack.c.l.b16 %v2070
    %v2103 = vunpack.c.l.b16 %v2071
    %v2104 = vunpack.c.l.b16 %v2072
    %v2105 = vpack.c.b16 %v2090, %v2089
    %v2106 = vpack.c.b16 %v2092, %v2091
    %v2107 = vpack.c.b16 %v2094, %v2093
    %v2108 = vpack.c.b16 %v2096, %v2095
    %v2109 = vpack.c.b16 %v2098, %v2097
    %v2110 = vpack.c.b16 %v2100, %v2099
    %v2111 = vpack.c.b16 %v2102, %v2101
    %v2112 = vpack.c.b16 %v2104, %v2103
    %2121 = vmatprep.subr.bf16.mxu0 0
    %2122 = vmatpush1.bf16.msra.mxu0 %v2112
    %2123 = vmatprep.subr.bf16.mxu0 0
    %2124 = vmatpush1.bf16.msra.mxu0 %v2111
    %2125 = vmatprep.subr.bf16.mxu0 0
    %2126 = vmatpush1.bf16.msra.mxu0 %v2110
    %2127 = vmatprep.subr.bf16.mxu0 0
    %2128 = vmatpush1.bf16.msra.mxu0 %v2109
    %2129 = vmatprep.subr.bf16.mxu0 0
    %2130 = vmatpush1.bf16.msra.mxu0 %v2108
    %2131 = vmatprep.subr.bf16.mxu0 0
    %2132 = vmatpush1.bf16.msra.mxu0 %v2107
    %2133 = vmatprep.subr.bf16.mxu0 0
    %2134 = vmatpush1.bf16.msra.mxu0 %v2106
    %2135 = vmatprep.subr.bf16.mxu0 0
    %2136 = vmatpush1.bf16.msra.mxu0 %v2105
    %2137 = vmatprep.subr.bf16.mxu0 0
    %2138 = vmatpush2.bf16.msra.mxu0 0
    %2139 = vmatprep.subr.bf16.mxu0 0
    %2140 = vmatpush2.bf16.msra.mxu0 0
    %2141 = vmatprep.subr.bf16.mxu0 0
    %2142 = vmatpush2.bf16.msra.mxu0 0
    %2143 = vmatprep.subr.bf16.mxu0 0
    %2144 = vmatpush2.bf16.msra.mxu0 0
    %2145 = vmatprep.subr.bf16.mxu0 0
    %2146 = vmatpush2.bf16.msra.mxu0 0
    %2147 = vmatprep.subr.bf16.mxu0 0
    %2148 = vmatpush2.bf16.msra.mxu0 0
    %2149 = vmatprep.subr.bf16.mxu0 0
    %2150 = vmatpush2.bf16.msra.mxu0 0
    %2151 = vmatprep.subr.bf16.mxu0 0
    %2152 = vmatpush2.bf16.msra.mxu0 0
    %2153 = vmatprep.mubr.bf16.mxu0 0
    %2154 = vmatmul.mubr.bf16.gmra.mxu0 %v2024
    %v2155 = vpop.f32.mrf.mxu0
    %v2156 = vadd.f32 0.0, %v2155
    %v2157 = vpop.f32.mrf.mxu0
    %v2158 = vpop.f32.mrf.mxu0
    %v2159 = vadd.f32 0.0, %v2158
    %v2160 = vpop.f32.mrf.mxu0
    %2161 = vmatprep.mubr.bf16.mxu0 0
    %2162 = vmatmul.mubr.bf16.gmra.mxu0 %v2025
    %v2163 = vpop.f32.mrf.mxu0
    %v2164 = vadd.f32 0.0, %v2163
    %v2165 = vpop.f32.mrf.mxu0
    %v2166 = vpop.f32.mrf.mxu0
    %v2167 = vadd.f32 0.0, %v2166
    %v2168 = vpop.f32.mrf.mxu0
    %2169 = vmatprep.mubr.bf16.mxu0 0
    %2170 = vmatmul.mubr.bf16.gmra.mxu0 %v2026
    %v2171 = vpop.f32.mrf.mxu0
    %v2172 = vadd.f32 0.0, %v2171
    %v2173 = vpop.f32.mrf.mxu0
    %v2174 = vpop.f32.mrf.mxu0
    %v2175 = vadd.f32 0.0, %v2174
    %v2176 = vpop.f32.mrf.mxu0
    %2177 = vmatprep.mubr.bf16.mxu0 0
    %2178 = vmatmul.mubr.bf16.gmra.mxu0 %v2027
    %v2179 = vpop.f32.mrf.mxu0
    %v2180 = vadd.f32 0.0, %v2179
    %v2181 = vpop.f32.mrf.mxu0
    %v2182 = vpop.f32.mrf.mxu0
    %v2183 = vadd.f32 0.0, %v2182
    %v2184 = vpop.f32.mrf.mxu0
    %2185 = vmatprep.mubr.bf16.mxu0 0
    %2186 = vmatmul.mubr.bf16.gmra.mxu0 %v2028
    %v2187 = vpop.f32.mrf.mxu0
    %v2188 = vadd.f32 0.0, %v2187
    %v2189 = vpop.f32.mrf.mxu0
    %v2190 = vpop.f32.mrf.mxu0
    %v2191 = vadd.f32 0.0, %v2190
    %v2192 = vpop.f32.mrf.mxu0
    %2193 = vmatprep.mubr.bf16.mxu0 0
    %2194 = vmatmul.mubr.bf16.gmra.mxu0 %v2029
    %v2195 = vpop.f32.mrf.mxu0
    %v2196 = vadd.f32 0.0, %v2195
    %v2197 = vpop.f32.mrf.mxu0
    %v2198 = vpop.f32.mrf.mxu0
    %v2199 = vadd.f32 0.0, %v2198
    %v2200 = vpop.f32.mrf.mxu0
    %2201 = vmatprep.mubr.bf16.mxu0 0
    %2202 = vmatmul.mubr.bf16.gmra.mxu0 %v2030
    %v2203 = vpop.f32.mrf.mxu0
    %v2204 = vadd.f32 0.0, %v2203
    %v2205 = vpop.f32.mrf.mxu0
    %v2206 = vpop.f32.mrf.mxu0
    %v2207 = vadd.f32 0.0, %v2206
    %v2208 = vpop.f32.mrf.mxu0
    %2209 = vmatprep.mubr.bf16.mxu0 0
    %2210 = vmatmul.mubr.bf16.gmra.mxu0 %v2031
    %v2211 = vpop.f32.mrf.mxu0
    %v2212 = vadd.f32 0.0, %v2211
    %v2213 = vpop.f32.mrf.mxu0
    %v2214 = vpop.f32.mrf.mxu0
    %v2215 = vadd.f32 0.0, %v2214
    %v2216 = vpop.f32.mrf.mxu0
    %2217 = vmatprep.mubr.bf16.mxu0 0
    %2218 = vmatmul.mubr.bf16.gmra.mxu0 %v2032
    %v2219 = vpop.f32.mrf.mxu0
    %v2220 = vadd.f32 0.0, %v2219
    %v2221 = vpop.f32.mrf.mxu0
    %v2222 = vpop.f32.mrf.mxu0
    %v2223 = vadd.f32 0.0, %v2222
    %v2224 = vpop.f32.mrf.mxu0
    %2225 = vmatprep.mubr.bf16.mxu0 0
    %2226 = vmatmul.mubr.bf16.gmra.mxu0 %v2033
    %v2227 = vpop.f32.mrf.mxu0
    %v2228 = vadd.f32 0.0, %v2227
    %v2229 = vpop.f32.mrf.mxu0
    %v2230 = vpop.f32.mrf.mxu0
    %v2231 = vadd.f32 0.0, %v2230
    %v2232 = vpop.f32.mrf.mxu0
    %2233 = vmatprep.mubr.bf16.mxu0 0
    %2234 = vmatmul.mubr.bf16.gmra.mxu0 %v2034
    %v2235 = vpop.f32.mrf.mxu0
    %v2236 = vadd.f32 0.0, %v2235
    %v2237 = vpop.f32.mrf.mxu0
    %v2238 = vpop.f32.mrf.mxu0
    %v2239 = vadd.f32 0.0, %v2238
    %v2240 = vpop.f32.mrf.mxu0
    %2241 = vmatprep.mubr.bf16.mxu0 0
    %2242 = vmatmul.mubr.bf16.gmra.mxu0 %v2035
    %v2243 = vpop.f32.mrf.mxu0
    %v2244 = vadd.f32 0.0, %v2243
    %v2245 = vpop.f32.mrf.mxu0
    %v2246 = vpop.f32.mrf.mxu0
    %v2247 = vadd.f32 0.0, %v2246
    %v2248 = vpop.f32.mrf.mxu0
    %2249 = vmatprep.mubr.bf16.mxu0 0
    %2250 = vmatmul.mubr.bf16.gmra.mxu0 %v2036
    %v2251 = vpop.f32.mrf.mxu0
    %v2252 = vadd.f32 0.0, %v2251
    %v2253 = vpop.f32.mrf.mxu0
    %v2254 = vpop.f32.mrf.mxu0
    %v2255 = vadd.f32 0.0, %v2254
    %v2256 = vpop.f32.mrf.mxu0
    %2257 = vmatprep.mubr.bf16.mxu0 0
    %2258 = vmatmul.mubr.bf16.gmra.mxu0 %v2037
    %v2259 = vpop.f32.mrf.mxu0
    %v2260 = vadd.f32 0.0, %v2259
    %v2261 = vpop.f32.mrf.mxu0
    %v2262 = vpop.f32.mrf.mxu0
    %v2263 = vadd.f32 0.0, %v2262
    %v2264 = vpop.f32.mrf.mxu0
    %2265 = vmatprep.mubr.bf16.mxu0 0
    %2266 = vmatmul.mubr.bf16.gmra.mxu0 %v2038
    %v2267 = vpop.f32.mrf.mxu0
    %v2268 = vadd.f32 0.0, %v2267
    %v2269 = vpop.f32.mrf.mxu0
    %v2270 = vpop.f32.mrf.mxu0
    %v2271 = vadd.f32 0.0, %v2270
    %v2272 = vpop.f32.mrf.mxu0
    %2273 = vmatprep.mubr.bf16.mxu0 0
    %2274 = vmatmul.mubr.bf16.gmra.mxu0 %v2039
    %v2275 = vpop.f32.mrf.mxu0
    %v2276 = vadd.f32 0.0, %v2275
    %v2277 = vpop.f32.mrf.mxu0
    %v2278 = vpop.f32.mrf.mxu0
    %v2279 = vadd.f32 0.0, %v2278
    %v2280 = vpop.f32.mrf.mxu0
    %2281 = vmatprep.mubr.bf16.mxu0 0
    %2282 = vmatmul.mubr.bf16.gmra.mxu0 %v2040
    %v2283 = vpop.f32.mrf.mxu0
    %v2284 = vadd.f32 0.0, %v2283
    %v2285 = vpop.f32.mrf.mxu0
    %v2286 = vpop.f32.mrf.mxu0
    %v2287 = vadd.f32 0.0, %v2286
    %v2288 = vpop.f32.mrf.mxu0
    %2289 = vmatprep.mubr.bf16.mxu0 0
    %2290 = vmatmul.mubr.bf16.gmra.mxu0 %v2041
    %v2291 = vpop.f32.mrf.mxu0
    %v2292 = vadd.f32 0.0, %v2291
    %v2293 = vpop.f32.mrf.mxu0
    %v2294 = vpop.f32.mrf.mxu0
    %v2295 = vadd.f32 0.0, %v2294
    %v2296 = vpop.f32.mrf.mxu0
    %2297 = vmatprep.mubr.bf16.mxu0 0
    %2298 = vmatmul.mubr.bf16.gmra.mxu0 %v2042
    %v2299 = vpop.f32.mrf.mxu0
    %v2300 = vadd.f32 0.0, %v2299
    %v2301 = vpop.f32.mrf.mxu0
    %v2302 = vpop.f32.mrf.mxu0
    %v2303 = vadd.f32 0.0, %v2302
    %v2304 = vpop.f32.mrf.mxu0
    %2305 = vmatprep.mubr.bf16.mxu0 0
    %2306 = vmatmul.mubr.bf16.gmra.mxu0 %v2043
    %v2307 = vpop.f32.mrf.mxu0
    %v2308 = vadd.f32 0.0, %v2307
    %v2309 = vpop.f32.mrf.mxu0
    %v2310 = vpop.f32.mrf.mxu0
    %v2311 = vadd.f32 0.0, %v2310
    %v2312 = vpop.f32.mrf.mxu0
    %2313 = vmatprep.mubr.bf16.mxu0 0
    %2314 = vmatmul.mubr.bf16.gmra.mxu0 %v2044
    %v2315 = vpop.f32.mrf.mxu0
    %v2316 = vadd.f32 0.0, %v2315
    %v2317 = vpop.f32.mrf.mxu0
    %v2318 = vpop.f32.mrf.mxu0
    %v2319 = vadd.f32 0.0, %v2318
    %v2320 = vpop.f32.mrf.mxu0
    %2321 = vmatprep.mubr.bf16.mxu0 0
    %2322 = vmatmul.mubr.bf16.gmra.mxu0 %v2045
    %v2323 = vpop.f32.mrf.mxu0
    %v2324 = vadd.f32 0.0, %v2323
    %v2325 = vpop.f32.mrf.mxu0
    %v2326 = vpop.f32.mrf.mxu0
    %v2327 = vadd.f32 0.0, %v2326
    %v2328 = vpop.f32.mrf.mxu0
    %2329 = vmatprep.mubr.bf16.mxu0 0
    %2330 = vmatmul.mubr.bf16.gmra.mxu0 %v2046
    %v2331 = vpop.f32.mrf.mxu0
    %v2332 = vadd.f32 0.0, %v2331
    %v2333 = vpop.f32.mrf.mxu0
    %v2334 = vpop.f32.mrf.mxu0
    %v2335 = vadd.f32 0.0, %v2334
    %v2336 = vpop.f32.mrf.mxu0
    %2337 = vmatprep.mubr.bf16.mxu0 0
    %2338 = vmatmul.mubr.bf16.gmra.mxu0 %v2047
    %v2339 = vpop.f32.mrf.mxu0
    %v2340 = vadd.f32 0.0, %v2339
    %v2341 = vpop.f32.mrf.mxu0
    %v2342 = vpop.f32.mrf.mxu0
    %v2343 = vadd.f32 0.0, %v2342
    %v2344 = vpop.f32.mrf.mxu0
    %2345 = vmatprep.mubr.bf16.mxu0 0
    %2346 = vmatmul.mubr.bf16.gmra.mxu0 %v2048
    %v2347 = vpop.f32.mrf.mxu0
    %v2348 = vadd.f32 0.0, %v2347
    %v2349 = vpop.f32.mrf.mxu0
    %v2350 = vpop.f32.mrf.mxu0
    %v2351 = vadd.f32 0.0, %v2350
    %v2352 = vpop.f32.mrf.mxu0
    %2353 = vmatprep.mubr.bf16.mxu0 0
    %2354 = vmatmul.mubr.bf16.gmra.mxu0 %v2049
    %v2355 = vpop.f32.mrf.mxu0
    %v2356 = vadd.f32 0.0, %v2355
    %v2357 = vpop.f32.mrf.mxu0
    %v2358 = vpop.f32.mrf.mxu0
    %v2359 = vadd.f32 0.0, %v2358
    %v2360 = vpop.f32.mrf.mxu0
    %2361 = vmatprep.mubr.bf16.mxu0 0
    %2362 = vmatmul.mubr.bf16.gmra.mxu0 %v2050
    %v2363 = vpop.f32.mrf.mxu0
    %v2364 = vadd.f32 0.0, %v2363
    %v2365 = vpop.f32.mrf.mxu0
    %v2366 = vpop.f32.mrf.mxu0
    %v2367 = vadd.f32 0.0, %v2366
    %v2368 = vpop.f32.mrf.mxu0
    %2369 = vmatprep.mubr.bf16.mxu0 0
    %2370 = vmatmul.mubr.bf16.gmra.mxu0 %v2051
    %v2371 = vpop.f32.mrf.mxu0
    %v2372 = vadd.f32 0.0, %v2371
    %v2373 = vpop.f32.mrf.mxu0
    %v2374 = vpop.f32.mrf.mxu0
    %v2375 = vadd.f32 0.0, %v2374
    %v2376 = vpop.f32.mrf.mxu0
    %2377 = vmatprep.mubr.bf16.mxu0 0
    %2378 = vmatmul.mubr.bf16.gmra.mxu0 %v2052
    %v2379 = vpop.f32.mrf.mxu0
    %v2380 = vadd.f32 0.0, %v2379
    %v2381 = vpop.f32.mrf.mxu0
    %v2382 = vpop.f32.mrf.mxu0
    %v2383 = vadd.f32 0.0, %v2382
    %v2384 = vpop.f32.mrf.mxu0
    %2385 = vmatprep.mubr.bf16.mxu0 0
    %2386 = vmatmul.mubr.bf16.gmra.mxu0 %v2053
    %v2387 = vpop.f32.mrf.mxu0
    %v2388 = vadd.f32 0.0, %v2387
    %v2389 = vpop.f32.mrf.mxu0
    %v2390 = vpop.f32.mrf.mxu0
    %v2391 = vadd.f32 0.0, %v2390
    %v2392 = vpop.f32.mrf.mxu0
    %2393 = vmatprep.mubr.bf16.mxu0 0
    %2394 = vmatmul.mubr.bf16.gmra.mxu0 %v2054
    %v2395 = vpop.f32.mrf.mxu0
    %v2396 = vadd.f32 0.0, %v2395
    %v2397 = vpop.f32.mrf.mxu0
    %v2398 = vpop.f32.mrf.mxu0
    %v2399 = vadd.f32 0.0, %v2398
    %v2400 = vpop.f32.mrf.mxu0
    %2401 = vmatprep.mubr.bf16.mxu0 0
    %2402 = vmatmul.mubr.bf16.gmra.mxu0 %v2055
    %v2403 = vpop.f32.mrf.mxu0
    %v2404 = vadd.f32 0.0, %v2403
    %v2405 = vpop.f32.mrf.mxu0
    %v2406 = vpop.f32.mrf.mxu0
    %v2407 = vadd.f32 0.0, %v2406
    %v2408 = vpop.f32.mrf.mxu0
    %2409 = vdwg.mxu0
    %v2410 = vadd.f32 %v1578, %v2156
    %v2411 = vadd.f32 %v1581, %v2159
    %v2412 = vadd.f32 %v1586, %v2164
    %v2413 = vadd.f32 %v1589, %v2167
    %v2414 = vadd.f32 %v1594, %v2172
    %v2415 = vadd.f32 %v1597, %v2175
    %v2416 = vadd.f32 %v1602, %v2180
    %v2417 = vadd.f32 %v1605, %v2183
    %v2418 = vadd.f32 %v1610, %v2188
    %v2419 = vadd.f32 %v1613, %v2191
    %v2420 = vadd.f32 %v1618, %v2196
    %v2421 = vadd.f32 %v1621, %v2199
    %v2422 = vadd.f32 %v1626, %v2204
    %v2423 = vadd.f32 %v1629, %v2207
    %v2424 = vadd.f32 %v1634, %v2212
    %v2425 = vadd.f32 %v1637, %v2215
    %v2426 = vadd.f32 %v1642, %v2220
    %v2427 = vadd.f32 %v1645, %v2223
    %v2428 = vadd.f32 %v1650, %v2228
    %v2429 = vadd.f32 %v1653, %v2231
    %v2430 = vadd.f32 %v1658, %v2236
    %v2431 = vadd.f32 %v1661, %v2239
    %v2432 = vadd.f32 %v1666, %v2244
    %v2433 = vadd.f32 %v1669, %v2247
    %v2434 = vadd.f32 %v1674, %v2252
    %v2435 = vadd.f32 %v1677, %v2255
    %v2436 = vadd.f32 %v1682, %v2260
    %v2437 = vadd.f32 %v1685, %v2263
    %v2438 = vadd.f32 %v1690, %v2268
    %v2439 = vadd.f32 %v1693, %v2271
    %v2440 = vadd.f32 %v1698, %v2276
    %v2441 = vadd.f32 %v1701, %v2279
    %v2442 = vadd.f32 %v1706, %v2284
    %v2443 = vadd.f32 %v1709, %v2287
    %v2444 = vadd.f32 %v1714, %v2292
    %v2445 = vadd.f32 %v1717, %v2295
    %v2446 = vadd.f32 %v1722, %v2300
    %v2447 = vadd.f32 %v1725, %v2303
    %v2448 = vadd.f32 %v1730, %v2308
    %v2449 = vadd.f32 %v1733, %v2311
    %v2450 = vadd.f32 %v1738, %v2316
    %v2451 = vadd.f32 %v1741, %v2319
    %v2452 = vadd.f32 %v1746, %v2324
    %v2453 = vadd.f32 %v1749, %v2327
    %v2454 = vadd.f32 %v1754, %v2332
    %v2455 = vadd.f32 %v1757, %v2335
    %v2456 = vadd.f32 %v1762, %v2340
    %v2457 = vadd.f32 %v1765, %v2343
    %v2458 = vadd.f32 %v1770, %v2348
    %v2459 = vadd.f32 %v1773, %v2351
    %v2460 = vadd.f32 %v1778, %v2356
    %v2461 = vadd.f32 %v1781, %v2359
    %v2462 = vadd.f32 %v1786, %v2364
    %v2463 = vadd.f32 %v1789, %v2367
    %v2464 = vadd.f32 %v1794, %v2372
    %v2465 = vadd.f32 %v1797, %v2375
    %v2466 = vadd.f32 %v1802, %v2380
    %v2467 = vadd.f32 %v1805, %v2383
    %v2468 = vadd.f32 %v1810, %v2388
    %v2469 = vadd.f32 %v1813, %v2391
    %v2470 = vadd.f32 %v1818, %v2396
    %v2471 = vadd.f32 %v1821, %v2399
    %v2472 = vadd.f32 %v1826, %v2404
    %v2473 = vadd.f32 %v1829, %v2407
    %v2474 = vld [vmem:[#allocation2 + $0x17] sm:$0xff]
    %v2475 = vld [vmem:[#allocation2 + $0x1f] sm:$0xff]
    %v2476 = vld [vmem:[#allocation2 + $0x27] sm:$0xff]
    %v2477 = vld [vmem:[#allocation2 + $0x2f] sm:$0xff]
    %v2478 = vld [vmem:[#allocation2 + $0x37] sm:$0xff]
    %v2479 = vld [vmem:[#allocation2 + $0x3f] sm:$0xff]
    %v2480 = vld [vmem:[#allocation2 + $0x47] sm:$0xff]
    %v2481 = vld [vmem:[#allocation2 + $0x4f] sm:$0xff]
    %v2482 = vld [vmem:[#allocation2 + $0x57] sm:$0xff]
    %v2483 = vld [vmem:[#allocation2 + $0x5f] sm:$0xff]
    %v2484 = vld [vmem:[#allocation2 + $0x67] sm:$0xff]
    %v2485 = vld [vmem:[#allocation2 + $0x6f] sm:$0xff]
    %v2486 = vld [vmem:[#allocation2 + $0x77] sm:$0xff]
    %v2487 = vld [vmem:[#allocation2 + $0x7f] sm:$0xff]
    %v2488 = vld [vmem:[#allocation2 + $0x87] sm:$0xff]
    %v2489 = vld [vmem:[#allocation2 + $0x8f] sm:$0xff]
    %v2490 = vld [vmem:[#allocation2 + $0x97] sm:$0xff]
    %v2491 = vld [vmem:[#allocation2 + $0x9f] sm:$0xff]
    %v2492 = vld [vmem:[#allocation2 + $0xa7] sm:$0xff]
    %v2493 = vld [vmem:[#allocation2 + $0xaf] sm:$0xff]
    %v2494 = vld [vmem:[#allocation2 + $0xb7] sm:$0xff]
    %v2495 = vld [vmem:[#allocation2 + $0xbf] sm:$0xff]
    %v2496 = vld [vmem:[#allocation2 + $0xc7] sm:$0xff]
    %v2497 = vld [vmem:[#allocation2 + $0xcf] sm:$0xff]
    %v2498 = vld [vmem:[#allocation2 + $0xd7] sm:$0xff]
    %v2499 = vld [vmem:[#allocation2 + $0xdf] sm:$0xff]
    %v2500 = vld [vmem:[#allocation2 + $0xe7] sm:$0xff]
    %v2501 = vld [vmem:[#allocation2 + $0xef] sm:$0xff]
    %v2502 = vld [vmem:[#allocation2 + $0xf7] sm:$0xff]
    %v2503 = vld [vmem:[#allocation2 + $0xff] sm:$0xff]
    %v2504 = vld [vmem:[#allocation2 + $0x107] sm:$0xff]
    %v2505 = vld [vmem:[#allocation2 + $0x10f] sm:$0xff]
    %v2506 = vld [vmem:[#allocation2 + $0x117] sm:$0xff]
    %v2507 = vld [vmem:[#allocation2 + $0x11f] sm:$0xff]
    %v2508 = vld [vmem:[#allocation2 + $0x127] sm:$0xff]
    %v2509 = vld [vmem:[#allocation2 + $0x12f] sm:$0xff]
    %v2510 = vld [vmem:[#allocation2 + $0x137] sm:$0xff]
    %v2511 = vld [vmem:[#allocation2 + $0x13f] sm:$0xff]
    %v2512 = vld [vmem:[#allocation2 + $0x147] sm:$0xff]
    %v2513 = vld [vmem:[#allocation2 + $0x14f] sm:$0xff]
    %v2514 = vld [vmem:[#allocation2 + $0x157] sm:$0xff]
    %v2515 = vld [vmem:[#allocation2 + $0x15f] sm:$0xff]
    %v2516 = vld [vmem:[#allocation2 + $0x167] sm:$0xff]
    %v2517 = vld [vmem:[#allocation2 + $0x16f] sm:$0xff]
    %v2518 = vld [vmem:[#allocation2 + $0x177] sm:$0xff]
    %v2519 = vld [vmem:[#allocation2 + $0x17f] sm:$0xff]
    %v2520 = vld [vmem:[#allocation2 + $0x187] sm:$0xff]
    %v2521 = vld [vmem:[#allocation2 + $0x18f] sm:$0xff]
    %v2522 = vld [vmem:[#allocation2 + $0x197] sm:$0xff]
    %v2523 = vld [vmem:[#allocation2 + $0x19f] sm:$0xff]
    %v2524 = vld [vmem:[#allocation2 + $0x1a7] sm:$0xff]
    %v2525 = vld [vmem:[#allocation2 + $0x1af] sm:$0xff]
    %v2526 = vld [vmem:[#allocation2 + $0x1b7] sm:$0xff]
    %v2527 = vld [vmem:[#allocation2 + $0x1bf] sm:$0xff]
    %v2528 = vld [vmem:[#allocation2 + $0x1c7] sm:$0xff]
    %v2529 = vld [vmem:[#allocation2 + $0x1cf] sm:$0xff]
    %v2530 = vld [vmem:[#allocation2 + $0x1d7] sm:$0xff]
    %v2531 = vld [vmem:[#allocation2 + $0x1df] sm:$0xff]
    %v2532 = vld [vmem:[#allocation2 + $0x1e7] sm:$0xff]
    %v2533 = vld [vmem:[#allocation2 + $0x1ef] sm:$0xff]
    %v2534 = vld [vmem:[#allocation2 + $0x1f7] sm:$0xff]
    %v2535 = vld [vmem:[#allocation2 + $0x1ff] sm:$0xff]
    %v2536 = vld [vmem:[#allocation2 + $0x207] sm:$0xff]
    %v2537 = vld [vmem:[#allocation2 + $0x20f] sm:$0xff]
    %v2538 = vsel %vm415, %v2474, 0.0
    %v2539 = vsel %vm416, %v2475, 0.0
    %v2540 = vsel %vm417, %v2476, 0.0
    %v2541 = vsel %vm418, %v2477, 0.0
    %v2542 = vsel %vm419, %v2478, 0.0
    %v2543 = vsel %vm420, %v2479, 0.0
    %v2544 = vsel %vm421, %v2480, 0.0
    %v2545 = vsel %vm422, %v2481, 0.0
    %v2546 = vsel %vm423, %v2482, 0.0
    %v2547 = vsel %vm424, %v2483, 0.0
    %v2548 = vsel %vm425, %v2484, 0.0
    %v2549 = vsel %vm426, %v2485, 0.0
    %v2550 = vsel %vm427, %v2486, 0.0
    %v2551 = vsel %vm428, %v2487, 0.0
    %v2552 = vsel %vm429, %v2488, 0.0
    %v2553 = vsel %vm430, %v2489, 0.0
    %v2554 = vsel %vm431, %v2490, 0.0
    %v2555 = vsel %vm432, %v2491, 0.0
    %v2556 = vsel %vm433, %v2492, 0.0
    %v2557 = vsel %vm434, %v2493, 0.0
    %v2558 = vsel %vm435, %v2494, 0.0
    %v2559 = vsel %vm436, %v2495, 0.0
    %v2560 = vsel %vm437, %v2496, 0.0
    %v2561 = vsel %vm438, %v2497, 0.0
    %v2562 = vsel %vm439, %v2498, 0.0
    %v2563 = vsel %vm440, %v2499, 0.0
    %v2564 = vsel %vm441, %v2500, 0.0
    %v2565 = vsel %vm442, %v2501, 0.0
    %v2566 = vsel %vm443, %v2502, 0.0
    %v2567 = vsel %vm444, %v2503, 0.0
    %v2568 = vsel %vm445, %v2504, 0.0
    %v2569 = vsel %vm446, %v2505, 0.0
    %v2570 = vsel %vm447, %v2506, 0.0
    %v2571 = vsel %vm448, %v2507, 0.0
    %v2572 = vsel %vm449, %v2508, 0.0
    %v2573 = vsel %vm450, %v2509, 0.0
    %v2574 = vsel %vm451, %v2510, 0.0
    %v2575 = vsel %vm452, %v2511, 0.0
    %v2576 = vsel %vm453, %v2512, 0.0
    %v2577 = vsel %vm454, %v2513, 0.0
    %v2578 = vsel %vm455, %v2514, 0.0
    %v2579 = vsel %vm456, %v2515, 0.0
    %v2580 = vsel %vm457, %v2516, 0.0
    %v2581 = vsel %vm458, %v2517, 0.0
    %v2582 = vsel %vm459, %v2518, 0.0
    %v2583 = vsel %vm460, %v2519, 0.0
    %v2584 = vsel %vm461, %v2520, 0.0
    %v2585 = vsel %vm462, %v2521, 0.0
    %v2586 = vsel %vm463, %v2522, 0.0
    %v2587 = vsel %vm464, %v2523, 0.0
    %v2588 = vsel %vm465, %v2524, 0.0
    %v2589 = vsel %vm466, %v2525, 0.0
    %v2590 = vsel %vm467, %v2526, 0.0
    %v2591 = vsel %vm468, %v2527, 0.0
    %v2592 = vsel %vm469, %v2528, 0.0
    %v2593 = vsel %vm470, %v2529, 0.0
    %v2594 = vsel %vm471, %v2530, 0.0
    %v2595 = vsel %vm472, %v2531, 0.0
    %v2596 = vsel %vm473, %v2532, 0.0
    %v2597 = vsel %vm474, %v2533, 0.0
    %v2598 = vsel %vm475, %v2534, 0.0
    %v2599 = vsel %vm476, %v2535, 0.0
    %v2600 = vsel %vm477, %v2536, 0.0
    %v2601 = vsel %vm478, %v2537, 0.0
    %v2602 = vpack.c.bf16 %v2539, %v2538
    %v2603 = vpack.c.bf16 %v2541, %v2540
    %v2604 = vpack.c.bf16 %v2543, %v2542
    %v2605 = vpack.c.bf16 %v2545, %v2544
    %v2606 = vpack.c.bf16 %v2547, %v2546
    %v2607 = vpack.c.bf16 %v2549, %v2548
    %v2608 = vpack.c.bf16 %v2551, %v2550
    %v2609 = vpack.c.bf16 %v2553, %v2552
    %v2610 = vpack.c.bf16 %v2555, %v2554
    %v2611 = vpack.c.bf16 %v2557, %v2556
    %v2612 = vpack.c.bf16 %v2559, %v2558
    %v2613 = vpack.c.bf16 %v2561, %v2560
    %v2614 = vpack.c.bf16 %v2563, %v2562
    %v2615 = vpack.c.bf16 %v2565, %v2564
    %v2616 = vpack.c.bf16 %v2567, %v2566
    %v2617 = vpack.c.bf16 %v2569, %v2568
    %v2618 = vpack.c.bf16 %v2571, %v2570
    %v2619 = vpack.c.bf16 %v2573, %v2572
    %v2620 = vpack.c.bf16 %v2575, %v2574
    %v2621 = vpack.c.bf16 %v2577, %v2576
    %v2622 = vpack.c.bf16 %v2579, %v2578
    %v2623 = vpack.c.bf16 %v2581, %v2580
    %v2624 = vpack.c.bf16 %v2583, %v2582
    %v2625 = vpack.c.bf16 %v2585, %v2584
    %v2626 = vpack.c.bf16 %v2587, %v2586
    %v2627 = vpack.c.bf16 %v2589, %v2588
    %v2628 = vpack.c.bf16 %v2591, %v2590
    %v2629 = vpack.c.bf16 %v2593, %v2592
    %v2630 = vpack.c.bf16 %v2595, %v2594
    %v2631 = vpack.c.bf16 %v2597, %v2596
    %v2632 = vpack.c.bf16 %v2599, %v2598
    %v2633 = vpack.c.bf16 %v2601, %v2600
    %s2634 = scalar_lea.vmem %s1, 192
    %v2635 = vld [vmem:[%s2634] sm:$0xf]
    %v2636 = vld [vmem:[%s2634 + $0x4] sm:$0xf]
    %v2637 = vld [vmem:[%s2634 + $0x8] sm:$0xf]
    %v2638 = vld [vmem:[%s2634 + $0xc] sm:$0xf]
    %v2639 = vld [vmem:[%s2634 + $0x10] sm:$0xf]
    %v2640 = vld [vmem:[%s2634 + $0x14] sm:$0xf]
    %v2641 = vld [vmem:[%s2634 + $0x18] sm:$0xf]
    %v2642 = vld [vmem:[%s2634 + $0x1c] sm:$0xf]
    %v2643 = vld [vmem:[%s2634 + $0x20] sm:$0xf]
    %v2644 = vld [vmem:[%s2634 + $0x24] sm:$0xf]
    %v2645 = vld [vmem:[%s2634 + $0x28] sm:$0xf]
    %v2646 = vld [vmem:[%s2634 + $0x2c] sm:$0xf]
    %v2647 = vld [vmem:[%s2634 + $0x30] sm:$0xf]
    %v2648 = vld [vmem:[%s2634 + $0x34] sm:$0xf]
    %v2649 = vld [vmem:[%s2634 + $0x38] sm:$0xf]
    %v2650 = vld [vmem:[%s2634 + $0x3c] sm:$0xf]
    %v2667 = vunpack.c.l.b16 %v2635
    %v2668 = vunpack.c.l.b16 %v2636
    %v2669 = vunpack.c.l.b16 %v2637
    %v2670 = vunpack.c.l.b16 %v2638
    %v2671 = vunpack.c.l.b16 %v2639
    %v2672 = vunpack.c.l.b16 %v2640
    %v2673 = vunpack.c.l.b16 %v2641
    %v2674 = vunpack.c.l.b16 %v2642
    %v2675 = vunpack.c.l.b16 %v2643
    %v2676 = vunpack.c.l.b16 %v2644
    %v2677 = vunpack.c.l.b16 %v2645
    %v2678 = vunpack.c.l.b16 %v2646
    %v2679 = vunpack.c.l.b16 %v2647
    %v2680 = vunpack.c.l.b16 %v2648
    %v2681 = vunpack.c.l.b16 %v2649
    %v2682 = vunpack.c.l.b16 %v2650
    %v2683 = vpack.c.b16 %v2668, %v2667
    %v2684 = vpack.c.b16 %v2670, %v2669
    %v2685 = vpack.c.b16 %v2672, %v2671
    %v2686 = vpack.c.b16 %v2674, %v2673
    %v2687 = vpack.c.b16 %v2676, %v2675
    %v2688 = vpack.c.b16 %v2678, %v2677
    %v2689 = vpack.c.b16 %v2680, %v2679
    %v2690 = vpack.c.b16 %v2682, %v2681
    %2699 = vmatprep.subr.bf16.mxu0 0
    %2700 = vmatpush1.bf16.msra.mxu0 %v2690
    %2701 = vmatprep.subr.bf16.mxu0 0
    %2702 = vmatpush1.bf16.msra.mxu0 %v2689
    %2703 = vmatprep.subr.bf16.mxu0 0
    %2704 = vmatpush1.bf16.msra.mxu0 %v2688
    %2705 = vmatprep.subr.bf16.mxu0 0
    %2706 = vmatpush1.bf16.msra.mxu0 %v2687
    %2707 = vmatprep.subr.bf16.mxu0 0
    %2708 = vmatpush1.bf16.msra.mxu0 %v2686
    %2709 = vmatprep.subr.bf16.mxu0 0
    %2710 = vmatpush1.bf16.msra.mxu0 %v2685
    %2711 = vmatprep.subr.bf16.mxu0 0
    %2712 = vmatpush1.bf16.msra.mxu0 %v2684
    %2713 = vmatprep.subr.bf16.mxu0 0
    %2714 = vmatpush1.bf16.msra.mxu0 %v2683
    %2715 = vmatprep.subr.bf16.mxu0 0
    %2716 = vmatpush2.bf16.msra.mxu0 0
    %2717 = vmatprep.subr.bf16.mxu0 0
    %2718 = vmatpush2.bf16.msra.mxu0 0
    %2719 = vmatprep.subr.bf16.mxu0 0
    %2720 = vmatpush2.bf16.msra.mxu0 0
    %2721 = vmatprep.subr.bf16.mxu0 0
    %2722 = vmatpush2.bf16.msra.mxu0 0
    %2723 = vmatprep.subr.bf16.mxu0 0
    %2724 = vmatpush2.bf16.msra.mxu0 0
    %2725 = vmatprep.subr.bf16.mxu0 0
    %2726 = vmatpush2.bf16.msra.mxu0 0
    %2727 = vmatprep.subr.bf16.mxu0 0
    %2728 = vmatpush2.bf16.msra.mxu0 0
    %2729 = vmatprep.subr.bf16.mxu0 0
    %2730 = vmatpush2.bf16.msra.mxu0 0
    %2731 = vmatprep.mubr.bf16.mxu0 0
    %2732 = vmatmul.mubr.bf16.gmra.mxu0 %v2602
    %v2733 = vpop.f32.mrf.mxu0
    %v2734 = vadd.f32 0.0, %v2733
    %v2735 = vpop.f32.mrf.mxu0
    %v2736 = vpop.f32.mrf.mxu0
    %v2737 = vadd.f32 0.0, %v2736
    %v2738 = vpop.f32.mrf.mxu0
    %2739 = vmatprep.mubr.bf16.mxu0 0
    %2740 = vmatmul.mubr.bf16.gmra.mxu0 %v2603
    %v2741 = vpop.f32.mrf.mxu0
    %v2742 = vadd.f32 0.0, %v2741
    %v2743 = vpop.f32.mrf.mxu0
    %v2744 = vpop.f32.mrf.mxu0
    %v2745 = vadd.f32 0.0, %v2744
    %v2746 = vpop.f32.mrf.mxu0
    %2747 = vmatprep.mubr.bf16.mxu0 0
    %2748 = vmatmul.mubr.bf16.gmra.mxu0 %v2604
    %v2749 = vpop.f32.mrf.mxu0
    %v2750 = vadd.f32 0.0, %v2749
    %v2751 = vpop.f32.mrf.mxu0
    %v2752 = vpop.f32.mrf.mxu0
    %v2753 = vadd.f32 0.0, %v2752
    %v2754 = vpop.f32.mrf.mxu0
    %2755 = vmatprep.mubr.bf16.mxu0 0
    %2756 = vmatmul.mubr.bf16.gmra.mxu0 %v2605
    %v2757 = vpop.f32.mrf.mxu0
    %v2758 = vadd.f32 0.0, %v2757
    %v2759 = vpop.f32.mrf.mxu0
    %v2760 = vpop.f32.mrf.mxu0
    %v2761 = vadd.f32 0.0, %v2760
    %v2762 = vpop.f32.mrf.mxu0
    %2763 = vmatprep.mubr.bf16.mxu0 0
    %2764 = vmatmul.mubr.bf16.gmra.mxu0 %v2606
    %v2765 = vpop.f32.mrf.mxu0
    %v2766 = vadd.f32 0.0, %v2765
    %v2767 = vpop.f32.mrf.mxu0
    %v2768 = vpop.f32.mrf.mxu0
    %v2769 = vadd.f32 0.0, %v2768
    %v2770 = vpop.f32.mrf.mxu0
    %2771 = vmatprep.mubr.bf16.mxu0 0
    %2772 = vmatmul.mubr.bf16.gmra.mxu0 %v2607
    %v2773 = vpop.f32.mrf.mxu0
    %v2774 = vadd.f32 0.0, %v2773
    %v2775 = vpop.f32.mrf.mxu0
    %v2776 = vpop.f32.mrf.mxu0
    %v2777 = vadd.f32 0.0, %v2776
    %v2778 = vpop.f32.mrf.mxu0
    %2779 = vmatprep.mubr.bf16.mxu0 0
    %2780 = vmatmul.mubr.bf16.gmra.mxu0 %v2608
    %v2781 = vpop.f32.mrf.mxu0
    %v2782 = vadd.f32 0.0, %v2781
    %v2783 = vpop.f32.mrf.mxu0
    %v2784 = vpop.f32.mrf.mxu0
    %v2785 = vadd.f32 0.0, %v2784
    %v2786 = vpop.f32.mrf.mxu0
    %2787 = vmatprep.mubr.bf16.mxu0 0
    %2788 = vmatmul.mubr.bf16.gmra.mxu0 %v2609
    %v2789 = vpop.f32.mrf.mxu0
    %v2790 = vadd.f32 0.0, %v2789
    %v2791 = vpop.f32.mrf.mxu0
    %v2792 = vpop.f32.mrf.mxu0
    %v2793 = vadd.f32 0.0, %v2792
    %v2794 = vpop.f32.mrf.mxu0
    %2795 = vmatprep.mubr.bf16.mxu0 0
    %2796 = vmatmul.mubr.bf16.gmra.mxu0 %v2610
    %v2797 = vpop.f32.mrf.mxu0
    %v2798 = vadd.f32 0.0, %v2797
    %v2799 = vpop.f32.mrf.mxu0
    %v2800 = vpop.f32.mrf.mxu0
    %v2801 = vadd.f32 0.0, %v2800
    %v2802 = vpop.f32.mrf.mxu0
    %2803 = vmatprep.mubr.bf16.mxu0 0
    %2804 = vmatmul.mubr.bf16.gmra.mxu0 %v2611
    %v2805 = vpop.f32.mrf.mxu0
    %v2806 = vadd.f32 0.0, %v2805
    %v2807 = vpop.f32.mrf.mxu0
    %v2808 = vpop.f32.mrf.mxu0
    %v2809 = vadd.f32 0.0, %v2808
    %v2810 = vpop.f32.mrf.mxu0
    %2811 = vmatprep.mubr.bf16.mxu0 0
    %2812 = vmatmul.mubr.bf16.gmra.mxu0 %v2612
    %v2813 = vpop.f32.mrf.mxu0
    %v2814 = vadd.f32 0.0, %v2813
    %v2815 = vpop.f32.mrf.mxu0
    %v2816 = vpop.f32.mrf.mxu0
    %v2817 = vadd.f32 0.0, %v2816
    %v2818 = vpop.f32.mrf.mxu0
    %2819 = vmatprep.mubr.bf16.mxu0 0
    %2820 = vmatmul.mubr.bf16.gmra.mxu0 %v2613
    %v2821 = vpop.f32.mrf.mxu0
    %v2822 = vadd.f32 0.0, %v2821
    %v2823 = vpop.f32.mrf.mxu0
    %v2824 = vpop.f32.mrf.mxu0
    %v2825 = vadd.f32 0.0, %v2824
    %v2826 = vpop.f32.mrf.mxu0
    %2827 = vmatprep.mubr.bf16.mxu0 0
    %2828 = vmatmul.mubr.bf16.gmra.mxu0 %v2614
    %v2829 = vpop.f32.mrf.mxu0
    %v2830 = vadd.f32 0.0, %v2829
    %v2831 = vpop.f32.mrf.mxu0
    %v2832 = vpop.f32.mrf.mxu0
    %v2833 = vadd.f32 0.0, %v2832
    %v2834 = vpop.f32.mrf.mxu0
    %2835 = vmatprep.mubr.bf16.mxu0 0
    %2836 = vmatmul.mubr.bf16.gmra.mxu0 %v2615
    %v2837 = vpop.f32.mrf.mxu0
    %v2838 = vadd.f32 0.0, %v2837
    %v2839 = vpop.f32.mrf.mxu0
    %v2840 = vpop.f32.mrf.mxu0
    %v2841 = vadd.f32 0.0, %v2840
    %v2842 = vpop.f32.mrf.mxu0
    %2843 = vmatprep.mubr.bf16.mxu0 0
    %2844 = vmatmul.mubr.bf16.gmra.mxu0 %v2616
    %v2845 = vpop.f32.mrf.mxu0
    %v2846 = vadd.f32 0.0, %v2845
    %v2847 = vpop.f32.mrf.mxu0
    %v2848 = vpop.f32.mrf.mxu0
    %v2849 = vadd.f32 0.0, %v2848
    %v2850 = vpop.f32.mrf.mxu0
    %2851 = vmatprep.mubr.bf16.mxu0 0
    %2852 = vmatmul.mubr.bf16.gmra.mxu0 %v2617
    %v2853 = vpop.f32.mrf.mxu0
    %v2854 = vadd.f32 0.0, %v2853
    %v2855 = vpop.f32.mrf.mxu0
    %v2856 = vpop.f32.mrf.mxu0
    %v2857 = vadd.f32 0.0, %v2856
    %v2858 = vpop.f32.mrf.mxu0
    %2859 = vmatprep.mubr.bf16.mxu0 0
    %2860 = vmatmul.mubr.bf16.gmra.mxu0 %v2618
    %v2861 = vpop.f32.mrf.mxu0
    %v2862 = vadd.f32 0.0, %v2861
    %v2863 = vpop.f32.mrf.mxu0
    %v2864 = vpop.f32.mrf.mxu0
    %v2865 = vadd.f32 0.0, %v2864
    %v2866 = vpop.f32.mrf.mxu0
    %2867 = vmatprep.mubr.bf16.mxu0 0
    %2868 = vmatmul.mubr.bf16.gmra.mxu0 %v2619
    %v2869 = vpop.f32.mrf.mxu0
    %v2870 = vadd.f32 0.0, %v2869
    %v2871 = vpop.f32.mrf.mxu0
    %v2872 = vpop.f32.mrf.mxu0
    %v2873 = vadd.f32 0.0, %v2872
    %v2874 = vpop.f32.mrf.mxu0
    %2875 = vmatprep.mubr.bf16.mxu0 0
    %2876 = vmatmul.mubr.bf16.gmra.mxu0 %v2620
    %v2877 = vpop.f32.mrf.mxu0
    %v2878 = vadd.f32 0.0, %v2877
    %v2879 = vpop.f32.mrf.mxu0
    %v2880 = vpop.f32.mrf.mxu0
    %v2881 = vadd.f32 0.0, %v2880
    %v2882 = vpop.f32.mrf.mxu0
    %2883 = vmatprep.mubr.bf16.mxu0 0
    %2884 = vmatmul.mubr.bf16.gmra.mxu0 %v2621
    %v2885 = vpop.f32.mrf.mxu0
    %v2886 = vadd.f32 0.0, %v2885
    %v2887 = vpop.f32.mrf.mxu0
    %v2888 = vpop.f32.mrf.mxu0
    %v2889 = vadd.f32 0.0, %v2888
    %v2890 = vpop.f32.mrf.mxu0
    %2891 = vmatprep.mubr.bf16.mxu0 0
    %2892 = vmatmul.mubr.bf16.gmra.mxu0 %v2622
    %v2893 = vpop.f32.mrf.mxu0
    %v2894 = vadd.f32 0.0, %v2893
    %v2895 = vpop.f32.mrf.mxu0
    %v2896 = vpop.f32.mrf.mxu0
    %v2897 = vadd.f32 0.0, %v2896
    %v2898 = vpop.f32.mrf.mxu0
    %2899 = vmatprep.mubr.bf16.mxu0 0
    %2900 = vmatmul.mubr.bf16.gmra.mxu0 %v2623
    %v2901 = vpop.f32.mrf.mxu0
    %v2902 = vadd.f32 0.0, %v2901
    %v2903 = vpop.f32.mrf.mxu0
    %v2904 = vpop.f32.mrf.mxu0
    %v2905 = vadd.f32 0.0, %v2904
    %v2906 = vpop.f32.mrf.mxu0
    %2907 = vmatprep.mubr.bf16.mxu0 0
    %2908 = vmatmul.mubr.bf16.gmra.mxu0 %v2624
    %v2909 = vpop.f32.mrf.mxu0
    %v2910 = vadd.f32 0.0, %v2909
    %v2911 = vpop.f32.mrf.mxu0
    %v2912 = vpop.f32.mrf.mxu0
    %v2913 = vadd.f32 0.0, %v2912
    %v2914 = vpop.f32.mrf.mxu0
    %2915 = vmatprep.mubr.bf16.mxu0 0
    %2916 = vmatmul.mubr.bf16.gmra.mxu0 %v2625
    %v2917 = vpop.f32.mrf.mxu0
    %v2918 = vadd.f32 0.0, %v2917
    %v2919 = vpop.f32.mrf.mxu0
    %v2920 = vpop.f32.mrf.mxu0
    %v2921 = vadd.f32 0.0, %v2920
    %v2922 = vpop.f32.mrf.mxu0
    %2923 = vmatprep.mubr.bf16.mxu0 0
    %2924 = vmatmul.mubr.bf16.gmra.mxu0 %v2626
    %v2925 = vpop.f32.mrf.mxu0
    %v2926 = vadd.f32 0.0, %v2925
    %v2927 = vpop.f32.mrf.mxu0
    %v2928 = vpop.f32.mrf.mxu0
    %v2929 = vadd.f32 0.0, %v2928
    %v2930 = vpop.f32.mrf.mxu0
    %2931 = vmatprep.mubr.bf16.mxu0 0
    %2932 = vmatmul.mubr.bf16.gmra.mxu0 %v2627
    %v2933 = vpop.f32.mrf.mxu0
    %v2934 = vadd.f32 0.0, %v2933
    %v2935 = vpop.f32.mrf.mxu0
    %v2936 = vpop.f32.mrf.mxu0
    %v2937 = vadd.f32 0.0, %v2936
    %v2938 = vpop.f32.mrf.mxu0
    %2939 = vmatprep.mubr.bf16.mxu0 0
    %2940 = vmatmul.mubr.bf16.gmra.mxu0 %v2628
    %v2941 = vpop.f32.mrf.mxu0
    %v2942 = vadd.f32 0.0, %v2941
    %v2943 = vpop.f32.mrf.mxu0
    %v2944 = vpop.f32.mrf.mxu0
    %v2945 = vadd.f32 0.0, %v2944
    %v2946 = vpop.f32.mrf.mxu0
    %2947 = vmatprep.mubr.bf16.mxu0 0
    %2948 = vmatmul.mubr.bf16.gmra.mxu0 %v2629
    %v2949 = vpop.f32.mrf.mxu0
    %v2950 = vadd.f32 0.0, %v2949
    %v2951 = vpop.f32.mrf.mxu0
    %v2952 = vpop.f32.mrf.mxu0
    %v2953 = vadd.f32 0.0, %v2952
    %v2954 = vpop.f32.mrf.mxu0
    %2955 = vmatprep.mubr.bf16.mxu0 0
    %2956 = vmatmul.mubr.bf16.gmra.mxu0 %v2630
    %v2957 = vpop.f32.mrf.mxu0
    %v2958 = vadd.f32 0.0, %v2957
    %v2959 = vpop.f32.mrf.mxu0
    %v2960 = vpop.f32.mrf.mxu0
    %v2961 = vadd.f32 0.0, %v2960
    %v2962 = vpop.f32.mrf.mxu0
    %2963 = vmatprep.mubr.bf16.mxu0 0
    %2964 = vmatmul.mubr.bf16.gmra.mxu0 %v2631
    %v2965 = vpop.f32.mrf.mxu0
    %v2966 = vadd.f32 0.0, %v2965
    %v2967 = vpop.f32.mrf.mxu0
    %v2968 = vpop.f32.mrf.mxu0
    %v2969 = vadd.f32 0.0, %v2968
    %v2970 = vpop.f32.mrf.mxu0
    %2971 = vmatprep.mubr.bf16.mxu0 0
    %2972 = vmatmul.mubr.bf16.gmra.mxu0 %v2632
    %v2973 = vpop.f32.mrf.mxu0
    %v2974 = vadd.f32 0.0, %v2973
    %v2975 = vpop.f32.mrf.mxu0
    %v2976 = vpop.f32.mrf.mxu0
    %v2977 = vadd.f32 0.0, %v2976
    %v2978 = vpop.f32.mrf.mxu0
    %2979 = vmatprep.mubr.bf16.mxu0 0
    %2980 = vmatmul.mubr.bf16.gmra.mxu0 %v2633
    %v2981 = vpop.f32.mrf.mxu0
    %v2982 = vadd.f32 0.0, %v2981
    %v2983 = vpop.f32.mrf.mxu0
    %v2984 = vpop.f32.mrf.mxu0
    %v2985 = vadd.f32 0.0, %v2984
    %v2986 = vpop.f32.mrf.mxu0
    %2987 = vdwg.mxu0
    %v2988 = vadd.f32 %v2410, %v2734
    %v2989 = vadd.f32 %v2411, %v2737
    %v2990 = vadd.f32 %v2412, %v2742
    %v2991 = vadd.f32 %v2413, %v2745
    %v2992 = vadd.f32 %v2414, %v2750
    %v2993 = vadd.f32 %v2415, %v2753
    %v2994 = vadd.f32 %v2416, %v2758
    %v2995 = vadd.f32 %v2417, %v2761
    %v2996 = vadd.f32 %v2418, %v2766
    %v2997 = vadd.f32 %v2419, %v2769
    %v2998 = vadd.f32 %v2420, %v2774
    %v2999 = vadd.f32 %v2421, %v2777
    %v3000 = vadd.f32 %v2422, %v2782
    %v3001 = vadd.f32 %v2423, %v2785
    %v3002 = vadd.f32 %v2424, %v2790
    %v3003 = vadd.f32 %v2425, %v2793
    %v3004 = vadd.f32 %v2426, %v2798
    %v3005 = vadd.f32 %v2427, %v2801
    %v3006 = vadd.f32 %v2428, %v2806
    %v3007 = vadd.f32 %v2429, %v2809
    %v3008 = vadd.f32 %v2430, %v2814
    %v3009 = vadd.f32 %v2431, %v2817
    %v3010 = vadd.f32 %v2432, %v2822
    %v3011 = vadd.f32 %v2433, %v2825
    %v3012 = vadd.f32 %v2434, %v2830
    %v3013 = vadd.f32 %v2435, %v2833
    %v3014 = vadd.f32 %v2436, %v2838
    %v3015 = vadd.f32 %v2437, %v2841
    %v3016 = vadd.f32 %v2438, %v2846
    %v3017 = vadd.f32 %v2439, %v2849
    %v3018 = vadd.f32 %v2440, %v2854
    %v3019 = vadd.f32 %v2441, %v2857
    %v3020 = vadd.f32 %v2442, %v2862
    %v3021 = vadd.f32 %v2443, %v2865
    %v3022 = vadd.f32 %v2444, %v2870
    %v3023 = vadd.f32 %v2445, %v2873
    %v3024 = vadd.f32 %v2446, %v2878
    %v3025 = vadd.f32 %v2447, %v2881
    %v3026 = vadd.f32 %v2448, %v2886
    %v3027 = vadd.f32 %v2449, %v2889
    %v3028 = vadd.f32 %v2450, %v2894
    %v3029 = vadd.f32 %v2451, %v2897
    %v3030 = vadd.f32 %v2452, %v2902
    %v3031 = vadd.f32 %v2453, %v2905
    %v3032 = vadd.f32 %v2454, %v2910
    %v3033 = vadd.f32 %v2455, %v2913
    %v3034 = vadd.f32 %v2456, %v2918
    %v3035 = vadd.f32 %v2457, %v2921
    %v3036 = vadd.f32 %v2458, %v2926
    %v3037 = vadd.f32 %v2459, %v2929
    %v3038 = vadd.f32 %v2460, %v2934
    %v3039 = vadd.f32 %v2461, %v2937
    %v3040 = vadd.f32 %v2462, %v2942
    %v3041 = vadd.f32 %v2463, %v2945
    %v3042 = vadd.f32 %v2464, %v2950
    %v3043 = vadd.f32 %v2465, %v2953
    %v3044 = vadd.f32 %v2466, %v2958
    %v3045 = vadd.f32 %v2467, %v2961
    %v3046 = vadd.f32 %v2468, %v2966
    %v3047 = vadd.f32 %v2469, %v2969
    %v3048 = vadd.f32 %v2470, %v2974
    %v3049 = vadd.f32 %v2471, %v2977
    %v3050 = vadd.f32 %v2472, %v2982
    %v3051 = vadd.f32 %v2473, %v2985
    %v3052 = vld [vmem:[#allocation2 + $0x18] sm:$0xff]
    %v3053 = vld [vmem:[#allocation2 + $0x20] sm:$0xff]
    %v3054 = vld [vmem:[#allocation2 + $0x28] sm:$0xff]
    %v3055 = vld [vmem:[#allocation2 + $0x30] sm:$0xff]
    %v3056 = vld [vmem:[#allocation2 + $0x38] sm:$0xff]
    %v3057 = vld [vmem:[#allocation2 + $0x40] sm:$0xff]
    %v3058 = vld [vmem:[#allocation2 + $0x48] sm:$0xff]
    %v3059 = vld [vmem:[#allocation2 + $0x50] sm:$0xff]
    %v3060 = vld [vmem:[#allocation2 + $0x58] sm:$0xff]
    %v3061 = vld [vmem:[#allocation2 + $0x60] sm:$0xff]
    %v3062 = vld [vmem:[#allocation2 + $0x68] sm:$0xff]
    %v3063 = vld [vmem:[#allocation2 + $0x70] sm:$0xff]
    %v3064 = vld [vmem:[#allocation2 + $0x78] sm:$0xff]
    %v3065 = vld [vmem:[#allocation2 + $0x80] sm:$0xff]
    %v3066 = vld [vmem:[#allocation2 + $0x88] sm:$0xff]
    %v3067 = vld [vmem:[#allocation2 + $0x90] sm:$0xff]
    %v3068 = vld [vmem:[#allocation2 + $0x98] sm:$0xff]
    %v3069 = vld [vmem:[#allocation2 + $0xa0] sm:$0xff]
    %v3070 = vld [vmem:[#allocation2 + $0xa8] sm:$0xff]
    %v3071 = vld [vmem:[#allocation2 + $0xb0] sm:$0xff]
    %v3072 = vld [vmem:[#allocation2 + $0xb8] sm:$0xff]
    %v3073 = vld [vmem:[#allocation2 + $0xc0] sm:$0xff]
    %v3074 = vld [vmem:[#allocation2 + $0xc8] sm:$0xff]
    %v3075 = vld [vmem:[#allocation2 + $0xd0] sm:$0xff]
    %v3076 = vld [vmem:[#allocation2 + $0xd8] sm:$0xff]
    %v3077 = vld [vmem:[#allocation2 + $0xe0] sm:$0xff]
    %v3078 = vld [vmem:[#allocation2 + $0xe8] sm:$0xff]
    %v3079 = vld [vmem:[#allocation2 + $0xf0] sm:$0xff]
    %v3080 = vld [vmem:[#allocation2 + $0xf8] sm:$0xff]
    %v3081 = vld [vmem:[#allocation2 + $0x100] sm:$0xff]
    %v3082 = vld [vmem:[#allocation2 + $0x108] sm:$0xff]
    %v3083 = vld [vmem:[#allocation2 + $0x110] sm:$0xff]
    %v3084 = vld [vmem:[#allocation2 + $0x118] sm:$0xff]
    %v3085 = vld [vmem:[#allocation2 + $0x120] sm:$0xff]
    %v3086 = vld [vmem:[#allocation2 + $0x128] sm:$0xff]
    %v3087 = vld [vmem:[#allocation2 + $0x130] sm:$0xff]
    %v3088 = vld [vmem:[#allocation2 + $0x138] sm:$0xff]
    %v3089 = vld [vmem:[#allocation2 + $0x140] sm:$0xff]
    %v3090 = vld [vmem:[#allocation2 + $0x148] sm:$0xff]
    %v3091 = vld [vmem:[#allocation2 + $0x150] sm:$0xff]
    %v3092 = vld [vmem:[#allocation2 + $0x158] sm:$0xff]
    %v3093 = vld [vmem:[#allocation2 + $0x160] sm:$0xff]
    %v3094 = vld [vmem:[#allocation2 + $0x168] sm:$0xff]
    %v3095 = vld [vmem:[#allocation2 + $0x170] sm:$0xff]
    %v3096 = vld [vmem:[#allocation2 + $0x178] sm:$0xff]
    %v3097 = vld [vmem:[#allocation2 + $0x180] sm:$0xff]
    %v3098 = vld [vmem:[#allocation2 + $0x188] sm:$0xff]
    %v3099 = vld [vmem:[#allocation2 + $0x190] sm:$0xff]
    %v3100 = vld [vmem:[#allocation2 + $0x198] sm:$0xff]
    %v3101 = vld [vmem:[#allocation2 + $0x1a0] sm:$0xff]
    %v3102 = vld [vmem:[#allocation2 + $0x1a8] sm:$0xff]
    %v3103 = vld [vmem:[#allocation2 + $0x1b0] sm:$0xff]
    %v3104 = vld [vmem:[#allocation2 + $0x1b8] sm:$0xff]
    %v3105 = vld [vmem:[#allocation2 + $0x1c0] sm:$0xff]
    %v3106 = vld [vmem:[#allocation2 + $0x1c8] sm:$0xff]
    %v3107 = vld [vmem:[#allocation2 + $0x1d0] sm:$0xff]
    %v3108 = vld [vmem:[#allocation2 + $0x1d8] sm:$0xff]
    %v3109 = vld [vmem:[#allocation2 + $0x1e0] sm:$0xff]
    %v3110 = vld [vmem:[#allocation2 + $0x1e8] sm:$0xff]
    %v3111 = vld [vmem:[#allocation2 + $0x1f0] sm:$0xff]
    %v3112 = vld [vmem:[#allocation2 + $0x1f8] sm:$0xff]
    %v3113 = vld [vmem:[#allocation2 + $0x200] sm:$0xff]
    %v3114 = vld [vmem:[#allocation2 + $0x208] sm:$0xff]
    %v3115 = vld [vmem:[#allocation2 + $0x210] sm:$0xff]
    %v3116 = vpack.c.bf16 %v3053, %v3052
    %v3117 = vpack.c.bf16 %v3055, %v3054
    %v3118 = vpack.c.bf16 %v3057, %v3056
    %v3119 = vpack.c.bf16 %v3059, %v3058
    %v3120 = vpack.c.bf16 %v3061, %v3060
    %v3121 = vpack.c.bf16 %v3063, %v3062
    %v3122 = vpack.c.bf16 %v3065, %v3064
    %v3123 = vpack.c.bf16 %v3067, %v3066
    %v3124 = vpack.c.bf16 %v3069, %v3068
    %v3125 = vpack.c.bf16 %v3071, %v3070
    %v3126 = vpack.c.bf16 %v3073, %v3072
    %v3127 = vpack.c.bf16 %v3075, %v3074
    %v3128 = vpack.c.bf16 %v3077, %v3076
    %v3129 = vpack.c.bf16 %v3079, %v3078
    %v3130 = vpack.c.bf16 %v3081, %v3080
    %v3131 = vpack.c.bf16 %v3083, %v3082
    %v3132 = vpack.c.bf16 %v3085, %v3084
    %v3133 = vpack.c.bf16 %v3087, %v3086
    %v3134 = vpack.c.bf16 %v3089, %v3088
    %v3135 = vpack.c.bf16 %v3091, %v3090
    %v3136 = vpack.c.bf16 %v3093, %v3092
    %v3137 = vpack.c.bf16 %v3095, %v3094
    %v3138 = vpack.c.bf16 %v3097, %v3096
    %v3139 = vpack.c.bf16 %v3099, %v3098
    %v3140 = vpack.c.bf16 %v3101, %v3100
    %v3141 = vpack.c.bf16 %v3103, %v3102
    %v3142 = vpack.c.bf16 %v3105, %v3104
    %v3143 = vpack.c.bf16 %v3107, %v3106
    %v3144 = vpack.c.bf16 %v3109, %v3108
    %v3145 = vpack.c.bf16 %v3111, %v3110
    %v3146 = vpack.c.bf16 %v3113, %v3112
    %v3147 = vpack.c.bf16 %v3115, %v3114
    %s3148 = scalar_lea.vmem %s1, 256
    %v3149 = vld [vmem:[%s3148] sm:$0xf]
    %v3150 = vld [vmem:[%s3148 + $0x4] sm:$0xf]
    %v3151 = vld [vmem:[%s3148 + $0x8] sm:$0xf]
    %v3152 = vld [vmem:[%s3148 + $0xc] sm:$0xf]
    %v3153 = vld [vmem:[%s3148 + $0x10] sm:$0xf]
    %v3154 = vld [vmem:[%s3148 + $0x14] sm:$0xf]
    %v3155 = vld [vmem:[%s3148 + $0x18] sm:$0xf]
    %v3156 = vld [vmem:[%s3148 + $0x1c] sm:$0xf]
    %v3157 = vld [vmem:[%s3148 + $0x20] sm:$0xf]
    %v3158 = vld [vmem:[%s3148 + $0x24] sm:$0xf]
    %v3159 = vld [vmem:[%s3148 + $0x28] sm:$0xf]
    %v3160 = vld [vmem:[%s3148 + $0x2c] sm:$0xf]
    %v3161 = vld [vmem:[%s3148 + $0x30] sm:$0xf]
    %v3162 = vld [vmem:[%s3148 + $0x34] sm:$0xf]
    %v3163 = vld [vmem:[%s3148 + $0x38] sm:$0xf]
    %v3164 = vld [vmem:[%s3148 + $0x3c] sm:$0xf]
    %v3181 = vunpack.c.l.b16 %v3149
    %v3182 = vunpack.c.l.b16 %v3150
    %v3183 = vunpack.c.l.b16 %v3151
    %v3184 = vunpack.c.l.b16 %v3152
    %v3185 = vunpack.c.l.b16 %v3153
    %v3186 = vunpack.c.l.b16 %v3154
    %v3187 = vunpack.c.l.b16 %v3155
    %v3188 = vunpack.c.l.b16 %v3156
    %v3189 = vunpack.c.l.b16 %v3157
    %v3190 = vunpack.c.l.b16 %v3158
    %v3191 = vunpack.c.l.b16 %v3159
    %v3192 = vunpack.c.l.b16 %v3160
    %v3193 = vunpack.c.l.b16 %v3161
    %v3194 = vunpack.c.l.b16 %v3162
    %v3195 = vunpack.c.l.b16 %v3163
    %v3196 = vunpack.c.l.b16 %v3164
    %v3197 = vpack.c.b16 %v3182, %v3181
    %v3198 = vpack.c.b16 %v3184, %v3183
    %v3199 = vpack.c.b16 %v3186, %v3185
    %v3200 = vpack.c.b16 %v3188, %v3187
    %v3201 = vpack.c.b16 %v3190, %v3189
    %v3202 = vpack.c.b16 %v3192, %v3191
    %v3203 = vpack.c.b16 %v3194, %v3193
    %v3204 = vpack.c.b16 %v3196, %v3195
    %3213 = vmatprep.subr.bf16.mxu0 0
    %3214 = vmatpush1.bf16.msra.mxu0 %v3204
    %3215 = vmatprep.subr.bf16.mxu0 0
    %3216 = vmatpush1.bf16.msra.mxu0 %v3203
    %3217 = vmatprep.subr.bf16.mxu0 0
    %3218 = vmatpush1.bf16.msra.mxu0 %v3202
    %3219 = vmatprep.subr.bf16.mxu0 0
    %3220 = vmatpush1.bf16.msra.mxu0 %v3201
    %3221 = vmatprep.subr.bf16.mxu0 0
    %3222 = vmatpush1.bf16.msra.mxu0 %v3200
    %3223 = vmatprep.subr.bf16.mxu0 0
    %3224 = vmatpush1.bf16.msra.mxu0 %v3199
    %3225 = vmatprep.subr.bf16.mxu0 0
    %3226 = vmatpush1.bf16.msra.mxu0 %v3198
    %3227 = vmatprep.subr.bf16.mxu0 0
    %3228 = vmatpush1.bf16.msra.mxu0 %v3197
    %3229 = vmatprep.subr.bf16.mxu0 0
    %3230 = vmatpush2.bf16.msra.mxu0 0
    %3231 = vmatprep.subr.bf16.mxu0 0
    %3232 = vmatpush2.bf16.msra.mxu0 0
    %3233 = vmatprep.subr.bf16.mxu0 0
    %3234 = vmatpush2.bf16.msra.mxu0 0
    %3235 = vmatprep.subr.bf16.mxu0 0
    %3236 = vmatpush2.bf16.msra.mxu0 0
    %3237 = vmatprep.subr.bf16.mxu0 0
    %3238 = vmatpush2.bf16.msra.mxu0 0
    %3239 = vmatprep.subr.bf16.mxu0 0
    %3240 = vmatpush2.bf16.msra.mxu0 0
    %3241 = vmatprep.subr.bf16.mxu0 0
    %3242 = vmatpush2.bf16.msra.mxu0 0
    %3243 = vmatprep.subr.bf16.mxu0 0
    %3244 = vmatpush2.bf16.msra.mxu0 0
    %3245 = vmatprep.mubr.bf16.mxu0 0
    %3246 = vmatmul.mubr.bf16.gmra.mxu0 %v3116
    %v3247 = vpop.f32.mrf.mxu0
    %v3248 = vadd.f32 0.0, %v3247
    %v3249 = vpop.f32.mrf.mxu0
    %v3250 = vpop.f32.mrf.mxu0
    %v3251 = vadd.f32 0.0, %v3250
    %v3252 = vpop.f32.mrf.mxu0
    %3253 = vmatprep.mubr.bf16.mxu0 0
    %3254 = vmatmul.mubr.bf16.gmra.mxu0 %v3117
    %v3255 = vpop.f32.mrf.mxu0
    %v3256 = vadd.f32 0.0, %v3255
    %v3257 = vpop.f32.mrf.mxu0
    %v3258 = vpop.f32.mrf.mxu0
    %v3259 = vadd.f32 0.0, %v3258
    %v3260 = vpop.f32.mrf.mxu0
    %3261 = vmatprep.mubr.bf16.mxu0 0
    %3262 = vmatmul.mubr.bf16.gmra.mxu0 %v3118
    %v3263 = vpop.f32.mrf.mxu0
    %v3264 = vadd.f32 0.0, %v3263
    %v3265 = vpop.f32.mrf.mxu0
    %v3266 = vpop.f32.mrf.mxu0
    %v3267 = vadd.f32 0.0, %v3266
    %v3268 = vpop.f32.mrf.mxu0
    %3269 = vmatprep.mubr.bf16.mxu0 0
    %3270 = vmatmul.mubr.bf16.gmra.mxu0 %v3119
    %v3271 = vpop.f32.mrf.mxu0
    %v3272 = vadd.f32 0.0, %v3271
    %v3273 = vpop.f32.mrf.mxu0
    %v3274 = vpop.f32.mrf.mxu0
    %v3275 = vadd.f32 0.0, %v3274
    %v3276 = vpop.f32.mrf.mxu0
    %3277 = vmatprep.mubr.bf16.mxu0 0
    %3278 = vmatmul.mubr.bf16.gmra.mxu0 %v3120
    %v3279 = vpop.f32.mrf.mxu0
    %v3280 = vadd.f32 0.0, %v3279
    %v3281 = vpop.f32.mrf.mxu0
    %v3282 = vpop.f32.mrf.mxu0
    %v3283 = vadd.f32 0.0, %v3282
    %v3284 = vpop.f32.mrf.mxu0
    %3285 = vmatprep.mubr.bf16.mxu0 0
    %3286 = vmatmul.mubr.bf16.gmra.mxu0 %v3121
    %v3287 = vpop.f32.mrf.mxu0
    %v3288 = vadd.f32 0.0, %v3287
    %v3289 = vpop.f32.mrf.mxu0
    %v3290 = vpop.f32.mrf.mxu0
    %v3291 = vadd.f32 0.0, %v3290
    %v3292 = vpop.f32.mrf.mxu0
    %3293 = vmatprep.mubr.bf16.mxu0 0
    %3294 = vmatmul.mubr.bf16.gmra.mxu0 %v3122
    %v3295 = vpop.f32.mrf.mxu0
    %v3296 = vadd.f32 0.0, %v3295
    %v3297 = vpop.f32.mrf.mxu0
    %v3298 = vpop.f32.mrf.mxu0
    %v3299 = vadd.f32 0.0, %v3298
    %v3300 = vpop.f32.mrf.mxu0
    %3301 = vmatprep.mubr.bf16.mxu0 0
    %3302 = vmatmul.mubr.bf16.gmra.mxu0 %v3123
    %v3303 = vpop.f32.mrf.mxu0
    %v3304 = vadd.f32 0.0, %v3303
    %v3305 = vpop.f32.mrf.mxu0
    %v3306 = vpop.f32.mrf.mxu0
    %v3307 = vadd.f32 0.0, %v3306
    %v3308 = vpop.f32.mrf.mxu0
    %3309 = vmatprep.mubr.bf16.mxu0 0
    %3310 = vmatmul.mubr.bf16.gmra.mxu0 %v3124
    %v3311 = vpop.f32.mrf.mxu0
    %v3312 = vadd.f32 0.0, %v3311
    %v3313 = vpop.f32.mrf.mxu0
    %v3314 = vpop.f32.mrf.mxu0
    %v3315 = vadd.f32 0.0, %v3314
    %v3316 = vpop.f32.mrf.mxu0
    %3317 = vmatprep.mubr.bf16.mxu0 0
    %3318 = vmatmul.mubr.bf16.gmra.mxu0 %v3125
    %v3319 = vpop.f32.mrf.mxu0
    %v3320 = vadd.f32 0.0, %v3319
    %v3321 = vpop.f32.mrf.mxu0
    %v3322 = vpop.f32.mrf.mxu0
    %v3323 = vadd.f32 0.0, %v3322
    %v3324 = vpop.f32.mrf.mxu0
    %3325 = vmatprep.mubr.bf16.mxu0 0
    %3326 = vmatmul.mubr.bf16.gmra.mxu0 %v3126
    %v3327 = vpop.f32.mrf.mxu0
    %v3328 = vadd.f32 0.0, %v3327
    %v3329 = vpop.f32.mrf.mxu0
    %v3330 = vpop.f32.mrf.mxu0
    %v3331 = vadd.f32 0.0, %v3330
    %v3332 = vpop.f32.mrf.mxu0
    %3333 = vmatprep.mubr.bf16.mxu0 0
    %3334 = vmatmul.mubr.bf16.gmra.mxu0 %v3127
    %v3335 = vpop.f32.mrf.mxu0
    %v3336 = vadd.f32 0.0, %v3335
    %v3337 = vpop.f32.mrf.mxu0
    %v3338 = vpop.f32.mrf.mxu0
    %v3339 = vadd.f32 0.0, %v3338
    %v3340 = vpop.f32.mrf.mxu0
    %3341 = vmatprep.mubr.bf16.mxu0 0
    %3342 = vmatmul.mubr.bf16.gmra.mxu0 %v3128
    %v3343 = vpop.f32.mrf.mxu0
    %v3344 = vadd.f32 0.0, %v3343
    %v3345 = vpop.f32.mrf.mxu0
    %v3346 = vpop.f32.mrf.mxu0
    %v3347 = vadd.f32 0.0, %v3346
    %v3348 = vpop.f32.mrf.mxu0
    %3349 = vmatprep.mubr.bf16.mxu0 0
    %3350 = vmatmul.mubr.bf16.gmra.mxu0 %v3129
    %v3351 = vpop.f32.mrf.mxu0
    %v3352 = vadd.f32 0.0, %v3351
    %v3353 = vpop.f32.mrf.mxu0
    %v3354 = vpop.f32.mrf.mxu0
    %v3355 = vadd.f32 0.0, %v3354
    %v3356 = vpop.f32.mrf.mxu0
    %3357 = vmatprep.mubr.bf16.mxu0 0
    %3358 = vmatmul.mubr.bf16.gmra.mxu0 %v3130
    %v3359 = vpop.f32.mrf.mxu0
    %v3360 = vadd.f32 0.0, %v3359
    %v3361 = vpop.f32.mrf.mxu0
    %v3362 = vpop.f32.mrf.mxu0
    %v3363 = vadd.f32 0.0, %v3362
    %v3364 = vpop.f32.mrf.mxu0
    %3365 = vmatprep.mubr.bf16.mxu0 0
    %3366 = vmatmul.mubr.bf16.gmra.mxu0 %v3131
    %v3367 = vpop.f32.mrf.mxu0
    %v3368 = vadd.f32 0.0, %v3367
    %v3369 = vpop.f32.mrf.mxu0
    %v3370 = vpop.f32.mrf.mxu0
    %v3371 = vadd.f32 0.0, %v3370
    %v3372 = vpop.f32.mrf.mxu0
    %3373 = vmatprep.mubr.bf16.mxu0 0
    %3374 = vmatmul.mubr.bf16.gmra.mxu0 %v3132
    %v3375 = vpop.f32.mrf.mxu0
    %v3376 = vadd.f32 0.0, %v3375
    %v3377 = vpop.f32.mrf.mxu0
    %v3378 = vpop.f32.mrf.mxu0
    %v3379 = vadd.f32 0.0, %v3378
    %v3380 = vpop.f32.mrf.mxu0
    %3381 = vmatprep.mubr.bf16.mxu0 0
    %3382 = vmatmul.mubr.bf16.gmra.mxu0 %v3133
    %v3383 = vpop.f32.mrf.mxu0
    %v3384 = vadd.f32 0.0, %v3383
    %v3385 = vpop.f32.mrf.mxu0
    %v3386 = vpop.f32.mrf.mxu0
    %v3387 = vadd.f32 0.0, %v3386
    %v3388 = vpop.f32.mrf.mxu0
    %3389 = vmatprep.mubr.bf16.mxu0 0
    %3390 = vmatmul.mubr.bf16.gmra.mxu0 %v3134
    %v3391 = vpop.f32.mrf.mxu0
    %v3392 = vadd.f32 0.0, %v3391
    %v3393 = vpop.f32.mrf.mxu0
    %v3394 = vpop.f32.mrf.mxu0
    %v3395 = vadd.f32 0.0, %v3394
    %v3396 = vpop.f32.mrf.mxu0
    %3397 = vmatprep.mubr.bf16.mxu0 0
    %3398 = vmatmul.mubr.bf16.gmra.mxu0 %v3135
    %v3399 = vpop.f32.mrf.mxu0
    %v3400 = vadd.f32 0.0, %v3399
    %v3401 = vpop.f32.mrf.mxu0
    %v3402 = vpop.f32.mrf.mxu0
    %v3403 = vadd.f32 0.0, %v3402
    %v3404 = vpop.f32.mrf.mxu0
    %3405 = vmatprep.mubr.bf16.mxu0 0
    %3406 = vmatmul.mubr.bf16.gmra.mxu0 %v3136
    %v3407 = vpop.f32.mrf.mxu0
    %v3408 = vadd.f32 0.0, %v3407
    %v3409 = vpop.f32.mrf.mxu0
    %v3410 = vpop.f32.mrf.mxu0
    %v3411 = vadd.f32 0.0, %v3410
    %v3412 = vpop.f32.mrf.mxu0
    %3413 = vmatprep.mubr.bf16.mxu0 0
    %3414 = vmatmul.mubr.bf16.gmra.mxu0 %v3137
    %v3415 = vpop.f32.mrf.mxu0
    %v3416 = vadd.f32 0.0, %v3415
    %v3417 = vpop.f32.mrf.mxu0
    %v3418 = vpop.f32.mrf.mxu0
    %v3419 = vadd.f32 0.0, %v3418
    %v3420 = vpop.f32.mrf.mxu0
    %3421 = vmatprep.mubr.bf16.mxu0 0
    %3422 = vmatmul.mubr.bf16.gmra.mxu0 %v3138
    %v3423 = vpop.f32.mrf.mxu0
    %v3424 = vadd.f32 0.0, %v3423
    %v3425 = vpop.f32.mrf.mxu0
    %v3426 = vpop.f32.mrf.mxu0
    %v3427 = vadd.f32 0.0, %v3426
    %v3428 = vpop.f32.mrf.mxu0
    %3429 = vmatprep.mubr.bf16.mxu0 0
    %3430 = vmatmul.mubr.bf16.gmra.mxu0 %v3139
    %v3431 = vpop.f32.mrf.mxu0
    %v3432 = vadd.f32 0.0, %v3431
    %v3433 = vpop.f32.mrf.mxu0
    %v3434 = vpop.f32.mrf.mxu0
    %v3435 = vadd.f32 0.0, %v3434
    %v3436 = vpop.f32.mrf.mxu0
    %3437 = vmatprep.mubr.bf16.mxu0 0
    %3438 = vmatmul.mubr.bf16.gmra.mxu0 %v3140
    %v3439 = vpop.f32.mrf.mxu0
    %v3440 = vadd.f32 0.0, %v3439
    %v3441 = vpop.f32.mrf.mxu0
    %v3442 = vpop.f32.mrf.mxu0
    %v3443 = vadd.f32 0.0, %v3442
    %v3444 = vpop.f32.mrf.mxu0
    %3445 = vmatprep.mubr.bf16.mxu0 0
    %3446 = vmatmul.mubr.bf16.gmra.mxu0 %v3141
    %v3447 = vpop.f32.mrf.mxu0
    %v3448 = vadd.f32 0.0, %v3447
    %v3449 = vpop.f32.mrf.mxu0
    %v3450 = vpop.f32.mrf.mxu0
    %v3451 = vadd.f32 0.0, %v3450
    %v3452 = vpop.f32.mrf.mxu0
    %3453 = vmatprep.mubr.bf16.mxu0 0
    %3454 = vmatmul.mubr.bf16.gmra.mxu0 %v3142
    %v3455 = vpop.f32.mrf.mxu0
    %v3456 = vadd.f32 0.0, %v3455
    %v3457 = vpop.f32.mrf.mxu0
    %v3458 = vpop.f32.mrf.mxu0
    %v3459 = vadd.f32 0.0, %v3458
    %v3460 = vpop.f32.mrf.mxu0
    %3461 = vmatprep.mubr.bf16.mxu0 0
    %3462 = vmatmul.mubr.bf16.gmra.mxu0 %v3143
    %v3463 = vpop.f32.mrf.mxu0
    %v3464 = vadd.f32 0.0, %v3463
    %v3465 = vpop.f32.mrf.mxu0
    %v3466 = vpop.f32.mrf.mxu0
    %v3467 = vadd.f32 0.0, %v3466
    %v3468 = vpop.f32.mrf.mxu0
    %3469 = vmatprep.mubr.bf16.mxu0 0
    %3470 = vmatmul.mubr.bf16.gmra.mxu0 %v3144
    %v3471 = vpop.f32.mrf.mxu0
    %v3472 = vadd.f32 0.0, %v3471
    %v3473 = vpop.f32.mrf.mxu0
    %v3474 = vpop.f32.mrf.mxu0
    %v3475 = vadd.f32 0.0, %v3474
    %v3476 = vpop.f32.mrf.mxu0
    %3477 = vmatprep.mubr.bf16.mxu0 0
    %3478 = vmatmul.mubr.bf16.gmra.mxu0 %v3145
    %v3479 = vpop.f32.mrf.mxu0
    %v3480 = vadd.f32 0.0, %v3479
    %v3481 = vpop.f32.mrf.mxu0
    %v3482 = vpop.f32.mrf.mxu0
    %v3483 = vadd.f32 0.0, %v3482
    %v3484 = vpop.f32.mrf.mxu0
    %3485 = vmatprep.mubr.bf16.mxu0 0
    %3486 = vmatmul.mubr.bf16.gmra.mxu0 %v3146
    %v3487 = vpop.f32.mrf.mxu0
    %v3488 = vadd.f32 0.0, %v3487
    %v3489 = vpop.f32.mrf.mxu0
    %v3490 = vpop.f32.mrf.mxu0
    %v3491 = vadd.f32 0.0, %v3490
    %v3492 = vpop.f32.mrf.mxu0
    %3493 = vmatprep.mubr.bf16.mxu0 0
    %3494 = vmatmul.mubr.bf16.gmra.mxu0 %v3147
    %v3495 = vpop.f32.mrf.mxu0
    %v3496 = vadd.f32 0.0, %v3495
    %v3497 = vpop.f32.mrf.mxu0
    %v3498 = vpop.f32.mrf.mxu0
    %v3499 = vadd.f32 0.0, %v3498
    %v3500 = vpop.f32.mrf.mxu0
    %3501 = vdwg.mxu0
    %v3502 = vadd.f32 %v2988, %v3248
    %v3503 = vadd.f32 %v2989, %v3251
    %v3504 = vadd.f32 %v2990, %v3256
    %v3505 = vadd.f32 %v2991, %v3259
    %v3506 = vadd.f32 %v2992, %v3264
    %v3507 = vadd.f32 %v2993, %v3267
    %v3508 = vadd.f32 %v2994, %v3272
    %v3509 = vadd.f32 %v2995, %v3275
    %v3510 = vadd.f32 %v2996, %v3280
    %v3511 = vadd.f32 %v2997, %v3283
    %v3512 = vadd.f32 %v2998, %v3288
    %v3513 = vadd.f32 %v2999, %v3291
    %v3514 = vadd.f32 %v3000, %v3296
    %v3515 = vadd.f32 %v3001, %v3299
    %v3516 = vadd.f32 %v3002, %v3304
    %v3517 = vadd.f32 %v3003, %v3307
    %v3518 = vadd.f32 %v3004, %v3312
    %v3519 = vadd.f32 %v3005, %v3315
    %v3520 = vadd.f32 %v3006, %v3320
    %v3521 = vadd.f32 %v3007, %v3323
    %v3522 = vadd.f32 %v3008, %v3328
    %v3523 = vadd.f32 %v3009, %v3331
    %v3524 = vadd.f32 %v3010, %v3336
    %v3525 = vadd.f32 %v3011, %v3339
    %v3526 = vadd.f32 %v3012, %v3344
    %v3527 = vadd.f32 %v3013, %v3347
    %v3528 = vadd.f32 %v3014, %v3352
    %v3529 = vadd.f32 %v3015, %v3355
    %v3530 = vadd.f32 %v3016, %v3360
    %v3531 = vadd.f32 %v3017, %v3363
    %v3532 = vadd.f32 %v3018, %v3368
    %v3533 = vadd.f32 %v3019, %v3371
    %v3534 = vadd.f32 %v3020, %v3376
    %v3535 = vadd.f32 %v3021, %v3379
    %v3536 = vadd.f32 %v3022, %v3384
    %v3537 = vadd.f32 %v3023, %v3387
    %v3538 = vadd.f32 %v3024, %v3392
    %v3539 = vadd.f32 %v3025, %v3395
    %v3540 = vadd.f32 %v3026, %v3400
    %v3541 = vadd.f32 %v3027, %v3403
    %v3542 = vadd.f32 %v3028, %v3408
    %v3543 = vadd.f32 %v3029, %v3411
    %v3544 = vadd.f32 %v3030, %v3416
    %v3545 = vadd.f32 %v3031, %v3419
    %v3546 = vadd.f32 %v3032, %v3424
    %v3547 = vadd.f32 %v3033, %v3427
    %v3548 = vadd.f32 %v3034, %v3432
    %v3549 = vadd.f32 %v3035, %v3435
    %v3550 = vadd.f32 %v3036, %v3440
    %v3551 = vadd.f32 %v3037, %v3443
    %v3552 = vadd.f32 %v3038, %v3448
    %v3553 = vadd.f32 %v3039, %v3451
    %v3554 = vadd.f32 %v3040, %v3456
    %v3555 = vadd.f32 %v3041, %v3459
    %v3556 = vadd.f32 %v3042, %v3464
    %v3557 = vadd.f32 %v3043, %v3467
    %v3558 = vadd.f32 %v3044, %v3472
    %v3559 = vadd.f32 %v3045, %v3475
    %v3560 = vadd.f32 %v3046, %v3480
    %v3561 = vadd.f32 %v3047, %v3483
    %v3562 = vadd.f32 %v3048, %v3488
    %v3563 = vadd.f32 %v3049, %v3491
    %v3564 = vadd.f32 %v3050, %v3496
    %v3565 = vadd.f32 %v3051, %v3499
    %v3566 = vld [vmem:[#allocation2 + $0x19] sm:$0xff]
    %v3567 = vld [vmem:[#allocation2 + $0x21] sm:$0xff]
    %v3568 = vld [vmem:[#allocation2 + $0x29] sm:$0xff]
    %v3569 = vld [vmem:[#allocation2 + $0x31] sm:$0xff]
    %v3570 = vld [vmem:[#allocation2 + $0x39] sm:$0xff]
    %v3571 = vld [vmem:[#allocation2 + $0x41] sm:$0xff]
    %v3572 = vld [vmem:[#allocation2 + $0x49] sm:$0xff]
    %v3573 = vld [vmem:[#allocation2 + $0x51] sm:$0xff]
    %v3574 = vld [vmem:[#allocation2 + $0x59] sm:$0xff]
    %v3575 = vld [vmem:[#allocation2 + $0x61] sm:$0xff]
    %v3576 = vld [vmem:[#allocation2 + $0x69] sm:$0xff]
    %v3577 = vld [vmem:[#allocation2 + $0x71] sm:$0xff]
    %v3578 = vld [vmem:[#allocation2 + $0x79] sm:$0xff]
    %v3579 = vld [vmem:[#allocation2 + $0x81] sm:$0xff]
    %v3580 = vld [vmem:[#allocation2 + $0x89] sm:$0xff]
    %v3581 = vld [vmem:[#allocation2 + $0x91] sm:$0xff]
    %v3582 = vld [vmem:[#allocation2 + $0x99] sm:$0xff]
    %v3583 = vld [vmem:[#allocation2 + $0xa1] sm:$0xff]
    %v3584 = vld [vmem:[#allocation2 + $0xa9] sm:$0xff]
    %v3585 = vld [vmem:[#allocation2 + $0xb1] sm:$0xff]
    %v3586 = vld [vmem:[#allocation2 + $0xb9] sm:$0xff]
    %v3587 = vld [vmem:[#allocation2 + $0xc1] sm:$0xff]
    %v3588 = vld [vmem:[#allocation2 + $0xc9] sm:$0xff]
    %v3589 = vld [vmem:[#allocation2 + $0xd1] sm:$0xff]
    %v3590 = vld [vmem:[#allocation2 + $0xd9] sm:$0xff]
    %v3591 = vld [vmem:[#allocation2 + $0xe1] sm:$0xff]
    %v3592 = vld [vmem:[#allocation2 + $0xe9] sm:$0xff]
    %v3593 = vld [vmem:[#allocation2 + $0xf1] sm:$0xff]
    %v3594 = vld [vmem:[#allocation2 + $0xf9] sm:$0xff]
    %v3595 = vld [vmem:[#allocation2 + $0x101] sm:$0xff]
    %v3596 = vld [vmem:[#allocation2 + $0x109] sm:$0xff]
    %v3597 = vld [vmem:[#allocation2 + $0x111] sm:$0xff]
    %v3598 = vld [vmem:[#allocation2 + $0x119] sm:$0xff]
    %v3599 = vld [vmem:[#allocation2 + $0x121] sm:$0xff]
    %v3600 = vld [vmem:[#allocation2 + $0x129] sm:$0xff]
    %v3601 = vld [vmem:[#allocation2 + $0x131] sm:$0xff]
    %v3602 = vld [vmem:[#allocation2 + $0x139] sm:$0xff]
    %v3603 = vld [vmem:[#allocation2 + $0x141] sm:$0xff]
    %v3604 = vld [vmem:[#allocation2 + $0x149] sm:$0xff]
    %v3605 = vld [vmem:[#allocation2 + $0x151] sm:$0xff]
    %v3606 = vld [vmem:[#allocation2 + $0x159] sm:$0xff]
    %v3607 = vld [vmem:[#allocation2 + $0x161] sm:$0xff]
    %v3608 = vld [vmem:[#allocation2 + $0x169] sm:$0xff]
    %v3609 = vld [vmem:[#allocation2 + $0x171] sm:$0xff]
    %v3610 = vld [vmem:[#allocation2 + $0x179] sm:$0xff]
    %v3611 = vld [vmem:[#allocation2 + $0x181] sm:$0xff]
    %v3612 = vld [vmem:[#allocation2 + $0x189] sm:$0xff]
    %v3613 = vld [vmem:[#allocation2 + $0x191] sm:$0xff]
    %v3614 = vld [vmem:[#allocation2 + $0x199] sm:$0xff]
    %v3615 = vld [vmem:[#allocation2 + $0x1a1] sm:$0xff]
    %v3616 = vld [vmem:[#allocation2 + $0x1a9] sm:$0xff]
    %v3617 = vld [vmem:[#allocation2 + $0x1b1] sm:$0xff]
    %v3618 = vld [vmem:[#allocation2 + $0x1b9] sm:$0xff]
    %v3619 = vld [vmem:[#allocation2 + $0x1c1] sm:$0xff]
    %v3620 = vld [vmem:[#allocation2 + $0x1c9] sm:$0xff]
    %v3621 = vld [vmem:[#allocation2 + $0x1d1] sm:$0xff]
    %v3622 = vld [vmem:[#allocation2 + $0x1d9] sm:$0xff]
    %v3623 = vld [vmem:[#allocation2 + $0x1e1] sm:$0xff]
    %v3624 = vld [vmem:[#allocation2 + $0x1e9] sm:$0xff]
    %v3625 = vld [vmem:[#allocation2 + $0x1f1] sm:$0xff]
    %v3626 = vld [vmem:[#allocation2 + $0x1f9] sm:$0xff]
    %v3627 = vld [vmem:[#allocation2 + $0x201] sm:$0xff]
    %v3628 = vld [vmem:[#allocation2 + $0x209] sm:$0xff]
    %v3629 = vld [vmem:[#allocation2 + $0x211] sm:$0xff]
    %v3630 = vsel %vm479, %v3566, 0.0
    %v3631 = vsel %vm480, %v3567, 0.0
    %v3632 = vsel %vm481, %v3568, 0.0
    %v3633 = vsel %vm482, %v3569, 0.0
    %v3634 = vsel %vm483, %v3570, 0.0
    %v3635 = vsel %vm484, %v3571, 0.0
    %v3636 = vsel %vm485, %v3572, 0.0
    %v3637 = vsel %vm486, %v3573, 0.0
    %v3638 = vsel %vm487, %v3574, 0.0
    %v3639 = vsel %vm488, %v3575, 0.0
    %v3640 = vsel %vm489, %v3576, 0.0
    %v3641 = vsel %vm490, %v3577, 0.0
    %v3642 = vsel %vm491, %v3578, 0.0
    %v3643 = vsel %vm492, %v3579, 0.0
    %v3644 = vsel %vm493, %v3580, 0.0
    %v3645 = vsel %vm494, %v3581, 0.0
    %v3646 = vsel %vm495, %v3582, 0.0
    %v3647 = vsel %vm496, %v3583, 0.0
    %v3648 = vsel %vm497, %v3584, 0.0
    %v3649 = vsel %vm498, %v3585, 0.0
    %v3650 = vsel %vm499, %v3586, 0.0
    %v3651 = vsel %vm500, %v3587, 0.0
    %v3652 = vsel %vm501, %v3588, 0.0
    %v3653 = vsel %vm502, %v3589, 0.0
    %v3654 = vsel %vm503, %v3590, 0.0
    %v3655 = vsel %vm504, %v3591, 0.0
    %v3656 = vsel %vm505, %v3592, 0.0
    %v3657 = vsel %vm506, %v3593, 0.0
    %v3658 = vsel %vm507, %v3594, 0.0
    %v3659 = vsel %vm508, %v3595, 0.0
    %v3660 = vsel %vm509, %v3596, 0.0
    %v3661 = vsel %vm510, %v3597, 0.0
    %v3662 = vsel %vm511, %v3598, 0.0
    %v3663 = vsel %vm512, %v3599, 0.0
    %v3664 = vsel %vm513, %v3600, 0.0
    %v3665 = vsel %vm514, %v3601, 0.0
    %v3666 = vsel %vm515, %v3602, 0.0
    %v3667 = vsel %vm516, %v3603, 0.0
    %v3668 = vsel %vm517, %v3604, 0.0
    %v3669 = vsel %vm518, %v3605, 0.0
    %v3670 = vsel %vm519, %v3606, 0.0
    %v3671 = vsel %vm520, %v3607, 0.0
    %v3672 = vsel %vm521, %v3608, 0.0
    %v3673 = vsel %vm522, %v3609, 0.0
    %v3674 = vsel %vm523, %v3610, 0.0
    %v3675 = vsel %vm524, %v3611, 0.0
    %v3676 = vsel %vm525, %v3612, 0.0
    %v3677 = vsel %vm526, %v3613, 0.0
    %v3678 = vsel %vm527, %v3614, 0.0
    %v3679 = vsel %vm528, %v3615, 0.0
    %v3680 = vsel %vm529, %v3616, 0.0
    %v3681 = vsel %vm530, %v3617, 0.0
    %v3682 = vsel %vm531, %v3618, 0.0
    %v3683 = vsel %vm532, %v3619, 0.0
    %v3684 = vsel %vm533, %v3620, 0.0
    %v3685 = vsel %vm534, %v3621, 0.0
    %v3686 = vsel %vm535, %v3622, 0.0
    %v3687 = vsel %vm536, %v3623, 0.0
    %v3688 = vsel %vm537, %v3624, 0.0
    %v3689 = vsel %vm538, %v3625, 0.0
    %v3690 = vsel %vm539, %v3626, 0.0
    %v3691 = vsel %vm540, %v3627, 0.0
    %v3692 = vsel %vm541, %v3628, 0.0
    %v3693 = vsel %vm542, %v3629, 0.0
    %v3694 = vpack.c.bf16 %v3631, %v3630
    %v3695 = vpack.c.bf16 %v3633, %v3632
    %v3696 = vpack.c.bf16 %v3635, %v3634
    %v3697 = vpack.c.bf16 %v3637, %v3636
    %v3698 = vpack.c.bf16 %v3639, %v3638
    %v3699 = vpack.c.bf16 %v3641, %v3640
    %v3700 = vpack.c.bf16 %v3643, %v3642
    %v3701 = vpack.c.bf16 %v3645, %v3644
    %v3702 = vpack.c.bf16 %v3647, %v3646
    %v3703 = vpack.c.bf16 %v3649, %v3648
    %v3704 = vpack.c.bf16 %v3651, %v3650
    %v3705 = vpack.c.bf16 %v3653, %v3652
    %v3706 = vpack.c.bf16 %v3655, %v3654
    %v3707 = vpack.c.bf16 %v3657, %v3656
    %v3708 = vpack.c.bf16 %v3659, %v3658
    %v3709 = vpack.c.bf16 %v3661, %v3660
    %v3710 = vpack.c.bf16 %v3663, %v3662
    %v3711 = vpack.c.bf16 %v3665, %v3664
    %v3712 = vpack.c.bf16 %v3667, %v3666
    %v3713 = vpack.c.bf16 %v3669, %v3668
    %v3714 = vpack.c.bf16 %v3671, %v3670
    %v3715 = vpack.c.bf16 %v3673, %v3672
    %v3716 = vpack.c.bf16 %v3675, %v3674
    %v3717 = vpack.c.bf16 %v3677, %v3676
    %v3718 = vpack.c.bf16 %v3679, %v3678
    %v3719 = vpack.c.bf16 %v3681, %v3680
    %v3720 = vpack.c.bf16 %v3683, %v3682
    %v3721 = vpack.c.bf16 %v3685, %v3684
    %v3722 = vpack.c.bf16 %v3687, %v3686
    %v3723 = vpack.c.bf16 %v3689, %v3688
    %v3724 = vpack.c.bf16 %v3691, %v3690
    %v3725 = vpack.c.bf16 %v3693, %v3692
    %s3726 = scalar_lea.vmem %s1, 320
    %v3727 = vld [vmem:[%s3726] sm:$0xf]
    %v3728 = vld [vmem:[%s3726 + $0x4] sm:$0xf]
    %v3729 = vld [vmem:[%s3726 + $0x8] sm:$0xf]
    %v3730 = vld [vmem:[%s3726 + $0xc] sm:$0xf]
    %v3731 = vld [vmem:[%s3726 + $0x10] sm:$0xf]
    %v3732 = vld [vmem:[%s3726 + $0x14] sm:$0xf]
    %v3733 = vld [vmem:[%s3726 + $0x18] sm:$0xf]
    %v3734 = vld [vmem:[%s3726 + $0x1c] sm:$0xf]
    %v3735 = vld [vmem:[%s3726 + $0x20] sm:$0xf]
    %v3736 = vld [vmem:[%s3726 + $0x24] sm:$0xf]
    %v3737 = vld [vmem:[%s3726 + $0x28] sm:$0xf]
    %v3738 = vld [vmem:[%s3726 + $0x2c] sm:$0xf]
    %v3739 = vld [vmem:[%s3726 + $0x30] sm:$0xf]
    %v3740 = vld [vmem:[%s3726 + $0x34] sm:$0xf]
    %v3741 = vld [vmem:[%s3726 + $0x38] sm:$0xf]
    %v3742 = vld [vmem:[%s3726 + $0x3c] sm:$0xf]
    %v3759 = vunpack.c.l.b16 %v3727
    %v3760 = vunpack.c.l.b16 %v3728
    %v3761 = vunpack.c.l.b16 %v3729
    %v3762 = vunpack.c.l.b16 %v3730
    %v3763 = vunpack.c.l.b16 %v3731
    %v3764 = vunpack.c.l.b16 %v3732
    %v3765 = vunpack.c.l.b16 %v3733
    %v3766 = vunpack.c.l.b16 %v3734
    %v3767 = vunpack.c.l.b16 %v3735
    %v3768 = vunpack.c.l.b16 %v3736
    %v3769 = vunpack.c.l.b16 %v3737
    %v3770 = vunpack.c.l.b16 %v3738
    %v3771 = vunpack.c.l.b16 %v3739
    %v3772 = vunpack.c.l.b16 %v3740
    %v3773 = vunpack.c.l.b16 %v3741
    %v3774 = vunpack.c.l.b16 %v3742
    %v3775 = vpack.c.b16 %v3760, %v3759
    %v3776 = vpack.c.b16 %v3762, %v3761
    %v3777 = vpack.c.b16 %v3764, %v3763
    %v3778 = vpack.c.b16 %v3766, %v3765
    %v3779 = vpack.c.b16 %v3768, %v3767
    %v3780 = vpack.c.b16 %v3770, %v3769
    %v3781 = vpack.c.b16 %v3772, %v3771
    %v3782 = vpack.c.b16 %v3774, %v3773
    %3791 = vmatprep.subr.bf16.mxu0 0
    %3792 = vmatpush1.bf16.msra.mxu0 %v3782
    %3793 = vmatprep.subr.bf16.mxu0 0
    %3794 = vmatpush1.bf16.msra.mxu0 %v3781
    %3795 = vmatprep.subr.bf16.mxu0 0
    %3796 = vmatpush1.bf16.msra.mxu0 %v3780
    %3797 = vmatprep.subr.bf16.mxu0 0
    %3798 = vmatpush1.bf16.msra.mxu0 %v3779
    %3799 = vmatprep.subr.bf16.mxu0 0
    %3800 = vmatpush1.bf16.msra.mxu0 %v3778
    %3801 = vmatprep.subr.bf16.mxu0 0
    %3802 = vmatpush1.bf16.msra.mxu0 %v3777
    %3803 = vmatprep.subr.bf16.mxu0 0
    %3804 = vmatpush1.bf16.msra.mxu0 %v3776
    %3805 = vmatprep.subr.bf16.mxu0 0
    %3806 = vmatpush1.bf16.msra.mxu0 %v3775
    %3807 = vmatprep.subr.bf16.mxu0 0
    %3808 = vmatpush2.bf16.msra.mxu0 0
    %3809 = vmatprep.subr.bf16.mxu0 0
    %3810 = vmatpush2.bf16.msra.mxu0 0
    %3811 = vmatprep.subr.bf16.mxu0 0
    %3812 = vmatpush2.bf16.msra.mxu0 0
    %3813 = vmatprep.subr.bf16.mxu0 0
    %3814 = vmatpush2.bf16.msra.mxu0 0
    %3815 = vmatprep.subr.bf16.mxu0 0
    %3816 = vmatpush2.bf16.msra.mxu0 0
    %3817 = vmatprep.subr.bf16.mxu0 0
    %3818 = vmatpush2.bf16.msra.mxu0 0
    %3819 = vmatprep.subr.bf16.mxu0 0
    %3820 = vmatpush2.bf16.msra.mxu0 0
    %3821 = vmatprep.subr.bf16.mxu0 0
    %3822 = vmatpush2.bf16.msra.mxu0 0
    %3823 = vmatprep.mubr.bf16.mxu0 0
    %3824 = vmatmul.mubr.bf16.gmra.mxu0 %v3694
    %v3825 = vpop.f32.mrf.mxu0
    %v3826 = vadd.f32 0.0, %v3825
    %v3827 = vpop.f32.mrf.mxu0
    %v3828 = vpop.f32.mrf.mxu0
    %v3829 = vadd.f32 0.0, %v3828
    %v3830 = vpop.f32.mrf.mxu0
    %3831 = vmatprep.mubr.bf16.mxu0 0
    %3832 = vmatmul.mubr.bf16.gmra.mxu0 %v3695
    %v3833 = vpop.f32.mrf.mxu0
    %v3834 = vadd.f32 0.0, %v3833
    %v3835 = vpop.f32.mrf.mxu0
    %v3836 = vpop.f32.mrf.mxu0
    %v3837 = vadd.f32 0.0, %v3836
    %v3838 = vpop.f32.mrf.mxu0
    %3839 = vmatprep.mubr.bf16.mxu0 0
    %3840 = vmatmul.mubr.bf16.gmra.mxu0 %v3696
    %v3841 = vpop.f32.mrf.mxu0
    %v3842 = vadd.f32 0.0, %v3841
    %v3843 = vpop.f32.mrf.mxu0
    %v3844 = vpop.f32.mrf.mxu0
    %v3845 = vadd.f32 0.0, %v3844
    %v3846 = vpop.f32.mrf.mxu0
    %3847 = vmatprep.mubr.bf16.mxu0 0
    %3848 = vmatmul.mubr.bf16.gmra.mxu0 %v3697
    %v3849 = vpop.f32.mrf.mxu0
    %v3850 = vadd.f32 0.0, %v3849
    %v3851 = vpop.f32.mrf.mxu0
    %v3852 = vpop.f32.mrf.mxu0
    %v3853 = vadd.f32 0.0, %v3852
    %v3854 = vpop.f32.mrf.mxu0
    %3855 = vmatprep.mubr.bf16.mxu0 0
    %3856 = vmatmul.mubr.bf16.gmra.mxu0 %v3698
    %v3857 = vpop.f32.mrf.mxu0
    %v3858 = vadd.f32 0.0, %v3857
    %v3859 = vpop.f32.mrf.mxu0
    %v3860 = vpop.f32.mrf.mxu0
    %v3861 = vadd.f32 0.0, %v3860
    %v3862 = vpop.f32.mrf.mxu0
    %3863 = vmatprep.mubr.bf16.mxu0 0
    %3864 = vmatmul.mubr.bf16.gmra.mxu0 %v3699
    %v3865 = vpop.f32.mrf.mxu0
    %v3866 = vadd.f32 0.0, %v3865
    %v3867 = vpop.f32.mrf.mxu0
    %v3868 = vpop.f32.mrf.mxu0
    %v3869 = vadd.f32 0.0, %v3868
    %v3870 = vpop.f32.mrf.mxu0
    %3871 = vmatprep.mubr.bf16.mxu0 0
    %3872 = vmatmul.mubr.bf16.gmra.mxu0 %v3700
    %v3873 = vpop.f32.mrf.mxu0
    %v3874 = vadd.f32 0.0, %v3873
    %v3875 = vpop.f32.mrf.mxu0
    %v3876 = vpop.f32.mrf.mxu0
    %v3877 = vadd.f32 0.0, %v3876
    %v3878 = vpop.f32.mrf.mxu0
    %3879 = vmatprep.mubr.bf16.mxu0 0
    %3880 = vmatmul.mubr.bf16.gmra.mxu0 %v3701
    %v3881 = vpop.f32.mrf.mxu0
    %v3882 = vadd.f32 0.0, %v3881
    %v3883 = vpop.f32.mrf.mxu0
    %v3884 = vpop.f32.mrf.mxu0
    %v3885 = vadd.f32 0.0, %v3884
    %v3886 = vpop.f32.mrf.mxu0
    %3887 = vmatprep.mubr.bf16.mxu0 0
    %3888 = vmatmul.mubr.bf16.gmra.mxu0 %v3702
    %v3889 = vpop.f32.mrf.mxu0
    %v3890 = vadd.f32 0.0, %v3889
    %v3891 = vpop.f32.mrf.mxu0
    %v3892 = vpop.f32.mrf.mxu0
    %v3893 = vadd.f32 0.0, %v3892
    %v3894 = vpop.f32.mrf.mxu0
    %3895 = vmatprep.mubr.bf16.mxu0 0
    %3896 = vmatmul.mubr.bf16.gmra.mxu0 %v3703
    %v3897 = vpop.f32.mrf.mxu0
    %v3898 = vadd.f32 0.0, %v3897
    %v3899 = vpop.f32.mrf.mxu0
    %v3900 = vpop.f32.mrf.mxu0
    %v3901 = vadd.f32 0.0, %v3900
    %v3902 = vpop.f32.mrf.mxu0
    %3903 = vmatprep.mubr.bf16.mxu0 0
    %3904 = vmatmul.mubr.bf16.gmra.mxu0 %v3704
    %v3905 = vpop.f32.mrf.mxu0
    %v3906 = vadd.f32 0.0, %v3905
    %v3907 = vpop.f32.mrf.mxu0
    %v3908 = vpop.f32.mrf.mxu0
    %v3909 = vadd.f32 0.0, %v3908
    %v3910 = vpop.f32.mrf.mxu0
    %3911 = vmatprep.mubr.bf16.mxu0 0
    %3912 = vmatmul.mubr.bf16.gmra.mxu0 %v3705
    %v3913 = vpop.f32.mrf.mxu0
    %v3914 = vadd.f32 0.0, %v3913
    %v3915 = vpop.f32.mrf.mxu0
    %v3916 = vpop.f32.mrf.mxu0
    %v3917 = vadd.f32 0.0, %v3916
    %v3918 = vpop.f32.mrf.mxu0
    %3919 = vmatprep.mubr.bf16.mxu0 0
    %3920 = vmatmul.mubr.bf16.gmra.mxu0 %v3706
    %v3921 = vpop.f32.mrf.mxu0
    %v3922 = vadd.f32 0.0, %v3921
    %v3923 = vpop.f32.mrf.mxu0
    %v3924 = vpop.f32.mrf.mxu0
    %v3925 = vadd.f32 0.0, %v3924
    %v3926 = vpop.f32.mrf.mxu0
    %3927 = vmatprep.mubr.bf16.mxu0 0
    %3928 = vmatmul.mubr.bf16.gmra.mxu0 %v3707
    %v3929 = vpop.f32.mrf.mxu0
    %v3930 = vadd.f32 0.0, %v3929
    %v3931 = vpop.f32.mrf.mxu0
    %v3932 = vpop.f32.mrf.mxu0
    %v3933 = vadd.f32 0.0, %v3932
    %v3934 = vpop.f32.mrf.mxu0
    %3935 = vmatprep.mubr.bf16.mxu0 0
    %3936 = vmatmul.mubr.bf16.gmra.mxu0 %v3708
    %v3937 = vpop.f32.mrf.mxu0
    %v3938 = vadd.f32 0.0, %v3937
    %v3939 = vpop.f32.mrf.mxu0
    %v3940 = vpop.f32.mrf.mxu0
    %v3941 = vadd.f32 0.0, %v3940
    %v3942 = vpop.f32.mrf.mxu0
    %3943 = vmatprep.mubr.bf16.mxu0 0
    %3944 = vmatmul.mubr.bf16.gmra.mxu0 %v3709
    %v3945 = vpop.f32.mrf.mxu0
    %v3946 = vadd.f32 0.0, %v3945
    %v3947 = vpop.f32.mrf.mxu0
    %v3948 = vpop.f32.mrf.mxu0
    %v3949 = vadd.f32 0.0, %v3948
    %v3950 = vpop.f32.mrf.mxu0
    %3951 = vmatprep.mubr.bf16.mxu0 0
    %3952 = vmatmul.mubr.bf16.gmra.mxu0 %v3710
    %v3953 = vpop.f32.mrf.mxu0
    %v3954 = vadd.f32 0.0, %v3953
    %v3955 = vpop.f32.mrf.mxu0
    %v3956 = vpop.f32.mrf.mxu0
    %v3957 = vadd.f32 0.0, %v3956
    %v3958 = vpop.f32.mrf.mxu0
    %3959 = vmatprep.mubr.bf16.mxu0 0
    %3960 = vmatmul.mubr.bf16.gmra.mxu0 %v3711
    %v3961 = vpop.f32.mrf.mxu0
    %v3962 = vadd.f32 0.0, %v3961
    %v3963 = vpop.f32.mrf.mxu0
    %v3964 = vpop.f32.mrf.mxu0
    %v3965 = vadd.f32 0.0, %v3964
    %v3966 = vpop.f32.mrf.mxu0
    %3967 = vmatprep.mubr.bf16.mxu0 0
    %3968 = vmatmul.mubr.bf16.gmra.mxu0 %v3712
    %v3969 = vpop.f32.mrf.mxu0
    %v3970 = vadd.f32 0.0, %v3969
    %v3971 = vpop.f32.mrf.mxu0
    %v3972 = vpop.f32.mrf.mxu0
    %v3973 = vadd.f32 0.0, %v3972
    %v3974 = vpop.f32.mrf.mxu0
    %3975 = vmatprep.mubr.bf16.mxu0 0
    %3976 = vmatmul.mubr.bf16.gmra.mxu0 %v3713
    %v3977 = vpop.f32.mrf.mxu0
    %v3978 = vadd.f32 0.0, %v3977
    %v3979 = vpop.f32.mrf.mxu0
    %v3980 = vpop.f32.mrf.mxu0
    %v3981 = vadd.f32 0.0, %v3980
    %v3982 = vpop.f32.mrf.mxu0
    %3983 = vmatprep.mubr.bf16.mxu0 0
    %3984 = vmatmul.mubr.bf16.gmra.mxu0 %v3714
    %v3985 = vpop.f32.mrf.mxu0
    %v3986 = vadd.f32 0.0, %v3985
    %v3987 = vpop.f32.mrf.mxu0
    %v3988 = vpop.f32.mrf.mxu0
    %v3989 = vadd.f32 0.0, %v3988
    %v3990 = vpop.f32.mrf.mxu0
    %3991 = vmatprep.mubr.bf16.mxu0 0
    %3992 = vmatmul.mubr.bf16.gmra.mxu0 %v3715
    %v3993 = vpop.f32.mrf.mxu0
    %v3994 = vadd.f32 0.0, %v3993
    %v3995 = vpop.f32.mrf.mxu0
    %v3996 = vpop.f32.mrf.mxu0
    %v3997 = vadd.f32 0.0, %v3996
    %v3998 = vpop.f32.mrf.mxu0
    %3999 = vmatprep.mubr.bf16.mxu0 0
    %4000 = vmatmul.mubr.bf16.gmra.mxu0 %v3716
    %v4001 = vpop.f32.mrf.mxu0
    %v4002 = vadd.f32 0.0, %v4001
    %v4003 = vpop.f32.mrf.mxu0
    %v4004 = vpop.f32.mrf.mxu0
    %v4005 = vadd.f32 0.0, %v4004
    %v4006 = vpop.f32.mrf.mxu0
    %4007 = vmatprep.mubr.bf16.mxu0 0
    %4008 = vmatmul.mubr.bf16.gmra.mxu0 %v3717
    %v4009 = vpop.f32.mrf.mxu0
    %v4010 = vadd.f32 0.0, %v4009
    %v4011 = vpop.f32.mrf.mxu0
    %v4012 = vpop.f32.mrf.mxu0
    %v4013 = vadd.f32 0.0, %v4012
    %v4014 = vpop.f32.mrf.mxu0
    %4015 = vmatprep.mubr.bf16.mxu0 0
    %4016 = vmatmul.mubr.bf16.gmra.mxu0 %v3718
    %v4017 = vpop.f32.mrf.mxu0
    %v4018 = vadd.f32 0.0, %v4017
    %v4019 = vpop.f32.mrf.mxu0
    %v4020 = vpop.f32.mrf.mxu0
    %v4021 = vadd.f32 0.0, %v4020
    %v4022 = vpop.f32.mrf.mxu0
    %4023 = vmatprep.mubr.bf16.mxu0 0
    %4024 = vmatmul.mubr.bf16.gmra.mxu0 %v3719
    %v4025 = vpop.f32.mrf.mxu0
    %v4026 = vadd.f32 0.0, %v4025
    %v4027 = vpop.f32.mrf.mxu0
    %v4028 = vpop.f32.mrf.mxu0
    %v4029 = vadd.f32 0.0, %v4028
    %v4030 = vpop.f32.mrf.mxu0
    %4031 = vmatprep.mubr.bf16.mxu0 0
    %4032 = vmatmul.mubr.bf16.gmra.mxu0 %v3720
    %v4033 = vpop.f32.mrf.mxu0
    %v4034 = vadd.f32 0.0, %v4033
    %v4035 = vpop.f32.mrf.mxu0
    %v4036 = vpop.f32.mrf.mxu0
    %v4037 = vadd.f32 0.0, %v4036
    %v4038 = vpop.f32.mrf.mxu0
    %4039 = vmatprep.mubr.bf16.mxu0 0
    %4040 = vmatmul.mubr.bf16.gmra.mxu0 %v3721
    %v4041 = vpop.f32.mrf.mxu0
    %v4042 = vadd.f32 0.0, %v4041
    %v4043 = vpop.f32.mrf.mxu0
    %v4044 = vpop.f32.mrf.mxu0
    %v4045 = vadd.f32 0.0, %v4044
    %v4046 = vpop.f32.mrf.mxu0
    %4047 = vmatprep.mubr.bf16.mxu0 0
    %4048 = vmatmul.mubr.bf16.gmra.mxu0 %v3722
    %v4049 = vpop.f32.mrf.mxu0
    %v4050 = vadd.f32 0.0, %v4049
    %v4051 = vpop.f32.mrf.mxu0
    %v4052 = vpop.f32.mrf.mxu0
    %v4053 = vadd.f32 0.0, %v4052
    %v4054 = vpop.f32.mrf.mxu0
    %4055 = vmatprep.mubr.bf16.mxu0 0
    %4056 = vmatmul.mubr.bf16.gmra.mxu0 %v3723
    %v4057 = vpop.f32.mrf.mxu0
    %v4058 = vadd.f32 0.0, %v4057
    %v4059 = vpop.f32.mrf.mxu0
    %v4060 = vpop.f32.mrf.mxu0
    %v4061 = vadd.f32 0.0, %v4060
    %v4062 = vpop.f32.mrf.mxu0
    %4063 = vmatprep.mubr.bf16.mxu0 0
    %4064 = vmatmul.mubr.bf16.gmra.mxu0 %v3724
    %v4065 = vpop.f32.mrf.mxu0
    %v4066 = vadd.f32 0.0, %v4065
    %v4067 = vpop.f32.mrf.mxu0
    %v4068 = vpop.f32.mrf.mxu0
    %v4069 = vadd.f32 0.0, %v4068
    %v4070 = vpop.f32.mrf.mxu0
    %4071 = vmatprep.mubr.bf16.mxu0 0
    %4072 = vmatmul.mubr.bf16.gmra.mxu0 %v3725
    %v4073 = vpop.f32.mrf.mxu0
    %v4074 = vadd.f32 0.0, %v4073
    %v4075 = vpop.f32.mrf.mxu0
    %v4076 = vpop.f32.mrf.mxu0
    %v4077 = vadd.f32 0.0, %v4076
    %v4078 = vpop.f32.mrf.mxu0
    %4079 = vdwg.mxu0
    %v4080 = vadd.f32 %v3502, %v3826
    %v4081 = vadd.f32 %v3503, %v3829
    %v4082 = vadd.f32 %v3504, %v3834
    %v4083 = vadd.f32 %v3505, %v3837
    %v4084 = vadd.f32 %v3506, %v3842
    %v4085 = vadd.f32 %v3507, %v3845
    %v4086 = vadd.f32 %v3508, %v3850
    %v4087 = vadd.f32 %v3509, %v3853
    %v4088 = vadd.f32 %v3510, %v3858
    %v4089 = vadd.f32 %v3511, %v3861
    %v4090 = vadd.f32 %v3512, %v3866
    %v4091 = vadd.f32 %v3513, %v3869
    %v4092 = vadd.f32 %v3514, %v3874
    %v4093 = vadd.f32 %v3515, %v3877
    %v4094 = vadd.f32 %v3516, %v3882
    %v4095 = vadd.f32 %v3517, %v3885
    %v4096 = vadd.f32 %v3518, %v3890
    %v4097 = vadd.f32 %v3519, %v3893
    %v4098 = vadd.f32 %v3520, %v3898
    %v4099 = vadd.f32 %v3521, %v3901
    %v4100 = vadd.f32 %v3522, %v3906
    %v4101 = vadd.f32 %v3523, %v3909
    %v4102 = vadd.f32 %v3524, %v3914
    %v4103 = vadd.f32 %v3525, %v3917
    %v4104 = vadd.f32 %v3526, %v3922
    %v4105 = vadd.f32 %v3527, %v3925
    %v4106 = vadd.f32 %v3528, %v3930
    %v4107 = vadd.f32 %v3529, %v3933
    %v4108 = vadd.f32 %v3530, %v3938
    %v4109 = vadd.f32 %v3531, %v3941
    %v4110 = vadd.f32 %v3532, %v3946
    %v4111 = vadd.f32 %v3533, %v3949
    %v4112 = vadd.f32 %v3534, %v3954
    %v4113 = vadd.f32 %v3535, %v3957
    %v4114 = vadd.f32 %v3536, %v3962
    %v4115 = vadd.f32 %v3537, %v3965
    %v4116 = vadd.f32 %v3538, %v3970
    %v4117 = vadd.f32 %v3539, %v3973
    %v4118 = vadd.f32 %v3540, %v3978
    %v4119 = vadd.f32 %v3541, %v3981
    %v4120 = vadd.f32 %v3542, %v3986
    %v4121 = vadd.f32 %v3543, %v3989
    %v4122 = vadd.f32 %v3544, %v3994
    %v4123 = vadd.f32 %v3545, %v3997
    %v4124 = vadd.f32 %v3546, %v4002
    %v4125 = vadd.f32 %v3547, %v4005
    %v4126 = vadd.f32 %v3548, %v4010
    %v4127 = vadd.f32 %v3549, %v4013
    %v4128 = vadd.f32 %v3550, %v4018
    %v4129 = vadd.f32 %v3551, %v4021
    %v4130 = vadd.f32 %v3552, %v4026
    %v4131 = vadd.f32 %v3553, %v4029
    %v4132 = vadd.f32 %v3554, %v4034
    %v4133 = vadd.f32 %v3555, %v4037
    %v4134 = vadd.f32 %v3556, %v4042
    %v4135 = vadd.f32 %v3557, %v4045
    %v4136 = vadd.f32 %v3558, %v4050
    %v4137 = vadd.f32 %v3559, %v4053
    %v4138 = vadd.f32 %v3560, %v4058
    %v4139 = vadd.f32 %v3561, %v4061
    %v4140 = vadd.f32 %v3562, %v4066
    %v4141 = vadd.f32 %v3563, %v4069
    %v4142 = vadd.f32 %v3564, %v4074
    %v4143 = vadd.f32 %v3565, %v4077
    %v4144 = vld [vmem:[#allocation2 + $0x27] sm:$0xff]
    %v4145 = vld [vmem:[#allocation2 + $0x2f] sm:$0xff]
    %v4146 = vld [vmem:[#allocation2 + $0x37] sm:$0xff]
    %v4147 = vld [vmem:[#allocation2 + $0x3f] sm:$0xff]
    %v4148 = vld [vmem:[#allocation2 + $0x47] sm:$0xff]
    %v4149 = vld [vmem:[#allocation2 + $0x4f] sm:$0xff]
    %v4150 = vld [vmem:[#allocation2 + $0x57] sm:$0xff]
    %v4151 = vld [vmem:[#allocation2 + $0x5f] sm:$0xff]
    %v4152 = vld [vmem:[#allocation2 + $0x67] sm:$0xff]
    %v4153 = vld [vmem:[#allocation2 + $0x6f] sm:$0xff]
    %v4154 = vld [vmem:[#allocation2 + $0x77] sm:$0xff]
    %v4155 = vld [vmem:[#allocation2 + $0x7f] sm:$0xff]
    %v4156 = vld [vmem:[#allocation2 + $0x87] sm:$0xff]
    %v4157 = vld [vmem:[#allocation2 + $0x8f] sm:$0xff]
    %v4158 = vld [vmem:[#allocation2 + $0x97] sm:$0xff]
    %v4159 = vld [vmem:[#allocation2 + $0x9f] sm:$0xff]
    %v4160 = vld [vmem:[#allocation2 + $0xa7] sm:$0xff]
    %v4161 = vld [vmem:[#allocation2 + $0xaf] sm:$0xff]
    %v4162 = vld [vmem:[#allocation2 + $0xb7] sm:$0xff]
    %v4163 = vld [vmem:[#allocation2 + $0xbf] sm:$0xff]
    %v4164 = vld [vmem:[#allocation2 + $0xc7] sm:$0xff]
    %v4165 = vld [vmem:[#allocation2 + $0xcf] sm:$0xff]
    %v4166 = vld [vmem:[#allocation2 + $0xd7] sm:$0xff]
    %v4167 = vld [vmem:[#allocation2 + $0xdf] sm:$0xff]
    %v4168 = vld [vmem:[#allocation2 + $0xe7] sm:$0xff]
    %v4169 = vld [vmem:[#allocation2 + $0xef] sm:$0xff]
    %v4170 = vld [vmem:[#allocation2 + $0xf7] sm:$0xff]
    %v4171 = vld [vmem:[#allocation2 + $0xff] sm:$0xff]
    %v4172 = vld [vmem:[#allocation2 + $0x107] sm:$0xff]
    %v4173 = vld [vmem:[#allocation2 + $0x10f] sm:$0xff]
    %v4174 = vld [vmem:[#allocation2 + $0x117] sm:$0xff]
    %v4175 = vld [vmem:[#allocation2 + $0x11f] sm:$0xff]
    %v4176 = vld [vmem:[#allocation2 + $0x127] sm:$0xff]
    %v4177 = vld [vmem:[#allocation2 + $0x12f] sm:$0xff]
    %v4178 = vld [vmem:[#allocation2 + $0x137] sm:$0xff]
    %v4179 = vld [vmem:[#allocation2 + $0x13f] sm:$0xff]
    %v4180 = vld [vmem:[#allocation2 + $0x147] sm:$0xff]
    %v4181 = vld [vmem:[#allocation2 + $0x14f] sm:$0xff]
    %v4182 = vld [vmem:[#allocation2 + $0x157] sm:$0xff]
    %v4183 = vld [vmem:[#allocation2 + $0x15f] sm:$0xff]
    %v4184 = vld [vmem:[#allocation2 + $0x167] sm:$0xff]
    %v4185 = vld [vmem:[#allocation2 + $0x16f] sm:$0xff]
    %v4186 = vld [vmem:[#allocation2 + $0x177] sm:$0xff]
    %v4187 = vld [vmem:[#allocation2 + $0x17f] sm:$0xff]
    %v4188 = vld [vmem:[#allocation2 + $0x187] sm:$0xff]
    %v4189 = vld [vmem:[#allocation2 + $0x18f] sm:$0xff]
    %v4190 = vld [vmem:[#allocation2 + $0x197] sm:$0xff]
    %v4191 = vld [vmem:[#allocation2 + $0x19f] sm:$0xff]
    %v4192 = vld [vmem:[#allocation2 + $0x1a7] sm:$0xff]
    %v4193 = vld [vmem:[#allocation2 + $0x1af] sm:$0xff]
    %v4194 = vld [vmem:[#allocation2 + $0x1b7] sm:$0xff]
    %v4195 = vld [vmem:[#allocation2 + $0x1bf] sm:$0xff]
    %v4196 = vld [vmem:[#allocation2 + $0x1c7] sm:$0xff]
    %v4197 = vld [vmem:[#allocation2 + $0x1cf] sm:$0xff]
    %v4198 = vld [vmem:[#allocation2 + $0x1d7] sm:$0xff]
    %v4199 = vld [vmem:[#allocation2 + $0x1df] sm:$0xff]
    %v4200 = vld [vmem:[#allocation2 + $0x1e7] sm:$0xff]
    %v4201 = vld [vmem:[#allocation2 + $0x1ef] sm:$0xff]
    %v4202 = vld [vmem:[#allocation2 + $0x1f7] sm:$0xff]
    %v4203 = vld [vmem:[#allocation2 + $0x1ff] sm:$0xff]
    %v4204 = vld [vmem:[#allocation2 + $0x207] sm:$0xff]
    %v4205 = vld [vmem:[#allocation2 + $0x20f] sm:$0xff]
    %v4206 = vld [vmem:[#allocation2 + $0x217] sm:$0xff]
    %v4207 = vld [vmem:[#allocation2 + $0x21f] sm:$0xff]
    %vm4208 = vmand %vm351, %vm415
    %vm4209 = vmand %vm352, %vm416
    %vm4210 = vmand %vm353, %vm417
    %vm4211 = vmand %vm354, %vm418
    %vm4212 = vmand %vm355, %vm419
    %vm4213 = vmand %vm356, %vm420
    %vm4214 = vmand %vm357, %vm421
    %vm4215 = vmand %vm358, %vm422
    %vm4216 = vmand %vm359, %vm423
    %vm4217 = vmand %vm360, %vm424
    %vm4218 = vmand %vm361, %vm425
    %vm4219 = vmand %vm362, %vm426
    %vm4220 = vmand %vm363, %vm427
    %vm4221 = vmand %vm364, %vm428
    %vm4222 = vmand %vm365, %vm429
    %vm4223 = vmand %vm366, %vm430
    %vm4224 = vmand %vm367, %vm431
    %vm4225 = vmand %vm368, %vm432
    %vm4226 = vmand %vm369, %vm433
    %vm4227 = vmand %vm370, %vm434
    %vm4228 = vmand %vm371, %vm435
    %vm4229 = vmand %vm372, %vm436
    %vm4230 = vmand %vm373, %vm437
    %vm4231 = vmand %vm374, %vm438
    %vm4232 = vmand %vm375, %vm439
    %vm4233 = vmand %vm376, %vm440
    %vm4234 = vmand %vm377, %vm441
    %vm4235 = vmand %vm378, %vm442
    %vm4236 = vmand %vm379, %vm443
    %vm4237 = vmand %vm380, %vm444
    %vm4238 = vmand %vm381, %vm445
    %vm4239 = vmand %vm382, %vm446
    %vm4240 = vmand %vm383, %vm447
    %vm4241 = vmand %vm384, %vm448
    %vm4242 = vmand %vm385, %vm449
    %vm4243 = vmand %vm386, %vm450
    %vm4244 = vmand %vm387, %vm451
    %vm4245 = vmand %vm388, %vm452
    %vm4246 = vmand %vm389, %vm453
    %vm4247 = vmand %vm390, %vm454
    %vm4248 = vmand %vm391, %vm455
    %vm4249 = vmand %vm392, %vm456
    %vm4250 = vmand %vm393, %vm457
    %vm4251 = vmand %vm394, %vm458
    %vm4252 = vmand %vm395, %vm459
    %vm4253 = vmand %vm396, %vm460
    %vm4254 = vmand %vm397, %vm461
    %vm4255 = vmand %vm398, %vm462
    %vm4256 = vmand %vm399, %vm463
    %vm4257 = vmand %vm400, %vm464
    %vm4258 = vmand %vm401, %vm465
    %vm4259 = vmand %vm402, %vm466
    %vm4260 = vmand %vm403, %vm467
    %vm4261 = vmand %vm404, %vm468
    %vm4262 = vmand %vm405, %vm469
    %vm4263 = vmand %vm406, %vm470
    %vm4264 = vmand %vm407, %vm471
    %vm4265 = vmand %vm408, %vm472
    %vm4266 = vmand %vm409, %vm473
    %vm4267 = vmand %vm410, %vm474
    %vm4268 = vmand %vm411, %vm475
    %vm4269 = vmand %vm412, %vm476
    %vm4270 = vmand %vm413, %vm477
    %vm4271 = vmand %vm414, %vm478
    %v4272 = vsel %vm4208, %v4144, 0.0
    %v4273 = vsel %vm4209, %v4145, 0.0
    %v4274 = vsel %vm4210, %v4146, 0.0
    %v4275 = vsel %vm4211, %v4147, 0.0
    %v4276 = vsel %vm4212, %v4148, 0.0
    %v4277 = vsel %vm4213, %v4149, 0.0
    %v4278 = vsel %vm4214, %v4150, 0.0
    %v4279 = vsel %vm4215, %v4151, 0.0
    %v4280 = vsel %vm4216, %v4152, 0.0
    %v4281 = vsel %vm4217, %v4153, 0.0
    %v4282 = vsel %vm4218, %v4154, 0.0
    %v4283 = vsel %vm4219, %v4155, 0.0
    %v4284 = vsel %vm4220, %v4156, 0.0
    %v4285 = vsel %vm4221, %v4157, 0.0
    %v4286 = vsel %vm4222, %v4158, 0.0
    %v4287 = vsel %vm4223, %v4159, 0.0
    %v4288 = vsel %vm4224, %v4160, 0.0
    %v4289 = vsel %vm4225, %v4161, 0.0
    %v4290 = vsel %vm4226, %v4162, 0.0
    %v4291 = vsel %vm4227, %v4163, 0.0
    %v4292 = vsel %vm4228, %v4164, 0.0
    %v4293 = vsel %vm4229, %v4165, 0.0
    %v4294 = vsel %vm4230, %v4166, 0.0
    %v4295 = vsel %vm4231, %v4167, 0.0
    %v4296 = vsel %vm4232, %v4168, 0.0
    %v4297 = vsel %vm4233, %v4169, 0.0
    %v4298 = vsel %vm4234, %v4170, 0.0
    %v4299 = vsel %vm4235, %v4171, 0.0
    %v4300 = vsel %vm4236, %v4172, 0.0
    %v4301 = vsel %vm4237, %v4173, 0.0
    %v4302 = vsel %vm4238, %v4174, 0.0
    %v4303 = vsel %vm4239, %v4175, 0.0
    %v4304 = vsel %vm4240, %v4176, 0.0
    %v4305 = vsel %vm4241, %v4177, 0.0
    %v4306 = vsel %vm4242, %v4178, 0.0
    %v4307 = vsel %vm4243, %v4179, 0.0
    %v4308 = vsel %vm4244, %v4180, 0.0
    %v4309 = vsel %vm4245, %v4181, 0.0
    %v4310 = vsel %vm4246, %v4182, 0.0
    %v4311 = vsel %vm4247, %v4183, 0.0
    %v4312 = vsel %vm4248, %v4184, 0.0
    %v4313 = vsel %vm4249, %v4185, 0.0
    %v4314 = vsel %vm4250, %v4186, 0.0
    %v4315 = vsel %vm4251, %v4187, 0.0
    %v4316 = vsel %vm4252, %v4188, 0.0
    %v4317 = vsel %vm4253, %v4189, 0.0
    %v4318 = vsel %vm4254, %v4190, 0.0
    %v4319 = vsel %vm4255, %v4191, 0.0
    %v4320 = vsel %vm4256, %v4192, 0.0
    %v4321 = vsel %vm4257, %v4193, 0.0
    %v4322 = vsel %vm4258, %v4194, 0.0
    %v4323 = vsel %vm4259, %v4195, 0.0
    %v4324 = vsel %vm4260, %v4196, 0.0
    %v4325 = vsel %vm4261, %v4197, 0.0
    %v4326 = vsel %vm4262, %v4198, 0.0
    %v4327 = vsel %vm4263, %v4199, 0.0
    %v4328 = vsel %vm4264, %v4200, 0.0
    %v4329 = vsel %vm4265, %v4201, 0.0
    %v4330 = vsel %vm4266, %v4202, 0.0
    %v4331 = vsel %vm4267, %v4203, 0.0
    %v4332 = vsel %vm4268, %v4204, 0.0
    %v4333 = vsel %vm4269, %v4205, 0.0
    %v4334 = vsel %vm4270, %v4206, 0.0
    %v4335 = vsel %vm4271, %v4207, 0.0
    %v4336 = vpack.c.bf16 %v4273, %v4272
    %v4337 = vpack.c.bf16 %v4275, %v4274
    %v4338 = vpack.c.bf16 %v4277, %v4276
    %v4339 = vpack.c.bf16 %v4279, %v4278
    %v4340 = vpack.c.bf16 %v4281, %v4280
    %v4341 = vpack.c.bf16 %v4283, %v4282
    %v4342 = vpack.c.bf16 %v4285, %v4284
    %v4343 = vpack.c.bf16 %v4287, %v4286
    %v4344 = vpack.c.bf16 %v4289, %v4288
    %v4345 = vpack.c.bf16 %v4291, %v4290
    %v4346 = vpack.c.bf16 %v4293, %v4292
    %v4347 = vpack.c.bf16 %v4295, %v4294
    %v4348 = vpack.c.bf16 %v4297, %v4296
    %v4349 = vpack.c.bf16 %v4299, %v4298
    %v4350 = vpack.c.bf16 %v4301, %v4300
    %v4351 = vpack.c.bf16 %v4303, %v4302
    %v4352 = vpack.c.bf16 %v4305, %v4304
    %v4353 = vpack.c.bf16 %v4307, %v4306
    %v4354 = vpack.c.bf16 %v4309, %v4308
    %v4355 = vpack.c.bf16 %v4311, %v4310
    %v4356 = vpack.c.bf16 %v4313, %v4312
    %v4357 = vpack.c.bf16 %v4315, %v4314
    %v4358 = vpack.c.bf16 %v4317, %v4316
    %v4359 = vpack.c.bf16 %v4319, %v4318
    %v4360 = vpack.c.bf16 %v4321, %v4320
    %v4361 = vpack.c.bf16 %v4323, %v4322
    %v4362 = vpack.c.bf16 %v4325, %v4324
    %v4363 = vpack.c.bf16 %v4327, %v4326
    %v4364 = vpack.c.bf16 %v4329, %v4328
    %v4365 = vpack.c.bf16 %v4331, %v4330
    %v4366 = vpack.c.bf16 %v4333, %v4332
    %v4367 = vpack.c.bf16 %v4335, %v4334
    %s4368 = scalar_lea.vmem %s1, 384
    %v4369 = vld [vmem:[%s4368] sm:$0xf]
    %v4370 = vld [vmem:[%s4368 + $0x4] sm:$0xf]
    %v4371 = vld [vmem:[%s4368 + $0x8] sm:$0xf]
    %v4372 = vld [vmem:[%s4368 + $0xc] sm:$0xf]
    %v4373 = vld [vmem:[%s4368 + $0x10] sm:$0xf]
    %v4374 = vld [vmem:[%s4368 + $0x14] sm:$0xf]
    %v4375 = vld [vmem:[%s4368 + $0x18] sm:$0xf]
    %v4376 = vld [vmem:[%s4368 + $0x1c] sm:$0xf]
    %v4377 = vld [vmem:[%s4368 + $0x20] sm:$0xf]
    %v4378 = vld [vmem:[%s4368 + $0x24] sm:$0xf]
    %v4379 = vld [vmem:[%s4368 + $0x28] sm:$0xf]
    %v4380 = vld [vmem:[%s4368 + $0x2c] sm:$0xf]
    %v4381 = vld [vmem:[%s4368 + $0x30] sm:$0xf]
    %v4382 = vld [vmem:[%s4368 + $0x34] sm:$0xf]
    %v4383 = vld [vmem:[%s4368 + $0x38] sm:$0xf]
    %v4384 = vld [vmem:[%s4368 + $0x3c] sm:$0xf]
    %v4401 = vunpack.c.l.b16 %v4369
    %v4402 = vunpack.c.l.b16 %v4370
    %v4403 = vunpack.c.l.b16 %v4371
    %v4404 = vunpack.c.l.b16 %v4372
    %v4405 = vunpack.c.l.b16 %v4373
    %v4406 = vunpack.c.l.b16 %v4374
    %v4407 = vunpack.c.l.b16 %v4375
    %v4408 = vunpack.c.l.b16 %v4376
    %v4409 = vunpack.c.l.b16 %v4377
    %v4410 = vunpack.c.l.b16 %v4378
    %v4411 = vunpack.c.l.b16 %v4379
    %v4412 = vunpack.c.l.b16 %v4380
    %v4413 = vunpack.c.l.b16 %v4381
    %v4414 = vunpack.c.l.b16 %v4382
    %v4415 = vunpack.c.l.b16 %v4383
    %v4416 = vunpack.c.l.b16 %v4384
    %v4417 = vpack.c.b16 %v4402, %v4401
    %v4418 = vpack.c.b16 %v4404, %v4403
    %v4419 = vpack.c.b16 %v4406, %v4405
    %v4420 = vpack.c.b16 %v4408, %v4407
    %v4421 = vpack.c.b16 %v4410, %v4409
    %v4422 = vpack.c.b16 %v4412, %v4411
    %v4423 = vpack.c.b16 %v4414, %v4413
    %v4424 = vpack.c.b16 %v4416, %v4415
    %4433 = vmatprep.subr.bf16.mxu0 0
    %4434 = vmatpush1.bf16.msra.mxu0 %v4424
    %4435 = vmatprep.subr.bf16.mxu0 0
    %4436 = vmatpush1.bf16.msra.mxu0 %v4423
    %4437 = vmatprep.subr.bf16.mxu0 0
    %4438 = vmatpush1.bf16.msra.mxu0 %v4422
    %4439 = vmatprep.subr.bf16.mxu0 0
    %4440 = vmatpush1.bf16.msra.mxu0 %v4421
    %4441 = vmatprep.subr.bf16.mxu0 0
    %4442 = vmatpush1.bf16.msra.mxu0 %v4420
    %4443 = vmatprep.subr.bf16.mxu0 0
    %4444 = vmatpush1.bf16.msra.mxu0 %v4419
    %4445 = vmatprep.subr.bf16.mxu0 0
    %4446 = vmatpush1.bf16.msra.mxu0 %v4418
    %4447 = vmatprep.subr.bf16.mxu0 0
    %4448 = vmatpush1.bf16.msra.mxu0 %v4417
    %4449 = vmatprep.subr.bf16.mxu0 0
    %4450 = vmatpush2.bf16.msra.mxu0 0
    %4451 = vmatprep.subr.bf16.mxu0 0
    %4452 = vmatpush2.bf16.msra.mxu0 0
    %4453 = vmatprep.subr.bf16.mxu0 0
    %4454 = vmatpush2.bf16.msra.mxu0 0
    %4455 = vmatprep.subr.bf16.mxu0 0
    %4456 = vmatpush2.bf16.msra.mxu0 0
    %4457 = vmatprep.subr.bf16.mxu0 0
    %4458 = vmatpush2.bf16.msra.mxu0 0
    %4459 = vmatprep.subr.bf16.mxu0 0
    %4460 = vmatpush2.bf16.msra.mxu0 0
    %4461 = vmatprep.subr.bf16.mxu0 0
    %4462 = vmatpush2.bf16.msra.mxu0 0
    %4463 = vmatprep.subr.bf16.mxu0 0
    %4464 = vmatpush2.bf16.msra.mxu0 0
    %4465 = vmatprep.mubr.bf16.mxu0 0
    %4466 = vmatmul.mubr.bf16.gmra.mxu0 %v4336
    %v4467 = vpop.f32.mrf.mxu0
    %v4468 = vadd.f32 0.0, %v4467
    %v4469 = vpop.f32.mrf.mxu0
    %v4470 = vpop.f32.mrf.mxu0
    %v4471 = vadd.f32 0.0, %v4470
    %v4472 = vpop.f32.mrf.mxu0
    %4473 = vmatprep.mubr.bf16.mxu0 0
    %4474 = vmatmul.mubr.bf16.gmra.mxu0 %v4337
    %v4475 = vpop.f32.mrf.mxu0
    %v4476 = vadd.f32 0.0, %v4475
    %v4477 = vpop.f32.mrf.mxu0
    %v4478 = vpop.f32.mrf.mxu0
    %v4479 = vadd.f32 0.0, %v4478
    %v4480 = vpop.f32.mrf.mxu0
    %4481 = vmatprep.mubr.bf16.mxu0 0
    %4482 = vmatmul.mubr.bf16.gmra.mxu0 %v4338
    %v4483 = vpop.f32.mrf.mxu0
    %v4484 = vadd.f32 0.0, %v4483
    %v4485 = vpop.f32.mrf.mxu0
    %v4486 = vpop.f32.mrf.mxu0
    %v4487 = vadd.f32 0.0, %v4486
    %v4488 = vpop.f32.mrf.mxu0
    %4489 = vmatprep.mubr.bf16.mxu0 0
    %4490 = vmatmul.mubr.bf16.gmra.mxu0 %v4339
    %v4491 = vpop.f32.mrf.mxu0
    %v4492 = vadd.f32 0.0, %v4491
    %v4493 = vpop.f32.mrf.mxu0
    %v4494 = vpop.f32.mrf.mxu0
    %v4495 = vadd.f32 0.0, %v4494
    %v4496 = vpop.f32.mrf.mxu0
    %4497 = vmatprep.mubr.bf16.mxu0 0
    %4498 = vmatmul.mubr.bf16.gmra.mxu0 %v4340
    %v4499 = vpop.f32.mrf.mxu0
    %v4500 = vadd.f32 0.0, %v4499
    %v4501 = vpop.f32.mrf.mxu0
    %v4502 = vpop.f32.mrf.mxu0
    %v4503 = vadd.f32 0.0, %v4502
    %v4504 = vpop.f32.mrf.mxu0
    %4505 = vmatprep.mubr.bf16.mxu0 0
    %4506 = vmatmul.mubr.bf16.gmra.mxu0 %v4341
    %v4507 = vpop.f32.mrf.mxu0
    %v4508 = vadd.f32 0.0, %v4507
    %v4509 = vpop.f32.mrf.mxu0
    %v4510 = vpop.f32.mrf.mxu0
    %v4511 = vadd.f32 0.0, %v4510
    %v4512 = vpop.f32.mrf.mxu0
    %4513 = vmatprep.mubr.bf16.mxu0 0
    %4514 = vmatmul.mubr.bf16.gmra.mxu0 %v4342
    %v4515 = vpop.f32.mrf.mxu0
    %v4516 = vadd.f32 0.0, %v4515
    %v4517 = vpop.f32.mrf.mxu0
    %v4518 = vpop.f32.mrf.mxu0
    %v4519 = vadd.f32 0.0, %v4518
    %v4520 = vpop.f32.mrf.mxu0
    %4521 = vmatprep.mubr.bf16.mxu0 0
    %4522 = vmatmul.mubr.bf16.gmra.mxu0 %v4343
    %v4523 = vpop.f32.mrf.mxu0
    %v4524 = vadd.f32 0.0, %v4523
    %v4525 = vpop.f32.mrf.mxu0
    %v4526 = vpop.f32.mrf.mxu0
    %v4527 = vadd.f32 0.0, %v4526
    %v4528 = vpop.f32.mrf.mxu0
    %4529 = vmatprep.mubr.bf16.mxu0 0
    %4530 = vmatmul.mubr.bf16.gmra.mxu0 %v4344
    %v4531 = vpop.f32.mrf.mxu0
    %v4532 = vadd.f32 0.0, %v4531
    %v4533 = vpop.f32.mrf.mxu0
    %v4534 = vpop.f32.mrf.mxu0
    %v4535 = vadd.f32 0.0, %v4534
    %v4536 = vpop.f32.mrf.mxu0
    %4537 = vmatprep.mubr.bf16.mxu0 0
    %4538 = vmatmul.mubr.bf16.gmra.mxu0 %v4345
    %v4539 = vpop.f32.mrf.mxu0
    %v4540 = vadd.f32 0.0, %v4539
    %v4541 = vpop.f32.mrf.mxu0
    %v4542 = vpop.f32.mrf.mxu0
    %v4543 = vadd.f32 0.0, %v4542
    %v4544 = vpop.f32.mrf.mxu0
    %4545 = vmatprep.mubr.bf16.mxu0 0
    %4546 = vmatmul.mubr.bf16.gmra.mxu0 %v4346
    %v4547 = vpop.f32.mrf.mxu0
    %v4548 = vadd.f32 0.0, %v4547
    %v4549 = vpop.f32.mrf.mxu0
    %v4550 = vpop.f32.mrf.mxu0
    %v4551 = vadd.f32 0.0, %v4550
    %v4552 = vpop.f32.mrf.mxu0
    %4553 = vmatprep.mubr.bf16.mxu0 0
    %4554 = vmatmul.mubr.bf16.gmra.mxu0 %v4347
    %v4555 = vpop.f32.mrf.mxu0
    %v4556 = vadd.f32 0.0, %v4555
    %v4557 = vpop.f32.mrf.mxu0
    %v4558 = vpop.f32.mrf.mxu0
    %v4559 = vadd.f32 0.0, %v4558
    %v4560 = vpop.f32.mrf.mxu0
    %4561 = vmatprep.mubr.bf16.mxu0 0
    %4562 = vmatmul.mubr.bf16.gmra.mxu0 %v4348
    %v4563 = vpop.f32.mrf.mxu0
    %v4564 = vadd.f32 0.0, %v4563
    %v4565 = vpop.f32.mrf.mxu0
    %v4566 = vpop.f32.mrf.mxu0
    %v4567 = vadd.f32 0.0, %v4566
    %v4568 = vpop.f32.mrf.mxu0
    %4569 = vmatprep.mubr.bf16.mxu0 0
    %4570 = vmatmul.mubr.bf16.gmra.mxu0 %v4349
    %v4571 = vpop.f32.mrf.mxu0
    %v4572 = vadd.f32 0.0, %v4571
    %v4573 = vpop.f32.mrf.mxu0
    %v4574 = vpop.f32.mrf.mxu0
    %v4575 = vadd.f32 0.0, %v4574
    %v4576 = vpop.f32.mrf.mxu0
    %4577 = vmatprep.mubr.bf16.mxu0 0
    %4578 = vmatmul.mubr.bf16.gmra.mxu0 %v4350
    %v4579 = vpop.f32.mrf.mxu0
    %v4580 = vadd.f32 0.0, %v4579
    %v4581 = vpop.f32.mrf.mxu0
    %v4582 = vpop.f32.mrf.mxu0
    %v4583 = vadd.f32 0.0, %v4582
    %v4584 = vpop.f32.mrf.mxu0
    %4585 = vmatprep.mubr.bf16.mxu0 0
    %4586 = vmatmul.mubr.bf16.gmra.mxu0 %v4351
    %v4587 = vpop.f32.mrf.mxu0
    %v4588 = vadd.f32 0.0, %v4587
    %v4589 = vpop.f32.mrf.mxu0
    %v4590 = vpop.f32.mrf.mxu0
    %v4591 = vadd.f32 0.0, %v4590
    %v4592 = vpop.f32.mrf.mxu0
    %4593 = vmatprep.mubr.bf16.mxu0 0
    %4594 = vmatmul.mubr.bf16.gmra.mxu0 %v4352
    %v4595 = vpop.f32.mrf.mxu0
    %v4596 = vadd.f32 0.0, %v4595
    %v4597 = vpop.f32.mrf.mxu0
    %v4598 = vpop.f32.mrf.mxu0
    %v4599 = vadd.f32 0.0, %v4598
    %v4600 = vpop.f32.mrf.mxu0
    %4601 = vmatprep.mubr.bf16.mxu0 0
    %4602 = vmatmul.mubr.bf16.gmra.mxu0 %v4353
    %v4603 = vpop.f32.mrf.mxu0
    %v4604 = vadd.f32 0.0, %v4603
    %v4605 = vpop.f32.mrf.mxu0
    %v4606 = vpop.f32.mrf.mxu0
    %v4607 = vadd.f32 0.0, %v4606
    %v4608 = vpop.f32.mrf.mxu0
    %4609 = vmatprep.mubr.bf16.mxu0 0
    %4610 = vmatmul.mubr.bf16.gmra.mxu0 %v4354
    %v4611 = vpop.f32.mrf.mxu0
    %v4612 = vadd.f32 0.0, %v4611
    %v4613 = vpop.f32.mrf.mxu0
    %v4614 = vpop.f32.mrf.mxu0
    %v4615 = vadd.f32 0.0, %v4614
    %v4616 = vpop.f32.mrf.mxu0
    %4617 = vmatprep.mubr.bf16.mxu0 0
    %4618 = vmatmul.mubr.bf16.gmra.mxu0 %v4355
    %v4619 = vpop.f32.mrf.mxu0
    %v4620 = vadd.f32 0.0, %v4619
    %v4621 = vpop.f32.mrf.mxu0
    %v4622 = vpop.f32.mrf.mxu0
    %v4623 = vadd.f32 0.0, %v4622
    %v4624 = vpop.f32.mrf.mxu0
    %4625 = vmatprep.mubr.bf16.mxu0 0
    %4626 = vmatmul.mubr.bf16.gmra.mxu0 %v4356
    %v4627 = vpop.f32.mrf.mxu0
    %v4628 = vadd.f32 0.0, %v4627
    %v4629 = vpop.f32.mrf.mxu0
    %v4630 = vpop.f32.mrf.mxu0
    %v4631 = vadd.f32 0.0, %v4630
    %v4632 = vpop.f32.mrf.mxu0
    %4633 = vmatprep.mubr.bf16.mxu0 0
    %4634 = vmatmul.mubr.bf16.gmra.mxu0 %v4357
    %v4635 = vpop.f32.mrf.mxu0
    %v4636 = vadd.f32 0.0, %v4635
    %v4637 = vpop.f32.mrf.mxu0
    %v4638 = vpop.f32.mrf.mxu0
    %v4639 = vadd.f32 0.0, %v4638
    %v4640 = vpop.f32.mrf.mxu0
    %4641 = vmatprep.mubr.bf16.mxu0 0
    %4642 = vmatmul.mubr.bf16.gmra.mxu0 %v4358
    %v4643 = vpop.f32.mrf.mxu0
    %v4644 = vadd.f32 0.0, %v4643
    %v4645 = vpop.f32.mrf.mxu0
    %v4646 = vpop.f32.mrf.mxu0
    %v4647 = vadd.f32 0.0, %v4646
    %v4648 = vpop.f32.mrf.mxu0
    %4649 = vmatprep.mubr.bf16.mxu0 0
    %4650 = vmatmul.mubr.bf16.gmra.mxu0 %v4359
    %v4651 = vpop.f32.mrf.mxu0
    %v4652 = vadd.f32 0.0, %v4651
    %v4653 = vpop.f32.mrf.mxu0
    %v4654 = vpop.f32.mrf.mxu0
    %v4655 = vadd.f32 0.0, %v4654
    %v4656 = vpop.f32.mrf.mxu0
    %4657 = vmatprep.mubr.bf16.mxu0 0
    %4658 = vmatmul.mubr.bf16.gmra.mxu0 %v4360
    %v4659 = vpop.f32.mrf.mxu0
    %v4660 = vadd.f32 0.0, %v4659
    %v4661 = vpop.f32.mrf.mxu0
    %v4662 = vpop.f32.mrf.mxu0
    %v4663 = vadd.f32 0.0, %v4662
    %v4664 = vpop.f32.mrf.mxu0
    %4665 = vmatprep.mubr.bf16.mxu0 0
    %4666 = vmatmul.mubr.bf16.gmra.mxu0 %v4361
    %v4667 = vpop.f32.mrf.mxu0
    %v4668 = vadd.f32 0.0, %v4667
    %v4669 = vpop.f32.mrf.mxu0
    %v4670 = vpop.f32.mrf.mxu0
    %v4671 = vadd.f32 0.0, %v4670
    %v4672 = vpop.f32.mrf.mxu0
    %4673 = vmatprep.mubr.bf16.mxu0 0
    %4674 = vmatmul.mubr.bf16.gmra.mxu0 %v4362
    %v4675 = vpop.f32.mrf.mxu0
    %v4676 = vadd.f32 0.0, %v4675
    %v4677 = vpop.f32.mrf.mxu0
    %v4678 = vpop.f32.mrf.mxu0
    %v4679 = vadd.f32 0.0, %v4678
    %v4680 = vpop.f32.mrf.mxu0
    %4681 = vmatprep.mubr.bf16.mxu0 0
    %4682 = vmatmul.mubr.bf16.gmra.mxu0 %v4363
    %v4683 = vpop.f32.mrf.mxu0
    %v4684 = vadd.f32 0.0, %v4683
    %v4685 = vpop.f32.mrf.mxu0
    %v4686 = vpop.f32.mrf.mxu0
    %v4687 = vadd.f32 0.0, %v4686
    %v4688 = vpop.f32.mrf.mxu0
    %4689 = vmatprep.mubr.bf16.mxu0 0
    %4690 = vmatmul.mubr.bf16.gmra.mxu0 %v4364
    %v4691 = vpop.f32.mrf.mxu0
    %v4692 = vadd.f32 0.0, %v4691
    %v4693 = vpop.f32.mrf.mxu0
    %v4694 = vpop.f32.mrf.mxu0
    %v4695 = vadd.f32 0.0, %v4694
    %v4696 = vpop.f32.mrf.mxu0
    %4697 = vmatprep.mubr.bf16.mxu0 0
    %4698 = vmatmul.mubr.bf16.gmra.mxu0 %v4365
    %v4699 = vpop.f32.mrf.mxu0
    %v4700 = vadd.f32 0.0, %v4699
    %v4701 = vpop.f32.mrf.mxu0
    %v4702 = vpop.f32.mrf.mxu0
    %v4703 = vadd.f32 0.0, %v4702
    %v4704 = vpop.f32.mrf.mxu0
    %4705 = vmatprep.mubr.bf16.mxu0 0
    %4706 = vmatmul.mubr.bf16.gmra.mxu0 %v4366
    %v4707 = vpop.f32.mrf.mxu0
    %v4708 = vadd.f32 0.0, %v4707
    %v4709 = vpop.f32.mrf.mxu0
    %v4710 = vpop.f32.mrf.mxu0
    %v4711 = vadd.f32 0.0, %v4710
    %v4712 = vpop.f32.mrf.mxu0
    %4713 = vmatprep.mubr.bf16.mxu0 0
    %4714 = vmatmul.mubr.bf16.gmra.mxu0 %v4367
    %v4715 = vpop.f32.mrf.mxu0
    %v4716 = vadd.f32 0.0, %v4715
    %v4717 = vpop.f32.mrf.mxu0
    %v4718 = vpop.f32.mrf.mxu0
    %v4719 = vadd.f32 0.0, %v4718
    %v4720 = vpop.f32.mrf.mxu0
    %4721 = vdwg.mxu0
    %v4722 = vadd.f32 %v4080, %v4468
    %v4723 = vadd.f32 %v4081, %v4471
    %v4724 = vadd.f32 %v4082, %v4476
    %v4725 = vadd.f32 %v4083, %v4479
    %v4726 = vadd.f32 %v4084, %v4484
    %v4727 = vadd.f32 %v4085, %v4487
    %v4728 = vadd.f32 %v4086, %v4492
    %v4729 = vadd.f32 %v4087, %v4495
    %v4730 = vadd.f32 %v4088, %v4500
    %v4731 = vadd.f32 %v4089, %v4503
    %v4732 = vadd.f32 %v4090, %v4508
    %v4733 = vadd.f32 %v4091, %v4511
    %v4734 = vadd.f32 %v4092, %v4516
    %v4735 = vadd.f32 %v4093, %v4519
    %v4736 = vadd.f32 %v4094, %v4524
    %v4737 = vadd.f32 %v4095, %v4527
    %v4738 = vadd.f32 %v4096, %v4532
    %v4739 = vadd.f32 %v4097, %v4535
    %v4740 = vadd.f32 %v4098, %v4540
    %v4741 = vadd.f32 %v4099, %v4543
    %v4742 = vadd.f32 %v4100, %v4548
    %v4743 = vadd.f32 %v4101, %v4551
    %v4744 = vadd.f32 %v4102, %v4556
    %v4745 = vadd.f32 %v4103, %v4559
    %v4746 = vadd.f32 %v4104, %v4564
    %v4747 = vadd.f32 %v4105, %v4567
    %v4748 = vadd.f32 %v4106, %v4572
    %v4749 = vadd.f32 %v4107, %v4575
    %v4750 = vadd.f32 %v4108, %v4580
    %v4751 = vadd.f32 %v4109, %v4583
    %v4752 = vadd.f32 %v4110, %v4588
    %v4753 = vadd.f32 %v4111, %v4591
    %v4754 = vadd.f32 %v4112, %v4596
    %v4755 = vadd.f32 %v4113, %v4599
    %v4756 = vadd.f32 %v4114, %v4604
    %v4757 = vadd.f32 %v4115, %v4607
    %v4758 = vadd.f32 %v4116, %v4612
    %v4759 = vadd.f32 %v4117, %v4615
    %v4760 = vadd.f32 %v4118, %v4620
    %v4761 = vadd.f32 %v4119, %v4623
    %v4762 = vadd.f32 %v4120, %v4628
    %v4763 = vadd.f32 %v4121, %v4631
    %v4764 = vadd.f32 %v4122, %v4636
    %v4765 = vadd.f32 %v4123, %v4639
    %v4766 = vadd.f32 %v4124, %v4644
    %v4767 = vadd.f32 %v4125, %v4647
    %v4768 = vadd.f32 %v4126, %v4652
    %v4769 = vadd.f32 %v4127, %v4655
    %v4770 = vadd.f32 %v4128, %v4660
    %v4771 = vadd.f32 %v4129, %v4663
    %v4772 = vadd.f32 %v4130, %v4668
    %v4773 = vadd.f32 %v4131, %v4671
    %v4774 = vadd.f32 %v4132, %v4676
    %v4775 = vadd.f32 %v4133, %v4679
    %v4776 = vadd.f32 %v4134, %v4684
    %v4777 = vadd.f32 %v4135, %v4687
    %v4778 = vadd.f32 %v4136, %v4692
    %v4779 = vadd.f32 %v4137, %v4695
    %v4780 = vadd.f32 %v4138, %v4700
    %v4781 = vadd.f32 %v4139, %v4703
    %v4782 = vadd.f32 %v4140, %v4708
    %v4783 = vadd.f32 %v4141, %v4711
    %v4784 = vadd.f32 %v4142, %v4716
    %v4785 = vadd.f32 %v4143, %v4719
    %v4786 = vld [vmem:[#allocation2 + $0x28] sm:$0xff]
    %v4787 = vld [vmem:[#allocation2 + $0x30] sm:$0xff]
    %v4788 = vld [vmem:[#allocation2 + $0x38] sm:$0xff]
    %v4789 = vld [vmem:[#allocation2 + $0x40] sm:$0xff]
    %v4790 = vld [vmem:[#allocation2 + $0x48] sm:$0xff]
    %v4791 = vld [vmem:[#allocation2 + $0x50] sm:$0xff]
    %v4792 = vld [vmem:[#allocation2 + $0x58] sm:$0xff]
    %v4793 = vld [vmem:[#allocation2 + $0x60] sm:$0xff]
    %v4794 = vld [vmem:[#allocation2 + $0x68] sm:$0xff]
    %v4795 = vld [vmem:[#allocation2 + $0x70] sm:$0xff]
    %v4796 = vld [vmem:[#allocation2 + $0x78] sm:$0xff]
    %v4797 = vld [vmem:[#allocation2 + $0x80] sm:$0xff]
    %v4798 = vld [vmem:[#allocation2 + $0x88] sm:$0xff]
    %v4799 = vld [vmem:[#allocation2 + $0x90] sm:$0xff]
    %v4800 = vld [vmem:[#allocation2 + $0x98] sm:$0xff]
    %v4801 = vld [vmem:[#allocation2 + $0xa0] sm:$0xff]
    %v4802 = vld [vmem:[#allocation2 + $0xa8] sm:$0xff]
    %v4803 = vld [vmem:[#allocation2 + $0xb0] sm:$0xff]
    %v4804 = vld [vmem:[#allocation2 + $0xb8] sm:$0xff]
    %v4805 = vld [vmem:[#allocation2 + $0xc0] sm:$0xff]
    %v4806 = vld [vmem:[#allocation2 + $0xc8] sm:$0xff]
    %v4807 = vld [vmem:[#allocation2 + $0xd0] sm:$0xff]
    %v4808 = vld [vmem:[#allocation2 + $0xd8] sm:$0xff]
    %v4809 = vld [vmem:[#allocation2 + $0xe0] sm:$0xff]
    %v4810 = vld [vmem:[#allocation2 + $0xe8] sm:$0xff]
    %v4811 = vld [vmem:[#allocation2 + $0xf0] sm:$0xff]
    %v4812 = vld [vmem:[#allocation2 + $0xf8] sm:$0xff]
    %v4813 = vld [vmem:[#allocation2 + $0x100] sm:$0xff]
    %v4814 = vld [vmem:[#allocation2 + $0x108] sm:$0xff]
    %v4815 = vld [vmem:[#allocation2 + $0x110] sm:$0xff]
    %v4816 = vld [vmem:[#allocation2 + $0x118] sm:$0xff]
    %v4817 = vld [vmem:[#allocation2 + $0x120] sm:$0xff]
    %v4818 = vld [vmem:[#allocation2 + $0x128] sm:$0xff]
    %v4819 = vld [vmem:[#allocation2 + $0x130] sm:$0xff]
    %v4820 = vld [vmem:[#allocation2 + $0x138] sm:$0xff]
    %v4821 = vld [vmem:[#allocation2 + $0x140] sm:$0xff]
    %v4822 = vld [vmem:[#allocation2 + $0x148] sm:$0xff]
    %v4823 = vld [vmem:[#allocation2 + $0x150] sm:$0xff]
    %v4824 = vld [vmem:[#allocation2 + $0x158] sm:$0xff]
    %v4825 = vld [vmem:[#allocation2 + $0x160] sm:$0xff]
    %v4826 = vld [vmem:[#allocation2 + $0x168] sm:$0xff]
    %v4827 = vld [vmem:[#allocation2 + $0x170] sm:$0xff]
    %v4828 = vld [vmem:[#allocation2 + $0x178] sm:$0xff]
    %v4829 = vld [vmem:[#allocation2 + $0x180] sm:$0xff]
    %v4830 = vld [vmem:[#allocation2 + $0x188] sm:$0xff]
    %v4831 = vld [vmem:[#allocation2 + $0x190] sm:$0xff]
    %v4832 = vld [vmem:[#allocation2 + $0x198] sm:$0xff]
    %v4833 = vld [vmem:[#allocation2 + $0x1a0] sm:$0xff]
    %v4834 = vld [vmem:[#allocation2 + $0x1a8] sm:$0xff]
    %v4835 = vld [vmem:[#allocation2 + $0x1b0] sm:$0xff]
    %v4836 = vld [vmem:[#allocation2 + $0x1b8] sm:$0xff]
    %v4837 = vld [vmem:[#allocation2 + $0x1c0] sm:$0xff]
    %v4838 = vld [vmem:[#allocation2 + $0x1c8] sm:$0xff]
    %v4839 = vld [vmem:[#allocation2 + $0x1d0] sm:$0xff]
    %v4840 = vld [vmem:[#allocation2 + $0x1d8] sm:$0xff]
    %v4841 = vld [vmem:[#allocation2 + $0x1e0] sm:$0xff]
    %v4842 = vld [vmem:[#allocation2 + $0x1e8] sm:$0xff]
    %v4843 = vld [vmem:[#allocation2 + $0x1f0] sm:$0xff]
    %v4844 = vld [vmem:[#allocation2 + $0x1f8] sm:$0xff]
    %v4845 = vld [vmem:[#allocation2 + $0x200] sm:$0xff]
    %v4846 = vld [vmem:[#allocation2 + $0x208] sm:$0xff]
    %v4847 = vld [vmem:[#allocation2 + $0x210] sm:$0xff]
    %v4848 = vld [vmem:[#allocation2 + $0x218] sm:$0xff]
    %v4849 = vld [vmem:[#allocation2 + $0x220] sm:$0xff]
    %v4850 = vsel %vm351, %v4786, 0.0
    %v4851 = vsel %vm352, %v4787, 0.0
    %v4852 = vsel %vm353, %v4788, 0.0
    %v4853 = vsel %vm354, %v4789, 0.0
    %v4854 = vsel %vm355, %v4790, 0.0
    %v4855 = vsel %vm356, %v4791, 0.0
    %v4856 = vsel %vm357, %v4792, 0.0
    %v4857 = vsel %vm358, %v4793, 0.0
    %v4858 = vsel %vm359, %v4794, 0.0
    %v4859 = vsel %vm360, %v4795, 0.0
    %v4860 = vsel %vm361, %v4796, 0.0
    %v4861 = vsel %vm362, %v4797, 0.0
    %v4862 = vsel %vm363, %v4798, 0.0
    %v4863 = vsel %vm364, %v4799, 0.0
    %v4864 = vsel %vm365, %v4800, 0.0
    %v4865 = vsel %vm366, %v4801, 0.0
    %v4866 = vsel %vm367, %v4802, 0.0
    %v4867 = vsel %vm368, %v4803, 0.0
    %v4868 = vsel %vm369, %v4804, 0.0
    %v4869 = vsel %vm370, %v4805, 0.0
    %v4870 = vsel %vm371, %v4806, 0.0
    %v4871 = vsel %vm372, %v4807, 0.0
    %v4872 = vsel %vm373, %v4808, 0.0
    %v4873 = vsel %vm374, %v4809, 0.0
    %v4874 = vsel %vm375, %v4810, 0.0
    %v4875 = vsel %vm376, %v4811, 0.0
    %v4876 = vsel %vm377, %v4812, 0.0
    %v4877 = vsel %vm378, %v4813, 0.0
    %v4878 = vsel %vm379, %v4814, 0.0
    %v4879 = vsel %vm380, %v4815, 0.0
    %v4880 = vsel %vm381, %v4816, 0.0
    %v4881 = vsel %vm382, %v4817, 0.0
    %v4882 = vsel %vm383, %v4818, 0.0
    %v4883 = vsel %vm384, %v4819, 0.0
    %v4884 = vsel %vm385, %v4820, 0.0
    %v4885 = vsel %vm386, %v4821, 0.0
    %v4886 = vsel %vm387, %v4822, 0.0
    %v4887 = vsel %vm388, %v4823, 0.0
    %v4888 = vsel %vm389, %v4824, 0.0
    %v4889 = vsel %vm390, %v4825, 0.0
    %v4890 = vsel %vm391, %v4826, 0.0
    %v4891 = vsel %vm392, %v4827, 0.0
    %v4892 = vsel %vm393, %v4828, 0.0
    %v4893 = vsel %vm394, %v4829, 0.0
    %v4894 = vsel %vm395, %v4830, 0.0
    %v4895 = vsel %vm396, %v4831, 0.0
    %v4896 = vsel %vm397, %v4832, 0.0
    %v4897 = vsel %vm398, %v4833, 0.0
    %v4898 = vsel %vm399, %v4834, 0.0
    %v4899 = vsel %vm400, %v4835, 0.0
    %v4900 = vsel %vm401, %v4836, 0.0
    %v4901 = vsel %vm402, %v4837, 0.0
    %v4902 = vsel %vm403, %v4838, 0.0
    %v4903 = vsel %vm404, %v4839, 0.0
    %v4904 = vsel %vm405, %v4840, 0.0
    %v4905 = vsel %vm406, %v4841, 0.0
    %v4906 = vsel %vm407, %v4842, 0.0
    %v4907 = vsel %vm408, %v4843, 0.0
    %v4908 = vsel %vm409, %v4844, 0.0
    %v4909 = vsel %vm410, %v4845, 0.0
    %v4910 = vsel %vm411, %v4846, 0.0
    %v4911 = vsel %vm412, %v4847, 0.0
    %v4912 = vsel %vm413, %v4848, 0.0
    %v4913 = vsel %vm414, %v4849, 0.0
    %v4914 = vpack.c.bf16 %v4851, %v4850
    %v4915 = vpack.c.bf16 %v4853, %v4852
    %v4916 = vpack.c.bf16 %v4855, %v4854
    %v4917 = vpack.c.bf16 %v4857, %v4856
    %v4918 = vpack.c.bf16 %v4859, %v4858
    %v4919 = vpack.c.bf16 %v4861, %v4860
    %v4920 = vpack.c.bf16 %v4863, %v4862
    %v4921 = vpack.c.bf16 %v4865, %v4864
    %v4922 = vpack.c.bf16 %v4867, %v4866
    %v4923 = vpack.c.bf16 %v4869, %v4868
    %v4924 = vpack.c.bf16 %v4871, %v4870
    %v4925 = vpack.c.bf16 %v4873, %v4872
    %v4926 = vpack.c.bf16 %v4875, %v4874
    %v4927 = vpack.c.bf16 %v4877, %v4876
    %v4928 = vpack.c.bf16 %v4879, %v4878
    %v4929 = vpack.c.bf16 %v4881, %v4880
    %v4930 = vpack.c.bf16 %v4883, %v4882
    %v4931 = vpack.c.bf16 %v4885, %v4884
    %v4932 = vpack.c.bf16 %v4887, %v4886
    %v4933 = vpack.c.bf16 %v4889, %v4888
    %v4934 = vpack.c.bf16 %v4891, %v4890
    %v4935 = vpack.c.bf16 %v4893, %v4892
    %v4936 = vpack.c.bf16 %v4895, %v4894
    %v4937 = vpack.c.bf16 %v4897, %v4896
    %v4938 = vpack.c.bf16 %v4899, %v4898
    %v4939 = vpack.c.bf16 %v4901, %v4900
    %v4940 = vpack.c.bf16 %v4903, %v4902
    %v4941 = vpack.c.bf16 %v4905, %v4904
    %v4942 = vpack.c.bf16 %v4907, %v4906
    %v4943 = vpack.c.bf16 %v4909, %v4908
    %v4944 = vpack.c.bf16 %v4911, %v4910
    %v4945 = vpack.c.bf16 %v4913, %v4912
    %s4946 = scalar_lea.vmem %s1, 448
    %v4947 = vld [vmem:[%s4946] sm:$0xf]
    %v4948 = vld [vmem:[%s4946 + $0x4] sm:$0xf]
    %v4949 = vld [vmem:[%s4946 + $0x8] sm:$0xf]
    %v4950 = vld [vmem:[%s4946 + $0xc] sm:$0xf]
    %v4951 = vld [vmem:[%s4946 + $0x10] sm:$0xf]
    %v4952 = vld [vmem:[%s4946 + $0x14] sm:$0xf]
    %v4953 = vld [vmem:[%s4946 + $0x18] sm:$0xf]
    %v4954 = vld [vmem:[%s4946 + $0x1c] sm:$0xf]
    %v4955 = vld [vmem:[%s4946 + $0x20] sm:$0xf]
    %v4956 = vld [vmem:[%s4946 + $0x24] sm:$0xf]
    %v4957 = vld [vmem:[%s4946 + $0x28] sm:$0xf]
    %v4958 = vld [vmem:[%s4946 + $0x2c] sm:$0xf]
    %v4959 = vld [vmem:[%s4946 + $0x30] sm:$0xf]
    %v4960 = vld [vmem:[%s4946 + $0x34] sm:$0xf]
    %v4961 = vld [vmem:[%s4946 + $0x38] sm:$0xf]
    %v4962 = vld [vmem:[%s4946 + $0x3c] sm:$0xf]
    %v4979 = vunpack.c.l.b16 %v4947
    %v4980 = vunpack.c.l.b16 %v4948
    %v4981 = vunpack.c.l.b16 %v4949
    %v4982 = vunpack.c.l.b16 %v4950
    %v4983 = vunpack.c.l.b16 %v4951
    %v4984 = vunpack.c.l.b16 %v4952
    %v4985 = vunpack.c.l.b16 %v4953
    %v4986 = vunpack.c.l.b16 %v4954
    %v4987 = vunpack.c.l.b16 %v4955
    %v4988 = vunpack.c.l.b16 %v4956
    %v4989 = vunpack.c.l.b16 %v4957
    %v4990 = vunpack.c.l.b16 %v4958
    %v4991 = vunpack.c.l.b16 %v4959
    %v4992 = vunpack.c.l.b16 %v4960
    %v4993 = vunpack.c.l.b16 %v4961
    %v4994 = vunpack.c.l.b16 %v4962
    %v4995 = vpack.c.b16 %v4980, %v4979
    %v4996 = vpack.c.b16 %v4982, %v4981
    %v4997 = vpack.c.b16 %v4984, %v4983
    %v4998 = vpack.c.b16 %v4986, %v4985
    %v4999 = vpack.c.b16 %v4988, %v4987
    %v5000 = vpack.c.b16 %v4990, %v4989
    %v5001 = vpack.c.b16 %v4992, %v4991
    %v5002 = vpack.c.b16 %v4994, %v4993
    %5011 = vmatprep.subr.bf16.mxu0 0
    %5012 = vmatpush1.bf16.msra.mxu0 %v5002
    %5013 = vmatprep.subr.bf16.mxu0 0
    %5014 = vmatpush1.bf16.msra.mxu0 %v5001
    %5015 = vmatprep.subr.bf16.mxu0 0
    %5016 = vmatpush1.bf16.msra.mxu0 %v5000
    %5017 = vmatprep.subr.bf16.mxu0 0
    %5018 = vmatpush1.bf16.msra.mxu0 %v4999
    %5019 = vmatprep.subr.bf16.mxu0 0
    %5020 = vmatpush1.bf16.msra.mxu0 %v4998
    %5021 = vmatprep.subr.bf16.mxu0 0
    %5022 = vmatpush1.bf16.msra.mxu0 %v4997
    %5023 = vmatprep.subr.bf16.mxu0 0
    %5024 = vmatpush1.bf16.msra.mxu0 %v4996
    %5025 = vmatprep.subr.bf16.mxu0 0
    %5026 = vmatpush1.bf16.msra.mxu0 %v4995
    %5027 = vmatprep.subr.bf16.mxu0 0
    %5028 = vmatpush2.bf16.msra.mxu0 0
    %5029 = vmatprep.subr.bf16.mxu0 0
    %5030 = vmatpush2.bf16.msra.mxu0 0
    %5031 = vmatprep.subr.bf16.mxu0 0
    %5032 = vmatpush2.bf16.msra.mxu0 0
    %5033 = vmatprep.subr.bf16.mxu0 0
    %5034 = vmatpush2.bf16.msra.mxu0 0
    %5035 = vmatprep.subr.bf16.mxu0 0
    %5036 = vmatpush2.bf16.msra.mxu0 0
    %5037 = vmatprep.subr.bf16.mxu0 0
    %5038 = vmatpush2.bf16.msra.mxu0 0
    %5039 = vmatprep.subr.bf16.mxu0 0
    %5040 = vmatpush2.bf16.msra.mxu0 0
    %5041 = vmatprep.subr.bf16.mxu0 0
    %5042 = vmatpush2.bf16.msra.mxu0 0
    %5043 = vmatprep.mubr.bf16.mxu0 0
    %5044 = vmatmul.mubr.bf16.gmra.mxu0 %v4914
    %v5045 = vpop.f32.mrf.mxu0
    %v5046 = vadd.f32 0.0, %v5045
    %v5047 = vpop.f32.mrf.mxu0
    %v5048 = vpop.f32.mrf.mxu0
    %v5049 = vadd.f32 0.0, %v5048
    %v5050 = vpop.f32.mrf.mxu0
    %5051 = vmatprep.mubr.bf16.mxu0 0
    %5052 = vmatmul.mubr.bf16.gmra.mxu0 %v4915
    %v5053 = vpop.f32.mrf.mxu0
    %v5054 = vadd.f32 0.0, %v5053
    %v5055 = vpop.f32.mrf.mxu0
    %v5056 = vpop.f32.mrf.mxu0
    %v5057 = vadd.f32 0.0, %v5056
    %v5058 = vpop.f32.mrf.mxu0
    %5059 = vmatprep.mubr.bf16.mxu0 0
    %5060 = vmatmul.mubr.bf16.gmra.mxu0 %v4916
    %v5061 = vpop.f32.mrf.mxu0
    %v5062 = vadd.f32 0.0, %v5061
    %v5063 = vpop.f32.mrf.mxu0
    %v5064 = vpop.f32.mrf.mxu0
    %v5065 = vadd.f32 0.0, %v5064
    %v5066 = vpop.f32.mrf.mxu0
    %5067 = vmatprep.mubr.bf16.mxu0 0
    %5068 = vmatmul.mubr.bf16.gmra.mxu0 %v4917
    %v5069 = vpop.f32.mrf.mxu0
    %v5070 = vadd.f32 0.0, %v5069
    %v5071 = vpop.f32.mrf.mxu0
    %v5072 = vpop.f32.mrf.mxu0
    %v5073 = vadd.f32 0.0, %v5072
    %v5074 = vpop.f32.mrf.mxu0
    %5075 = vmatprep.mubr.bf16.mxu0 0
    %5076 = vmatmul.mubr.bf16.gmra.mxu0 %v4918
    %v5077 = vpop.f32.mrf.mxu0
    %v5078 = vadd.f32 0.0, %v5077
    %v5079 = vpop.f32.mrf.mxu0
    %v5080 = vpop.f32.mrf.mxu0
    %v5081 = vadd.f32 0.0, %v5080
    %v5082 = vpop.f32.mrf.mxu0
    %5083 = vmatprep.mubr.bf16.mxu0 0
    %5084 = vmatmul.mubr.bf16.gmra.mxu0 %v4919
    %v5085 = vpop.f32.mrf.mxu0
    %v5086 = vadd.f32 0.0, %v5085
    %v5087 = vpop.f32.mrf.mxu0
    %v5088 = vpop.f32.mrf.mxu0
    %v5089 = vadd.f32 0.0, %v5088
    %v5090 = vpop.f32.mrf.mxu0
    %5091 = vmatprep.mubr.bf16.mxu0 0
    %5092 = vmatmul.mubr.bf16.gmra.mxu0 %v4920
    %v5093 = vpop.f32.mrf.mxu0
    %v5094 = vadd.f32 0.0, %v5093
    %v5095 = vpop.f32.mrf.mxu0
    %v5096 = vpop.f32.mrf.mxu0
    %v5097 = vadd.f32 0.0, %v5096
    %v5098 = vpop.f32.mrf.mxu0
    %5099 = vmatprep.mubr.bf16.mxu0 0
    %5100 = vmatmul.mubr.bf16.gmra.mxu0 %v4921
    %v5101 = vpop.f32.mrf.mxu0
    %v5102 = vadd.f32 0.0, %v5101
    %v5103 = vpop.f32.mrf.mxu0
    %v5104 = vpop.f32.mrf.mxu0
    %v5105 = vadd.f32 0.0, %v5104
    %v5106 = vpop.f32.mrf.mxu0
    %5107 = vmatprep.mubr.bf16.mxu0 0
    %5108 = vmatmul.mubr.bf16.gmra.mxu0 %v4922
    %v5109 = vpop.f32.mrf.mxu0
    %v5110 = vadd.f32 0.0, %v5109
    %v5111 = vpop.f32.mrf.mxu0
    %v5112 = vpop.f32.mrf.mxu0
    %v5113 = vadd.f32 0.0, %v5112
    %v5114 = vpop.f32.mrf.mxu0
    %5115 = vmatprep.mubr.bf16.mxu0 0
    %5116 = vmatmul.mubr.bf16.gmra.mxu0 %v4923
    %v5117 = vpop.f32.mrf.mxu0
    %v5118 = vadd.f32 0.0, %v5117
    %v5119 = vpop.f32.mrf.mxu0
    %v5120 = vpop.f32.mrf.mxu0
    %v5121 = vadd.f32 0.0, %v5120
    %v5122 = vpop.f32.mrf.mxu0
    %5123 = vmatprep.mubr.bf16.mxu0 0
    %5124 = vmatmul.mubr.bf16.gmra.mxu0 %v4924
    %v5125 = vpop.f32.mrf.mxu0
    %v5126 = vadd.f32 0.0, %v5125
    %v5127 = vpop.f32.mrf.mxu0
    %v5128 = vpop.f32.mrf.mxu0
    %v5129 = vadd.f32 0.0, %v5128
    %v5130 = vpop.f32.mrf.mxu0
    %5131 = vmatprep.mubr.bf16.mxu0 0
    %5132 = vmatmul.mubr.bf16.gmra.mxu0 %v4925
    %v5133 = vpop.f32.mrf.mxu0
    %v5134 = vadd.f32 0.0, %v5133
    %v5135 = vpop.f32.mrf.mxu0
    %v5136 = vpop.f32.mrf.mxu0
    %v5137 = vadd.f32 0.0, %v5136
    %v5138 = vpop.f32.mrf.mxu0
    %5139 = vmatprep.mubr.bf16.mxu0 0
    %5140 = vmatmul.mubr.bf16.gmra.mxu0 %v4926
    %v5141 = vpop.f32.mrf.mxu0
    %v5142 = vadd.f32 0.0, %v5141
    %v5143 = vpop.f32.mrf.mxu0
    %v5144 = vpop.f32.mrf.mxu0
    %v5145 = vadd.f32 0.0, %v5144
    %v5146 = vpop.f32.mrf.mxu0
    %5147 = vmatprep.mubr.bf16.mxu0 0
    %5148 = vmatmul.mubr.bf16.gmra.mxu0 %v4927
    %v5149 = vpop.f32.mrf.mxu0
    %v5150 = vadd.f32 0.0, %v5149
    %v5151 = vpop.f32.mrf.mxu0
    %v5152 = vpop.f32.mrf.mxu0
    %v5153 = vadd.f32 0.0, %v5152
    %v5154 = vpop.f32.mrf.mxu0
    %5155 = vmatprep.mubr.bf16.mxu0 0
    %5156 = vmatmul.mubr.bf16.gmra.mxu0 %v4928
    %v5157 = vpop.f32.mrf.mxu0
    %v5158 = vadd.f32 0.0, %v5157
    %v5159 = vpop.f32.mrf.mxu0
    %v5160 = vpop.f32.mrf.mxu0
    %v5161 = vadd.f32 0.0, %v5160
    %v5162 = vpop.f32.mrf.mxu0
    %5163 = vmatprep.mubr.bf16.mxu0 0
    %5164 = vmatmul.mubr.bf16.gmra.mxu0 %v4929
    %v5165 = vpop.f32.mrf.mxu0
    %v5166 = vadd.f32 0.0, %v5165
    %v5167 = vpop.f32.mrf.mxu0
    %v5168 = vpop.f32.mrf.mxu0
    %v5169 = vadd.f32 0.0, %v5168
    %v5170 = vpop.f32.mrf.mxu0
    %5171 = vmatprep.mubr.bf16.mxu0 0
    %5172 = vmatmul.mubr.bf16.gmra.mxu0 %v4930
    %v5173 = vpop.f32.mrf.mxu0
    %v5174 = vadd.f32 0.0, %v5173
    %v5175 = vpop.f32.mrf.mxu0
    %v5176 = vpop.f32.mrf.mxu0
    %v5177 = vadd.f32 0.0, %v5176
    %v5178 = vpop.f32.mrf.mxu0
    %5179 = vmatprep.mubr.bf16.mxu0 0
    %5180 = vmatmul.mubr.bf16.gmra.mxu0 %v4931
    %v5181 = vpop.f32.mrf.mxu0
    %v5182 = vadd.f32 0.0, %v5181
    %v5183 = vpop.f32.mrf.mxu0
    %v5184 = vpop.f32.mrf.mxu0
    %v5185 = vadd.f32 0.0, %v5184
    %v5186 = vpop.f32.mrf.mxu0
    %5187 = vmatprep.mubr.bf16.mxu0 0
    %5188 = vmatmul.mubr.bf16.gmra.mxu0 %v4932
    %v5189 = vpop.f32.mrf.mxu0
    %v5190 = vadd.f32 0.0, %v5189
    %v5191 = vpop.f32.mrf.mxu0
    %v5192 = vpop.f32.mrf.mxu0
    %v5193 = vadd.f32 0.0, %v5192
    %v5194 = vpop.f32.mrf.mxu0
    %5195 = vmatprep.mubr.bf16.mxu0 0
    %5196 = vmatmul.mubr.bf16.gmra.mxu0 %v4933
    %v5197 = vpop.f32.mrf.mxu0
    %v5198 = vadd.f32 0.0, %v5197
    %v5199 = vpop.f32.mrf.mxu0
    %v5200 = vpop.f32.mrf.mxu0
    %v5201 = vadd.f32 0.0, %v5200
    %v5202 = vpop.f32.mrf.mxu0
    %5203 = vmatprep.mubr.bf16.mxu0 0
    %5204 = vmatmul.mubr.bf16.gmra.mxu0 %v4934
    %v5205 = vpop.f32.mrf.mxu0
    %v5206 = vadd.f32 0.0, %v5205
    %v5207 = vpop.f32.mrf.mxu0
    %v5208 = vpop.f32.mrf.mxu0
    %v5209 = vadd.f32 0.0, %v5208
    %v5210 = vpop.f32.mrf.mxu0
    %5211 = vmatprep.mubr.bf16.mxu0 0
    %5212 = vmatmul.mubr.bf16.gmra.mxu0 %v4935
    %v5213 = vpop.f32.mrf.mxu0
    %v5214 = vadd.f32 0.0, %v5213
    %v5215 = vpop.f32.mrf.mxu0
    %v5216 = vpop.f32.mrf.mxu0
    %v5217 = vadd.f32 0.0, %v5216
    %v5218 = vpop.f32.mrf.mxu0
    %5219 = vmatprep.mubr.bf16.mxu0 0
    %5220 = vmatmul.mubr.bf16.gmra.mxu0 %v4936
    %v5221 = vpop.f32.mrf.mxu0
    %v5222 = vadd.f32 0.0, %v5221
    %v5223 = vpop.f32.mrf.mxu0
    %v5224 = vpop.f32.mrf.mxu0
    %v5225 = vadd.f32 0.0, %v5224
    %v5226 = vpop.f32.mrf.mxu0
    %5227 = vmatprep.mubr.bf16.mxu0 0
    %5228 = vmatmul.mubr.bf16.gmra.mxu0 %v4937
    %v5229 = vpop.f32.mrf.mxu0
    %v5230 = vadd.f32 0.0, %v5229
    %v5231 = vpop.f32.mrf.mxu0
    %v5232 = vpop.f32.mrf.mxu0
    %v5233 = vadd.f32 0.0, %v5232
    %v5234 = vpop.f32.mrf.mxu0
    %5235 = vmatprep.mubr.bf16.mxu0 0
    %5236 = vmatmul.mubr.bf16.gmra.mxu0 %v4938
    %v5237 = vpop.f32.mrf.mxu0
    %v5238 = vadd.f32 0.0, %v5237
    %v5239 = vpop.f32.mrf.mxu0
    %v5240 = vpop.f32.mrf.mxu0
    %v5241 = vadd.f32 0.0, %v5240
    %v5242 = vpop.f32.mrf.mxu0
    %5243 = vmatprep.mubr.bf16.mxu0 0
    %5244 = vmatmul.mubr.bf16.gmra.mxu0 %v4939
    %v5245 = vpop.f32.mrf.mxu0
    %v5246 = vadd.f32 0.0, %v5245
    %v5247 = vpop.f32.mrf.mxu0
    %v5248 = vpop.f32.mrf.mxu0
    %v5249 = vadd.f32 0.0, %v5248
    %v5250 = vpop.f32.mrf.mxu0
    %5251 = vmatprep.mubr.bf16.mxu0 0
    %5252 = vmatmul.mubr.bf16.gmra.mxu0 %v4940
    %v5253 = vpop.f32.mrf.mxu0
    %v5254 = vadd.f32 0.0, %v5253
    %v5255 = vpop.f32.mrf.mxu0
    %v5256 = vpop.f32.mrf.mxu0
    %v5257 = vadd.f32 0.0, %v5256
    %v5258 = vpop.f32.mrf.mxu0
    %5259 = vmatprep.mubr.bf16.mxu0 0
    %5260 = vmatmul.mubr.bf16.gmra.mxu0 %v4941
    %v5261 = vpop.f32.mrf.mxu0
    %v5262 = vadd.f32 0.0, %v5261
    %v5263 = vpop.f32.mrf.mxu0
    %v5264 = vpop.f32.mrf.mxu0
    %v5265 = vadd.f32 0.0, %v5264
    %v5266 = vpop.f32.mrf.mxu0
    %5267 = vmatprep.mubr.bf16.mxu0 0
    %5268 = vmatmul.mubr.bf16.gmra.mxu0 %v4942
    %v5269 = vpop.f32.mrf.mxu0
    %v5270 = vadd.f32 0.0, %v5269
    %v5271 = vpop.f32.mrf.mxu0
    %v5272 = vpop.f32.mrf.mxu0
    %v5273 = vadd.f32 0.0, %v5272
    %v5274 = vpop.f32.mrf.mxu0
    %5275 = vmatprep.mubr.bf16.mxu0 0
    %5276 = vmatmul.mubr.bf16.gmra.mxu0 %v4943
    %v5277 = vpop.f32.mrf.mxu0
    %v5278 = vadd.f32 0.0, %v5277
    %v5279 = vpop.f32.mrf.mxu0
    %v5280 = vpop.f32.mrf.mxu0
    %v5281 = vadd.f32 0.0, %v5280
    %v5282 = vpop.f32.mrf.mxu0
    %5283 = vmatprep.mubr.bf16.mxu0 0
    %5284 = vmatmul.mubr.bf16.gmra.mxu0 %v4944
    %v5285 = vpop.f32.mrf.mxu0
    %v5286 = vadd.f32 0.0, %v5285
    %v5287 = vpop.f32.mrf.mxu0
    %v5288 = vpop.f32.mrf.mxu0
    %v5289 = vadd.f32 0.0, %v5288
    %v5290 = vpop.f32.mrf.mxu0
    %5291 = vmatprep.mubr.bf16.mxu0 0
    %5292 = vmatmul.mubr.bf16.gmra.mxu0 %v4945
    %v5293 = vpop.f32.mrf.mxu0
    %v5294 = vadd.f32 0.0, %v5293
    %v5295 = vpop.f32.mrf.mxu0
    %v5296 = vpop.f32.mrf.mxu0
    %v5297 = vadd.f32 0.0, %v5296
    %v5298 = vpop.f32.mrf.mxu0
    %5299 = vdwg.mxu0
    %v5300 = vadd.f32 %v4722, %v5046
    %v5301 = vadd.f32 %v4723, %v5049
    %v5302 = vadd.f32 %v4724, %v5054
    %v5303 = vadd.f32 %v4725, %v5057
    %v5304 = vadd.f32 %v4726, %v5062
    %v5305 = vadd.f32 %v4727, %v5065
    %v5306 = vadd.f32 %v4728, %v5070
    %v5307 = vadd.f32 %v4729, %v5073
    %v5308 = vadd.f32 %v4730, %v5078
    %v5309 = vadd.f32 %v4731, %v5081
    %v5310 = vadd.f32 %v4732, %v5086
    %v5311 = vadd.f32 %v4733, %v5089
    %v5312 = vadd.f32 %v4734, %v5094
    %v5313 = vadd.f32 %v4735, %v5097
    %v5314 = vadd.f32 %v4736, %v5102
    %v5315 = vadd.f32 %v4737, %v5105
    %v5316 = vadd.f32 %v4738, %v5110
    %v5317 = vadd.f32 %v4739, %v5113
    %v5318 = vadd.f32 %v4740, %v5118
    %v5319 = vadd.f32 %v4741, %v5121
    %v5320 = vadd.f32 %v4742, %v5126
    %v5321 = vadd.f32 %v4743, %v5129
    %v5322 = vadd.f32 %v4744, %v5134
    %v5323 = vadd.f32 %v4745, %v5137
    %v5324 = vadd.f32 %v4746, %v5142
    %v5325 = vadd.f32 %v4747, %v5145
    %v5326 = vadd.f32 %v4748, %v5150
    %v5327 = vadd.f32 %v4749, %v5153
    %v5328 = vadd.f32 %v4750, %v5158
    %v5329 = vadd.f32 %v4751, %v5161
    %v5330 = vadd.f32 %v4752, %v5166
    %v5331 = vadd.f32 %v4753, %v5169
    %v5332 = vadd.f32 %v4754, %v5174
    %v5333 = vadd.f32 %v4755, %v5177
    %v5334 = vadd.f32 %v4756, %v5182
    %v5335 = vadd.f32 %v4757, %v5185
    %v5336 = vadd.f32 %v4758, %v5190
    %v5337 = vadd.f32 %v4759, %v5193
    %v5338 = vadd.f32 %v4760, %v5198
    %v5339 = vadd.f32 %v4761, %v5201
    %v5340 = vadd.f32 %v4762, %v5206
    %v5341 = vadd.f32 %v4763, %v5209
    %v5342 = vadd.f32 %v4764, %v5214
    %v5343 = vadd.f32 %v4765, %v5217
    %v5344 = vadd.f32 %v4766, %v5222
    %v5345 = vadd.f32 %v4767, %v5225
    %v5346 = vadd.f32 %v4768, %v5230
    %v5347 = vadd.f32 %v4769, %v5233
    %v5348 = vadd.f32 %v4770, %v5238
    %v5349 = vadd.f32 %v4771, %v5241
    %v5350 = vadd.f32 %v4772, %v5246
    %v5351 = vadd.f32 %v4773, %v5249
    %v5352 = vadd.f32 %v4774, %v5254
    %v5353 = vadd.f32 %v4775, %v5257
    %v5354 = vadd.f32 %v4776, %v5262
    %v5355 = vadd.f32 %v4777, %v5265
    %v5356 = vadd.f32 %v4778, %v5270
    %v5357 = vadd.f32 %v4779, %v5273
    %v5358 = vadd.f32 %v4780, %v5278
    %v5359 = vadd.f32 %v4781, %v5281
    %v5360 = vadd.f32 %v4782, %v5286
    %v5361 = vadd.f32 %v4783, %v5289
    %v5362 = vadd.f32 %v4784, %v5294
    %v5363 = vadd.f32 %v4785, %v5297
    %v5364 = vld [vmem:[#allocation2 + $0x29] sm:$0xff]
    %v5365 = vld [vmem:[#allocation2 + $0x31] sm:$0xff]
    %v5366 = vld [vmem:[#allocation2 + $0x39] sm:$0xff]
    %v5367 = vld [vmem:[#allocation2 + $0x41] sm:$0xff]
    %v5368 = vld [vmem:[#allocation2 + $0x49] sm:$0xff]
    %v5369 = vld [vmem:[#allocation2 + $0x51] sm:$0xff]
    %v5370 = vld [vmem:[#allocation2 + $0x59] sm:$0xff]
    %v5371 = vld [vmem:[#allocation2 + $0x61] sm:$0xff]
    %v5372 = vld [vmem:[#allocation2 + $0x69] sm:$0xff]
    %v5373 = vld [vmem:[#allocation2 + $0x71] sm:$0xff]
    %v5374 = vld [vmem:[#allocation2 + $0x79] sm:$0xff]
    %v5375 = vld [vmem:[#allocation2 + $0x81] sm:$0xff]
    %v5376 = vld [vmem:[#allocation2 + $0x89] sm:$0xff]
    %v5377 = vld [vmem:[#allocation2 + $0x91] sm:$0xff]
    %v5378 = vld [vmem:[#allocation2 + $0x99] sm:$0xff]
    %v5379 = vld [vmem:[#allocation2 + $0xa1] sm:$0xff]
    %v5380 = vld [vmem:[#allocation2 + $0xa9] sm:$0xff]
    %v5381 = vld [vmem:[#allocation2 + $0xb1] sm:$0xff]
    %v5382 = vld [vmem:[#allocation2 + $0xb9] sm:$0xff]
    %v5383 = vld [vmem:[#allocation2 + $0xc1] sm:$0xff]
    %v5384 = vld [vmem:[#allocation2 + $0xc9] sm:$0xff]
    %v5385 = vld [vmem:[#allocation2 + $0xd1] sm:$0xff]
    %v5386 = vld [vmem:[#allocation2 + $0xd9] sm:$0xff]
    %v5387 = vld [vmem:[#allocation2 + $0xe1] sm:$0xff]
    %v5388 = vld [vmem:[#allocation2 + $0xe9] sm:$0xff]
    %v5389 = vld [vmem:[#allocation2 + $0xf1] sm:$0xff]
    %v5390 = vld [vmem:[#allocation2 + $0xf9] sm:$0xff]
    %v5391 = vld [vmem:[#allocation2 + $0x101] sm:$0xff]
    %v5392 = vld [vmem:[#allocation2 + $0x109] sm:$0xff]
    %v5393 = vld [vmem:[#allocation2 + $0x111] sm:$0xff]
    %v5394 = vld [vmem:[#allocation2 + $0x119] sm:$0xff]
    %v5395 = vld [vmem:[#allocation2 + $0x121] sm:$0xff]
    %v5396 = vld [vmem:[#allocation2 + $0x129] sm:$0xff]
    %v5397 = vld [vmem:[#allocation2 + $0x131] sm:$0xff]
    %v5398 = vld [vmem:[#allocation2 + $0x139] sm:$0xff]
    %v5399 = vld [vmem:[#allocation2 + $0x141] sm:$0xff]
    %v5400 = vld [vmem:[#allocation2 + $0x149] sm:$0xff]
    %v5401 = vld [vmem:[#allocation2 + $0x151] sm:$0xff]
    %v5402 = vld [vmem:[#allocation2 + $0x159] sm:$0xff]
    %v5403 = vld [vmem:[#allocation2 + $0x161] sm:$0xff]
    %v5404 = vld [vmem:[#allocation2 + $0x169] sm:$0xff]
    %v5405 = vld [vmem:[#allocation2 + $0x171] sm:$0xff]
    %v5406 = vld [vmem:[#allocation2 + $0x179] sm:$0xff]
    %v5407 = vld [vmem:[#allocation2 + $0x181] sm:$0xff]
    %v5408 = vld [vmem:[#allocation2 + $0x189] sm:$0xff]
    %v5409 = vld [vmem:[#allocation2 + $0x191] sm:$0xff]
    %v5410 = vld [vmem:[#allocation2 + $0x199] sm:$0xff]
    %v5411 = vld [vmem:[#allocation2 + $0x1a1] sm:$0xff]
    %v5412 = vld [vmem:[#allocation2 + $0x1a9] sm:$0xff]
    %v5413 = vld [vmem:[#allocation2 + $0x1b1] sm:$0xff]
    %v5414 = vld [vmem:[#allocation2 + $0x1b9] sm:$0xff]
    %v5415 = vld [vmem:[#allocation2 + $0x1c1] sm:$0xff]
    %v5416 = vld [vmem:[#allocation2 + $0x1c9] sm:$0xff]
    %v5417 = vld [vmem:[#allocation2 + $0x1d1] sm:$0xff]
    %v5418 = vld [vmem:[#allocation2 + $0x1d9] sm:$0xff]
    %v5419 = vld [vmem:[#allocation2 + $0x1e1] sm:$0xff]
    %v5420 = vld [vmem:[#allocation2 + $0x1e9] sm:$0xff]
    %v5421 = vld [vmem:[#allocation2 + $0x1f1] sm:$0xff]
    %v5422 = vld [vmem:[#allocation2 + $0x1f9] sm:$0xff]
    %v5423 = vld [vmem:[#allocation2 + $0x201] sm:$0xff]
    %v5424 = vld [vmem:[#allocation2 + $0x209] sm:$0xff]
    %v5425 = vld [vmem:[#allocation2 + $0x211] sm:$0xff]
    %v5426 = vld [vmem:[#allocation2 + $0x219] sm:$0xff]
    %v5427 = vld [vmem:[#allocation2 + $0x221] sm:$0xff]
    %vm5428 = vmand %vm351, %vm479
    %vm5429 = vmand %vm352, %vm480
    %vm5430 = vmand %vm353, %vm481
    %vm5431 = vmand %vm354, %vm482
    %vm5432 = vmand %vm355, %vm483
    %vm5433 = vmand %vm356, %vm484
    %vm5434 = vmand %vm357, %vm485
    %vm5435 = vmand %vm358, %vm486
    %vm5436 = vmand %vm359, %vm487
    %vm5437 = vmand %vm360, %vm488
    %vm5438 = vmand %vm361, %vm489
    %vm5439 = vmand %vm362, %vm490
    %vm5440 = vmand %vm363, %vm491
    %vm5441 = vmand %vm364, %vm492
    %vm5442 = vmand %vm365, %vm493
    %vm5443 = vmand %vm366, %vm494
    %vm5444 = vmand %vm367, %vm495
    %vm5445 = vmand %vm368, %vm496
    %vm5446 = vmand %vm369, %vm497
    %vm5447 = vmand %vm370, %vm498
    %vm5448 = vmand %vm371, %vm499
    %vm5449 = vmand %vm372, %vm500
    %vm5450 = vmand %vm373, %vm501
    %vm5451 = vmand %vm374, %vm502
    %vm5452 = vmand %vm375, %vm503
    %vm5453 = vmand %vm376, %vm504
    %vm5454 = vmand %vm377, %vm505
    %vm5455 = vmand %vm378, %vm506
    %vm5456 = vmand %vm379, %vm507
    %vm5457 = vmand %vm380, %vm508
    %vm5458 = vmand %vm381, %vm509
    %vm5459 = vmand %vm382, %vm510
    %vm5460 = vmand %vm383, %vm511
    %vm5461 = vmand %vm384, %vm512
    %vm5462 = vmand %vm385, %vm513
    %vm5463 = vmand %vm386, %vm514
    %vm5464 = vmand %vm387, %vm515
    %vm5465 = vmand %vm388, %vm516
    %vm5466 = vmand %vm389, %vm517
    %vm5467 = vmand %vm390, %vm518
    %vm5468 = vmand %vm391, %vm519
    %vm5469 = vmand %vm392, %vm520
    %vm5470 = vmand %vm393, %vm521
    %vm5471 = vmand %vm394, %vm522
    %vm5472 = vmand %vm395, %vm523
    %vm5473 = vmand %vm396, %vm524
    %vm5474 = vmand %vm397, %vm525
    %vm5475 = vmand %vm398, %vm526
    %vm5476 = vmand %vm399, %vm527
    %vm5477 = vmand %vm400, %vm528
    %vm5478 = vmand %vm401, %vm529
    %vm5479 = vmand %vm402, %vm530
    %vm5480 = vmand %vm403, %vm531
    %vm5481 = vmand %vm404, %vm532
    %vm5482 = vmand %vm405, %vm533
    %vm5483 = vmand %vm406, %vm534
    %vm5484 = vmand %vm407, %vm535
    %vm5485 = vmand %vm408, %vm536
    %vm5486 = vmand %vm409, %vm537
    %vm5487 = vmand %vm410, %vm538
    %vm5488 = vmand %vm411, %vm539
    %vm5489 = vmand %vm412, %vm540
    %vm5490 = vmand %vm413, %vm541
    %vm5491 = vmand %vm414, %vm542
    %v5492 = vsel %vm5428, %v5364, 0.0
    %v5493 = vsel %vm5429, %v5365, 0.0
    %v5494 = vsel %vm5430, %v5366, 0.0
    %v5495 = vsel %vm5431, %v5367, 0.0
    %v5496 = vsel %vm5432, %v5368, 0.0
    %v5497 = vsel %vm5433, %v5369, 0.0
    %v5498 = vsel %vm5434, %v5370, 0.0
    %v5499 = vsel %vm5435, %v5371, 0.0
    %v5500 = vsel %vm5436, %v5372, 0.0
    %v5501 = vsel %vm5437, %v5373, 0.0
    %v5502 = vsel %vm5438, %v5374, 0.0
    %v5503 = vsel %vm5439, %v5375, 0.0
    %v5504 = vsel %vm5440, %v5376, 0.0
    %v5505 = vsel %vm5441, %v5377, 0.0
    %v5506 = vsel %vm5442, %v5378, 0.0
    %v5507 = vsel %vm5443, %v5379, 0.0
    %v5508 = vsel %vm5444, %v5380, 0.0
    %v5509 = vsel %vm5445, %v5381, 0.0
    %v5510 = vsel %vm5446, %v5382, 0.0
    %v5511 = vsel %vm5447, %v5383, 0.0
    %v5512 = vsel %vm5448, %v5384, 0.0
    %v5513 = vsel %vm5449, %v5385, 0.0
    %v5514 = vsel %vm5450, %v5386, 0.0
    %v5515 = vsel %vm5451, %v5387, 0.0
    %v5516 = vsel %vm5452, %v5388, 0.0
    %v5517 = vsel %vm5453, %v5389, 0.0
    %v5518 = vsel %vm5454, %v5390, 0.0
    %v5519 = vsel %vm5455, %v5391, 0.0
    %v5520 = vsel %vm5456, %v5392, 0.0
    %v5521 = vsel %vm5457, %v5393, 0.0
    %v5522 = vsel %vm5458, %v5394, 0.0
    %v5523 = vsel %vm5459, %v5395, 0.0
    %v5524 = vsel %vm5460, %v5396, 0.0
    %v5525 = vsel %vm5461, %v5397, 0.0
    %v5526 = vsel %vm5462, %v5398, 0.0
    %v5527 = vsel %vm5463, %v5399, 0.0
    %v5528 = vsel %vm5464, %v5400, 0.0
    %v5529 = vsel %vm5465, %v5401, 0.0
    %v5530 = vsel %vm5466, %v5402, 0.0
    %v5531 = vsel %vm5467, %v5403, 0.0
    %v5532 = vsel %vm5468, %v5404, 0.0
    %v5533 = vsel %vm5469, %v5405, 0.0
    %v5534 = vsel %vm5470, %v5406, 0.0
    %v5535 = vsel %vm5471, %v5407, 0.0
    %v5536 = vsel %vm5472, %v5408, 0.0
    %v5537 = vsel %vm5473, %v5409, 0.0
    %v5538 = vsel %vm5474, %v5410, 0.0
    %v5539 = vsel %vm5475, %v5411, 0.0
    %v5540 = vsel %vm5476, %v5412, 0.0
    %v5541 = vsel %vm5477, %v5413, 0.0
    %v5542 = vsel %vm5478, %v5414, 0.0
    %v5543 = vsel %vm5479, %v5415, 0.0
    %v5544 = vsel %vm5480, %v5416, 0.0
    %v5545 = vsel %vm5481, %v5417, 0.0
    %v5546 = vsel %vm5482, %v5418, 0.0
    %v5547 = vsel %vm5483, %v5419, 0.0
    %v5548 = vsel %vm5484, %v5420, 0.0
    %v5549 = vsel %vm5485, %v5421, 0.0
    %v5550 = vsel %vm5486, %v5422, 0.0
    %v5551 = vsel %vm5487, %v5423, 0.0
    %v5552 = vsel %vm5488, %v5424, 0.0
    %v5553 = vsel %vm5489, %v5425, 0.0
    %v5554 = vsel %vm5490, %v5426, 0.0
    %v5555 = vsel %vm5491, %v5427, 0.0
    %v5556 = vpack.c.bf16 %v5493, %v5492
    %v5557 = vpack.c.bf16 %v5495, %v5494
    %v5558 = vpack.c.bf16 %v5497, %v5496
    %v5559 = vpack.c.bf16 %v5499, %v5498
    %v5560 = vpack.c.bf16 %v5501, %v5500
    %v5561 = vpack.c.bf16 %v5503, %v5502
    %v5562 = vpack.c.bf16 %v5505, %v5504
    %v5563 = vpack.c.bf16 %v5507, %v5506
    %v5564 = vpack.c.bf16 %v5509, %v5508
    %v5565 = vpack.c.bf16 %v5511, %v5510
    %v5566 = vpack.c.bf16 %v5513, %v5512
    %v5567 = vpack.c.bf16 %v5515, %v5514
    %v5568 = vpack.c.bf16 %v5517, %v5516
    %v5569 = vpack.c.bf16 %v5519, %v5518
    %v5570 = vpack.c.bf16 %v5521, %v5520
    %v5571 = vpack.c.bf16 %v5523, %v5522
    %v5572 = vpack.c.bf16 %v5525, %v5524
    %v5573 = vpack.c.bf16 %v5527, %v5526
    %v5574 = vpack.c.bf16 %v5529, %v5528
    %v5575 = vpack.c.bf16 %v5531, %v5530
    %v5576 = vpack.c.bf16 %v5533, %v5532
    %v5577 = vpack.c.bf16 %v5535, %v5534
    %v5578 = vpack.c.bf16 %v5537, %v5536
    %v5579 = vpack.c.bf16 %v5539, %v5538
    %v5580 = vpack.c.bf16 %v5541, %v5540
    %v5581 = vpack.c.bf16 %v5543, %v5542
    %v5582 = vpack.c.bf16 %v5545, %v5544
    %v5583 = vpack.c.bf16 %v5547, %v5546
    %v5584 = vpack.c.bf16 %v5549, %v5548
    %v5585 = vpack.c.bf16 %v5551, %v5550
    %v5586 = vpack.c.bf16 %v5553, %v5552
    %v5587 = vpack.c.bf16 %v5555, %v5554
    %s5588 = scalar_lea.vmem %s1, 512
    %v5589 = vld [vmem:[%s5588] sm:$0xf]
    %v5590 = vld [vmem:[%s5588 + $0x4] sm:$0xf]
    %v5591 = vld [vmem:[%s5588 + $0x8] sm:$0xf]
    %v5592 = vld [vmem:[%s5588 + $0xc] sm:$0xf]
    %v5593 = vld [vmem:[%s5588 + $0x10] sm:$0xf]
    %v5594 = vld [vmem:[%s5588 + $0x14] sm:$0xf]
    %v5595 = vld [vmem:[%s5588 + $0x18] sm:$0xf]
    %v5596 = vld [vmem:[%s5588 + $0x1c] sm:$0xf]
    %v5597 = vld [vmem:[%s5588 + $0x20] sm:$0xf]
    %v5598 = vld [vmem:[%s5588 + $0x24] sm:$0xf]
    %v5599 = vld [vmem:[%s5588 + $0x28] sm:$0xf]
    %v5600 = vld [vmem:[%s5588 + $0x2c] sm:$0xf]
    %v5601 = vld [vmem:[%s5588 + $0x30] sm:$0xf]
    %v5602 = vld [vmem:[%s5588 + $0x34] sm:$0xf]
    %v5603 = vld [vmem:[%s5588 + $0x38] sm:$0xf]
    %v5604 = vld [vmem:[%s5588 + $0x3c] sm:$0xf]
    %v5621 = vunpack.c.l.b16 %v5589
    %v5622 = vunpack.c.l.b16 %v5590
    %v5623 = vunpack.c.l.b16 %v5591
    %v5624 = vunpack.c.l.b16 %v5592
    %v5625 = vunpack.c.l.b16 %v5593
    %v5626 = vunpack.c.l.b16 %v5594
    %v5627 = vunpack.c.l.b16 %v5595
    %v5628 = vunpack.c.l.b16 %v5596
    %v5629 = vunpack.c.l.b16 %v5597
    %v5630 = vunpack.c.l.b16 %v5598
    %v5631 = vunpack.c.l.b16 %v5599
    %v5632 = vunpack.c.l.b16 %v5600
    %v5633 = vunpack.c.l.b16 %v5601
    %v5634 = vunpack.c.l.b16 %v5602
    %v5635 = vunpack.c.l.b16 %v5603
    %v5636 = vunpack.c.l.b16 %v5604
    %v5637 = vpack.c.b16 %v5622, %v5621
    %v5638 = vpack.c.b16 %v5624, %v5623
    %v5639 = vpack.c.b16 %v5626, %v5625
    %v5640 = vpack.c.b16 %v5628, %v5627
    %v5641 = vpack.c.b16 %v5630, %v5629
    %v5642 = vpack.c.b16 %v5632, %v5631
    %v5643 = vpack.c.b16 %v5634, %v5633
    %v5644 = vpack.c.b16 %v5636, %v5635
    %5653 = vmatprep.subr.bf16.mxu0 0
    %5654 = vmatpush1.bf16.msra.mxu0 %v5644
    %5655 = vmatprep.subr.bf16.mxu0 0
    %5656 = vmatpush1.bf16.msra.mxu0 %v5643
    %5657 = vmatprep.subr.bf16.mxu0 0
    %5658 = vmatpush1.bf16.msra.mxu0 %v5642
    %5659 = vmatprep.subr.bf16.mxu0 0
    %5660 = vmatpush1.bf16.msra.mxu0 %v5641
    %5661 = vmatprep.subr.bf16.mxu0 0
    %5662 = vmatpush1.bf16.msra.mxu0 %v5640
    %5663 = vmatprep.subr.bf16.mxu0 0
    %5664 = vmatpush1.bf16.msra.mxu0 %v5639
    %5665 = vmatprep.subr.bf16.mxu0 0
    %5666 = vmatpush1.bf16.msra.mxu0 %v5638
    %5667 = vmatprep.subr.bf16.mxu0 0
    %5668 = vmatpush1.bf16.msra.mxu0 %v5637
    %5669 = vmatprep.subr.bf16.mxu0 0
    %5670 = vmatpush2.bf16.msra.mxu0 0
    %5671 = vmatprep.subr.bf16.mxu0 0
    %5672 = vmatpush2.bf16.msra.mxu0 0
    %5673 = vmatprep.subr.bf16.mxu0 0
    %5674 = vmatpush2.bf16.msra.mxu0 0
    %5675 = vmatprep.subr.bf16.mxu0 0
    %5676 = vmatpush2.bf16.msra.mxu0 0
    %5677 = vmatprep.subr.bf16.mxu0 0
    %5678 = vmatpush2.bf16.msra.mxu0 0
    %5679 = vmatprep.subr.bf16.mxu0 0
    %5680 = vmatpush2.bf16.msra.mxu0 0
    %5681 = vmatprep.subr.bf16.mxu0 0
    %5682 = vmatpush2.bf16.msra.mxu0 0
    %5683 = vmatprep.subr.bf16.mxu0 0
    %5684 = vmatpush2.bf16.msra.mxu0 0
    %5685 = vmatprep.mubr.bf16.mxu0 0
    %5686 = vmatmul.mubr.bf16.gmra.mxu0 %v5556
    %v5687 = vpop.f32.mrf.mxu0
    %v5688 = vadd.f32 0.0, %v5687
    %v5689 = vpop.f32.mrf.mxu0
    %v5690 = vpop.f32.mrf.mxu0
    %v5691 = vadd.f32 0.0, %v5690
    %v5692 = vpop.f32.mrf.mxu0
    %5693 = vmatprep.mubr.bf16.mxu0 0
    %5694 = vmatmul.mubr.bf16.gmra.mxu0 %v5557
    %v5695 = vpop.f32.mrf.mxu0
    %v5696 = vadd.f32 0.0, %v5695
    %v5697 = vpop.f32.mrf.mxu0
    %v5698 = vpop.f32.mrf.mxu0
    %v5699 = vadd.f32 0.0, %v5698
    %v5700 = vpop.f32.mrf.mxu0
    %5701 = vmatprep.mubr.bf16.mxu0 0
    %5702 = vmatmul.mubr.bf16.gmra.mxu0 %v5558
    %v5703 = vpop.f32.mrf.mxu0
    %v5704 = vadd.f32 0.0, %v5703
    %v5705 = vpop.f32.mrf.mxu0
    %v5706 = vpop.f32.mrf.mxu0
    %v5707 = vadd.f32 0.0, %v5706
    %v5708 = vpop.f32.mrf.mxu0
    %5709 = vmatprep.mubr.bf16.mxu0 0
    %5710 = vmatmul.mubr.bf16.gmra.mxu0 %v5559
    %v5711 = vpop.f32.mrf.mxu0
    %v5712 = vadd.f32 0.0, %v5711
    %v5713 = vpop.f32.mrf.mxu0
    %v5714 = vpop.f32.mrf.mxu0
    %v5715 = vadd.f32 0.0, %v5714
    %v5716 = vpop.f32.mrf.mxu0
    %5717 = vmatprep.mubr.bf16.mxu0 0
    %5718 = vmatmul.mubr.bf16.gmra.mxu0 %v5560
    %v5719 = vpop.f32.mrf.mxu0
    %v5720 = vadd.f32 0.0, %v5719
    %v5721 = vpop.f32.mrf.mxu0
    %v5722 = vpop.f32.mrf.mxu0
    %v5723 = vadd.f32 0.0, %v5722
    %v5724 = vpop.f32.mrf.mxu0
    %5725 = vmatprep.mubr.bf16.mxu0 0
    %5726 = vmatmul.mubr.bf16.gmra.mxu0 %v5561
    %v5727 = vpop.f32.mrf.mxu0
    %v5728 = vadd.f32 0.0, %v5727
    %v5729 = vpop.f32.mrf.mxu0
    %v5730 = vpop.f32.mrf.mxu0
    %v5731 = vadd.f32 0.0, %v5730
    %v5732 = vpop.f32.mrf.mxu0
    %5733 = vmatprep.mubr.bf16.mxu0 0
    %5734 = vmatmul.mubr.bf16.gmra.mxu0 %v5562
    %v5735 = vpop.f32.mrf.mxu0
    %v5736 = vadd.f32 0.0, %v5735
    %v5737 = vpop.f32.mrf.mxu0
    %v5738 = vpop.f32.mrf.mxu0
    %v5739 = vadd.f32 0.0, %v5738
    %v5740 = vpop.f32.mrf.mxu0
    %5741 = vmatprep.mubr.bf16.mxu0 0
    %5742 = vmatmul.mubr.bf16.gmra.mxu0 %v5563
    %v5743 = vpop.f32.mrf.mxu0
    %v5744 = vadd.f32 0.0, %v5743
    %v5745 = vpop.f32.mrf.mxu0
    %v5746 = vpop.f32.mrf.mxu0
    %v5747 = vadd.f32 0.0, %v5746
    %v5748 = vpop.f32.mrf.mxu0
    %5749 = vmatprep.mubr.bf16.mxu0 0
    %5750 = vmatmul.mubr.bf16.gmra.mxu0 %v5564
    %v5751 = vpop.f32.mrf.mxu0
    %v5752 = vadd.f32 0.0, %v5751
    %v5753 = vpop.f32.mrf.mxu0
    %v5754 = vpop.f32.mrf.mxu0
    %v5755 = vadd.f32 0.0, %v5754
    %v5756 = vpop.f32.mrf.mxu0
    %5757 = vmatprep.mubr.bf16.mxu0 0
    %5758 = vmatmul.mubr.bf16.gmra.mxu0 %v5565
    %v5759 = vpop.f32.mrf.mxu0
    %v5760 = vadd.f32 0.0, %v5759
    %v5761 = vpop.f32.mrf.mxu0
    %v5762 = vpop.f32.mrf.mxu0
    %v5763 = vadd.f32 0.0, %v5762
    %v5764 = vpop.f32.mrf.mxu0
    %5765 = vmatprep.mubr.bf16.mxu0 0
    %5766 = vmatmul.mubr.bf16.gmra.mxu0 %v5566
    %v5767 = vpop.f32.mrf.mxu0
    %v5768 = vadd.f32 0.0, %v5767
    %v5769 = vpop.f32.mrf.mxu0
    %v5770 = vpop.f32.mrf.mxu0
    %v5771 = vadd.f32 0.0, %v5770
    %v5772 = vpop.f32.mrf.mxu0
    %5773 = vmatprep.mubr.bf16.mxu0 0
    %5774 = vmatmul.mubr.bf16.gmra.mxu0 %v5567
    %v5775 = vpop.f32.mrf.mxu0
    %v5776 = vadd.f32 0.0, %v5775
    %v5777 = vpop.f32.mrf.mxu0
    %v5778 = vpop.f32.mrf.mxu0
    %v5779 = vadd.f32 0.0, %v5778
    %v5780 = vpop.f32.mrf.mxu0
    %5781 = vmatprep.mubr.bf16.mxu0 0
    %5782 = vmatmul.mubr.bf16.gmra.mxu0 %v5568
    %v5783 = vpop.f32.mrf.mxu0
    %v5784 = vadd.f32 0.0, %v5783
    %v5785 = vpop.f32.mrf.mxu0
    %v5786 = vpop.f32.mrf.mxu0
    %v5787 = vadd.f32 0.0, %v5786
    %v5788 = vpop.f32.mrf.mxu0
    %5789 = vmatprep.mubr.bf16.mxu0 0
    %5790 = vmatmul.mubr.bf16.gmra.mxu0 %v5569
    %v5791 = vpop.f32.mrf.mxu0
    %v5792 = vadd.f32 0.0, %v5791
    %v5793 = vpop.f32.mrf.mxu0
    %v5794 = vpop.f32.mrf.mxu0
    %v5795 = vadd.f32 0.0, %v5794
    %v5796 = vpop.f32.mrf.mxu0
    %5797 = vmatprep.mubr.bf16.mxu0 0
    %5798 = vmatmul.mubr.bf16.gmra.mxu0 %v5570
    %v5799 = vpop.f32.mrf.mxu0
    %v5800 = vadd.f32 0.0, %v5799
    %v5801 = vpop.f32.mrf.mxu0
    %v5802 = vpop.f32.mrf.mxu0
    %v5803 = vadd.f32 0.0, %v5802
    %v5804 = vpop.f32.mrf.mxu0
    %5805 = vmatprep.mubr.bf16.mxu0 0
    %5806 = vmatmul.mubr.bf16.gmra.mxu0 %v5571
    %v5807 = vpop.f32.mrf.mxu0
    %v5808 = vadd.f32 0.0, %v5807
    %v5809 = vpop.f32.mrf.mxu0
    %v5810 = vpop.f32.mrf.mxu0
    %v5811 = vadd.f32 0.0, %v5810
    %v5812 = vpop.f32.mrf.mxu0
    %5813 = vmatprep.mubr.bf16.mxu0 0
    %5814 = vmatmul.mubr.bf16.gmra.mxu0 %v5572
    %v5815 = vpop.f32.mrf.mxu0
    %v5816 = vadd.f32 0.0, %v5815
    %v5817 = vpop.f32.mrf.mxu0
    %v5818 = vpop.f32.mrf.mxu0
    %v5819 = vadd.f32 0.0, %v5818
    %v5820 = vpop.f32.mrf.mxu0
    %5821 = vmatprep.mubr.bf16.mxu0 0
    %5822 = vmatmul.mubr.bf16.gmra.mxu0 %v5573
    %v5823 = vpop.f32.mrf.mxu0
    %v5824 = vadd.f32 0.0, %v5823
    %v5825 = vpop.f32.mrf.mxu0
    %v5826 = vpop.f32.mrf.mxu0
    %v5827 = vadd.f32 0.0, %v5826
    %v5828 = vpop.f32.mrf.mxu0
    %5829 = vmatprep.mubr.bf16.mxu0 0
    %5830 = vmatmul.mubr.bf16.gmra.mxu0 %v5574
    %v5831 = vpop.f32.mrf.mxu0
    %v5832 = vadd.f32 0.0, %v5831
    %v5833 = vpop.f32.mrf.mxu0
    %v5834 = vpop.f32.mrf.mxu0
    %v5835 = vadd.f32 0.0, %v5834
    %v5836 = vpop.f32.mrf.mxu0
    %5837 = vmatprep.mubr.bf16.mxu0 0
    %5838 = vmatmul.mubr.bf16.gmra.mxu0 %v5575
    %v5839 = vpop.f32.mrf.mxu0
    %v5840 = vadd.f32 0.0, %v5839
    %v5841 = vpop.f32.mrf.mxu0
    %v5842 = vpop.f32.mrf.mxu0
    %v5843 = vadd.f32 0.0, %v5842
    %v5844 = vpop.f32.mrf.mxu0
    %5845 = vmatprep.mubr.bf16.mxu0 0
    %5846 = vmatmul.mubr.bf16.gmra.mxu0 %v5576
    %v5847 = vpop.f32.mrf.mxu0
    %v5848 = vadd.f32 0.0, %v5847
    %v5849 = vpop.f32.mrf.mxu0
    %v5850 = vpop.f32.mrf.mxu0
    %v5851 = vadd.f32 0.0, %v5850
    %v5852 = vpop.f32.mrf.mxu0
    %5853 = vmatprep.mubr.bf16.mxu0 0
    %5854 = vmatmul.mubr.bf16.gmra.mxu0 %v5577
    %v5855 = vpop.f32.mrf.mxu0
    %v5856 = vadd.f32 0.0, %v5855
    %v5857 = vpop.f32.mrf.mxu0
    %v5858 = vpop.f32.mrf.mxu0
    %v5859 = vadd.f32 0.0, %v5858
    %v5860 = vpop.f32.mrf.mxu0
    %5861 = vmatprep.mubr.bf16.mxu0 0
    %5862 = vmatmul.mubr.bf16.gmra.mxu0 %v5578
    %v5863 = vpop.f32.mrf.mxu0
    %v5864 = vadd.f32 0.0, %v5863
    %v5865 = vpop.f32.mrf.mxu0
    %v5866 = vpop.f32.mrf.mxu0
    %v5867 = vadd.f32 0.0, %v5866
    %v5868 = vpop.f32.mrf.mxu0
    %5869 = vmatprep.mubr.bf16.mxu0 0
    %5870 = vmatmul.mubr.bf16.gmra.mxu0 %v5579
    %v5871 = vpop.f32.mrf.mxu0
    %v5872 = vadd.f32 0.0, %v5871
    %v5873 = vpop.f32.mrf.mxu0
    %v5874 = vpop.f32.mrf.mxu0
    %v5875 = vadd.f32 0.0, %v5874
    %v5876 = vpop.f32.mrf.mxu0
    %5877 = vmatprep.mubr.bf16.mxu0 0
    %5878 = vmatmul.mubr.bf16.gmra.mxu0 %v5580
    %v5879 = vpop.f32.mrf.mxu0
    %v5880 = vadd.f32 0.0, %v5879
    %v5881 = vpop.f32.mrf.mxu0
    %v5882 = vpop.f32.mrf.mxu0
    %v5883 = vadd.f32 0.0, %v5882
    %v5884 = vpop.f32.mrf.mxu0
    %5885 = vmatprep.mubr.bf16.mxu0 0
    %5886 = vmatmul.mubr.bf16.gmra.mxu0 %v5581
    %v5887 = vpop.f32.mrf.mxu0
    %v5888 = vadd.f32 0.0, %v5887
    %v5889 = vpop.f32.mrf.mxu0
    %v5890 = vpop.f32.mrf.mxu0
    %v5891 = vadd.f32 0.0, %v5890
    %v5892 = vpop.f32.mrf.mxu0
    %5893 = vmatprep.mubr.bf16.mxu0 0
    %5894 = vmatmul.mubr.bf16.gmra.mxu0 %v5582
    %v5895 = vpop.f32.mrf.mxu0
    %v5896 = vadd.f32 0.0, %v5895
    %v5897 = vpop.f32.mrf.mxu0
    %v5898 = vpop.f32.mrf.mxu0
    %v5899 = vadd.f32 0.0, %v5898
    %v5900 = vpop.f32.mrf.mxu0
    %5901 = vmatprep.mubr.bf16.mxu0 0
    %5902 = vmatmul.mubr.bf16.gmra.mxu0 %v5583
    %v5903 = vpop.f32.mrf.mxu0
    %v5904 = vadd.f32 0.0, %v5903
    %v5905 = vpop.f32.mrf.mxu0
    %v5906 = vpop.f32.mrf.mxu0
    %v5907 = vadd.f32 0.0, %v5906
    %v5908 = vpop.f32.mrf.mxu0
    %5909 = vmatprep.mubr.bf16.mxu0 0
    %5910 = vmatmul.mubr.bf16.gmra.mxu0 %v5584
    %v5911 = vpop.f32.mrf.mxu0
    %v5912 = vadd.f32 0.0, %v5911
    %v5913 = vpop.f32.mrf.mxu0
    %v5914 = vpop.f32.mrf.mxu0
    %v5915 = vadd.f32 0.0, %v5914
    %v5916 = vpop.f32.mrf.mxu0
    %5917 = vmatprep.mubr.bf16.mxu0 0
    %5918 = vmatmul.mubr.bf16.gmra.mxu0 %v5585
    %v5919 = vpop.f32.mrf.mxu0
    %v5920 = vadd.f32 0.0, %v5919
    %v5921 = vpop.f32.mrf.mxu0
    %v5922 = vpop.f32.mrf.mxu0
    %v5923 = vadd.f32 0.0, %v5922
    %v5924 = vpop.f32.mrf.mxu0
    %5925 = vmatprep.mubr.bf16.mxu0 0
    %5926 = vmatmul.mubr.bf16.gmra.mxu0 %v5586
    %v5927 = vpop.f32.mrf.mxu0
    %v5928 = vadd.f32 0.0, %v5927
    %v5929 = vpop.f32.mrf.mxu0
    %v5930 = vpop.f32.mrf.mxu0
    %v5931 = vadd.f32 0.0, %v5930
    %v5932 = vpop.f32.mrf.mxu0
    %5933 = vmatprep.mubr.bf16.mxu0 0
    %5934 = vmatmul.mubr.bf16.gmra.mxu0 %v5587
    %v5935 = vpop.f32.mrf.mxu0
    %v5936 = vadd.f32 0.0, %v5935
    %v5937 = vpop.f32.mrf.mxu0
    %v5938 = vpop.f32.mrf.mxu0
    %v5939 = vadd.f32 0.0, %v5938
    %v5940 = vpop.f32.mrf.mxu0
    %5941 = vdwg.mxu0
    %v5942 = vadd.f32 %v5300, %v5688
    %v5943 = vadd.f32 %v5301, %v5691
    %v5944 = vadd.f32 %v5302, %v5696
    %v5945 = vadd.f32 %v5303, %v5699
    %v5946 = vadd.f32 %v5304, %v5704
    %v5947 = vadd.f32 %v5305, %v5707
    %v5948 = vadd.f32 %v5306, %v5712
    %v5949 = vadd.f32 %v5307, %v5715
    %v5950 = vadd.f32 %v5308, %v5720
    %v5951 = vadd.f32 %v5309, %v5723
    %v5952 = vadd.f32 %v5310, %v5728
    %v5953 = vadd.f32 %v5311, %v5731
    %v5954 = vadd.f32 %v5312, %v5736
    %v5955 = vadd.f32 %v5313, %v5739
    %v5956 = vadd.f32 %v5314, %v5744
    %v5957 = vadd.f32 %v5315, %v5747
    %v5958 = vadd.f32 %v5316, %v5752
    %v5959 = vadd.f32 %v5317, %v5755
    %v5960 = vadd.f32 %v5318, %v5760
    %v5961 = vadd.f32 %v5319, %v5763
    %v5962 = vadd.f32 %v5320, %v5768
    %v5963 = vadd.f32 %v5321, %v5771
    %v5964 = vadd.f32 %v5322, %v5776
    %v5965 = vadd.f32 %v5323, %v5779
    %v5966 = vadd.f32 %v5324, %v5784
    %v5967 = vadd.f32 %v5325, %v5787
    %v5968 = vadd.f32 %v5326, %v5792
    %v5969 = vadd.f32 %v5327, %v5795
    %v5970 = vadd.f32 %v5328, %v5800
    %v5971 = vadd.f32 %v5329, %v5803
    %v5972 = vadd.f32 %v5330, %v5808
    %v5973 = vadd.f32 %v5331, %v5811
    %v5974 = vadd.f32 %v5332, %v5816
    %v5975 = vadd.f32 %v5333, %v5819
    %v5976 = vadd.f32 %v5334, %v5824
    %v5977 = vadd.f32 %v5335, %v5827
    %v5978 = vadd.f32 %v5336, %v5832
    %v5979 = vadd.f32 %v5337, %v5835
    %v5980 = vadd.f32 %v5338, %v5840
    %v5981 = vadd.f32 %v5339, %v5843
    %v5982 = vadd.f32 %v5340, %v5848
    %v5983 = vadd.f32 %v5341, %v5851
    %v5984 = vadd.f32 %v5342, %v5856
    %v5985 = vadd.f32 %v5343, %v5859
    %v5986 = vadd.f32 %v5344, %v5864
    %v5987 = vadd.f32 %v5345, %v5867
    %v5988 = vadd.f32 %v5346, %v5872
    %v5989 = vadd.f32 %v5347, %v5875
    %v5990 = vadd.f32 %v5348, %v5880
    %v5991 = vadd.f32 %v5349, %v5883
    %v5992 = vadd.f32 %v5350, %v5888
    %v5993 = vadd.f32 %v5351, %v5891
    %v5994 = vadd.f32 %v5352, %v5896
    %v5995 = vadd.f32 %v5353, %v5899
    %v5996 = vadd.f32 %v5354, %v5904
    %v5997 = vadd.f32 %v5355, %v5907
    %v5998 = vadd.f32 %v5356, %v5912
    %v5999 = vadd.f32 %v5357, %v5915
    %v6000 = vadd.f32 %v5358, %v5920
    %v6001 = vadd.f32 %v5359, %v5923
    %v6002 = vadd.f32 %v5360, %v5928
    %v6003 = vadd.f32 %v5361, %v5931
    %v6004 = vadd.f32 %v5362, %v5936
    %v6005 = vadd.f32 %v5363, %v5939
    %v6006 = vld [vmem:[%s2] sm:$0x1]
    %v6008 = vlaneseq
    %v6009 = vshrl.u32 %v6008, 7
    %v6010 = vsub.s32 0, %v6009
    %v6011 = vrot.slane %v6006, %v6010
    %v6013 = vadd.f32 %v5942, %v6011
    %v6014 = vadd.f32 %v5943, %v6011
    %v6015 = vadd.f32 %v5944, %v6011
    %v6016 = vadd.f32 %v5945, %v6011
    %v6017 = vadd.f32 %v5946, %v6011
    %v6018 = vadd.f32 %v5947, %v6011
    %v6019 = vadd.f32 %v5948, %v6011
    %v6020 = vadd.f32 %v5949, %v6011
    %v6021 = vadd.f32 %v5950, %v6011
    %v6022 = vadd.f32 %v5951, %v6011
    %v6023 = vadd.f32 %v5952, %v6011
    %v6024 = vadd.f32 %v5953, %v6011
    %v6025 = vadd.f32 %v5954, %v6011
    %v6026 = vadd.f32 %v5955, %v6011
    %v6027 = vadd.f32 %v5956, %v6011
    %v6028 = vadd.f32 %v5957, %v6011
    %v6029 = vadd.f32 %v5958, %v6011
    %v6030 = vadd.f32 %v5959, %v6011
    %v6031 = vadd.f32 %v5960, %v6011
    %v6032 = vadd.f32 %v5961, %v6011
    %v6033 = vadd.f32 %v5962, %v6011
    %v6034 = vadd.f32 %v5963, %v6011
    %v6035 = vadd.f32 %v5964, %v6011
    %v6036 = vadd.f32 %v5965, %v6011
    %v6037 = vadd.f32 %v5966, %v6011
    %v6038 = vadd.f32 %v5967, %v6011
    %v6039 = vadd.f32 %v5968, %v6011
    %v6040 = vadd.f32 %v5969, %v6011
    %v6041 = vadd.f32 %v5970, %v6011
    %v6042 = vadd.f32 %v5971, %v6011
    %v6043 = vadd.f32 %v5972, %v6011
    %v6044 = vadd.f32 %v5973, %v6011
    %v6045 = vadd.f32 %v5974, %v6011
    %v6046 = vadd.f32 %v5975, %v6011
    %v6047 = vadd.f32 %v5976, %v6011
    %v6048 = vadd.f32 %v5977, %v6011
    %v6049 = vadd.f32 %v5978, %v6011
    %v6050 = vadd.f32 %v5979, %v6011
    %v6051 = vadd.f32 %v5980, %v6011
    %v6052 = vadd.f32 %v5981, %v6011
    %v6053 = vadd.f32 %v5982, %v6011
    %v6054 = vadd.f32 %v5983, %v6011
    %v6055 = vadd.f32 %v5984, %v6011
    %v6056 = vadd.f32 %v5985, %v6011
    %v6057 = vadd.f32 %v5986, %v6011
    %v6058 = vadd.f32 %v5987, %v6011
    %v6059 = vadd.f32 %v5988, %v6011
    %v6060 = vadd.f32 %v5989, %v6011
    %v6061 = vadd.f32 %v5990, %v6011
    %v6062 = vadd.f32 %v5991, %v6011
    %v6063 = vadd.f32 %v5992, %v6011
    %v6064 = vadd.f32 %v5993, %v6011
    %v6065 = vadd.f32 %v5994, %v6011
    %v6066 = vadd.f32 %v5995, %v6011
    %v6067 = vadd.f32 %v5996, %v6011
    %v6068 = vadd.f32 %v5997, %v6011
    %v6069 = vadd.f32 %v5998, %v6011
    %v6070 = vadd.f32 %v5999, %v6011
    %v6071 = vadd.f32 %v6000, %v6011
    %v6072 = vadd.f32 %v6001, %v6011
    %v6073 = vadd.f32 %v6002, %v6011
    %v6074 = vadd.f32 %v6003, %v6011
    %v6075 = vadd.f32 %v6004, %v6011
    %v6076 = vadd.f32 %v6005, %v6011
    %v6077 = vmax.f32 %v6013, 0.0
    %v6078 = vmax.f32 %v6014, 0.0
    %v6079 = vmax.f32 %v6015, 0.0
    %v6080 = vmax.f32 %v6016, 0.0
    %v6081 = vmax.f32 %v6017, 0.0
    %v6082 = vmax.f32 %v6018, 0.0
    %v6083 = vmax.f32 %v6019, 0.0
    %v6084 = vmax.f32 %v6020, 0.0
    %v6085 = vmax.f32 %v6021, 0.0
    %v6086 = vmax.f32 %v6022, 0.0
    %v6087 = vmax.f32 %v6023, 0.0
    %v6088 = vmax.f32 %v6024, 0.0
    %v6089 = vmax.f32 %v6025, 0.0
    %v6090 = vmax.f32 %v6026, 0.0
    %v6091 = vmax.f32 %v6027, 0.0
    %v6092 = vmax.f32 %v6028, 0.0
    %v6093 = vmax.f32 %v6029, 0.0
    %v6094 = vmax.f32 %v6030, 0.0
    %v6095 = vmax.f32 %v6031, 0.0
    %v6096 = vmax.f32 %v6032, 0.0
    %v6097 = vmax.f32 %v6033, 0.0
    %v6098 = vmax.f32 %v6034, 0.0
    %v6099 = vmax.f32 %v6035, 0.0
    %v6100 = vmax.f32 %v6036, 0.0
    %v6101 = vmax.f32 %v6037, 0.0
    %v6102 = vmax.f32 %v6038, 0.0
    %v6103 = vmax.f32 %v6039, 0.0
    %v6104 = vmax.f32 %v6040, 0.0
    %v6105 = vmax.f32 %v6041, 0.0
    %v6106 = vmax.f32 %v6042, 0.0
    %v6107 = vmax.f32 %v6043, 0.0
    %v6108 = vmax.f32 %v6044, 0.0
    %v6109 = vmax.f32 %v6045, 0.0
    %v6110 = vmax.f32 %v6046, 0.0
    %v6111 = vmax.f32 %v6047, 0.0
    %v6112 = vmax.f32 %v6048, 0.0
    %v6113 = vmax.f32 %v6049, 0.0
    %v6114 = vmax.f32 %v6050, 0.0
    %v6115 = vmax.f32 %v6051, 0.0
    %v6116 = vmax.f32 %v6052, 0.0
    %v6117 = vmax.f32 %v6053, 0.0
    %v6118 = vmax.f32 %v6054, 0.0
    %v6119 = vmax.f32 %v6055, 0.0
    %v6120 = vmax.f32 %v6056, 0.0
    %v6121 = vmax.f32 %v6057, 0.0
    %v6122 = vmax.f32 %v6058, 0.0
    %v6123 = vmax.f32 %v6059, 0.0
    %v6124 = vmax.f32 %v6060, 0.0
    %v6125 = vmax.f32 %v6061, 0.0
    %v6126 = vmax.f32 %v6062, 0.0
    %v6127 = vmax.f32 %v6063, 0.0
    %v6128 = vmax.f32 %v6064, 0.0
    %v6129 = vmax.f32 %v6065, 0.0
    %v6130 = vmax.f32 %v6066, 0.0
    %v6131 = vmax.f32 %v6067, 0.0
    %v6132 = vmax.f32 %v6068, 0.0
    %v6133 = vmax.f32 %v6069, 0.0
    %v6134 = vmax.f32 %v6070, 0.0
    %v6135 = vmax.f32 %v6071, 0.0
    %v6136 = vmax.f32 %v6072, 0.0
    %v6137 = vmax.f32 %v6073, 0.0
    %v6138 = vmax.f32 %v6074, 0.0
    %v6139 = vmax.f32 %v6075, 0.0
    %v6140 = vmax.f32 %v6076, 0.0
    %6141 = vst [vmem:[#allocation2 + $0x18] sm:$0xff] %v6077
    %6142 = vst [vmem:[#allocation2 + $0x20] sm:$0xff] %v6078
    %6143 = vst [vmem:[#allocation2 + $0x28] sm:$0xff] %v6079
    %6144 = vst [vmem:[#allocation2 + $0x30] sm:$0xff] %v6080
    %6145 = vst [vmem:[#allocation2 + $0x38] sm:$0xff] %v6081
    %6146 = vst [vmem:[#allocation2 + $0x40] sm:$0xff] %v6082
    %6147 = vst [vmem:[#allocation2 + $0x48] sm:$0xff] %v6083
    %6148 = vst [vmem:[#allocation2 + $0x50] sm:$0xff] %v6084
    %6149 = vst [vmem:[#allocation2 + $0x58] sm:$0xff] %v6085
    %6150 = vst [vmem:[#allocation2 + $0x60] sm:$0xff] %v6086
    %6151 = vst [vmem:[#allocation2 + $0x68] sm:$0xff] %v6087
    %6152 = vst [vmem:[#allocation2 + $0x70] sm:$0xff] %v6088
    %6153 = vst [vmem:[#allocation2 + $0x78] sm:$0xff] %v6089
    %6154 = vst [vmem:[#allocation2 + $0x80] sm:$0xff] %v6090
    %6155 = vst [vmem:[#allocation2 + $0x88] sm:$0xff] %v6091
    %6156 = vst [vmem:[#allocation2 + $0x90] sm:$0xff] %v6092
    %6157 = vst [vmem:[#allocation2 + $0x98] sm:$0xff] %v6093
    %6158 = vst [vmem:[#allocation2 + $0xa0] sm:$0xff] %v6094
    %6159 = vst [vmem:[#allocation2 + $0xa8] sm:$0xff] %v6095
    %6160 = vst [vmem:[#allocation2 + $0xb0] sm:$0xff] %v6096
    %6161 = vst [vmem:[#allocation2 + $0xb8] sm:$0xff] %v6097
    %6162 = vst [vmem:[#allocation2 + $0xc0] sm:$0xff] %v6098
    %6163 = vst [vmem:[#allocation2 + $0xc8] sm:$0xff] %v6099
    %6164 = vst [vmem:[#allocation2 + $0xd0] sm:$0xff] %v6100
    %6165 = vst [vmem:[#allocation2 + $0xd8] sm:$0xff] %v6101
    %6166 = vst [vmem:[#allocation2 + $0xe0] sm:$0xff] %v6102
    %6167 = vst [vmem:[#allocation2 + $0xe8] sm:$0xff] %v6103
    %6168 = vst [vmem:[#allocation2 + $0xf0] sm:$0xff] %v6104
    %6169 = vst [vmem:[#allocation2 + $0xf8] sm:$0xff] %v6105
    %6170 = vst [vmem:[#allocation2 + $0x100] sm:$0xff] %v6106
    %6171 = vst [vmem:[#allocation2 + $0x108] sm:$0xff] %v6107
    %6172 = vst [vmem:[#allocation2 + $0x110] sm:$0xff] %v6108
    %6173 = vst [vmem:[#allocation2 + $0x118] sm:$0xff] %v6109
    %6174 = vst [vmem:[#allocation2 + $0x120] sm:$0xff] %v6110
    %6175 = vst [vmem:[#allocation2 + $0x128] sm:$0xff] %v6111
    %6176 = vst [vmem:[#allocation2 + $0x130] sm:$0xff] %v6112
    %6177 = vst [vmem:[#allocation2 + $0x138] sm:$0xff] %v6113
    %6178 = vst [vmem:[#allocation2 + $0x140] sm:$0xff] %v6114
    %6179 = vst [vmem:[#allocation2 + $0x148] sm:$0xff] %v6115
    %6180 = vst [vmem:[#allocation2 + $0x150] sm:$0xff] %v6116
    %6181 = vst [vmem:[#allocation2 + $0x158] sm:$0xff] %v6117
    %6182 = vst [vmem:[#allocation2 + $0x160] sm:$0xff] %v6118
    %6183 = vst [vmem:[#allocation2 + $0x168] sm:$0xff] %v6119
    %6184 = vst [vmem:[#allocation2 + $0x170] sm:$0xff] %v6120
    %6185 = vst [vmem:[#allocation2 + $0x178] sm:$0xff] %v6121
    %6186 = vst [vmem:[#allocation2 + $0x180] sm:$0xff] %v6122
    %6187 = vst [vmem:[#allocation2 + $0x188] sm:$0xff] %v6123
    %6188 = vst [vmem:[#allocation2 + $0x190] sm:$0xff] %v6124
    %6189 = vst [vmem:[#allocation2 + $0x198] sm:$0xff] %v6125
    %6190 = vst [vmem:[#allocation2 + $0x1a0] sm:$0xff] %v6126
    %6191 = vst [vmem:[#allocation2 + $0x1a8] sm:$0xff] %v6127
    %6192 = vst [vmem:[#allocation2 + $0x1b0] sm:$0xff] %v6128
    %6193 = vst [vmem:[#allocation2 + $0x1b8] sm:$0xff] %v6129
    %6194 = vst [vmem:[#allocation2 + $0x1c0] sm:$0xff] %v6130
    %6195 = vst [vmem:[#allocation2 + $0x1c8] sm:$0xff] %v6131
    %6196 = vst [vmem:[#allocation2 + $0x1d0] sm:$0xff] %v6132
    %6197 = vst [vmem:[#allocation2 + $0x1d8] sm:$0xff] %v6133
    %6198 = vst [vmem:[#allocation2 + $0x1e0] sm:$0xff] %v6134
    %6199 = vst [vmem:[#allocation2 + $0x1e8] sm:$0xff] %v6135
    %6200 = vst [vmem:[#allocation2 + $0x1f0] sm:$0xff] %v6136
    %6201 = vst [vmem:[#allocation2 + $0x1f8] sm:$0xff] %v6137
    %6202 = vst [vmem:[#allocation2 + $0x200] sm:$0xff] %v6138
    %6203 = vst [vmem:[#allocation2 + $0x208] sm:$0xff] %v6139
    %6204 = vst [vmem:[#allocation2 + $0x210] sm:$0xff] %v6140
    %v6205 = vld [vmem:[#allocation2 + $0x7] sm:$0xff]
    %v6206 = vld [vmem:[#allocation2 + $0xf] sm:$0xff]
    %v6207 = vld [vmem:[#allocation2 + $0x17] sm:$0xff]
    %v6208 = vld [vmem:[#allocation2 + $0x1f] sm:$0xff]
    %v6209 = vld [vmem:[#allocation2 + $0x27] sm:$0xff]
    %v6210 = vld [vmem:[#allocation2 + $0x2f] sm:$0xff]
    %v6211 = vld [vmem:[#allocation2 + $0x37] sm:$0xff]
    %v6212 = vld [vmem:[#allocation2 + $0x3f] sm:$0xff]
    %v6213 = vld [vmem:[#allocation2 + $0x47] sm:$0xff]
    %v6214 = vld [vmem:[#allocation2 + $0x4f] sm:$0xff]
    %v6215 = vld [vmem:[#allocation2 + $0x57] sm:$0xff]
    %v6216 = vld [vmem:[#allocation2 + $0x5f] sm:$0xff]
    %v6217 = vld [vmem:[#allocation2 + $0x67] sm:$0xff]
    %v6218 = vld [vmem:[#allocation2 + $0x6f] sm:$0xff]
    %v6219 = vld [vmem:[#allocation2 + $0x77] sm:$0xff]
    %v6220 = vld [vmem:[#allocation2 + $0x7f] sm:$0xff]
    %v6221 = vld [vmem:[#allocation2 + $0x87] sm:$0xff]
    %v6222 = vld [vmem:[#allocation2 + $0x8f] sm:$0xff]
    %v6223 = vld [vmem:[#allocation2 + $0x97] sm:$0xff]
    %v6224 = vld [vmem:[#allocation2 + $0x9f] sm:$0xff]
    %v6225 = vld [vmem:[#allocation2 + $0xa7] sm:$0xff]
    %v6226 = vld [vmem:[#allocation2 + $0xaf] sm:$0xff]
    %v6227 = vld [vmem:[#allocation2 + $0xb7] sm:$0xff]
    %v6228 = vld [vmem:[#allocation2 + $0xbf] sm:$0xff]
    %v6229 = vld [vmem:[#allocation2 + $0xc7] sm:$0xff]
    %v6230 = vld [vmem:[#allocation2 + $0xcf] sm:$0xff]
    %v6231 = vld [vmem:[#allocation2 + $0xd7] sm:$0xff]
    %v6232 = vld [vmem:[#allocation2 + $0xdf] sm:$0xff]
    %v6233 = vld [vmem:[#allocation2 + $0xe7] sm:$0xff]
    %v6234 = vld [vmem:[#allocation2 + $0xef] sm:$0xff]
    %v6235 = vld [vmem:[#allocation2 + $0xf7] sm:$0xff]
    %v6236 = vld [vmem:[#allocation2 + $0xff] sm:$0xff]
    %v6237 = vld [vmem:[#allocation2 + $0x107] sm:$0xff]
    %v6238 = vld [vmem:[#allocation2 + $0x10f] sm:$0xff]
    %v6239 = vld [vmem:[#allocation2 + $0x117] sm:$0xff]
    %v6240 = vld [vmem:[#allocation2 + $0x11f] sm:$0xff]
    %v6241 = vld [vmem:[#allocation2 + $0x127] sm:$0xff]
    %v6242 = vld [vmem:[#allocation2 + $0x12f] sm:$0xff]
    %v6243 = vld [vmem:[#allocation2 + $0x137] sm:$0xff]
    %v6244 = vld [vmem:[#allocation2 + $0x13f] sm:$0xff]
    %v6245 = vld [vmem:[#allocation2 + $0x147] sm:$0xff]
    %v6246 = vld [vmem:[#allocation2 + $0x14f] sm:$0xff]
    %v6247 = vld [vmem:[#allocation2 + $0x157] sm:$0xff]
    %v6248 = vld [vmem:[#allocation2 + $0x15f] sm:$0xff]
    %v6249 = vld [vmem:[#allocation2 + $0x167] sm:$0xff]
    %v6250 = vld [vmem:[#allocation2 + $0x16f] sm:$0xff]
    %v6251 = vld [vmem:[#allocation2 + $0x177] sm:$0xff]
    %v6252 = vld [vmem:[#allocation2 + $0x17f] sm:$0xff]
    %v6253 = vld [vmem:[#allocation2 + $0x187] sm:$0xff]
    %v6254 = vld [vmem:[#allocation2 + $0x18f] sm:$0xff]
    %v6255 = vld [vmem:[#allocation2 + $0x197] sm:$0xff]
    %v6256 = vld [vmem:[#allocation2 + $0x19f] sm:$0xff]
    %v6257 = vld [vmem:[#allocation2 + $0x1a7] sm:$0xff]
    %v6258 = vld [vmem:[#allocation2 + $0x1af] sm:$0xff]
    %v6259 = vld [vmem:[#allocation2 + $0x1b7] sm:$0xff]
    %v6260 = vld [vmem:[#allocation2 + $0x1bf] sm:$0xff]
    %v6261 = vld [vmem:[#allocation2 + $0x1c7] sm:$0xff]
    %v6262 = vld [vmem:[#allocation2 + $0x1cf] sm:$0xff]
    %v6263 = vld [vmem:[#allocation2 + $0x1d7] sm:$0xff]
    %v6264 = vld [vmem:[#allocation2 + $0x1df] sm:$0xff]
    %v6265 = vld [vmem:[#allocation2 + $0x1e7] sm:$0xff]
    %v6266 = vld [vmem:[#allocation2 + $0x1ef] sm:$0xff]
    %v6267 = vld [vmem:[#allocation2 + $0x1f7] sm:$0xff]
    %v6268 = vld [vmem:[#allocation2 + $0x1ff] sm:$0xff]
    %v6269 = vsel %vm805, %v6205, 0.0
    %v6270 = vsel %vm806, %v6206, 0.0
    %v6271 = vsel %vm807, %v6207, 0.0
    %v6272 = vsel %vm808, %v6208, 0.0
    %v6273 = vsel %vm809, %v6209, 0.0
    %v6274 = vsel %vm810, %v6210, 0.0
    %v6275 = vsel %vm811, %v6211, 0.0
    %v6276 = vsel %vm812, %v6212, 0.0
    %v6277 = vsel %vm813, %v6213, 0.0
    %v6278 = vsel %vm814, %v6214, 0.0
    %v6279 = vsel %vm815, %v6215, 0.0
    %v6280 = vsel %vm816, %v6216, 0.0
    %v6281 = vsel %vm817, %v6217, 0.0
    %v6282 = vsel %vm818, %v6218, 0.0
    %v6283 = vsel %vm819, %v6219, 0.0
    %v6284 = vsel %vm820, %v6220, 0.0
    %v6285 = vsel %vm821, %v6221, 0.0
    %v6286 = vsel %vm822, %v6222, 0.0
    %v6287 = vsel %vm823, %v6223, 0.0
    %v6288 = vsel %vm824, %v6224, 0.0
    %v6289 = vsel %vm825, %v6225, 0.0
    %v6290 = vsel %vm826, %v6226, 0.0
    %v6291 = vsel %vm827, %v6227, 0.0
    %v6292 = vsel %vm828, %v6228, 0.0
    %v6293 = vsel %vm829, %v6229, 0.0
    %v6294 = vsel %vm830, %v6230, 0.0
    %v6295 = vsel %vm831, %v6231, 0.0
    %v6296 = vsel %vm832, %v6232, 0.0
    %v6297 = vsel %vm833, %v6233, 0.0
    %v6298 = vsel %vm834, %v6234, 0.0
    %v6299 = vsel %vm835, %v6235, 0.0
    %v6300 = vsel %vm836, %v6236, 0.0
    %v6301 = vsel %vm837, %v6237, 0.0
    %v6302 = vsel %vm838, %v6238, 0.0
    %v6303 = vsel %vm839, %v6239, 0.0
    %v6304 = vsel %vm840, %v6240, 0.0
    %v6305 = vsel %vm841, %v6241, 0.0
    %v6306 = vsel %vm842, %v6242, 0.0
    %v6307 = vsel %vm843, %v6243, 0.0
    %v6308 = vsel %vm844, %v6244, 0.0
    %v6309 = vsel %vm845, %v6245, 0.0
    %v6310 = vsel %vm846, %v6246, 0.0
    %v6311 = vsel %vm847, %v6247, 0.0
    %v6312 = vsel %vm848, %v6248, 0.0
    %v6313 = vsel %vm849, %v6249, 0.0
    %v6314 = vsel %vm850, %v6250, 0.0
    %v6315 = vsel %vm851, %v6251, 0.0
    %v6316 = vsel %vm852, %v6252, 0.0
    %v6317 = vsel %vm853, %v6253, 0.0
    %v6318 = vsel %vm854, %v6254, 0.0
    %v6319 = vsel %vm855, %v6255, 0.0
    %v6320 = vsel %vm856, %v6256, 0.0
    %v6321 = vsel %vm857, %v6257, 0.0
    %v6322 = vsel %vm858, %v6258, 0.0
    %v6323 = vsel %vm859, %v6259, 0.0
    %v6324 = vsel %vm860, %v6260, 0.0
    %v6325 = vsel %vm861, %v6261, 0.0
    %v6326 = vsel %vm862, %v6262, 0.0
    %v6327 = vsel %vm863, %v6263, 0.0
    %v6328 = vsel %vm864, %v6264, 0.0
    %v6329 = vsel %vm865, %v6265, 0.0
    %v6330 = vsel %vm866, %v6266, 0.0
    %v6331 = vsel %vm867, %v6267, 0.0
    %v6332 = vsel %vm868, %v6268, 0.0
    %v6333 = vpack.c.bf16 %v6270, %v6269
    %v6334 = vpack.c.bf16 %v6272, %v6271
    %v6335 = vpack.c.bf16 %v6274, %v6273
    %v6336 = vpack.c.bf16 %v6276, %v6275
    %v6337 = vpack.c.bf16 %v6278, %v6277
    %v6338 = vpack.c.bf16 %v6280, %v6279
    %v6339 = vpack.c.bf16 %v6282, %v6281
    %v6340 = vpack.c.bf16 %v6284, %v6283
    %v6341 = vpack.c.bf16 %v6286, %v6285
    %v6342 = vpack.c.bf16 %v6288, %v6287
    %v6343 = vpack.c.bf16 %v6290, %v6289
    %v6344 = vpack.c.bf16 %v6292, %v6291
    %v6345 = vpack.c.bf16 %v6294, %v6293
    %v6346 = vpack.c.bf16 %v6296, %v6295
    %v6347 = vpack.c.bf16 %v6298, %v6297
    %v6348 = vpack.c.bf16 %v6300, %v6299
    %v6349 = vpack.c.bf16 %v6302, %v6301
    %v6350 = vpack.c.bf16 %v6304, %v6303
    %v6351 = vpack.c.bf16 %v6306, %v6305
    %v6352 = vpack.c.bf16 %v6308, %v6307
    %v6353 = vpack.c.bf16 %v6310, %v6309
    %v6354 = vpack.c.bf16 %v6312, %v6311
    %v6355 = vpack.c.bf16 %v6314, %v6313
    %v6356 = vpack.c.bf16 %v6316, %v6315
    %v6357 = vpack.c.bf16 %v6318, %v6317
    %v6358 = vpack.c.bf16 %v6320, %v6319
    %v6359 = vpack.c.bf16 %v6322, %v6321
    %v6360 = vpack.c.bf16 %v6324, %v6323
    %v6361 = vpack.c.bf16 %v6326, %v6325
    %v6362 = vpack.c.bf16 %v6328, %v6327
    %v6363 = vpack.c.bf16 %v6330, %v6329
    %v6364 = vpack.c.bf16 %v6332, %v6331
    %v6365 = vld [vmem:[%s3] sm:$0xf]
    %v6366 = vld [vmem:[%s3 + $0x4] sm:$0xf]
    %v6367 = vld [vmem:[%s3 + $0x8] sm:$0xf]
    %v6368 = vld [vmem:[%s3 + $0xc] sm:$0xf]
    %v6369 = vld [vmem:[%s3 + $0x10] sm:$0xf]
    %v6370 = vld [vmem:[%s3 + $0x14] sm:$0xf]
    %v6371 = vld [vmem:[%s3 + $0x18] sm:$0xf]
    %v6372 = vld [vmem:[%s3 + $0x1c] sm:$0xf]
    %v6373 = vld [vmem:[%s3 + $0x20] sm:$0xf]
    %v6374 = vld [vmem:[%s3 + $0x24] sm:$0xf]
    %v6375 = vld [vmem:[%s3 + $0x28] sm:$0xf]
    %v6376 = vld [vmem:[%s3 + $0x2c] sm:$0xf]
    %v6377 = vld [vmem:[%s3 + $0x30] sm:$0xf]
    %v6378 = vld [vmem:[%s3 + $0x34] sm:$0xf]
    %v6379 = vld [vmem:[%s3 + $0x38] sm:$0xf]
    %v6380 = vld [vmem:[%s3 + $0x3c] sm:$0xf]
    %v6381 = vld [vmem:[#allocation2 + $0x8] sm:$0xff]
    %v6382 = vld [vmem:[#allocation2 + $0x10] sm:$0xff]
    %v6383 = vld [vmem:[#allocation2 + $0x18] sm:$0xff]
    %v6384 = vld [vmem:[#allocation2 + $0x20] sm:$0xff]
    %v6385 = vld [vmem:[#allocation2 + $0x28] sm:$0xff]
    %v6386 = vld [vmem:[#allocation2 + $0x30] sm:$0xff]
    %v6387 = vld [vmem:[#allocation2 + $0x38] sm:$0xff]
    %v6388 = vld [vmem:[#allocation2 + $0x40] sm:$0xff]
    %v6389 = vld [vmem:[#allocation2 + $0x48] sm:$0xff]
    %v6390 = vld [vmem:[#allocation2 + $0x50] sm:$0xff]
    %v6391 = vld [vmem:[#allocation2 + $0x58] sm:$0xff]
    %v6392 = vld [vmem:[#allocation2 + $0x60] sm:$0xff]
    %v6393 = vld [vmem:[#allocation2 + $0x68] sm:$0xff]
    %v6394 = vld [vmem:[#allocation2 + $0x70] sm:$0xff]
    %v6395 = vld [vmem:[#allocation2 + $0x78] sm:$0xff]
    %v6396 = vld [vmem:[#allocation2 + $0x80] sm:$0xff]
    %v6397 = vld [vmem:[#allocation2 + $0x88] sm:$0xff]
    %v6398 = vld [vmem:[#allocation2 + $0x90] sm:$0xff]
    %v6399 = vld [vmem:[#allocation2 + $0x98] sm:$0xff]
    %v6400 = vld [vmem:[#allocation2 + $0xa0] sm:$0xff]
    %v6401 = vld [vmem:[#allocation2 + $0xa8] sm:$0xff]
    %v6402 = vld [vmem:[#allocation2 + $0xb0] sm:$0xff]
    %v6403 = vld [vmem:[#allocation2 + $0xb8] sm:$0xff]
    %v6404 = vld [vmem:[#allocation2 + $0xc0] sm:$0xff]
    %v6405 = vld [vmem:[#allocation2 + $0xc8] sm:$0xff]
    %v6406 = vld [vmem:[#allocation2 + $0xd0] sm:$0xff]
    %v6407 = vld [vmem:[#allocation2 + $0xd8] sm:$0xff]
    %v6408 = vld [vmem:[#allocation2 + $0xe0] sm:$0xff]
    %v6409 = vld [vmem:[#allocation2 + $0xe8] sm:$0xff]
    %v6410 = vld [vmem:[#allocation2 + $0xf0] sm:$0xff]
    %v6411 = vld [vmem:[#allocation2 + $0xf8] sm:$0xff]
    %v6412 = vld [vmem:[#allocation2 + $0x100] sm:$0xff]
    %v6413 = vld [vmem:[#allocation2 + $0x108] sm:$0xff]
    %v6414 = vld [vmem:[#allocation2 + $0x110] sm:$0xff]
    %v6415 = vld [vmem:[#allocation2 + $0x118] sm:$0xff]
    %v6416 = vld [vmem:[#allocation2 + $0x120] sm:$0xff]
    %v6417 = vld [vmem:[#allocation2 + $0x128] sm:$0xff]
    %v6418 = vld [vmem:[#allocation2 + $0x130] sm:$0xff]
    %v6419 = vld [vmem:[#allocation2 + $0x138] sm:$0xff]
    %v6420 = vld [vmem:[#allocation2 + $0x140] sm:$0xff]
    %v6421 = vld [vmem:[#allocation2 + $0x148] sm:$0xff]
    %v6422 = vld [vmem:[#allocation2 + $0x150] sm:$0xff]
    %v6423 = vld [vmem:[#allocation2 + $0x158] sm:$0xff]
    %v6424 = vld [vmem:[#allocation2 + $0x160] sm:$0xff]
    %v6425 = vld [vmem:[#allocation2 + $0x168] sm:$0xff]
    %v6426 = vld [vmem:[#allocation2 + $0x170] sm:$0xff]
    %v6427 = vld [vmem:[#allocation2 + $0x178] sm:$0xff]
    %v6428 = vld [vmem:[#allocation2 + $0x180] sm:$0xff]
    %v6429 = vld [vmem:[#allocation2 + $0x188] sm:$0xff]
    %v6430 = vld [vmem:[#allocation2 + $0x190] sm:$0xff]
    %v6431 = vld [vmem:[#allocation2 + $0x198] sm:$0xff]
    %v6432 = vld [vmem:[#allocation2 + $0x1a0] sm:$0xff]
    %v6433 = vld [vmem:[#allocation2 + $0x1a8] sm:$0xff]
    %v6434 = vld [vmem:[#allocation2 + $0x1b0] sm:$0xff]
    %v6435 = vld [vmem:[#allocation2 + $0x1b8] sm:$0xff]
    %v6436 = vld [vmem:[#allocation2 + $0x1c0] sm:$0xff]
    %v6437 = vld [vmem:[#allocation2 + $0x1c8] sm:$0xff]
    %v6438 = vld [vmem:[#allocation2 + $0x1d0] sm:$0xff]
    %v6439 = vld [vmem:[#allocation2 + $0x1d8] sm:$0xff]
    %v6440 = vld [vmem:[#allocation2 + $0x1e0] sm:$0xff]
    %v6441 = vld [vmem:[#allocation2 + $0x1e8] sm:$0xff]
    %v6442 = vld [vmem:[#allocation2 + $0x1f0] sm:$0xff]
    %v6443 = vld [vmem:[#allocation2 + $0x1f8] sm:$0xff]
    %v6444 = vld [vmem:[#allocation2 + $0x200] sm:$0xff]
    %v6445 = vsel %vm287, %v6381, 0.0
    %v6446 = vsel %vm288, %v6382, 0.0
    %v6447 = vsel %vm289, %v6383, 0.0
    %v6448 = vsel %vm290, %v6384, 0.0
    %v6449 = vsel %vm291, %v6385, 0.0
    %v6450 = vsel %vm292, %v6386, 0.0
    %v6451 = vsel %vm293, %v6387, 0.0
    %v6452 = vsel %vm294, %v6388, 0.0
    %v6453 = vsel %vm295, %v6389, 0.0
    %v6454 = vsel %vm296, %v6390, 0.0
    %v6455 = vsel %vm297, %v6391, 0.0
    %v6456 = vsel %vm298, %v6392, 0.0
    %v6457 = vsel %vm299, %v6393, 0.0
    %v6458 = vsel %vm300, %v6394, 0.0
    %v6459 = vsel %vm301, %v6395, 0.0
    %v6460 = vsel %vm302, %v6396, 0.0
    %v6461 = vsel %vm303, %v6397, 0.0
    %v6462 = vsel %vm304, %v6398, 0.0
    %v6463 = vsel %vm305, %v6399, 0.0
    %v6464 = vsel %vm306, %v6400, 0.0
    %v6465 = vsel %vm307, %v6401, 0.0
    %v6466 = vsel %vm308, %v6402, 0.0
    %v6467 = vsel %vm309, %v6403, 0.0
    %v6468 = vsel %vm310, %v6404, 0.0
    %v6469 = vsel %vm311, %v6405, 0.0
    %v6470 = vsel %vm312, %v6406, 0.0
    %v6471 = vsel %vm313, %v6407, 0.0
    %v6472 = vsel %vm314, %v6408, 0.0
    %v6473 = vsel %vm315, %v6409, 0.0
    %v6474 = vsel %vm316, %v6410, 0.0
    %v6475 = vsel %vm317, %v6411, 0.0
    %v6476 = vsel %vm318, %v6412, 0.0
    %v6477 = vsel %vm319, %v6413, 0.0
    %v6478 = vsel %vm320, %v6414, 0.0
    %v6479 = vsel %vm321, %v6415, 0.0
    %v6480 = vsel %vm322, %v6416, 0.0
    %v6481 = vsel %vm323, %v6417, 0.0
    %v6482 = vsel %vm324, %v6418, 0.0
    %v6483 = vsel %vm325, %v6419, 0.0
    %v6484 = vsel %vm326, %v6420, 0.0
    %v6485 = vsel %vm327, %v6421, 0.0
    %v6486 = vsel %vm328, %v6422, 0.0
    %v6487 = vsel %vm329, %v6423, 0.0
    %v6488 = vsel %vm330, %v6424, 0.0
    %v6489 = vsel %vm331, %v6425, 0.0
    %v6490 = vsel %vm332, %v6426, 0.0
    %v6491 = vsel %vm333, %v6427, 0.0
    %v6492 = vsel %vm334, %v6428, 0.0
    %v6493 = vsel %vm335, %v6429, 0.0
    %v6494 = vsel %vm336, %v6430, 0.0
    %v6495 = vsel %vm337, %v6431, 0.0
    %v6496 = vsel %vm338, %v6432, 0.0
    %v6497 = vsel %vm339, %v6433, 0.0
    %v6498 = vsel %vm340, %v6434, 0.0
    %v6499 = vsel %vm341, %v6435, 0.0
    %v6500 = vsel %vm342, %v6436, 0.0
    %v6501 = vsel %vm343, %v6437, 0.0
    %v6502 = vsel %vm344, %v6438, 0.0
    %v6503 = vsel %vm345, %v6439, 0.0
    %v6504 = vsel %vm346, %v6440, 0.0
    %v6505 = vsel %vm347, %v6441, 0.0
    %v6506 = vsel %vm348, %v6442, 0.0
    %v6507 = vsel %vm349, %v6443, 0.0
    %v6508 = vsel %vm350, %v6444, 0.0
    %v6509 = vpack.c.bf16 %v6446, %v6445
    %v6510 = vpack.c.bf16 %v6448, %v6447
    %v6511 = vpack.c.bf16 %v6450, %v6449
    %v6512 = vpack.c.bf16 %v6452, %v6451
    %v6513 = vpack.c.bf16 %v6454, %v6453
    %v6514 = vpack.c.bf16 %v6456, %v6455
    %v6515 = vpack.c.bf16 %v6458, %v6457
    %v6516 = vpack.c.bf16 %v6460, %v6459
    %v6517 = vpack.c.bf16 %v6462, %v6461
    %v6518 = vpack.c.bf16 %v6464, %v6463
    %v6519 = vpack.c.bf16 %v6466, %v6465
    %v6520 = vpack.c.bf16 %v6468, %v6467
    %v6521 = vpack.c.bf16 %v6470, %v6469
    %v6522 = vpack.c.bf16 %v6472, %v6471
    %v6523 = vpack.c.bf16 %v6474, %v6473
    %v6524 = vpack.c.bf16 %v6476, %v6475
    %v6525 = vpack.c.bf16 %v6478, %v6477
    %v6526 = vpack.c.bf16 %v6480, %v6479
    %v6527 = vpack.c.bf16 %v6482, %v6481
    %v6528 = vpack.c.bf16 %v6484, %v6483
    %v6529 = vpack.c.bf16 %v6486, %v6485
    %v6530 = vpack.c.bf16 %v6488, %v6487
    %v6531 = vpack.c.bf16 %v6490, %v6489
    %v6532 = vpack.c.bf16 %v6492, %v6491
    %v6533 = vpack.c.bf16 %v6494, %v6493
    %v6534 = vpack.c.bf16 %v6496, %v6495
    %v6535 = vpack.c.bf16 %v6498, %v6497
    %v6536 = vpack.c.bf16 %v6500, %v6499
    %v6537 = vpack.c.bf16 %v6502, %v6501
    %v6538 = vpack.c.bf16 %v6504, %v6503
    %v6539 = vpack.c.bf16 %v6506, %v6505
    %v6540 = vpack.c.bf16 %v6508, %v6507
    %s6541 = scalar_lea.vmem %s3, 64
    %v6542 = vld [vmem:[%s6541] sm:$0xf]
    %v6543 = vld [vmem:[%s6541 + $0x4] sm:$0xf]
    %v6544 = vld [vmem:[%s6541 + $0x8] sm:$0xf]
    %v6545 = vld [vmem:[%s6541 + $0xc] sm:$0xf]
    %v6546 = vld [vmem:[%s6541 + $0x10] sm:$0xf]
    %v6547 = vld [vmem:[%s6541 + $0x14] sm:$0xf]
    %v6548 = vld [vmem:[%s6541 + $0x18] sm:$0xf]
    %v6549 = vld [vmem:[%s6541 + $0x1c] sm:$0xf]
    %v6550 = vld [vmem:[%s6541 + $0x20] sm:$0xf]
    %v6551 = vld [vmem:[%s6541 + $0x24] sm:$0xf]
    %v6552 = vld [vmem:[%s6541 + $0x28] sm:$0xf]
    %v6553 = vld [vmem:[%s6541 + $0x2c] sm:$0xf]
    %v6554 = vld [vmem:[%s6541 + $0x30] sm:$0xf]
    %v6555 = vld [vmem:[%s6541 + $0x34] sm:$0xf]
    %v6556 = vld [vmem:[%s6541 + $0x38] sm:$0xf]
    %v6557 = vld [vmem:[%s6541 + $0x3c] sm:$0xf]
    %v6574 = vunpack.c.l.b16 %v6542
    %v6575 = vunpack.c.l.b16 %v6543
    %v6576 = vunpack.c.l.b16 %v6544
    %v6577 = vunpack.c.l.b16 %v6545
    %v6578 = vunpack.c.l.b16 %v6546
    %v6579 = vunpack.c.l.b16 %v6547
    %v6580 = vunpack.c.l.b16 %v6548
    %v6581 = vunpack.c.l.b16 %v6549
    %v6582 = vunpack.c.l.b16 %v6550
    %v6583 = vunpack.c.l.b16 %v6551
    %v6584 = vunpack.c.l.b16 %v6552
    %v6585 = vunpack.c.l.b16 %v6553
    %v6586 = vunpack.c.l.b16 %v6554
    %v6587 = vunpack.c.l.b16 %v6555
    %v6588 = vunpack.c.l.b16 %v6556
    %v6589 = vunpack.c.l.b16 %v6557
    %v6590 = vpack.c.b16 %v6575, %v6574
    %v6591 = vpack.c.b16 %v6577, %v6576
    %v6592 = vpack.c.b16 %v6579, %v6578
    %v6593 = vpack.c.b16 %v6581, %v6580
    %v6594 = vpack.c.b16 %v6583, %v6582
    %v6595 = vpack.c.b16 %v6585, %v6584
    %v6596 = vpack.c.b16 %v6587, %v6586
    %v6597 = vpack.c.b16 %v6589, %v6588
    %6606 = vmatprep.subr.bf16.mxu0 0
    %6607 = vmatpush1.bf16.msra.mxu0 %v6597
    %6608 = vmatprep.subr.bf16.mxu0 0
    %6609 = vmatpush1.bf16.msra.mxu0 %v6596
    %6610 = vmatprep.subr.bf16.mxu0 0
    %6611 = vmatpush1.bf16.msra.mxu0 %v6595
    %6612 = vmatprep.subr.bf16.mxu0 0
    %6613 = vmatpush1.bf16.msra.mxu0 %v6594
    %6614 = vmatprep.subr.bf16.mxu0 0
    %6615 = vmatpush1.bf16.msra.mxu0 %v6593
    %6616 = vmatprep.subr.bf16.mxu0 0
    %6617 = vmatpush1.bf16.msra.mxu0 %v6592
    %6618 = vmatprep.subr.bf16.mxu0 0
    %6619 = vmatpush1.bf16.msra.mxu0 %v6591
    %6620 = vmatprep.subr.bf16.mxu0 0
    %6621 = vmatpush1.bf16.msra.mxu0 %v6590
    %6622 = vmatprep.subr.bf16.mxu0 0
    %6623 = vmatpush2.bf16.msra.mxu0 0
    %6624 = vmatprep.subr.bf16.mxu0 0
    %6625 = vmatpush2.bf16.msra.mxu0 0
    %6626 = vmatprep.subr.bf16.mxu0 0
    %6627 = vmatpush2.bf16.msra.mxu0 0
    %6628 = vmatprep.subr.bf16.mxu0 0
    %6629 = vmatpush2.bf16.msra.mxu0 0
    %6630 = vmatprep.subr.bf16.mxu0 0
    %6631 = vmatpush2.bf16.msra.mxu0 0
    %6632 = vmatprep.subr.bf16.mxu0 0
    %6633 = vmatpush2.bf16.msra.mxu0 0
    %6634 = vmatprep.subr.bf16.mxu0 0
    %6635 = vmatpush2.bf16.msra.mxu0 0
    %6636 = vmatprep.subr.bf16.mxu0 0
    %6637 = vmatpush2.bf16.msra.mxu0 0
    %6638 = vmatprep.mubr.bf16.mxu0 0
    %6639 = vmatmul.mubr.bf16.gmra.mxu0 %v6509
    %v6640 = vpop.f32.mrf.mxu0
    %v6641 = vadd.f32 0.0, %v6640
    %v6642 = vpop.f32.mrf.mxu0
    %v6643 = vpop.f32.mrf.mxu0
    %v6644 = vadd.f32 0.0, %v6643
    %v6645 = vpop.f32.mrf.mxu0
    %6646 = vmatprep.mubr.bf16.mxu0 0
    %6647 = vmatmul.mubr.bf16.gmra.mxu0 %v6510
    %v6648 = vpop.f32.mrf.mxu0
    %v6649 = vadd.f32 0.0, %v6648
    %v6650 = vpop.f32.mrf.mxu0
    %v6651 = vpop.f32.mrf.mxu0
    %v6652 = vadd.f32 0.0, %v6651
    %v6653 = vpop.f32.mrf.mxu0
    %6654 = vmatprep.mubr.bf16.mxu0 0
    %6655 = vmatmul.mubr.bf16.gmra.mxu0 %v6511
    %v6656 = vpop.f32.mrf.mxu0
    %v6657 = vadd.f32 0.0, %v6656
    %v6658 = vpop.f32.mrf.mxu0
    %v6659 = vpop.f32.mrf.mxu0
    %v6660 = vadd.f32 0.0, %v6659
    %v6661 = vpop.f32.mrf.mxu0
    %6662 = vmatprep.mubr.bf16.mxu0 0
    %6663 = vmatmul.mubr.bf16.gmra.mxu0 %v6512
    %v6664 = vpop.f32.mrf.mxu0
    %v6665 = vadd.f32 0.0, %v6664
    %v6666 = vpop.f32.mrf.mxu0
    %v6667 = vpop.f32.mrf.mxu0
    %v6668 = vadd.f32 0.0, %v6667
    %v6669 = vpop.f32.mrf.mxu0
    %6670 = vmatprep.mubr.bf16.mxu0 0
    %6671 = vmatmul.mubr.bf16.gmra.mxu0 %v6513
    %v6672 = vpop.f32.mrf.mxu0
    %v6673 = vadd.f32 0.0, %v6672
    %v6674 = vpop.f32.mrf.mxu0
    %v6675 = vpop.f32.mrf.mxu0
    %v6676 = vadd.f32 0.0, %v6675
    %v6677 = vpop.f32.mrf.mxu0
    %6678 = vmatprep.mubr.bf16.mxu0 0
    %6679 = vmatmul.mubr.bf16.gmra.mxu0 %v6514
    %v6680 = vpop.f32.mrf.mxu0
    %v6681 = vadd.f32 0.0, %v6680
    %v6682 = vpop.f32.mrf.mxu0
    %v6683 = vpop.f32.mrf.mxu0
    %v6684 = vadd.f32 0.0, %v6683
    %v6685 = vpop.f32.mrf.mxu0
    %6686 = vmatprep.mubr.bf16.mxu0 0
    %6687 = vmatmul.mubr.bf16.gmra.mxu0 %v6515
    %v6688 = vpop.f32.mrf.mxu0
    %v6689 = vadd.f32 0.0, %v6688
    %v6690 = vpop.f32.mrf.mxu0
    %v6691 = vpop.f32.mrf.mxu0
    %v6692 = vadd.f32 0.0, %v6691
    %v6693 = vpop.f32.mrf.mxu0
    %6694 = vmatprep.mubr.bf16.mxu0 0
    %6695 = vmatmul.mubr.bf16.gmra.mxu0 %v6516
    %v6696 = vpop.f32.mrf.mxu0
    %v6697 = vadd.f32 0.0, %v6696
    %v6698 = vpop.f32.mrf.mxu0
    %v6699 = vpop.f32.mrf.mxu0
    %v6700 = vadd.f32 0.0, %v6699
    %v6701 = vpop.f32.mrf.mxu0
    %6702 = vmatprep.mubr.bf16.mxu0 0
    %6703 = vmatmul.mubr.bf16.gmra.mxu0 %v6517
    %v6704 = vpop.f32.mrf.mxu0
    %v6705 = vadd.f32 0.0, %v6704
    %v6706 = vpop.f32.mrf.mxu0
    %v6707 = vpop.f32.mrf.mxu0
    %v6708 = vadd.f32 0.0, %v6707
    %v6709 = vpop.f32.mrf.mxu0
    %6710 = vmatprep.mubr.bf16.mxu0 0
    %6711 = vmatmul.mubr.bf16.gmra.mxu0 %v6518
    %v6712 = vpop.f32.mrf.mxu0
    %v6713 = vadd.f32 0.0, %v6712
    %v6714 = vpop.f32.mrf.mxu0
    %v6715 = vpop.f32.mrf.mxu0
    %v6716 = vadd.f32 0.0, %v6715
    %v6717 = vpop.f32.mrf.mxu0
    %6718 = vmatprep.mubr.bf16.mxu0 0
    %6719 = vmatmul.mubr.bf16.gmra.mxu0 %v6519
    %v6720 = vpop.f32.mrf.mxu0
    %v6721 = vadd.f32 0.0, %v6720
    %v6722 = vpop.f32.mrf.mxu0
    %v6723 = vpop.f32.mrf.mxu0
    %v6724 = vadd.f32 0.0, %v6723
    %v6725 = vpop.f32.mrf.mxu0
    %6726 = vmatprep.mubr.bf16.mxu0 0
    %6727 = vmatmul.mubr.bf16.gmra.mxu0 %v6520
    %v6728 = vpop.f32.mrf.mxu0
    %v6729 = vadd.f32 0.0, %v6728
    %v6730 = vpop.f32.mrf.mxu0
    %v6731 = vpop.f32.mrf.mxu0
    %v6732 = vadd.f32 0.0, %v6731
    %v6733 = vpop.f32.mrf.mxu0
    %6734 = vmatprep.mubr.bf16.mxu0 0
    %6735 = vmatmul.mubr.bf16.gmra.mxu0 %v6521
    %v6736 = vpop.f32.mrf.mxu0
    %v6737 = vadd.f32 0.0, %v6736
    %v6738 = vpop.f32.mrf.mxu0
    %v6739 = vpop.f32.mrf.mxu0
    %v6740 = vadd.f32 0.0, %v6739
    %v6741 = vpop.f32.mrf.mxu0
    %6742 = vmatprep.mubr.bf16.mxu0 0
    %6743 = vmatmul.mubr.bf16.gmra.mxu0 %v6522
    %v6744 = vpop.f32.mrf.mxu0
    %v6745 = vadd.f32 0.0, %v6744
    %v6746 = vpop.f32.mrf.mxu0
    %v6747 = vpop.f32.mrf.mxu0
    %v6748 = vadd.f32 0.0, %v6747
    %v6749 = vpop.f32.mrf.mxu0
    %6750 = vmatprep.mubr.bf16.mxu0 0
    %6751 = vmatmul.mubr.bf16.gmra.mxu0 %v6523
    %v6752 = vpop.f32.mrf.mxu0
    %v6753 = vadd.f32 0.0, %v6752
    %v6754 = vpop.f32.mrf.mxu0
    %v6755 = vpop.f32.mrf.mxu0
    %v6756 = vadd.f32 0.0, %v6755
    %v6757 = vpop.f32.mrf.mxu0
    %6758 = vmatprep.mubr.bf16.mxu0 0
    %6759 = vmatmul.mubr.bf16.gmra.mxu0 %v6524
    %v6760 = vpop.f32.mrf.mxu0
    %v6761 = vadd.f32 0.0, %v6760
    %v6762 = vpop.f32.mrf.mxu0
    %v6763 = vpop.f32.mrf.mxu0
    %v6764 = vadd.f32 0.0, %v6763
    %v6765 = vpop.f32.mrf.mxu0
    %6766 = vmatprep.mubr.bf16.mxu0 0
    %6767 = vmatmul.mubr.bf16.gmra.mxu0 %v6525
    %v6768 = vpop.f32.mrf.mxu0
    %v6769 = vadd.f32 0.0, %v6768
    %v6770 = vpop.f32.mrf.mxu0
    %v6771 = vpop.f32.mrf.mxu0
    %v6772 = vadd.f32 0.0, %v6771
    %v6773 = vpop.f32.mrf.mxu0
    %6774 = vmatprep.mubr.bf16.mxu0 0
    %6775 = vmatmul.mubr.bf16.gmra.mxu0 %v6526
    %v6776 = vpop.f32.mrf.mxu0
    %v6777 = vadd.f32 0.0, %v6776
    %v6778 = vpop.f32.mrf.mxu0
    %v6779 = vpop.f32.mrf.mxu0
    %v6780 = vadd.f32 0.0, %v6779
    %v6781 = vpop.f32.mrf.mxu0
    %6782 = vmatprep.mubr.bf16.mxu0 0
    %6783 = vmatmul.mubr.bf16.gmra.mxu0 %v6527
    %v6784 = vpop.f32.mrf.mxu0
    %v6785 = vadd.f32 0.0, %v6784
    %v6786 = vpop.f32.mrf.mxu0
    %v6787 = vpop.f32.mrf.mxu0
    %v6788 = vadd.f32 0.0, %v6787
    %v6789 = vpop.f32.mrf.mxu0
    %6790 = vmatprep.mubr.bf16.mxu0 0
    %6791 = vmatmul.mubr.bf16.gmra.mxu0 %v6528
    %v6792 = vpop.f32.mrf.mxu0
    %v6793 = vadd.f32 0.0, %v6792
    %v6794 = vpop.f32.mrf.mxu0
    %v6795 = vpop.f32.mrf.mxu0
    %v6796 = vadd.f32 0.0, %v6795
    %v6797 = vpop.f32.mrf.mxu0
    %6798 = vmatprep.mubr.bf16.mxu0 0
    %6799 = vmatmul.mubr.bf16.gmra.mxu0 %v6529
    %v6800 = vpop.f32.mrf.mxu0
    %v6801 = vadd.f32 0.0, %v6800
    %v6802 = vpop.f32.mrf.mxu0
    %v6803 = vpop.f32.mrf.mxu0
    %v6804 = vadd.f32 0.0, %v6803
    %v6805 = vpop.f32.mrf.mxu0
    %6806 = vmatprep.mubr.bf16.mxu0 0
    %6807 = vmatmul.mubr.bf16.gmra.mxu0 %v6530
    %v6808 = vpop.f32.mrf.mxu0
    %v6809 = vadd.f32 0.0, %v6808
    %v6810 = vpop.f32.mrf.mxu0
    %v6811 = vpop.f32.mrf.mxu0
    %v6812 = vadd.f32 0.0, %v6811
    %v6813 = vpop.f32.mrf.mxu0
    %6814 = vmatprep.mubr.bf16.mxu0 0
    %6815 = vmatmul.mubr.bf16.gmra.mxu0 %v6531
    %v6816 = vpop.f32.mrf.mxu0
    %v6817 = vadd.f32 0.0, %v6816
    %v6818 = vpop.f32.mrf.mxu0
    %v6819 = vpop.f32.mrf.mxu0
    %v6820 = vadd.f32 0.0, %v6819
    %v6821 = vpop.f32.mrf.mxu0
    %6822 = vmatprep.mubr.bf16.mxu0 0
    %6823 = vmatmul.mubr.bf16.gmra.mxu0 %v6532
    %v6824 = vpop.f32.mrf.mxu0
    %v6825 = vadd.f32 0.0, %v6824
    %v6826 = vpop.f32.mrf.mxu0
    %v6827 = vpop.f32.mrf.mxu0
    %v6828 = vadd.f32 0.0, %v6827
    %v6829 = vpop.f32.mrf.mxu0
    %6830 = vmatprep.mubr.bf16.mxu0 0
    %6831 = vmatmul.mubr.bf16.gmra.mxu0 %v6533
    %v6832 = vpop.f32.mrf.mxu0
    %v6833 = vadd.f32 0.0, %v6832
    %v6834 = vpop.f32.mrf.mxu0
    %v6835 = vpop.f32.mrf.mxu0
    %v6836 = vadd.f32 0.0, %v6835
    %v6837 = vpop.f32.mrf.mxu0
    %6838 = vmatprep.mubr.bf16.mxu0 0
    %6839 = vmatmul.mubr.bf16.gmra.mxu0 %v6534
    %v6840 = vpop.f32.mrf.mxu0
    %v6841 = vadd.f32 0.0, %v6840
    %v6842 = vpop.f32.mrf.mxu0
    %v6843 = vpop.f32.mrf.mxu0
    %v6844 = vadd.f32 0.0, %v6843
    %v6845 = vpop.f32.mrf.mxu0
    %6846 = vmatprep.mubr.bf16.mxu0 0
    %6847 = vmatmul.mubr.bf16.gmra.mxu0 %v6535
    %v6848 = vpop.f32.mrf.mxu0
    %v6849 = vadd.f32 0.0, %v6848
    %v6850 = vpop.f32.mrf.mxu0
    %v6851 = vpop.f32.mrf.mxu0
    %v6852 = vadd.f32 0.0, %v6851
    %v6853 = vpop.f32.mrf.mxu0
    %6854 = vmatprep.mubr.bf16.mxu0 0
    %6855 = vmatmul.mubr.bf16.gmra.mxu0 %v6536
    %v6856 = vpop.f32.mrf.mxu0
    %v6857 = vadd.f32 0.0, %v6856
    %v6858 = vpop.f32.mrf.mxu0
    %v6859 = vpop.f32.mrf.mxu0
    %v6860 = vadd.f32 0.0, %v6859
    %v6861 = vpop.f32.mrf.mxu0
    %6862 = vmatprep.mubr.bf16.mxu0 0
    %6863 = vmatmul.mubr.bf16.gmra.mxu0 %v6537
    %v6864 = vpop.f32.mrf.mxu0
    %v6865 = vadd.f32 0.0, %v6864
    %v6866 = vpop.f32.mrf.mxu0
    %v6867 = vpop.f32.mrf.mxu0
    %v6868 = vadd.f32 0.0, %v6867
    %v6869 = vpop.f32.mrf.mxu0
    %6870 = vmatprep.mubr.bf16.mxu0 0
    %6871 = vmatmul.mubr.bf16.gmra.mxu0 %v6538
    %v6872 = vpop.f32.mrf.mxu0
    %v6873 = vadd.f32 0.0, %v6872
    %v6874 = vpop.f32.mrf.mxu0
    %v6875 = vpop.f32.mrf.mxu0
    %v6876 = vadd.f32 0.0, %v6875
    %v6877 = vpop.f32.mrf.mxu0
    %6878 = vmatprep.mubr.bf16.mxu0 0
    %6879 = vmatmul.mubr.bf16.gmra.mxu0 %v6539
    %v6880 = vpop.f32.mrf.mxu0
    %v6881 = vadd.f32 0.0, %v6880
    %v6882 = vpop.f32.mrf.mxu0
    %v6883 = vpop.f32.mrf.mxu0
    %v6884 = vadd.f32 0.0, %v6883
    %v6885 = vpop.f32.mrf.mxu0
    %6886 = vmatprep.mubr.bf16.mxu0 0
    %6887 = vmatmul.mubr.bf16.gmra.mxu0 %v6540
    %v6888 = vpop.f32.mrf.mxu0
    %v6889 = vadd.f32 0.0, %v6888
    %v6890 = vpop.f32.mrf.mxu0
    %v6891 = vpop.f32.mrf.mxu0
    %v6892 = vadd.f32 0.0, %v6891
    %v6893 = vpop.f32.mrf.mxu0
    %6894 = vdwg.mxu0
    %v6911 = vunpack.c.l.b16 %v6365
    %v6912 = vunpack.c.l.b16 %v6366
    %v6913 = vunpack.c.l.b16 %v6367
    %v6914 = vunpack.c.l.b16 %v6368
    %v6915 = vunpack.c.l.b16 %v6369
    %v6916 = vunpack.c.l.b16 %v6370
    %v6917 = vunpack.c.l.b16 %v6371
    %v6918 = vunpack.c.l.b16 %v6372
    %v6919 = vunpack.c.l.b16 %v6373
    %v6920 = vunpack.c.l.b16 %v6374
    %v6921 = vunpack.c.l.b16 %v6375
    %v6922 = vunpack.c.l.b16 %v6376
    %v6923 = vunpack.c.l.b16 %v6377
    %v6924 = vunpack.c.l.b16 %v6378
    %v6925 = vunpack.c.l.b16 %v6379
    %v6926 = vunpack.c.l.b16 %v6380
    %v6927 = vpack.c.b16 %v6912, %v6911
    %v6928 = vpack.c.b16 %v6914, %v6913
    %v6929 = vpack.c.b16 %v6916, %v6915
    %v6930 = vpack.c.b16 %v6918, %v6917
    %v6931 = vpack.c.b16 %v6920, %v6919
    %v6932 = vpack.c.b16 %v6922, %v6921
    %v6933 = vpack.c.b16 %v6924, %v6923
    %v6934 = vpack.c.b16 %v6926, %v6925
    %6943 = vmatprep.subr.bf16.mxu0 0
    %6944 = vmatpush1.bf16.msra.mxu0 %v6934
    %6945 = vmatprep.subr.bf16.mxu0 0
    %6946 = vmatpush1.bf16.msra.mxu0 %v6933
    %6947 = vmatprep.subr.bf16.mxu0 0
    %6948 = vmatpush1.bf16.msra.mxu0 %v6932
    %6949 = vmatprep.subr.bf16.mxu0 0
    %6950 = vmatpush1.bf16.msra.mxu0 %v6931
    %6951 = vmatprep.subr.bf16.mxu0 0
    %6952 = vmatpush1.bf16.msra.mxu0 %v6930
    %6953 = vmatprep.subr.bf16.mxu0 0
    %6954 = vmatpush1.bf16.msra.mxu0 %v6929
    %6955 = vmatprep.subr.bf16.mxu0 0
    %6956 = vmatpush1.bf16.msra.mxu0 %v6928
    %6957 = vmatprep.subr.bf16.mxu0 0
    %6958 = vmatpush1.bf16.msra.mxu0 %v6927
    %6959 = vmatprep.subr.bf16.mxu0 0
    %6960 = vmatpush2.bf16.msra.mxu0 0
    %6961 = vmatprep.subr.bf16.mxu0 0
    %6962 = vmatpush2.bf16.msra.mxu0 0
    %6963 = vmatprep.subr.bf16.mxu0 0
    %6964 = vmatpush2.bf16.msra.mxu0 0
    %6965 = vmatprep.subr.bf16.mxu0 0
    %6966 = vmatpush2.bf16.msra.mxu0 0
    %6967 = vmatprep.subr.bf16.mxu0 0
    %6968 = vmatpush2.bf16.msra.mxu0 0
    %6969 = vmatprep.subr.bf16.mxu0 0
    %6970 = vmatpush2.bf16.msra.mxu0 0
    %6971 = vmatprep.subr.bf16.mxu0 0
    %6972 = vmatpush2.bf16.msra.mxu0 0
    %6973 = vmatprep.subr.bf16.mxu0 0
    %6974 = vmatpush2.bf16.msra.mxu0 0
    %6975 = vmatprep.mubr.bf16.mxu0 0
    %6976 = vmatmul.mubr.bf16.gmra.mxu0 %v6333
    %v6977 = vpop.f32.mrf.mxu0
    %v6978 = vadd.f32 %v6641, %v6977
    %v6979 = vpop.f32.mrf.mxu0
    %v6980 = vpop.f32.mrf.mxu0
    %v6981 = vadd.f32 %v6644, %v6980
    %v6982 = vpop.f32.mrf.mxu0
    %6983 = vmatprep.mubr.bf16.mxu0 0
    %6984 = vmatmul.mubr.bf16.gmra.mxu0 %v6334
    %v6985 = vpop.f32.mrf.mxu0
    %v6986 = vadd.f32 %v6649, %v6985
    %v6987 = vpop.f32.mrf.mxu0
    %v6988 = vpop.f32.mrf.mxu0
    %v6989 = vadd.f32 %v6652, %v6988
    %v6990 = vpop.f32.mrf.mxu0
    %6991 = vmatprep.mubr.bf16.mxu0 0
    %6992 = vmatmul.mubr.bf16.gmra.mxu0 %v6335
    %v6993 = vpop.f32.mrf.mxu0
    %v6994 = vadd.f32 %v6657, %v6993
    %v6995 = vpop.f32.mrf.mxu0
    %v6996 = vpop.f32.mrf.mxu0
    %v6997 = vadd.f32 %v6660, %v6996
    %v6998 = vpop.f32.mrf.mxu0
    %6999 = vmatprep.mubr.bf16.mxu0 0
    %7000 = vmatmul.mubr.bf16.gmra.mxu0 %v6336
    %v7001 = vpop.f32.mrf.mxu0
    %v7002 = vadd.f32 %v6665, %v7001
    %v7003 = vpop.f32.mrf.mxu0
    %v7004 = vpop.f32.mrf.mxu0
    %v7005 = vadd.f32 %v6668, %v7004
    %v7006 = vpop.f32.mrf.mxu0
    %7007 = vmatprep.mubr.bf16.mxu0 0
    %7008 = vmatmul.mubr.bf16.gmra.mxu0 %v6337
    %v7009 = vpop.f32.mrf.mxu0
    %v7010 = vadd.f32 %v6673, %v7009
    %v7011 = vpop.f32.mrf.mxu0
    %v7012 = vpop.f32.mrf.mxu0
    %v7013 = vadd.f32 %v6676, %v7012
    %v7014 = vpop.f32.mrf.mxu0
    %7015 = vmatprep.mubr.bf16.mxu0 0
    %7016 = vmatmul.mubr.bf16.gmra.mxu0 %v6338
    %v7017 = vpop.f32.mrf.mxu0
    %v7018 = vadd.f32 %v6681, %v7017
    %v7019 = vpop.f32.mrf.mxu0
    %v7020 = vpop.f32.mrf.mxu0
    %v7021 = vadd.f32 %v6684, %v7020
    %v7022 = vpop.f32.mrf.mxu0
    %7023 = vmatprep.mubr.bf16.mxu0 0
    %7024 = vmatmul.mubr.bf16.gmra.mxu0 %v6339
    %v7025 = vpop.f32.mrf.mxu0
    %v7026 = vadd.f32 %v6689, %v7025
    %v7027 = vpop.f32.mrf.mxu0
    %v7028 = vpop.f32.mrf.mxu0
    %v7029 = vadd.f32 %v6692, %v7028
    %v7030 = vpop.f32.mrf.mxu0
    %7031 = vmatprep.mubr.bf16.mxu0 0
    %7032 = vmatmul.mubr.bf16.gmra.mxu0 %v6340
    %v7033 = vpop.f32.mrf.mxu0
    %v7034 = vadd.f32 %v6697, %v7033
    %v7035 = vpop.f32.mrf.mxu0
    %v7036 = vpop.f32.mrf.mxu0
    %v7037 = vadd.f32 %v6700, %v7036
    %v7038 = vpop.f32.mrf.mxu0
    %7039 = vmatprep.mubr.bf16.mxu0 0
    %7040 = vmatmul.mubr.bf16.gmra.mxu0 %v6341
    %v7041 = vpop.f32.mrf.mxu0
    %v7042 = vadd.f32 %v6705, %v7041
    %v7043 = vpop.f32.mrf.mxu0
    %v7044 = vpop.f32.mrf.mxu0
    %v7045 = vadd.f32 %v6708, %v7044
    %v7046 = vpop.f32.mrf.mxu0
    %7047 = vmatprep.mubr.bf16.mxu0 0
    %7048 = vmatmul.mubr.bf16.gmra.mxu0 %v6342
    %v7049 = vpop.f32.mrf.mxu0
    %v7050 = vadd.f32 %v6713, %v7049
    %v7051 = vpop.f32.mrf.mxu0
    %v7052 = vpop.f32.mrf.mxu0
    %v7053 = vadd.f32 %v6716, %v7052
    %v7054 = vpop.f32.mrf.mxu0
    %7055 = vmatprep.mubr.bf16.mxu0 0
    %7056 = vmatmul.mubr.bf16.gmra.mxu0 %v6343
    %v7057 = vpop.f32.mrf.mxu0
    %v7058 = vadd.f32 %v6721, %v7057
    %v7059 = vpop.f32.mrf.mxu0
    %v7060 = vpop.f32.mrf.mxu0
    %v7061 = vadd.f32 %v6724, %v7060
    %v7062 = vpop.f32.mrf.mxu0
    %7063 = vmatprep.mubr.bf16.mxu0 0
    %7064 = vmatmul.mubr.bf16.gmra.mxu0 %v6344
    %v7065 = vpop.f32.mrf.mxu0
    %v7066 = vadd.f32 %v6729, %v7065
    %v7067 = vpop.f32.mrf.mxu0
    %v7068 = vpop.f32.mrf.mxu0
    %v7069 = vadd.f32 %v6732, %v7068
    %v7070 = vpop.f32.mrf.mxu0
    %7071 = vmatprep.mubr.bf16.mxu0 0
    %7072 = vmatmul.mubr.bf16.gmra.mxu0 %v6345
    %v7073 = vpop.f32.mrf.mxu0
    %v7074 = vadd.f32 %v6737, %v7073
    %v7075 = vpop.f32.mrf.mxu0
    %v7076 = vpop.f32.mrf.mxu0
    %v7077 = vadd.f32 %v6740, %v7076
    %v7078 = vpop.f32.mrf.mxu0
    %7079 = vmatprep.mubr.bf16.mxu0 0
    %7080 = vmatmul.mubr.bf16.gmra.mxu0 %v6346
    %v7081 = vpop.f32.mrf.mxu0
    %v7082 = vadd.f32 %v6745, %v7081
    %v7083 = vpop.f32.mrf.mxu0
    %v7084 = vpop.f32.mrf.mxu0
    %v7085 = vadd.f32 %v6748, %v7084
    %v7086 = vpop.f32.mrf.mxu0
    %7087 = vmatprep.mubr.bf16.mxu0 0
    %7088 = vmatmul.mubr.bf16.gmra.mxu0 %v6347
    %v7089 = vpop.f32.mrf.mxu0
    %v7090 = vadd.f32 %v6753, %v7089
    %v7091 = vpop.f32.mrf.mxu0
    %v7092 = vpop.f32.mrf.mxu0
    %v7093 = vadd.f32 %v6756, %v7092
    %v7094 = vpop.f32.mrf.mxu0
    %7095 = vmatprep.mubr.bf16.mxu0 0
    %7096 = vmatmul.mubr.bf16.gmra.mxu0 %v6348
    %v7097 = vpop.f32.mrf.mxu0
    %v7098 = vadd.f32 %v6761, %v7097
    %v7099 = vpop.f32.mrf.mxu0
    %v7100 = vpop.f32.mrf.mxu0
    %v7101 = vadd.f32 %v6764, %v7100
    %v7102 = vpop.f32.mrf.mxu0
    %7103 = vmatprep.mubr.bf16.mxu0 0
    %7104 = vmatmul.mubr.bf16.gmra.mxu0 %v6349
    %v7105 = vpop.f32.mrf.mxu0
    %v7106 = vadd.f32 %v6769, %v7105
    %v7107 = vpop.f32.mrf.mxu0
    %v7108 = vpop.f32.mrf.mxu0
    %v7109 = vadd.f32 %v6772, %v7108
    %v7110 = vpop.f32.mrf.mxu0
    %7111 = vmatprep.mubr.bf16.mxu0 0
    %7112 = vmatmul.mubr.bf16.gmra.mxu0 %v6350
    %v7113 = vpop.f32.mrf.mxu0
    %v7114 = vadd.f32 %v6777, %v7113
    %v7115 = vpop.f32.mrf.mxu0
    %v7116 = vpop.f32.mrf.mxu0
    %v7117 = vadd.f32 %v6780, %v7116
    %v7118 = vpop.f32.mrf.mxu0
    %7119 = vmatprep.mubr.bf16.mxu0 0
    %7120 = vmatmul.mubr.bf16.gmra.mxu0 %v6351
    %v7121 = vpop.f32.mrf.mxu0
    %v7122 = vadd.f32 %v6785, %v7121
    %v7123 = vpop.f32.mrf.mxu0
    %v7124 = vpop.f32.mrf.mxu0
    %v7125 = vadd.f32 %v6788, %v7124
    %v7126 = vpop.f32.mrf.mxu0
    %7127 = vmatprep.mubr.bf16.mxu0 0
    %7128 = vmatmul.mubr.bf16.gmra.mxu0 %v6352
    %v7129 = vpop.f32.mrf.mxu0
    %v7130 = vadd.f32 %v6793, %v7129
    %v7131 = vpop.f32.mrf.mxu0
    %v7132 = vpop.f32.mrf.mxu0
    %v7133 = vadd.f32 %v6796, %v7132
    %v7134 = vpop.f32.mrf.mxu0
    %7135 = vmatprep.mubr.bf16.mxu0 0
    %7136 = vmatmul.mubr.bf16.gmra.mxu0 %v6353
    %v7137 = vpop.f32.mrf.mxu0
    %v7138 = vadd.f32 %v6801, %v7137
    %v7139 = vpop.f32.mrf.mxu0
    %v7140 = vpop.f32.mrf.mxu0
    %v7141 = vadd.f32 %v6804, %v7140
    %v7142 = vpop.f32.mrf.mxu0
    %7143 = vmatprep.mubr.bf16.mxu0 0
    %7144 = vmatmul.mubr.bf16.gmra.mxu0 %v6354
    %v7145 = vpop.f32.mrf.mxu0
    %v7146 = vadd.f32 %v6809, %v7145
    %v7147 = vpop.f32.mrf.mxu0
    %v7148 = vpop.f32.mrf.mxu0
    %v7149 = vadd.f32 %v6812, %v7148
    %v7150 = vpop.f32.mrf.mxu0
    %7151 = vmatprep.mubr.bf16.mxu0 0
    %7152 = vmatmul.mubr.bf16.gmra.mxu0 %v6355
    %v7153 = vpop.f32.mrf.mxu0
    %v7154 = vadd.f32 %v6817, %v7153
    %v7155 = vpop.f32.mrf.mxu0
    %v7156 = vpop.f32.mrf.mxu0
    %v7157 = vadd.f32 %v6820, %v7156
    %v7158 = vpop.f32.mrf.mxu0
    %7159 = vmatprep.mubr.bf16.mxu0 0
    %7160 = vmatmul.mubr.bf16.gmra.mxu0 %v6356
    %v7161 = vpop.f32.mrf.mxu0
    %v7162 = vadd.f32 %v6825, %v7161
    %v7163 = vpop.f32.mrf.mxu0
    %v7164 = vpop.f32.mrf.mxu0
    %v7165 = vadd.f32 %v6828, %v7164
    %v7166 = vpop.f32.mrf.mxu0
    %7167 = vmatprep.mubr.bf16.mxu0 0
    %7168 = vmatmul.mubr.bf16.gmra.mxu0 %v6357
    %v7169 = vpop.f32.mrf.mxu0
    %v7170 = vadd.f32 %v6833, %v7169
    %v7171 = vpop.f32.mrf.mxu0
    %v7172 = vpop.f32.mrf.mxu0
    %v7173 = vadd.f32 %v6836, %v7172
    %v7174 = vpop.f32.mrf.mxu0
    %7175 = vmatprep.mubr.bf16.mxu0 0
    %7176 = vmatmul.mubr.bf16.gmra.mxu0 %v6358
    %v7177 = vpop.f32.mrf.mxu0
    %v7178 = vadd.f32 %v6841, %v7177
    %v7179 = vpop.f32.mrf.mxu0
    %v7180 = vpop.f32.mrf.mxu0
    %v7181 = vadd.f32 %v6844, %v7180
    %v7182 = vpop.f32.mrf.mxu0
    %7183 = vmatprep.mubr.bf16.mxu0 0
    %7184 = vmatmul.mubr.bf16.gmra.mxu0 %v6359
    %v7185 = vpop.f32.mrf.mxu0
    %v7186 = vadd.f32 %v6849, %v7185
    %v7187 = vpop.f32.mrf.mxu0
    %v7188 = vpop.f32.mrf.mxu0
    %v7189 = vadd.f32 %v6852, %v7188
    %v7190 = vpop.f32.mrf.mxu0
    %7191 = vmatprep.mubr.bf16.mxu0 0
    %7192 = vmatmul.mubr.bf16.gmra.mxu0 %v6360
    %v7193 = vpop.f32.mrf.mxu0
    %v7194 = vadd.f32 %v6857, %v7193
    %v7195 = vpop.f32.mrf.mxu0
    %v7196 = vpop.f32.mrf.mxu0
    %v7197 = vadd.f32 %v6860, %v7196
    %v7198 = vpop.f32.mrf.mxu0
    %7199 = vmatprep.mubr.bf16.mxu0 0
    %7200 = vmatmul.mubr.bf16.gmra.mxu0 %v6361
    %v7201 = vpop.f32.mrf.mxu0
    %v7202 = vadd.f32 %v6865, %v7201
    %v7203 = vpop.f32.mrf.mxu0
    %v7204 = vpop.f32.mrf.mxu0
    %v7205 = vadd.f32 %v6868, %v7204
    %v7206 = vpop.f32.mrf.mxu0
    %7207 = vmatprep.mubr.bf16.mxu0 0
    %7208 = vmatmul.mubr.bf16.gmra.mxu0 %v6362
    %v7209 = vpop.f32.mrf.mxu0
    %v7210 = vadd.f32 %v6873, %v7209
    %v7211 = vpop.f32.mrf.mxu0
    %v7212 = vpop.f32.mrf.mxu0
    %v7213 = vadd.f32 %v6876, %v7212
    %v7214 = vpop.f32.mrf.mxu0
    %7215 = vmatprep.mubr.bf16.mxu0 0
    %7216 = vmatmul.mubr.bf16.gmra.mxu0 %v6363
    %v7217 = vpop.f32.mrf.mxu0
    %v7218 = vadd.f32 %v6881, %v7217
    %v7219 = vpop.f32.mrf.mxu0
    %v7220 = vpop.f32.mrf.mxu0
    %v7221 = vadd.f32 %v6884, %v7220
    %v7222 = vpop.f32.mrf.mxu0
    %7223 = vmatprep.mubr.bf16.mxu0 0
    %7224 = vmatmul.mubr.bf16.gmra.mxu0 %v6364
    %v7225 = vpop.f32.mrf.mxu0
    %v7226 = vadd.f32 %v6889, %v7225
    %v7227 = vpop.f32.mrf.mxu0
    %v7228 = vpop.f32.mrf.mxu0
    %v7229 = vadd.f32 %v6892, %v7228
    %v7230 = vpop.f32.mrf.mxu0
    %7231 = vdwg.mxu0
    %v7232 = vld [vmem:[#allocation2 + $0x9] sm:$0xff]
    %v7233 = vld [vmem:[#allocation2 + $0x11] sm:$0xff]
    %v7234 = vld [vmem:[#allocation2 + $0x19] sm:$0xff]
    %v7235 = vld [vmem:[#allocation2 + $0x21] sm:$0xff]
    %v7236 = vld [vmem:[#allocation2 + $0x29] sm:$0xff]
    %v7237 = vld [vmem:[#allocation2 + $0x31] sm:$0xff]
    %v7238 = vld [vmem:[#allocation2 + $0x39] sm:$0xff]
    %v7239 = vld [vmem:[#allocation2 + $0x41] sm:$0xff]
    %v7240 = vld [vmem:[#allocation2 + $0x49] sm:$0xff]
    %v7241 = vld [vmem:[#allocation2 + $0x51] sm:$0xff]
    %v7242 = vld [vmem:[#allocation2 + $0x59] sm:$0xff]
    %v7243 = vld [vmem:[#allocation2 + $0x61] sm:$0xff]
    %v7244 = vld [vmem:[#allocation2 + $0x69] sm:$0xff]
    %v7245 = vld [vmem:[#allocation2 + $0x71] sm:$0xff]
    %v7246 = vld [vmem:[#allocation2 + $0x79] sm:$0xff]
    %v7247 = vld [vmem:[#allocation2 + $0x81] sm:$0xff]
    %v7248 = vld [vmem:[#allocation2 + $0x89] sm:$0xff]
    %v7249 = vld [vmem:[#allocation2 + $0x91] sm:$0xff]
    %v7250 = vld [vmem:[#allocation2 + $0x99] sm:$0xff]
    %v7251 = vld [vmem:[#allocation2 + $0xa1] sm:$0xff]
    %v7252 = vld [vmem:[#allocation2 + $0xa9] sm:$0xff]
    %v7253 = vld [vmem:[#allocation2 + $0xb1] sm:$0xff]
    %v7254 = vld [vmem:[#allocation2 + $0xb9] sm:$0xff]
    %v7255 = vld [vmem:[#allocation2 + $0xc1] sm:$0xff]
    %v7256 = vld [vmem:[#allocation2 + $0xc9] sm:$0xff]
    %v7257 = vld [vmem:[#allocation2 + $0xd1] sm:$0xff]
    %v7258 = vld [vmem:[#allocation2 + $0xd9] sm:$0xff]
    %v7259 = vld [vmem:[#allocation2 + $0xe1] sm:$0xff]
    %v7260 = vld [vmem:[#allocation2 + $0xe9] sm:$0xff]
    %v7261 = vld [vmem:[#allocation2 + $0xf1] sm:$0xff]
    %v7262 = vld [vmem:[#allocation2 + $0xf9] sm:$0xff]
    %v7263 = vld [vmem:[#allocation2 + $0x101] sm:$0xff]
    %v7264 = vld [vmem:[#allocation2 + $0x109] sm:$0xff]
    %v7265 = vld [vmem:[#allocation2 + $0x111] sm:$0xff]
    %v7266 = vld [vmem:[#allocation2 + $0x119] sm:$0xff]
    %v7267 = vld [vmem:[#allocation2 + $0x121] sm:$0xff]
    %v7268 = vld [vmem:[#allocation2 + $0x129] sm:$0xff]
    %v7269 = vld [vmem:[#allocation2 + $0x131] sm:$0xff]
    %v7270 = vld [vmem:[#allocation2 + $0x139] sm:$0xff]
    %v7271 = vld [vmem:[#allocation2 + $0x141] sm:$0xff]
    %v7272 = vld [vmem:[#allocation2 + $0x149] sm:$0xff]
    %v7273 = vld [vmem:[#allocation2 + $0x151] sm:$0xff]
    %v7274 = vld [vmem:[#allocation2 + $0x159] sm:$0xff]
    %v7275 = vld [vmem:[#allocation2 + $0x161] sm:$0xff]
    %v7276 = vld [vmem:[#allocation2 + $0x169] sm:$0xff]
    %v7277 = vld [vmem:[#allocation2 + $0x171] sm:$0xff]
    %v7278 = vld [vmem:[#allocation2 + $0x179] sm:$0xff]
    %v7279 = vld [vmem:[#allocation2 + $0x181] sm:$0xff]
    %v7280 = vld [vmem:[#allocation2 + $0x189] sm:$0xff]
    %v7281 = vld [vmem:[#allocation2 + $0x191] sm:$0xff]
    %v7282 = vld [vmem:[#allocation2 + $0x199] sm:$0xff]
    %v7283 = vld [vmem:[#allocation2 + $0x1a1] sm:$0xff]
    %v7284 = vld [vmem:[#allocation2 + $0x1a9] sm:$0xff]
    %v7285 = vld [vmem:[#allocation2 + $0x1b1] sm:$0xff]
    %v7286 = vld [vmem:[#allocation2 + $0x1b9] sm:$0xff]
    %v7287 = vld [vmem:[#allocation2 + $0x1c1] sm:$0xff]
    %v7288 = vld [vmem:[#allocation2 + $0x1c9] sm:$0xff]
    %v7289 = vld [vmem:[#allocation2 + $0x1d1] sm:$0xff]
    %v7290 = vld [vmem:[#allocation2 + $0x1d9] sm:$0xff]
    %v7291 = vld [vmem:[#allocation2 + $0x1e1] sm:$0xff]
    %v7292 = vld [vmem:[#allocation2 + $0x1e9] sm:$0xff]
    %v7293 = vld [vmem:[#allocation2 + $0x1f1] sm:$0xff]
    %v7294 = vld [vmem:[#allocation2 + $0x1f9] sm:$0xff]
    %v7295 = vld [vmem:[#allocation2 + $0x201] sm:$0xff]
    %v7296 = vsel %vm1896, %v7232, 0.0
    %v7297 = vsel %vm1897, %v7233, 0.0
    %v7298 = vsel %vm1898, %v7234, 0.0
    %v7299 = vsel %vm1899, %v7235, 0.0
    %v7300 = vsel %vm1900, %v7236, 0.0
    %v7301 = vsel %vm1901, %v7237, 0.0
    %v7302 = vsel %vm1902, %v7238, 0.0
    %v7303 = vsel %vm1903, %v7239, 0.0
    %v7304 = vsel %vm1904, %v7240, 0.0
    %v7305 = vsel %vm1905, %v7241, 0.0
    %v7306 = vsel %vm1906, %v7242, 0.0
    %v7307 = vsel %vm1907, %v7243, 0.0
    %v7308 = vsel %vm1908, %v7244, 0.0
    %v7309 = vsel %vm1909, %v7245, 0.0
    %v7310 = vsel %vm1910, %v7246, 0.0
    %v7311 = vsel %vm1911, %v7247, 0.0
    %v7312 = vsel %vm1912, %v7248, 0.0
    %v7313 = vsel %vm1913, %v7249, 0.0
    %v7314 = vsel %vm1914, %v7250, 0.0
    %v7315 = vsel %vm1915, %v7251, 0.0
    %v7316 = vsel %vm1916, %v7252, 0.0
    %v7317 = vsel %vm1917, %v7253, 0.0
    %v7318 = vsel %vm1918, %v7254, 0.0
    %v7319 = vsel %vm1919, %v7255, 0.0
    %v7320 = vsel %vm1920, %v7256, 0.0
    %v7321 = vsel %vm1921, %v7257, 0.0
    %v7322 = vsel %vm1922, %v7258, 0.0
    %v7323 = vsel %vm1923, %v7259, 0.0
    %v7324 = vsel %vm1924, %v7260, 0.0
    %v7325 = vsel %vm1925, %v7261, 0.0
    %v7326 = vsel %vm1926, %v7262, 0.0
    %v7327 = vsel %vm1927, %v7263, 0.0
    %v7328 = vsel %vm1928, %v7264, 0.0
    %v7329 = vsel %vm1929, %v7265, 0.0
    %v7330 = vsel %vm1930, %v7266, 0.0
    %v7331 = vsel %vm1931, %v7267, 0.0
    %v7332 = vsel %vm1932, %v7268, 0.0
    %v7333 = vsel %vm1933, %v7269, 0.0
    %v7334 = vsel %vm1934, %v7270, 0.0
    %v7335 = vsel %vm1935, %v7271, 0.0
    %v7336 = vsel %vm1936, %v7272, 0.0
    %v7337 = vsel %vm1937, %v7273, 0.0
    %v7338 = vsel %vm1938, %v7274, 0.0
    %v7339 = vsel %vm1939, %v7275, 0.0
    %v7340 = vsel %vm1940, %v7276, 0.0
    %v7341 = vsel %vm1941, %v7277, 0.0
    %v7342 = vsel %vm1942, %v7278, 0.0
    %v7343 = vsel %vm1943, %v7279, 0.0
    %v7344 = vsel %vm1944, %v7280, 0.0
    %v7345 = vsel %vm1945, %v7281, 0.0
    %v7346 = vsel %vm1946, %v7282, 0.0
    %v7347 = vsel %vm1947, %v7283, 0.0
    %v7348 = vsel %vm1948, %v7284, 0.0
    %v7349 = vsel %vm1949, %v7285, 0.0
    %v7350 = vsel %vm1950, %v7286, 0.0
    %v7351 = vsel %vm1951, %v7287, 0.0
    %v7352 = vsel %vm1952, %v7288, 0.0
    %v7353 = vsel %vm1953, %v7289, 0.0
    %v7354 = vsel %vm1954, %v7290, 0.0
    %v7355 = vsel %vm1955, %v7291, 0.0
    %v7356 = vsel %vm1956, %v7292, 0.0
    %v7357 = vsel %vm1957, %v7293, 0.0
    %v7358 = vsel %vm1958, %v7294, 0.0
    %v7359 = vsel %vm1959, %v7295, 0.0
    %v7360 = vpack.c.bf16 %v7297, %v7296
    %v7361 = vpack.c.bf16 %v7299, %v7298
    %v7362 = vpack.c.bf16 %v7301, %v7300
    %v7363 = vpack.c.bf16 %v7303, %v7302
    %v7364 = vpack.c.bf16 %v7305, %v7304
    %v7365 = vpack.c.bf16 %v7307, %v7306
    %v7366 = vpack.c.bf16 %v7309, %v7308
    %v7367 = vpack.c.bf16 %v7311, %v7310
    %v7368 = vpack.c.bf16 %v7313, %v7312
    %v7369 = vpack.c.bf16 %v7315, %v7314
    %v7370 = vpack.c.bf16 %v7317, %v7316
    %v7371 = vpack.c.bf16 %v7319, %v7318
    %v7372 = vpack.c.bf16 %v7321, %v7320
    %v7373 = vpack.c.bf16 %v7323, %v7322
    %v7374 = vpack.c.bf16 %v7325, %v7324
    %v7375 = vpack.c.bf16 %v7327, %v7326
    %v7376 = vpack.c.bf16 %v7329, %v7328
    %v7377 = vpack.c.bf16 %v7331, %v7330
    %v7378 = vpack.c.bf16 %v7333, %v7332
    %v7379 = vpack.c.bf16 %v7335, %v7334
    %v7380 = vpack.c.bf16 %v7337, %v7336
    %v7381 = vpack.c.bf16 %v7339, %v7338
    %v7382 = vpack.c.bf16 %v7341, %v7340
    %v7383 = vpack.c.bf16 %v7343, %v7342
    %v7384 = vpack.c.bf16 %v7345, %v7344
    %v7385 = vpack.c.bf16 %v7347, %v7346
    %v7386 = vpack.c.bf16 %v7349, %v7348
    %v7387 = vpack.c.bf16 %v7351, %v7350
    %v7388 = vpack.c.bf16 %v7353, %v7352
    %v7389 = vpack.c.bf16 %v7355, %v7354
    %v7390 = vpack.c.bf16 %v7357, %v7356
    %v7391 = vpack.c.bf16 %v7359, %v7358
    %s7392 = scalar_lea.vmem %s3, 128
    %v7393 = vld [vmem:[%s7392] sm:$0xf]
    %v7394 = vld [vmem:[%s7392 + $0x4] sm:$0xf]
    %v7395 = vld [vmem:[%s7392 + $0x8] sm:$0xf]
    %v7396 = vld [vmem:[%s7392 + $0xc] sm:$0xf]
    %v7397 = vld [vmem:[%s7392 + $0x10] sm:$0xf]
    %v7398 = vld [vmem:[%s7392 + $0x14] sm:$0xf]
    %v7399 = vld [vmem:[%s7392 + $0x18] sm:$0xf]
    %v7400 = vld [vmem:[%s7392 + $0x1c] sm:$0xf]
    %v7401 = vld [vmem:[%s7392 + $0x20] sm:$0xf]
    %v7402 = vld [vmem:[%s7392 + $0x24] sm:$0xf]
    %v7403 = vld [vmem:[%s7392 + $0x28] sm:$0xf]
    %v7404 = vld [vmem:[%s7392 + $0x2c] sm:$0xf]
    %v7405 = vld [vmem:[%s7392 + $0x30] sm:$0xf]
    %v7406 = vld [vmem:[%s7392 + $0x34] sm:$0xf]
    %v7407 = vld [vmem:[%s7392 + $0x38] sm:$0xf]
    %v7408 = vld [vmem:[%s7392 + $0x3c] sm:$0xf]
    %v7425 = vunpack.c.l.b16 %v7393
    %v7426 = vunpack.c.l.b16 %v7394
    %v7427 = vunpack.c.l.b16 %v7395
    %v7428 = vunpack.c.l.b16 %v7396
    %v7429 = vunpack.c.l.b16 %v7397
    %v7430 = vunpack.c.l.b16 %v7398
    %v7431 = vunpack.c.l.b16 %v7399
    %v7432 = vunpack.c.l.b16 %v7400
    %v7433 = vunpack.c.l.b16 %v7401
    %v7434 = vunpack.c.l.b16 %v7402
    %v7435 = vunpack.c.l.b16 %v7403
    %v7436 = vunpack.c.l.b16 %v7404
    %v7437 = vunpack.c.l.b16 %v7405
    %v7438 = vunpack.c.l.b16 %v7406
    %v7439 = vunpack.c.l.b16 %v7407
    %v7440 = vunpack.c.l.b16 %v7408
    %v7441 = vpack.c.b16 %v7426, %v7425
    %v7442 = vpack.c.b16 %v7428, %v7427
    %v7443 = vpack.c.b16 %v7430, %v7429
    %v7444 = vpack.c.b16 %v7432, %v7431
    %v7445 = vpack.c.b16 %v7434, %v7433
    %v7446 = vpack.c.b16 %v7436, %v7435
    %v7447 = vpack.c.b16 %v7438, %v7437
    %v7448 = vpack.c.b16 %v7440, %v7439
    %7457 = vmatprep.subr.bf16.mxu0 0
    %7458 = vmatpush1.bf16.msra.mxu0 %v7448
    %7459 = vmatprep.subr.bf16.mxu0 0
    %7460 = vmatpush1.bf16.msra.mxu0 %v7447
    %7461 = vmatprep.subr.bf16.mxu0 0
    %7462 = vmatpush1.bf16.msra.mxu0 %v7446
    %7463 = vmatprep.subr.bf16.mxu0 0
    %7464 = vmatpush1.bf16.msra.mxu0 %v7445
    %7465 = vmatprep.subr.bf16.mxu0 0
    %7466 = vmatpush1.bf16.msra.mxu0 %v7444
    %7467 = vmatprep.subr.bf16.mxu0 0
    %7468 = vmatpush1.bf16.msra.mxu0 %v7443
    %7469 = vmatprep.subr.bf16.mxu0 0
    %7470 = vmatpush1.bf16.msra.mxu0 %v7442
    %7471 = vmatprep.subr.bf16.mxu0 0
    %7472 = vmatpush1.bf16.msra.mxu0 %v7441
    %7473 = vmatprep.subr.bf16.mxu0 0
    %7474 = vmatpush2.bf16.msra.mxu0 0
    %7475 = vmatprep.subr.bf16.mxu0 0
    %7476 = vmatpush2.bf16.msra.mxu0 0
    %7477 = vmatprep.subr.bf16.mxu0 0
    %7478 = vmatpush2.bf16.msra.mxu0 0
    %7479 = vmatprep.subr.bf16.mxu0 0
    %7480 = vmatpush2.bf16.msra.mxu0 0
    %7481 = vmatprep.subr.bf16.mxu0 0
    %7482 = vmatpush2.bf16.msra.mxu0 0
    %7483 = vmatprep.subr.bf16.mxu0 0
    %7484 = vmatpush2.bf16.msra.mxu0 0
    %7485 = vmatprep.subr.bf16.mxu0 0
    %7486 = vmatpush2.bf16.msra.mxu0 0
    %7487 = vmatprep.subr.bf16.mxu0 0
    %7488 = vmatpush2.bf16.msra.mxu0 0
    %7489 = vmatprep.mubr.bf16.mxu0 0
    %7490 = vmatmul.mubr.bf16.gmra.mxu0 %v7360
    %v7491 = vpop.f32.mrf.mxu0
    %v7492 = vadd.f32 0.0, %v7491
    %v7493 = vpop.f32.mrf.mxu0
    %v7494 = vpop.f32.mrf.mxu0
    %v7495 = vadd.f32 0.0, %v7494
    %v7496 = vpop.f32.mrf.mxu0
    %7497 = vmatprep.mubr.bf16.mxu0 0
    %7498 = vmatmul.mubr.bf16.gmra.mxu0 %v7361
    %v7499 = vpop.f32.mrf.mxu0
    %v7500 = vadd.f32 0.0, %v7499
    %v7501 = vpop.f32.mrf.mxu0
    %v7502 = vpop.f32.mrf.mxu0
    %v7503 = vadd.f32 0.0, %v7502
    %v7504 = vpop.f32.mrf.mxu0
    %7505 = vmatprep.mubr.bf16.mxu0 0
    %7506 = vmatmul.mubr.bf16.gmra.mxu0 %v7362
    %v7507 = vpop.f32.mrf.mxu0
    %v7508 = vadd.f32 0.0, %v7507
    %v7509 = vpop.f32.mrf.mxu0
    %v7510 = vpop.f32.mrf.mxu0
    %v7511 = vadd.f32 0.0, %v7510
    %v7512 = vpop.f32.mrf.mxu0
    %7513 = vmatprep.mubr.bf16.mxu0 0
    %7514 = vmatmul.mubr.bf16.gmra.mxu0 %v7363
    %v7515 = vpop.f32.mrf.mxu0
    %v7516 = vadd.f32 0.0, %v7515
    %v7517 = vpop.f32.mrf.mxu0
    %v7518 = vpop.f32.mrf.mxu0
    %v7519 = vadd.f32 0.0, %v7518
    %v7520 = vpop.f32.mrf.mxu0
    %7521 = vmatprep.mubr.bf16.mxu0 0
    %7522 = vmatmul.mubr.bf16.gmra.mxu0 %v7364
    %v7523 = vpop.f32.mrf.mxu0
    %v7524 = vadd.f32 0.0, %v7523
    %v7525 = vpop.f32.mrf.mxu0
    %v7526 = vpop.f32.mrf.mxu0
    %v7527 = vadd.f32 0.0, %v7526
    %v7528 = vpop.f32.mrf.mxu0
    %7529 = vmatprep.mubr.bf16.mxu0 0
    %7530 = vmatmul.mubr.bf16.gmra.mxu0 %v7365
    %v7531 = vpop.f32.mrf.mxu0
    %v7532 = vadd.f32 0.0, %v7531
    %v7533 = vpop.f32.mrf.mxu0
    %v7534 = vpop.f32.mrf.mxu0
    %v7535 = vadd.f32 0.0, %v7534
    %v7536 = vpop.f32.mrf.mxu0
    %7537 = vmatprep.mubr.bf16.mxu0 0
    %7538 = vmatmul.mubr.bf16.gmra.mxu0 %v7366
    %v7539 = vpop.f32.mrf.mxu0
    %v7540 = vadd.f32 0.0, %v7539
    %v7541 = vpop.f32.mrf.mxu0
    %v7542 = vpop.f32.mrf.mxu0
    %v7543 = vadd.f32 0.0, %v7542
    %v7544 = vpop.f32.mrf.mxu0
    %7545 = vmatprep.mubr.bf16.mxu0 0
    %7546 = vmatmul.mubr.bf16.gmra.mxu0 %v7367
    %v7547 = vpop.f32.mrf.mxu0
    %v7548 = vadd.f32 0.0, %v7547
    %v7549 = vpop.f32.mrf.mxu0
    %v7550 = vpop.f32.mrf.mxu0
    %v7551 = vadd.f32 0.0, %v7550
    %v7552 = vpop.f32.mrf.mxu0
    %7553 = vmatprep.mubr.bf16.mxu0 0
    %7554 = vmatmul.mubr.bf16.gmra.mxu0 %v7368
    %v7555 = vpop.f32.mrf.mxu0
    %v7556 = vadd.f32 0.0, %v7555
    %v7557 = vpop.f32.mrf.mxu0
    %v7558 = vpop.f32.mrf.mxu0
    %v7559 = vadd.f32 0.0, %v7558
    %v7560 = vpop.f32.mrf.mxu0
    %7561 = vmatprep.mubr.bf16.mxu0 0
    %7562 = vmatmul.mubr.bf16.gmra.mxu0 %v7369
    %v7563 = vpop.f32.mrf.mxu0
    %v7564 = vadd.f32 0.0, %v7563
    %v7565 = vpop.f32.mrf.mxu0
    %v7566 = vpop.f32.mrf.mxu0
    %v7567 = vadd.f32 0.0, %v7566
    %v7568 = vpop.f32.mrf.mxu0
    %7569 = vmatprep.mubr.bf16.mxu0 0
    %7570 = vmatmul.mubr.bf16.gmra.mxu0 %v7370
    %v7571 = vpop.f32.mrf.mxu0
    %v7572 = vadd.f32 0.0, %v7571
    %v7573 = vpop.f32.mrf.mxu0
    %v7574 = vpop.f32.mrf.mxu0
    %v7575 = vadd.f32 0.0, %v7574
    %v7576 = vpop.f32.mrf.mxu0
    %7577 = vmatprep.mubr.bf16.mxu0 0
    %7578 = vmatmul.mubr.bf16.gmra.mxu0 %v7371
    %v7579 = vpop.f32.mrf.mxu0
    %v7580 = vadd.f32 0.0, %v7579
    %v7581 = vpop.f32.mrf.mxu0
    %v7582 = vpop.f32.mrf.mxu0
    %v7583 = vadd.f32 0.0, %v7582
    %v7584 = vpop.f32.mrf.mxu0
    %7585 = vmatprep.mubr.bf16.mxu0 0
    %7586 = vmatmul.mubr.bf16.gmra.mxu0 %v7372
    %v7587 = vpop.f32.mrf.mxu0
    %v7588 = vadd.f32 0.0, %v7587
    %v7589 = vpop.f32.mrf.mxu0
    %v7590 = vpop.f32.mrf.mxu0
    %v7591 = vadd.f32 0.0, %v7590
    %v7592 = vpop.f32.mrf.mxu0
    %7593 = vmatprep.mubr.bf16.mxu0 0
    %7594 = vmatmul.mubr.bf16.gmra.mxu0 %v7373
    %v7595 = vpop.f32.mrf.mxu0
    %v7596 = vadd.f32 0.0, %v7595
    %v7597 = vpop.f32.mrf.mxu0
    %v7598 = vpop.f32.mrf.mxu0
    %v7599 = vadd.f32 0.0, %v7598
    %v7600 = vpop.f32.mrf.mxu0
    %7601 = vmatprep.mubr.bf16.mxu0 0
    %7602 = vmatmul.mubr.bf16.gmra.mxu0 %v7374
    %v7603 = vpop.f32.mrf.mxu0
    %v7604 = vadd.f32 0.0, %v7603
    %v7605 = vpop.f32.mrf.mxu0
    %v7606 = vpop.f32.mrf.mxu0
    %v7607 = vadd.f32 0.0, %v7606
    %v7608 = vpop.f32.mrf.mxu0
    %7609 = vmatprep.mubr.bf16.mxu0 0
    %7610 = vmatmul.mubr.bf16.gmra.mxu0 %v7375
    %v7611 = vpop.f32.mrf.mxu0
    %v7612 = vadd.f32 0.0, %v7611
    %v7613 = vpop.f32.mrf.mxu0
    %v7614 = vpop.f32.mrf.mxu0
    %v7615 = vadd.f32 0.0, %v7614
    %v7616 = vpop.f32.mrf.mxu0
    %7617 = vmatprep.mubr.bf16.mxu0 0
    %7618 = vmatmul.mubr.bf16.gmra.mxu0 %v7376
    %v7619 = vpop.f32.mrf.mxu0
    %v7620 = vadd.f32 0.0, %v7619
    %v7621 = vpop.f32.mrf.mxu0
    %v7622 = vpop.f32.mrf.mxu0
    %v7623 = vadd.f32 0.0, %v7622
    %v7624 = vpop.f32.mrf.mxu0
    %7625 = vmatprep.mubr.bf16.mxu0 0
    %7626 = vmatmul.mubr.bf16.gmra.mxu0 %v7377
    %v7627 = vpop.f32.mrf.mxu0
    %v7628 = vadd.f32 0.0, %v7627
    %v7629 = vpop.f32.mrf.mxu0
    %v7630 = vpop.f32.mrf.mxu0
    %v7631 = vadd.f32 0.0, %v7630
    %v7632 = vpop.f32.mrf.mxu0
    %7633 = vmatprep.mubr.bf16.mxu0 0
    %7634 = vmatmul.mubr.bf16.gmra.mxu0 %v7378
    %v7635 = vpop.f32.mrf.mxu0
    %v7636 = vadd.f32 0.0, %v7635
    %v7637 = vpop.f32.mrf.mxu0
    %v7638 = vpop.f32.mrf.mxu0
    %v7639 = vadd.f32 0.0, %v7638
    %v7640 = vpop.f32.mrf.mxu0
    %7641 = vmatprep.mubr.bf16.mxu0 0
    %7642 = vmatmul.mubr.bf16.gmra.mxu0 %v7379
    %v7643 = vpop.f32.mrf.mxu0
    %v7644 = vadd.f32 0.0, %v7643
    %v7645 = vpop.f32.mrf.mxu0
    %v7646 = vpop.f32.mrf.mxu0
    %v7647 = vadd.f32 0.0, %v7646
    %v7648 = vpop.f32.mrf.mxu0
    %7649 = vmatprep.mubr.bf16.mxu0 0
    %7650 = vmatmul.mubr.bf16.gmra.mxu0 %v7380
    %v7651 = vpop.f32.mrf.mxu0
    %v7652 = vadd.f32 0.0, %v7651
    %v7653 = vpop.f32.mrf.mxu0
    %v7654 = vpop.f32.mrf.mxu0
    %v7655 = vadd.f32 0.0, %v7654
    %v7656 = vpop.f32.mrf.mxu0
    %7657 = vmatprep.mubr.bf16.mxu0 0
    %7658 = vmatmul.mubr.bf16.gmra.mxu0 %v7381
    %v7659 = vpop.f32.mrf.mxu0
    %v7660 = vadd.f32 0.0, %v7659
    %v7661 = vpop.f32.mrf.mxu0
    %v7662 = vpop.f32.mrf.mxu0
    %v7663 = vadd.f32 0.0, %v7662
    %v7664 = vpop.f32.mrf.mxu0
    %7665 = vmatprep.mubr.bf16.mxu0 0
    %7666 = vmatmul.mubr.bf16.gmra.mxu0 %v7382
    %v7667 = vpop.f32.mrf.mxu0
    %v7668 = vadd.f32 0.0, %v7667
    %v7669 = vpop.f32.mrf.mxu0
    %v7670 = vpop.f32.mrf.mxu0
    %v7671 = vadd.f32 0.0, %v7670
    %v7672 = vpop.f32.mrf.mxu0
    %7673 = vmatprep.mubr.bf16.mxu0 0
    %7674 = vmatmul.mubr.bf16.gmra.mxu0 %v7383
    %v7675 = vpop.f32.mrf.mxu0
    %v7676 = vadd.f32 0.0, %v7675
    %v7677 = vpop.f32.mrf.mxu0
    %v7678 = vpop.f32.mrf.mxu0
    %v7679 = vadd.f32 0.0, %v7678
    %v7680 = vpop.f32.mrf.mxu0
    %7681 = vmatprep.mubr.bf16.mxu0 0
    %7682 = vmatmul.mubr.bf16.gmra.mxu0 %v7384
    %v7683 = vpop.f32.mrf.mxu0
    %v7684 = vadd.f32 0.0, %v7683
    %v7685 = vpop.f32.mrf.mxu0
    %v7686 = vpop.f32.mrf.mxu0
    %v7687 = vadd.f32 0.0, %v7686
    %v7688 = vpop.f32.mrf.mxu0
    %7689 = vmatprep.mubr.bf16.mxu0 0
    %7690 = vmatmul.mubr.bf16.gmra.mxu0 %v7385
    %v7691 = vpop.f32.mrf.mxu0
    %v7692 = vadd.f32 0.0, %v7691
    %v7693 = vpop.f32.mrf.mxu0
    %v7694 = vpop.f32.mrf.mxu0
    %v7695 = vadd.f32 0.0, %v7694
    %v7696 = vpop.f32.mrf.mxu0
    %7697 = vmatprep.mubr.bf16.mxu0 0
    %7698 = vmatmul.mubr.bf16.gmra.mxu0 %v7386
    %v7699 = vpop.f32.mrf.mxu0
    %v7700 = vadd.f32 0.0, %v7699
    %v7701 = vpop.f32.mrf.mxu0
    %v7702 = vpop.f32.mrf.mxu0
    %v7703 = vadd.f32 0.0, %v7702
    %v7704 = vpop.f32.mrf.mxu0
    %7705 = vmatprep.mubr.bf16.mxu0 0
    %7706 = vmatmul.mubr.bf16.gmra.mxu0 %v7387
    %v7707 = vpop.f32.mrf.mxu0
    %v7708 = vadd.f32 0.0, %v7707
    %v7709 = vpop.f32.mrf.mxu0
    %v7710 = vpop.f32.mrf.mxu0
    %v7711 = vadd.f32 0.0, %v7710
    %v7712 = vpop.f32.mrf.mxu0
    %7713 = vmatprep.mubr.bf16.mxu0 0
    %7714 = vmatmul.mubr.bf16.gmra.mxu0 %v7388
    %v7715 = vpop.f32.mrf.mxu0
    %v7716 = vadd.f32 0.0, %v7715
    %v7717 = vpop.f32.mrf.mxu0
    %v7718 = vpop.f32.mrf.mxu0
    %v7719 = vadd.f32 0.0, %v7718
    %v7720 = vpop.f32.mrf.mxu0
    %7721 = vmatprep.mubr.bf16.mxu0 0
    %7722 = vmatmul.mubr.bf16.gmra.mxu0 %v7389
    %v7723 = vpop.f32.mrf.mxu0
    %v7724 = vadd.f32 0.0, %v7723
    %v7725 = vpop.f32.mrf.mxu0
    %v7726 = vpop.f32.mrf.mxu0
    %v7727 = vadd.f32 0.0, %v7726
    %v7728 = vpop.f32.mrf.mxu0
    %7729 = vmatprep.mubr.bf16.mxu0 0
    %7730 = vmatmul.mubr.bf16.gmra.mxu0 %v7390
    %v7731 = vpop.f32.mrf.mxu0
    %v7732 = vadd.f32 0.0, %v7731
    %v7733 = vpop.f32.mrf.mxu0
    %v7734 = vpop.f32.mrf.mxu0
    %v7735 = vadd.f32 0.0, %v7734
    %v7736 = vpop.f32.mrf.mxu0
    %7737 = vmatprep.mubr.bf16.mxu0 0
    %7738 = vmatmul.mubr.bf16.gmra.mxu0 %v7391
    %v7739 = vpop.f32.mrf.mxu0
    %v7740 = vadd.f32 0.0, %v7739
    %v7741 = vpop.f32.mrf.mxu0
    %v7742 = vpop.f32.mrf.mxu0
    %v7743 = vadd.f32 0.0, %v7742
    %v7744 = vpop.f32.mrf.mxu0
    %7745 = vdwg.mxu0
    %v7746 = vadd.f32 %v6978, %v7492
    %v7747 = vadd.f32 %v6981, %v7495
    %v7748 = vadd.f32 %v6986, %v7500
    %v7749 = vadd.f32 %v6989, %v7503
    %v7750 = vadd.f32 %v6994, %v7508
    %v7751 = vadd.f32 %v6997, %v7511
    %v7752 = vadd.f32 %v7002, %v7516
    %v7753 = vadd.f32 %v7005, %v7519
    %v7754 = vadd.f32 %v7010, %v7524
    %v7755 = vadd.f32 %v7013, %v7527
    %v7756 = vadd.f32 %v7018, %v7532
    %v7757 = vadd.f32 %v7021, %v7535
    %v7758 = vadd.f32 %v7026, %v7540
    %v7759 = vadd.f32 %v7029, %v7543
    %v7760 = vadd.f32 %v7034, %v7548
    %v7761 = vadd.f32 %v7037, %v7551
    %v7762 = vadd.f32 %v7042, %v7556
    %v7763 = vadd.f32 %v7045, %v7559
    %v7764 = vadd.f32 %v7050, %v7564
    %v7765 = vadd.f32 %v7053, %v7567
    %v7766 = vadd.f32 %v7058, %v7572
    %v7767 = vadd.f32 %v7061, %v7575
    %v7768 = vadd.f32 %v7066, %v7580
    %v7769 = vadd.f32 %v7069, %v7583
    %v7770 = vadd.f32 %v7074, %v7588
    %v7771 = vadd.f32 %v7077, %v7591
    %v7772 = vadd.f32 %v7082, %v7596
    %v7773 = vadd.f32 %v7085, %v7599
    %v7774 = vadd.f32 %v7090, %v7604
    %v7775 = vadd.f32 %v7093, %v7607
    %v7776 = vadd.f32 %v7098, %v7612
    %v7777 = vadd.f32 %v7101, %v7615
    %v7778 = vadd.f32 %v7106, %v7620
    %v7779 = vadd.f32 %v7109, %v7623
    %v7780 = vadd.f32 %v7114, %v7628
    %v7781 = vadd.f32 %v7117, %v7631
    %v7782 = vadd.f32 %v7122, %v7636
    %v7783 = vadd.f32 %v7125, %v7639
    %v7784 = vadd.f32 %v7130, %v7644
    %v7785 = vadd.f32 %v7133, %v7647
    %v7786 = vadd.f32 %v7138, %v7652
    %v7787 = vadd.f32 %v7141, %v7655
    %v7788 = vadd.f32 %v7146, %v7660
    %v7789 = vadd.f32 %v7149, %v7663
    %v7790 = vadd.f32 %v7154, %v7668
    %v7791 = vadd.f32 %v7157, %v7671
    %v7792 = vadd.f32 %v7162, %v7676
    %v7793 = vadd.f32 %v7165, %v7679
    %v7794 = vadd.f32 %v7170, %v7684
    %v7795 = vadd.f32 %v7173, %v7687
    %v7796 = vadd.f32 %v7178, %v7692
    %v7797 = vadd.f32 %v7181, %v7695
    %v7798 = vadd.f32 %v7186, %v7700
    %v7799 = vadd.f32 %v7189, %v7703
    %v7800 = vadd.f32 %v7194, %v7708
    %v7801 = vadd.f32 %v7197, %v7711
    %v7802 = vadd.f32 %v7202, %v7716
    %v7803 = vadd.f32 %v7205, %v7719
    %v7804 = vadd.f32 %v7210, %v7724
    %v7805 = vadd.f32 %v7213, %v7727
    %v7806 = vadd.f32 %v7218, %v7732
    %v7807 = vadd.f32 %v7221, %v7735
    %v7808 = vadd.f32 %v7226, %v7740
    %v7809 = vadd.f32 %v7229, %v7743
    %v7810 = vld [vmem:[#allocation2 + $0x17] sm:$0xff]
    %v7811 = vld [vmem:[#allocation2 + $0x1f] sm:$0xff]
    %v7812 = vld [vmem:[#allocation2 + $0x27] sm:$0xff]
    %v7813 = vld [vmem:[#allocation2 + $0x2f] sm:$0xff]
    %v7814 = vld [vmem:[#allocation2 + $0x37] sm:$0xff]
    %v7815 = vld [vmem:[#allocation2 + $0x3f] sm:$0xff]
    %v7816 = vld [vmem:[#allocation2 + $0x47] sm:$0xff]
    %v7817 = vld [vmem:[#allocation2 + $0x4f] sm:$0xff]
    %v7818 = vld [vmem:[#allocation2 + $0x57] sm:$0xff]
    %v7819 = vld [vmem:[#allocation2 + $0x5f] sm:$0xff]
    %v7820 = vld [vmem:[#allocation2 + $0x67] sm:$0xff]
    %v7821 = vld [vmem:[#allocation2 + $0x6f] sm:$0xff]
    %v7822 = vld [vmem:[#allocation2 + $0x77] sm:$0xff]
    %v7823 = vld [vmem:[#allocation2 + $0x7f] sm:$0xff]
    %v7824 = vld [vmem:[#allocation2 + $0x87] sm:$0xff]
    %v7825 = vld [vmem:[#allocation2 + $0x8f] sm:$0xff]
    %v7826 = vld [vmem:[#allocation2 + $0x97] sm:$0xff]
    %v7827 = vld [vmem:[#allocation2 + $0x9f] sm:$0xff]
    %v7828 = vld [vmem:[#allocation2 + $0xa7] sm:$0xff]
    %v7829 = vld [vmem:[#allocation2 + $0xaf] sm:$0xff]
    %v7830 = vld [vmem:[#allocation2 + $0xb7] sm:$0xff]
    %v7831 = vld [vmem:[#allocation2 + $0xbf] sm:$0xff]
    %v7832 = vld [vmem:[#allocation2 + $0xc7] sm:$0xff]
    %v7833 = vld [vmem:[#allocation2 + $0xcf] sm:$0xff]
    %v7834 = vld [vmem:[#allocation2 + $0xd7] sm:$0xff]
    %v7835 = vld [vmem:[#allocation2 + $0xdf] sm:$0xff]
    %v7836 = vld [vmem:[#allocation2 + $0xe7] sm:$0xff]
    %v7837 = vld [vmem:[#allocation2 + $0xef] sm:$0xff]
    %v7838 = vld [vmem:[#allocation2 + $0xf7] sm:$0xff]
    %v7839 = vld [vmem:[#allocation2 + $0xff] sm:$0xff]
    %v7840 = vld [vmem:[#allocation2 + $0x107] sm:$0xff]
    %v7841 = vld [vmem:[#allocation2 + $0x10f] sm:$0xff]
    %v7842 = vld [vmem:[#allocation2 + $0x117] sm:$0xff]
    %v7843 = vld [vmem:[#allocation2 + $0x11f] sm:$0xff]
    %v7844 = vld [vmem:[#allocation2 + $0x127] sm:$0xff]
    %v7845 = vld [vmem:[#allocation2 + $0x12f] sm:$0xff]
    %v7846 = vld [vmem:[#allocation2 + $0x137] sm:$0xff]
    %v7847 = vld [vmem:[#allocation2 + $0x13f] sm:$0xff]
    %v7848 = vld [vmem:[#allocation2 + $0x147] sm:$0xff]
    %v7849 = vld [vmem:[#allocation2 + $0x14f] sm:$0xff]
    %v7850 = vld [vmem:[#allocation2 + $0x157] sm:$0xff]
    %v7851 = vld [vmem:[#allocation2 + $0x15f] sm:$0xff]
    %v7852 = vld [vmem:[#allocation2 + $0x167] sm:$0xff]
    %v7853 = vld [vmem:[#allocation2 + $0x16f] sm:$0xff]
    %v7854 = vld [vmem:[#allocation2 + $0x177] sm:$0xff]
    %v7855 = vld [vmem:[#allocation2 + $0x17f] sm:$0xff]
    %v7856 = vld [vmem:[#allocation2 + $0x187] sm:$0xff]
    %v7857 = vld [vmem:[#allocation2 + $0x18f] sm:$0xff]
    %v7858 = vld [vmem:[#allocation2 + $0x197] sm:$0xff]
    %v7859 = vld [vmem:[#allocation2 + $0x19f] sm:$0xff]
    %v7860 = vld [vmem:[#allocation2 + $0x1a7] sm:$0xff]
    %v7861 = vld [vmem:[#allocation2 + $0x1af] sm:$0xff]
    %v7862 = vld [vmem:[#allocation2 + $0x1b7] sm:$0xff]
    %v7863 = vld [vmem:[#allocation2 + $0x1bf] sm:$0xff]
    %v7864 = vld [vmem:[#allocation2 + $0x1c7] sm:$0xff]
    %v7865 = vld [vmem:[#allocation2 + $0x1cf] sm:$0xff]
    %v7866 = vld [vmem:[#allocation2 + $0x1d7] sm:$0xff]
    %v7867 = vld [vmem:[#allocation2 + $0x1df] sm:$0xff]
    %v7868 = vld [vmem:[#allocation2 + $0x1e7] sm:$0xff]
    %v7869 = vld [vmem:[#allocation2 + $0x1ef] sm:$0xff]
    %v7870 = vld [vmem:[#allocation2 + $0x1f7] sm:$0xff]
    %v7871 = vld [vmem:[#allocation2 + $0x1ff] sm:$0xff]
    %v7872 = vld [vmem:[#allocation2 + $0x207] sm:$0xff]
    %v7873 = vld [vmem:[#allocation2 + $0x20f] sm:$0xff]
    %v7874 = vsel %vm415, %v7810, 0.0
    %v7875 = vsel %vm416, %v7811, 0.0
    %v7876 = vsel %vm417, %v7812, 0.0
    %v7877 = vsel %vm418, %v7813, 0.0
    %v7878 = vsel %vm419, %v7814, 0.0
    %v7879 = vsel %vm420, %v7815, 0.0
    %v7880 = vsel %vm421, %v7816, 0.0
    %v7881 = vsel %vm422, %v7817, 0.0
    %v7882 = vsel %vm423, %v7818, 0.0
    %v7883 = vsel %vm424, %v7819, 0.0
    %v7884 = vsel %vm425, %v7820, 0.0
    %v7885 = vsel %vm426, %v7821, 0.0
    %v7886 = vsel %vm427, %v7822, 0.0
    %v7887 = vsel %vm428, %v7823, 0.0
    %v7888 = vsel %vm429, %v7824, 0.0
    %v7889 = vsel %vm430, %v7825, 0.0
    %v7890 = vsel %vm431, %v7826, 0.0
    %v7891 = vsel %vm432, %v7827, 0.0
    %v7892 = vsel %vm433, %v7828, 0.0
    %v7893 = vsel %vm434, %v7829, 0.0
    %v7894 = vsel %vm435, %v7830, 0.0
    %v7895 = vsel %vm436, %v7831, 0.0
    %v7896 = vsel %vm437, %v7832, 0.0
    %v7897 = vsel %vm438, %v7833, 0.0
    %v7898 = vsel %vm439, %v7834, 0.0
    %v7899 = vsel %vm440, %v7835, 0.0
    %v7900 = vsel %vm441, %v7836, 0.0
    %v7901 = vsel %vm442, %v7837, 0.0
    %v7902 = vsel %vm443, %v7838, 0.0
    %v7903 = vsel %vm444, %v7839, 0.0
    %v7904 = vsel %vm445, %v7840, 0.0
    %v7905 = vsel %vm446, %v7841, 0.0
    %v7906 = vsel %vm447, %v7842, 0.0
    %v7907 = vsel %vm448, %v7843, 0.0
    %v7908 = vsel %vm449, %v7844, 0.0
    %v7909 = vsel %vm450, %v7845, 0.0
    %v7910 = vsel %vm451, %v7846, 0.0
    %v7911 = vsel %vm452, %v7847, 0.0
    %v7912 = vsel %vm453, %v7848, 0.0
    %v7913 = vsel %vm454, %v7849, 0.0
    %v7914 = vsel %vm455, %v7850, 0.0
    %v7915 = vsel %vm456, %v7851, 0.0
    %v7916 = vsel %vm457, %v7852, 0.0
    %v7917 = vsel %vm458, %v7853, 0.0
    %v7918 = vsel %vm459, %v7854, 0.0
    %v7919 = vsel %vm460, %v7855, 0.0
    %v7920 = vsel %vm461, %v7856, 0.0
    %v7921 = vsel %vm462, %v7857, 0.0
    %v7922 = vsel %vm463, %v7858, 0.0
    %v7923 = vsel %vm464, %v7859, 0.0
    %v7924 = vsel %vm465, %v7860, 0.0
    %v7925 = vsel %vm466, %v7861, 0.0
    %v7926 = vsel %vm467, %v7862, 0.0
    %v7927 = vsel %vm468, %v7863, 0.0
    %v7928 = vsel %vm469, %v7864, 0.0
    %v7929 = vsel %vm470, %v7865, 0.0
    %v7930 = vsel %vm471, %v7866, 0.0
    %v7931 = vsel %vm472, %v7867, 0.0
    %v7932 = vsel %vm473, %v7868, 0.0
    %v7933 = vsel %vm474, %v7869, 0.0
    %v7934 = vsel %vm475, %v7870, 0.0
    %v7935 = vsel %vm476, %v7871, 0.0
    %v7936 = vsel %vm477, %v7872, 0.0
    %v7937 = vsel %vm478, %v7873, 0.0
    %v7938 = vpack.c.bf16 %v7875, %v7874
    %v7939 = vpack.c.bf16 %v7877, %v7876
    %v7940 = vpack.c.bf16 %v7879, %v7878
    %v7941 = vpack.c.bf16 %v7881, %v7880
    %v7942 = vpack.c.bf16 %v7883, %v7882
    %v7943 = vpack.c.bf16 %v7885, %v7884
    %v7944 = vpack.c.bf16 %v7887, %v7886
    %v7945 = vpack.c.bf16 %v7889, %v7888
    %v7946 = vpack.c.bf16 %v7891, %v7890
    %v7947 = vpack.c.bf16 %v7893, %v7892
    %v7948 = vpack.c.bf16 %v7895, %v7894
    %v7949 = vpack.c.bf16 %v7897, %v7896
    %v7950 = vpack.c.bf16 %v7899, %v7898
    %v7951 = vpack.c.bf16 %v7901, %v7900
    %v7952 = vpack.c.bf16 %v7903, %v7902
    %v7953 = vpack.c.bf16 %v7905, %v7904
    %v7954 = vpack.c.bf16 %v7907, %v7906
    %v7955 = vpack.c.bf16 %v7909, %v7908
    %v7956 = vpack.c.bf16 %v7911, %v7910
    %v7957 = vpack.c.bf16 %v7913, %v7912
    %v7958 = vpack.c.bf16 %v7915, %v7914
    %v7959 = vpack.c.bf16 %v7917, %v7916
    %v7960 = vpack.c.bf16 %v7919, %v7918
    %v7961 = vpack.c.bf16 %v7921, %v7920
    %v7962 = vpack.c.bf16 %v7923, %v7922
    %v7963 = vpack.c.bf16 %v7925, %v7924
    %v7964 = vpack.c.bf16 %v7927, %v7926
    %v7965 = vpack.c.bf16 %v7929, %v7928
    %v7966 = vpack.c.bf16 %v7931, %v7930
    %v7967 = vpack.c.bf16 %v7933, %v7932
    %v7968 = vpack.c.bf16 %v7935, %v7934
    %v7969 = vpack.c.bf16 %v7937, %v7936
    %s7970 = scalar_lea.vmem %s3, 192
    %v7971 = vld [vmem:[%s7970] sm:$0xf]
    %v7972 = vld [vmem:[%s7970 + $0x4] sm:$0xf]
    %v7973 = vld [vmem:[%s7970 + $0x8] sm:$0xf]
    %v7974 = vld [vmem:[%s7970 + $0xc] sm:$0xf]
    %v7975 = vld [vmem:[%s7970 + $0x10] sm:$0xf]
    %v7976 = vld [vmem:[%s7970 + $0x14] sm:$0xf]
    %v7977 = vld [vmem:[%s7970 + $0x18] sm:$0xf]
    %v7978 = vld [vmem:[%s7970 + $0x1c] sm:$0xf]
    %v7979 = vld [vmem:[%s7970 + $0x20] sm:$0xf]
    %v7980 = vld [vmem:[%s7970 + $0x24] sm:$0xf]
    %v7981 = vld [vmem:[%s7970 + $0x28] sm:$0xf]
    %v7982 = vld [vmem:[%s7970 + $0x2c] sm:$0xf]
    %v7983 = vld [vmem:[%s7970 + $0x30] sm:$0xf]
    %v7984 = vld [vmem:[%s7970 + $0x34] sm:$0xf]
    %v7985 = vld [vmem:[%s7970 + $0x38] sm:$0xf]
    %v7986 = vld [vmem:[%s7970 + $0x3c] sm:$0xf]
    %v8003 = vunpack.c.l.b16 %v7971
    %v8004 = vunpack.c.l.b16 %v7972
    %v8005 = vunpack.c.l.b16 %v7973
    %v8006 = vunpack.c.l.b16 %v7974
    %v8007 = vunpack.c.l.b16 %v7975
    %v8008 = vunpack.c.l.b16 %v7976
    %v8009 = vunpack.c.l.b16 %v7977
    %v8010 = vunpack.c.l.b16 %v7978
    %v8011 = vunpack.c.l.b16 %v7979
    %v8012 = vunpack.c.l.b16 %v7980
    %v8013 = vunpack.c.l.b16 %v7981
    %v8014 = vunpack.c.l.b16 %v7982
    %v8015 = vunpack.c.l.b16 %v7983
    %v8016 = vunpack.c.l.b16 %v7984
    %v8017 = vunpack.c.l.b16 %v7985
    %v8018 = vunpack.c.l.b16 %v7986
    %v8019 = vpack.c.b16 %v8004, %v8003
    %v8020 = vpack.c.b16 %v8006, %v8005
    %v8021 = vpack.c.b16 %v8008, %v8007
    %v8022 = vpack.c.b16 %v8010, %v8009
    %v8023 = vpack.c.b16 %v8012, %v8011
    %v8024 = vpack.c.b16 %v8014, %v8013
    %v8025 = vpack.c.b16 %v8016, %v8015
    %v8026 = vpack.c.b16 %v8018, %v8017
    %8035 = vmatprep.subr.bf16.mxu0 0
    %8036 = vmatpush1.bf16.msra.mxu0 %v8026
    %8037 = vmatprep.subr.bf16.mxu0 0
    %8038 = vmatpush1.bf16.msra.mxu0 %v8025
    %8039 = vmatprep.subr.bf16.mxu0 0
    %8040 = vmatpush1.bf16.msra.mxu0 %v8024
    %8041 = vmatprep.subr.bf16.mxu0 0
    %8042 = vmatpush1.bf16.msra.mxu0 %v8023
    %8043 = vmatprep.subr.bf16.mxu0 0
    %8044 = vmatpush1.bf16.msra.mxu0 %v8022
    %8045 = vmatprep.subr.bf16.mxu0 0
    %8046 = vmatpush1.bf16.msra.mxu0 %v8021
    %8047 = vmatprep.subr.bf16.mxu0 0
    %8048 = vmatpush1.bf16.msra.mxu0 %v8020
    %8049 = vmatprep.subr.bf16.mxu0 0
    %8050 = vmatpush1.bf16.msra.mxu0 %v8019
    %8051 = vmatprep.subr.bf16.mxu0 0
    %8052 = vmatpush2.bf16.msra.mxu0 0
    %8053 = vmatprep.subr.bf16.mxu0 0
    %8054 = vmatpush2.bf16.msra.mxu0 0
    %8055 = vmatprep.subr.bf16.mxu0 0
    %8056 = vmatpush2.bf16.msra.mxu0 0
    %8057 = vmatprep.subr.bf16.mxu0 0
    %8058 = vmatpush2.bf16.msra.mxu0 0
    %8059 = vmatprep.subr.bf16.mxu0 0
    %8060 = vmatpush2.bf16.msra.mxu0 0
    %8061 = vmatprep.subr.bf16.mxu0 0
    %8062 = vmatpush2.bf16.msra.mxu0 0
    %8063 = vmatprep.subr.bf16.mxu0 0
    %8064 = vmatpush2.bf16.msra.mxu0 0
    %8065 = vmatprep.subr.bf16.mxu0 0
    %8066 = vmatpush2.bf16.msra.mxu0 0
    %8067 = vmatprep.mubr.bf16.mxu0 0
    %8068 = vmatmul.mubr.bf16.gmra.mxu0 %v7938
    %v8069 = vpop.f32.mrf.mxu0
    %v8070 = vadd.f32 0.0, %v8069
    %v8071 = vpop.f32.mrf.mxu0
    %v8072 = vpop.f32.mrf.mxu0
    %v8073 = vadd.f32 0.0, %v8072
    %v8074 = vpop.f32.mrf.mxu0
    %8075 = vmatprep.mubr.bf16.mxu0 0
    %8076 = vmatmul.mubr.bf16.gmra.mxu0 %v7939
    %v8077 = vpop.f32.mrf.mxu0
    %v8078 = vadd.f32 0.0, %v8077
    %v8079 = vpop.f32.mrf.mxu0
    %v8080 = vpop.f32.mrf.mxu0
    %v8081 = vadd.f32 0.0, %v8080
    %v8082 = vpop.f32.mrf.mxu0
    %8083 = vmatprep.mubr.bf16.mxu0 0
    %8084 = vmatmul.mubr.bf16.gmra.mxu0 %v7940
    %v8085 = vpop.f32.mrf.mxu0
    %v8086 = vadd.f32 0.0, %v8085
    %v8087 = vpop.f32.mrf.mxu0
    %v8088 = vpop.f32.mrf.mxu0
    %v8089 = vadd.f32 0.0, %v8088
    %v8090 = vpop.f32.mrf.mxu0
    %8091 = vmatprep.mubr.bf16.mxu0 0
    %8092 = vmatmul.mubr.bf16.gmra.mxu0 %v7941
    %v8093 = vpop.f32.mrf.mxu0
    %v8094 = vadd.f32 0.0, %v8093
    %v8095 = vpop.f32.mrf.mxu0
    %v8096 = vpop.f32.mrf.mxu0
    %v8097 = vadd.f32 0.0, %v8096
    %v8098 = vpop.f32.mrf.mxu0
    %8099 = vmatprep.mubr.bf16.mxu0 0
    %8100 = vmatmul.mubr.bf16.gmra.mxu0 %v7942
    %v8101 = vpop.f32.mrf.mxu0
    %v8102 = vadd.f32 0.0, %v8101
    %v8103 = vpop.f32.mrf.mxu0
    %v8104 = vpop.f32.mrf.mxu0
    %v8105 = vadd.f32 0.0, %v8104
    %v8106 = vpop.f32.mrf.mxu0
    %8107 = vmatprep.mubr.bf16.mxu0 0
    %8108 = vmatmul.mubr.bf16.gmra.mxu0 %v7943
    %v8109 = vpop.f32.mrf.mxu0
    %v8110 = vadd.f32 0.0, %v8109
    %v8111 = vpop.f32.mrf.mxu0
    %v8112 = vpop.f32.mrf.mxu0
    %v8113 = vadd.f32 0.0, %v8112
    %v8114 = vpop.f32.mrf.mxu0
    %8115 = vmatprep.mubr.bf16.mxu0 0
    %8116 = vmatmul.mubr.bf16.gmra.mxu0 %v7944
    %v8117 = vpop.f32.mrf.mxu0
    %v8118 = vadd.f32 0.0, %v8117
    %v8119 = vpop.f32.mrf.mxu0
    %v8120 = vpop.f32.mrf.mxu0
    %v8121 = vadd.f32 0.0, %v8120
    %v8122 = vpop.f32.mrf.mxu0
    %8123 = vmatprep.mubr.bf16.mxu0 0
    %8124 = vmatmul.mubr.bf16.gmra.mxu0 %v7945
    %v8125 = vpop.f32.mrf.mxu0
    %v8126 = vadd.f32 0.0, %v8125
    %v8127 = vpop.f32.mrf.mxu0
    %v8128 = vpop.f32.mrf.mxu0
    %v8129 = vadd.f32 0.0, %v8128
    %v8130 = vpop.f32.mrf.mxu0
    %8131 = vmatprep.mubr.bf16.mxu0 0
    %8132 = vmatmul.mubr.bf16.gmra.mxu0 %v7946
    %v8133 = vpop.f32.mrf.mxu0
    %v8134 = vadd.f32 0.0, %v8133
    %v8135 = vpop.f32.mrf.mxu0
    %v8136 = vpop.f32.mrf.mxu0
    %v8137 = vadd.f32 0.0, %v8136
    %v8138 = vpop.f32.mrf.mxu0
    %8139 = vmatprep.mubr.bf16.mxu0 0
    %8140 = vmatmul.mubr.bf16.gmra.mxu0 %v7947
    %v8141 = vpop.f32.mrf.mxu0
    %v8142 = vadd.f32 0.0, %v8141
    %v8143 = vpop.f32.mrf.mxu0
    %v8144 = vpop.f32.mrf.mxu0
    %v8145 = vadd.f32 0.0, %v8144
    %v8146 = vpop.f32.mrf.mxu0
    %8147 = vmatprep.mubr.bf16.mxu0 0
    %8148 = vmatmul.mubr.bf16.gmra.mxu0 %v7948
    %v8149 = vpop.f32.mrf.mxu0
    %v8150 = vadd.f32 0.0, %v8149
    %v8151 = vpop.f32.mrf.mxu0
    %v8152 = vpop.f32.mrf.mxu0
    %v8153 = vadd.f32 0.0, %v8152
    %v8154 = vpop.f32.mrf.mxu0
    %8155 = vmatprep.mubr.bf16.mxu0 0
    %8156 = vmatmul.mubr.bf16.gmra.mxu0 %v7949
    %v8157 = vpop.f32.mrf.mxu0
    %v8158 = vadd.f32 0.0, %v8157
    %v8159 = vpop.f32.mrf.mxu0
    %v8160 = vpop.f32.mrf.mxu0
    %v8161 = vadd.f32 0.0, %v8160
    %v8162 = vpop.f32.mrf.mxu0
    %8163 = vmatprep.mubr.bf16.mxu0 0
    %8164 = vmatmul.mubr.bf16.gmra.mxu0 %v7950
    %v8165 = vpop.f32.mrf.mxu0
    %v8166 = vadd.f32 0.0, %v8165
    %v8167 = vpop.f32.mrf.mxu0
    %v8168 = vpop.f32.mrf.mxu0
    %v8169 = vadd.f32 0.0, %v8168
    %v8170 = vpop.f32.mrf.mxu0
    %8171 = vmatprep.mubr.bf16.mxu0 0
    %8172 = vmatmul.mubr.bf16.gmra.mxu0 %v7951
    %v8173 = vpop.f32.mrf.mxu0
    %v8174 = vadd.f32 0.0, %v8173
    %v8175 = vpop.f32.mrf.mxu0
    %v8176 = vpop.f32.mrf.mxu0
    %v8177 = vadd.f32 0.0, %v8176
    %v8178 = vpop.f32.mrf.mxu0
    %8179 = vmatprep.mubr.bf16.mxu0 0
    %8180 = vmatmul.mubr.bf16.gmra.mxu0 %v7952
    %v8181 = vpop.f32.mrf.mxu0
    %v8182 = vadd.f32 0.0, %v8181
    %v8183 = vpop.f32.mrf.mxu0
    %v8184 = vpop.f32.mrf.mxu0
    %v8185 = vadd.f32 0.0, %v8184
    %v8186 = vpop.f32.mrf.mxu0
    %8187 = vmatprep.mubr.bf16.mxu0 0
    %8188 = vmatmul.mubr.bf16.gmra.mxu0 %v7953
    %v8189 = vpop.f32.mrf.mxu0
    %v8190 = vadd.f32 0.0, %v8189
    %v8191 = vpop.f32.mrf.mxu0
    %v8192 = vpop.f32.mrf.mxu0
    %v8193 = vadd.f32 0.0, %v8192
    %v8194 = vpop.f32.mrf.mxu0
    %8195 = vmatprep.mubr.bf16.mxu0 0
    %8196 = vmatmul.mubr.bf16.gmra.mxu0 %v7954
    %v8197 = vpop.f32.mrf.mxu0
    %v8198 = vadd.f32 0.0, %v8197
    %v8199 = vpop.f32.mrf.mxu0
    %v8200 = vpop.f32.mrf.mxu0
    %v8201 = vadd.f32 0.0, %v8200
    %v8202 = vpop.f32.mrf.mxu0
    %8203 = vmatprep.mubr.bf16.mxu0 0
    %8204 = vmatmul.mubr.bf16.gmra.mxu0 %v7955
    %v8205 = vpop.f32.mrf.mxu0
    %v8206 = vadd.f32 0.0, %v8205
    %v8207 = vpop.f32.mrf.mxu0
    %v8208 = vpop.f32.mrf.mxu0
    %v8209 = vadd.f32 0.0, %v8208
    %v8210 = vpop.f32.mrf.mxu0
    %8211 = vmatprep.mubr.bf16.mxu0 0
    %8212 = vmatmul.mubr.bf16.gmra.mxu0 %v7956
    %v8213 = vpop.f32.mrf.mxu0
    %v8214 = vadd.f32 0.0, %v8213
    %v8215 = vpop.f32.mrf.mxu0
    %v8216 = vpop.f32.mrf.mxu0
    %v8217 = vadd.f32 0.0, %v8216
    %v8218 = vpop.f32.mrf.mxu0
    %8219 = vmatprep.mubr.bf16.mxu0 0
    %8220 = vmatmul.mubr.bf16.gmra.mxu0 %v7957
    %v8221 = vpop.f32.mrf.mxu0
    %v8222 = vadd.f32 0.0, %v8221
    %v8223 = vpop.f32.mrf.mxu0
    %v8224 = vpop.f32.mrf.mxu0
    %v8225 = vadd.f32 0.0, %v8224
    %v8226 = vpop.f32.mrf.mxu0
    %8227 = vmatprep.mubr.bf16.mxu0 0
    %8228 = vmatmul.mubr.bf16.gmra.mxu0 %v7958
    %v8229 = vpop.f32.mrf.mxu0
    %v8230 = vadd.f32 0.0, %v8229
    %v8231 = vpop.f32.mrf.mxu0
    %v8232 = vpop.f32.mrf.mxu0
    %v8233 = vadd.f32 0.0, %v8232
    %v8234 = vpop.f32.mrf.mxu0
    %8235 = vmatprep.mubr.bf16.mxu0 0
    %8236 = vmatmul.mubr.bf16.gmra.mxu0 %v7959
    %v8237 = vpop.f32.mrf.mxu0
    %v8238 = vadd.f32 0.0, %v8237
    %v8239 = vpop.f32.mrf.mxu0
    %v8240 = vpop.f32.mrf.mxu0
    %v8241 = vadd.f32 0.0, %v8240
    %v8242 = vpop.f32.mrf.mxu0
    %8243 = vmatprep.mubr.bf16.mxu0 0
    %8244 = vmatmul.mubr.bf16.gmra.mxu0 %v7960
    %v8245 = vpop.f32.mrf.mxu0
    %v8246 = vadd.f32 0.0, %v8245
    %v8247 = vpop.f32.mrf.mxu0
    %v8248 = vpop.f32.mrf.mxu0
    %v8249 = vadd.f32 0.0, %v8248
    %v8250 = vpop.f32.mrf.mxu0
    %8251 = vmatprep.mubr.bf16.mxu0 0
    %8252 = vmatmul.mubr.bf16.gmra.mxu0 %v7961
    %v8253 = vpop.f32.mrf.mxu0
    %v8254 = vadd.f32 0.0, %v8253
    %v8255 = vpop.f32.mrf.mxu0
    %v8256 = vpop.f32.mrf.mxu0
    %v8257 = vadd.f32 0.0, %v8256
    %v8258 = vpop.f32.mrf.mxu0
    %8259 = vmatprep.mubr.bf16.mxu0 0
    %8260 = vmatmul.mubr.bf16.gmra.mxu0 %v7962
    %v8261 = vpop.f32.mrf.mxu0
    %v8262 = vadd.f32 0.0, %v8261
    %v8263 = vpop.f32.mrf.mxu0
    %v8264 = vpop.f32.mrf.mxu0
    %v8265 = vadd.f32 0.0, %v8264
    %v8266 = vpop.f32.mrf.mxu0
    %8267 = vmatprep.mubr.bf16.mxu0 0
    %8268 = vmatmul.mubr.bf16.gmra.mxu0 %v7963
    %v8269 = vpop.f32.mrf.mxu0
    %v8270 = vadd.f32 0.0, %v8269
    %v8271 = vpop.f32.mrf.mxu0
    %v8272 = vpop.f32.mrf.mxu0
    %v8273 = vadd.f32 0.0, %v8272
    %v8274 = vpop.f32.mrf.mxu0
    %8275 = vmatprep.mubr.bf16.mxu0 0
    %8276 = vmatmul.mubr.bf16.gmra.mxu0 %v7964
    %v8277 = vpop.f32.mrf.mxu0
    %v8278 = vadd.f32 0.0, %v8277
    %v8279 = vpop.f32.mrf.mxu0
    %v8280 = vpop.f32.mrf.mxu0
    %v8281 = vadd.f32 0.0, %v8280
    %v8282 = vpop.f32.mrf.mxu0
    %8283 = vmatprep.mubr.bf16.mxu0 0
    %8284 = vmatmul.mubr.bf16.gmra.mxu0 %v7965
    %v8285 = vpop.f32.mrf.mxu0
    %v8286 = vadd.f32 0.0, %v8285
    %v8287 = vpop.f32.mrf.mxu0
    %v8288 = vpop.f32.mrf.mxu0
    %v8289 = vadd.f32 0.0, %v8288
    %v8290 = vpop.f32.mrf.mxu0
    %8291 = vmatprep.mubr.bf16.mxu0 0
    %8292 = vmatmul.mubr.bf16.gmra.mxu0 %v7966
    %v8293 = vpop.f32.mrf.mxu0
    %v8294 = vadd.f32 0.0, %v8293
    %v8295 = vpop.f32.mrf.mxu0
    %v8296 = vpop.f32.mrf.mxu0
    %v8297 = vadd.f32 0.0, %v8296
    %v8298 = vpop.f32.mrf.mxu0
    %8299 = vmatprep.mubr.bf16.mxu0 0
    %8300 = vmatmul.mubr.bf16.gmra.mxu0 %v7967
    %v8301 = vpop.f32.mrf.mxu0
    %v8302 = vadd.f32 0.0, %v8301
    %v8303 = vpop.f32.mrf.mxu0
    %v8304 = vpop.f32.mrf.mxu0
    %v8305 = vadd.f32 0.0, %v8304
    %v8306 = vpop.f32.mrf.mxu0
    %8307 = vmatprep.mubr.bf16.mxu0 0
    %8308 = vmatmul.mubr.bf16.gmra.mxu0 %v7968
    %v8309 = vpop.f32.mrf.mxu0
    %v8310 = vadd.f32 0.0, %v8309
    %v8311 = vpop.f32.mrf.mxu0
    %v8312 = vpop.f32.mrf.mxu0
    %v8313 = vadd.f32 0.0, %v8312
    %v8314 = vpop.f32.mrf.mxu0
    %8315 = vmatprep.mubr.bf16.mxu0 0
    %8316 = vmatmul.mubr.bf16.gmra.mxu0 %v7969
    %v8317 = vpop.f32.mrf.mxu0
    %v8318 = vadd.f32 0.0, %v8317
    %v8319 = vpop.f32.mrf.mxu0
    %v8320 = vpop.f32.mrf.mxu0
    %v8321 = vadd.f32 0.0, %v8320
    %v8322 = vpop.f32.mrf.mxu0
    %8323 = vdwg.mxu0
    %v8324 = vadd.f32 %v7746, %v8070
    %v8325 = vadd.f32 %v7747, %v8073
    %v8326 = vadd.f32 %v7748, %v8078
    %v8327 = vadd.f32 %v7749, %v8081
    %v8328 = vadd.f32 %v7750, %v8086
    %v8329 = vadd.f32 %v7751, %v8089
    %v8330 = vadd.f32 %v7752, %v8094
    %v8331 = vadd.f32 %v7753, %v8097
    %v8332 = vadd.f32 %v7754, %v8102
    %v8333 = vadd.f32 %v7755, %v8105
    %v8334 = vadd.f32 %v7756, %v8110
    %v8335 = vadd.f32 %v7757, %v8113
    %v8336 = vadd.f32 %v7758, %v8118
    %v8337 = vadd.f32 %v7759, %v8121
    %v8338 = vadd.f32 %v7760, %v8126
    %v8339 = vadd.f32 %v7761, %v8129
    %v8340 = vadd.f32 %v7762, %v8134
    %v8341 = vadd.f32 %v7763, %v8137
    %v8342 = vadd.f32 %v7764, %v8142
    %v8343 = vadd.f32 %v7765, %v8145
    %v8344 = vadd.f32 %v7766, %v8150
    %v8345 = vadd.f32 %v7767, %v8153
    %v8346 = vadd.f32 %v7768, %v8158
    %v8347 = vadd.f32 %v7769, %v8161
    %v8348 = vadd.f32 %v7770, %v8166
    %v8349 = vadd.f32 %v7771, %v8169
    %v8350 = vadd.f32 %v7772, %v8174
    %v8351 = vadd.f32 %v7773, %v8177
    %v8352 = vadd.f32 %v7774, %v8182
    %v8353 = vadd.f32 %v7775, %v8185
    %v8354 = vadd.f32 %v7776, %v8190
    %v8355 = vadd.f32 %v7777, %v8193
    %v8356 = vadd.f32 %v7778, %v8198
    %v8357 = vadd.f32 %v7779, %v8201
    %v8358 = vadd.f32 %v7780, %v8206
    %v8359 = vadd.f32 %v7781, %v8209
    %v8360 = vadd.f32 %v7782, %v8214
    %v8361 = vadd.f32 %v7783, %v8217
    %v8362 = vadd.f32 %v7784, %v8222
    %v8363 = vadd.f32 %v7785, %v8225
    %v8364 = vadd.f32 %v7786, %v8230
    %v8365 = vadd.f32 %v7787, %v8233
    %v8366 = vadd.f32 %v7788, %v8238
    %v8367 = vadd.f32 %v7789, %v8241
    %v8368 = vadd.f32 %v7790, %v8246
    %v8369 = vadd.f32 %v7791, %v8249
    %v8370 = vadd.f32 %v7792, %v8254
    %v8371 = vadd.f32 %v7793, %v8257
    %v8372 = vadd.f32 %v7794, %v8262
    %v8373 = vadd.f32 %v7795, %v8265
    %v8374 = vadd.f32 %v7796, %v8270
    %v8375 = vadd.f32 %v7797, %v8273
    %v8376 = vadd.f32 %v7798, %v8278
    %v8377 = vadd.f32 %v7799, %v8281
    %v8378 = vadd.f32 %v7800, %v8286
    %v8379 = vadd.f32 %v7801, %v8289
    %v8380 = vadd.f32 %v7802, %v8294
    %v8381 = vadd.f32 %v7803, %v8297
    %v8382 = vadd.f32 %v7804, %v8302
    %v8383 = vadd.f32 %v7805, %v8305
    %v8384 = vadd.f32 %v7806, %v8310
    %v8385 = vadd.f32 %v7807, %v8313
    %v8386 = vadd.f32 %v7808, %v8318
    %v8387 = vadd.f32 %v7809, %v8321
    %v8388 = vld [vmem:[#allocation2 + $0x18] sm:$0xff]
    %v8389 = vld [vmem:[#allocation2 + $0x20] sm:$0xff]
    %v8390 = vld [vmem:[#allocation2 + $0x28] sm:$0xff]
    %v8391 = vld [vmem:[#allocation2 + $0x30] sm:$0xff]
    %v8392 = vld [vmem:[#allocation2 + $0x38] sm:$0xff]
    %v8393 = vld [vmem:[#allocation2 + $0x40] sm:$0xff]
    %v8394 = vld [vmem:[#allocation2 + $0x48] sm:$0xff]
    %v8395 = vld [vmem:[#allocation2 + $0x50] sm:$0xff]
    %v8396 = vld [vmem:[#allocation2 + $0x58] sm:$0xff]
    %v8397 = vld [vmem:[#allocation2 + $0x60] sm:$0xff]
    %v8398 = vld [vmem:[#allocation2 + $0x68] sm:$0xff]
    %v8399 = vld [vmem:[#allocation2 + $0x70] sm:$0xff]
    %v8400 = vld [vmem:[#allocation2 + $0x78] sm:$0xff]
    %v8401 = vld [vmem:[#allocation2 + $0x80] sm:$0xff]
    %v8402 = vld [vmem:[#allocation2 + $0x88] sm:$0xff]
    %v8403 = vld [vmem:[#allocation2 + $0x90] sm:$0xff]
    %v8404 = vld [vmem:[#allocation2 + $0x98] sm:$0xff]
    %v8405 = vld [vmem:[#allocation2 + $0xa0] sm:$0xff]
    %v8406 = vld [vmem:[#allocation2 + $0xa8] sm:$0xff]
    %v8407 = vld [vmem:[#allocation2 + $0xb0] sm:$0xff]
    %v8408 = vld [vmem:[#allocation2 + $0xb8] sm:$0xff]
    %v8409 = vld [vmem:[#allocation2 + $0xc0] sm:$0xff]
    %v8410 = vld [vmem:[#allocation2 + $0xc8] sm:$0xff]
    %v8411 = vld [vmem:[#allocation2 + $0xd0] sm:$0xff]
    %v8412 = vld [vmem:[#allocation2 + $0xd8] sm:$0xff]
    %v8413 = vld [vmem:[#allocation2 + $0xe0] sm:$0xff]
    %v8414 = vld [vmem:[#allocation2 + $0xe8] sm:$0xff]
    %v8415 = vld [vmem:[#allocation2 + $0xf0] sm:$0xff]
    %v8416 = vld [vmem:[#allocation2 + $0xf8] sm:$0xff]
    %v8417 = vld [vmem:[#allocation2 + $0x100] sm:$0xff]
    %v8418 = vld [vmem:[#allocation2 + $0x108] sm:$0xff]
    %v8419 = vld [vmem:[#allocation2 + $0x110] sm:$0xff]
    %v8420 = vld [vmem:[#allocation2 + $0x118] sm:$0xff]
    %v8421 = vld [vmem:[#allocation2 + $0x120] sm:$0xff]
    %v8422 = vld [vmem:[#allocation2 + $0x128] sm:$0xff]
    %v8423 = vld [vmem:[#allocation2 + $0x130] sm:$0xff]
    %v8424 = vld [vmem:[#allocation2 + $0x138] sm:$0xff]
    %v8425 = vld [vmem:[#allocation2 + $0x140] sm:$0xff]
    %v8426 = vld [vmem:[#allocation2 + $0x148] sm:$0xff]
    %v8427 = vld [vmem:[#allocation2 + $0x150] sm:$0xff]
    %v8428 = vld [vmem:[#allocation2 + $0x158] sm:$0xff]
    %v8429 = vld [vmem:[#allocation2 + $0x160] sm:$0xff]
    %v8430 = vld [vmem:[#allocation2 + $0x168] sm:$0xff]
    %v8431 = vld [vmem:[#allocation2 + $0x170] sm:$0xff]
    %v8432 = vld [vmem:[#allocation2 + $0x178] sm:$0xff]
    %v8433 = vld [vmem:[#allocation2 + $0x180] sm:$0xff]
    %v8434 = vld [vmem:[#allocation2 + $0x188] sm:$0xff]
    %v8435 = vld [vmem:[#allocation2 + $0x190] sm:$0xff]
    %v8436 = vld [vmem:[#allocation2 + $0x198] sm:$0xff]
    %v8437 = vld [vmem:[#allocation2 + $0x1a0] sm:$0xff]
    %v8438 = vld [vmem:[#allocation2 + $0x1a8] sm:$0xff]
    %v8439 = vld [vmem:[#allocation2 + $0x1b0] sm:$0xff]
    %v8440 = vld [vmem:[#allocation2 + $0x1b8] sm:$0xff]
    %v8441 = vld [vmem:[#allocation2 + $0x1c0] sm:$0xff]
    %v8442 = vld [vmem:[#allocation2 + $0x1c8] sm:$0xff]
    %v8443 = vld [vmem:[#allocation2 + $0x1d0] sm:$0xff]
    %v8444 = vld [vmem:[#allocation2 + $0x1d8] sm:$0xff]
    %v8445 = vld [vmem:[#allocation2 + $0x1e0] sm:$0xff]
    %v8446 = vld [vmem:[#allocation2 + $0x1e8] sm:$0xff]
    %v8447 = vld [vmem:[#allocation2 + $0x1f0] sm:$0xff]
    %v8448 = vld [vmem:[#allocation2 + $0x1f8] sm:$0xff]
    %v8449 = vld [vmem:[#allocation2 + $0x200] sm:$0xff]
    %v8450 = vld [vmem:[#allocation2 + $0x208] sm:$0xff]
    %v8451 = vld [vmem:[#allocation2 + $0x210] sm:$0xff]
    %v8452 = vpack.c.bf16 %v8389, %v8388
    %v8453 = vpack.c.bf16 %v8391, %v8390
    %v8454 = vpack.c.bf16 %v8393, %v8392
    %v8455 = vpack.c.bf16 %v8395, %v8394
    %v8456 = vpack.c.bf16 %v8397, %v8396
    %v8457 = vpack.c.bf16 %v8399, %v8398
    %v8458 = vpack.c.bf16 %v8401, %v8400
    %v8459 = vpack.c.bf16 %v8403, %v8402
    %v8460 = vpack.c.bf16 %v8405, %v8404
    %v8461 = vpack.c.bf16 %v8407, %v8406
    %v8462 = vpack.c.bf16 %v8409, %v8408
    %v8463 = vpack.c.bf16 %v8411, %v8410
    %v8464 = vpack.c.bf16 %v8413, %v8412
    %v8465 = vpack.c.bf16 %v8415, %v8414
    %v8466 = vpack.c.bf16 %v8417, %v8416
    %v8467 = vpack.c.bf16 %v8419, %v8418
    %v8468 = vpack.c.bf16 %v8421, %v8420
    %v8469 = vpack.c.bf16 %v8423, %v8422
    %v8470 = vpack.c.bf16 %v8425, %v8424
    %v8471 = vpack.c.bf16 %v8427, %v8426
    %v8472 = vpack.c.bf16 %v8429, %v8428
    %v8473 = vpack.c.bf16 %v8431, %v8430
    %v8474 = vpack.c.bf16 %v8433, %v8432
    %v8475 = vpack.c.bf16 %v8435, %v8434
    %v8476 = vpack.c.bf16 %v8437, %v8436
    %v8477 = vpack.c.bf16 %v8439, %v8438
    %v8478 = vpack.c.bf16 %v8441, %v8440
    %v8479 = vpack.c.bf16 %v8443, %v8442
    %v8480 = vpack.c.bf16 %v8445, %v8444
    %v8481 = vpack.c.bf16 %v8447, %v8446
    %v8482 = vpack.c.bf16 %v8449, %v8448
    %v8483 = vpack.c.bf16 %v8451, %v8450
    %s8484 = scalar_lea.vmem %s3, 256
    %v8485 = vld [vmem:[%s8484] sm:$0xf]
    %v8486 = vld [vmem:[%s8484 + $0x4] sm:$0xf]
    %v8487 = vld [vmem:[%s8484 + $0x8] sm:$0xf]
    %v8488 = vld [vmem:[%s8484 + $0xc] sm:$0xf]
    %v8489 = vld [vmem:[%s8484 + $0x10] sm:$0xf]
    %v8490 = vld [vmem:[%s8484 + $0x14] sm:$0xf]
    %v8491 = vld [vmem:[%s8484 + $0x18] sm:$0xf]
    %v8492 = vld [vmem:[%s8484 + $0x1c] sm:$0xf]
    %v8493 = vld [vmem:[%s8484 + $0x20] sm:$0xf]
    %v8494 = vld [vmem:[%s8484 + $0x24] sm:$0xf]
    %v8495 = vld [vmem:[%s8484 + $0x28] sm:$0xf]
    %v8496 = vld [vmem:[%s8484 + $0x2c] sm:$0xf]
    %v8497 = vld [vmem:[%s8484 + $0x30] sm:$0xf]
    %v8498 = vld [vmem:[%s8484 + $0x34] sm:$0xf]
    %v8499 = vld [vmem:[%s8484 + $0x38] sm:$0xf]
    %v8500 = vld [vmem:[%s8484 + $0x3c] sm:$0xf]
    %v8517 = vunpack.c.l.b16 %v8485
    %v8518 = vunpack.c.l.b16 %v8486
    %v8519 = vunpack.c.l.b16 %v8487
    %v8520 = vunpack.c.l.b16 %v8488
    %v8521 = vunpack.c.l.b16 %v8489
    %v8522 = vunpack.c.l.b16 %v8490
    %v8523 = vunpack.c.l.b16 %v8491
    %v8524 = vunpack.c.l.b16 %v8492
    %v8525 = vunpack.c.l.b16 %v8493
    %v8526 = vunpack.c.l.b16 %v8494
    %v8527 = vunpack.c.l.b16 %v8495
    %v8528 = vunpack.c.l.b16 %v8496
    %v8529 = vunpack.c.l.b16 %v8497
    %v8530 = vunpack.c.l.b16 %v8498
    %v8531 = vunpack.c.l.b16 %v8499
    %v8532 = vunpack.c.l.b16 %v8500
    %v8533 = vpack.c.b16 %v8518, %v8517
    %v8534 = vpack.c.b16 %v8520, %v8519
    %v8535 = vpack.c.b16 %v8522, %v8521
    %v8536 = vpack.c.b16 %v8524, %v8523
    %v8537 = vpack.c.b16 %v8526, %v8525
    %v8538 = vpack.c.b16 %v8528, %v8527
    %v8539 = vpack.c.b16 %v8530, %v8529
    %v8540 = vpack.c.b16 %v8532, %v8531
    %8549 = vmatprep.subr.bf16.mxu0 0
    %8550 = vmatpush1.bf16.msra.mxu0 %v8540
    %8551 = vmatprep.subr.bf16.mxu0 0
    %8552 = vmatpush1.bf16.msra.mxu0 %v8539
    %8553 = vmatprep.subr.bf16.mxu0 0
    %8554 = vmatpush1.bf16.msra.mxu0 %v8538
    %8555 = vmatprep.subr.bf16.mxu0 0
    %8556 = vmatpush1.bf16.msra.mxu0 %v8537
    %8557 = vmatprep.subr.bf16.mxu0 0
    %8558 = vmatpush1.bf16.msra.mxu0 %v8536
    %8559 = vmatprep.subr.bf16.mxu0 0
    %8560 = vmatpush1.bf16.msra.mxu0 %v8535
    %8561 = vmatprep.subr.bf16.mxu0 0
    %8562 = vmatpush1.bf16.msra.mxu0 %v8534
    %8563 = vmatprep.subr.bf16.mxu0 0
    %8564 = vmatpush1.bf16.msra.mxu0 %v8533
    %8565 = vmatprep.subr.bf16.mxu0 0
    %8566 = vmatpush2.bf16.msra.mxu0 0
    %8567 = vmatprep.subr.bf16.mxu0 0
    %8568 = vmatpush2.bf16.msra.mxu0 0
    %8569 = vmatprep.subr.bf16.mxu0 0
    %8570 = vmatpush2.bf16.msra.mxu0 0
    %8571 = vmatprep.subr.bf16.mxu0 0
    %8572 = vmatpush2.bf16.msra.mxu0 0
    %8573 = vmatprep.subr.bf16.mxu0 0
    %8574 = vmatpush2.bf16.msra.mxu0 0
    %8575 = vmatprep.subr.bf16.mxu0 0
    %8576 = vmatpush2.bf16.msra.mxu0 0
    %8577 = vmatprep.subr.bf16.mxu0 0
    %8578 = vmatpush2.bf16.msra.mxu0 0
    %8579 = vmatprep.subr.bf16.mxu0 0
    %8580 = vmatpush2.bf16.msra.mxu0 0
    %8581 = vmatprep.mubr.bf16.mxu0 0
    %8582 = vmatmul.mubr.bf16.gmra.mxu0 %v8452
    %v8583 = vpop.f32.mrf.mxu0
    %v8584 = vadd.f32 0.0, %v8583
    %v8585 = vpop.f32.mrf.mxu0
    %v8586 = vpop.f32.mrf.mxu0
    %v8587 = vadd.f32 0.0, %v8586
    %v8588 = vpop.f32.mrf.mxu0
    %8589 = vmatprep.mubr.bf16.mxu0 0
    %8590 = vmatmul.mubr.bf16.gmra.mxu0 %v8453
    %v8591 = vpop.f32.mrf.mxu0
    %v8592 = vadd.f32 0.0, %v8591
    %v8593 = vpop.f32.mrf.mxu0
    %v8594 = vpop.f32.mrf.mxu0
    %v8595 = vadd.f32 0.0, %v8594
    %v8596 = vpop.f32.mrf.mxu0
    %8597 = vmatprep.mubr.bf16.mxu0 0
    %8598 = vmatmul.mubr.bf16.gmra.mxu0 %v8454
    %v8599 = vpop.f32.mrf.mxu0
    %v8600 = vadd.f32 0.0, %v8599
    %v8601 = vpop.f32.mrf.mxu0
    %v8602 = vpop.f32.mrf.mxu0
    %v8603 = vadd.f32 0.0, %v8602
    %v8604 = vpop.f32.mrf.mxu0
    %8605 = vmatprep.mubr.bf16.mxu0 0
    %8606 = vmatmul.mubr.bf16.gmra.mxu0 %v8455
    %v8607 = vpop.f32.mrf.mxu0
    %v8608 = vadd.f32 0.0, %v8607
    %v8609 = vpop.f32.mrf.mxu0
    %v8610 = vpop.f32.mrf.mxu0
    %v8611 = vadd.f32 0.0, %v8610
    %v8612 = vpop.f32.mrf.mxu0
    %8613 = vmatprep.mubr.bf16.mxu0 0
    %8614 = vmatmul.mubr.bf16.gmra.mxu0 %v8456
    %v8615 = vpop.f32.mrf.mxu0
    %v8616 = vadd.f32 0.0, %v8615
    %v8617 = vpop.f32.mrf.mxu0
    %v8618 = vpop.f32.mrf.mxu0
    %v8619 = vadd.f32 0.0, %v8618
    %v8620 = vpop.f32.mrf.mxu0
    %8621 = vmatprep.mubr.bf16.mxu0 0
    %8622 = vmatmul.mubr.bf16.gmra.mxu0 %v8457
    %v8623 = vpop.f32.mrf.mxu0
    %v8624 = vadd.f32 0.0, %v8623
    %v8625 = vpop.f32.mrf.mxu0
    %v8626 = vpop.f32.mrf.mxu0
    %v8627 = vadd.f32 0.0, %v8626
    %v8628 = vpop.f32.mrf.mxu0
    %8629 = vmatprep.mubr.bf16.mxu0 0
    %8630 = vmatmul.mubr.bf16.gmra.mxu0 %v8458
    %v8631 = vpop.f32.mrf.mxu0
    %v8632 = vadd.f32 0.0, %v8631
    %v8633 = vpop.f32.mrf.mxu0
    %v8634 = vpop.f32.mrf.mxu0
    %v8635 = vadd.f32 0.0, %v8634
    %v8636 = vpop.f32.mrf.mxu0
    %8637 = vmatprep.mubr.bf16.mxu0 0
    %8638 = vmatmul.mubr.bf16.gmra.mxu0 %v8459
    %v8639 = vpop.f32.mrf.mxu0
    %v8640 = vadd.f32 0.0, %v8639
    %v8641 = vpop.f32.mrf.mxu0
    %v8642 = vpop.f32.mrf.mxu0
    %v8643 = vadd.f32 0.0, %v8642
    %v8644 = vpop.f32.mrf.mxu0
    %8645 = vmatprep.mubr.bf16.mxu0 0
    %8646 = vmatmul.mubr.bf16.gmra.mxu0 %v8460
    %v8647 = vpop.f32.mrf.mxu0
    %v8648 = vadd.f32 0.0, %v8647
    %v8649 = vpop.f32.mrf.mxu0
    %v8650 = vpop.f32.mrf.mxu0
    %v8651 = vadd.f32 0.0, %v8650
    %v8652 = vpop.f32.mrf.mxu0
    %8653 = vmatprep.mubr.bf16.mxu0 0
    %8654 = vmatmul.mubr.bf16.gmra.mxu0 %v8461
    %v8655 = vpop.f32.mrf.mxu0
    %v8656 = vadd.f32 0.0, %v8655
    %v8657 = vpop.f32.mrf.mxu0
    %v8658 = vpop.f32.mrf.mxu0
    %v8659 = vadd.f32 0.0, %v8658
    %v8660 = vpop.f32.mrf.mxu0
    %8661 = vmatprep.mubr.bf16.mxu0 0
    %8662 = vmatmul.mubr.bf16.gmra.mxu0 %v8462
    %v8663 = vpop.f32.mrf.mxu0
    %v8664 = vadd.f32 0.0, %v8663
    %v8665 = vpop.f32.mrf.mxu0
    %v8666 = vpop.f32.mrf.mxu0
    %v8667 = vadd.f32 0.0, %v8666
    %v8668 = vpop.f32.mrf.mxu0
    %8669 = vmatprep.mubr.bf16.mxu0 0
    %8670 = vmatmul.mubr.bf16.gmra.mxu0 %v8463
    %v8671 = vpop.f32.mrf.mxu0
    %v8672 = vadd.f32 0.0, %v8671
    %v8673 = vpop.f32.mrf.mxu0
    %v8674 = vpop.f32.mrf.mxu0
    %v8675 = vadd.f32 0.0, %v8674
    %v8676 = vpop.f32.mrf.mxu0
    %8677 = vmatprep.mubr.bf16.mxu0 0
    %8678 = vmatmul.mubr.bf16.gmra.mxu0 %v8464
    %v8679 = vpop.f32.mrf.mxu0
    %v8680 = vadd.f32 0.0, %v8679
    %v8681 = vpop.f32.mrf.mxu0
    %v8682 = vpop.f32.mrf.mxu0
    %v8683 = vadd.f32 0.0, %v8682
    %v8684 = vpop.f32.mrf.mxu0
    %8685 = vmatprep.mubr.bf16.mxu0 0
    %8686 = vmatmul.mubr.bf16.gmra.mxu0 %v8465
    %v8687 = vpop.f32.mrf.mxu0
    %v8688 = vadd.f32 0.0, %v8687
    %v8689 = vpop.f32.mrf.mxu0
    %v8690 = vpop.f32.mrf.mxu0
    %v8691 = vadd.f32 0.0, %v8690
    %v8692 = vpop.f32.mrf.mxu0
    %8693 = vmatprep.mubr.bf16.mxu0 0
    %8694 = vmatmul.mubr.bf16.gmra.mxu0 %v8466
    %v8695 = vpop.f32.mrf.mxu0
    %v8696 = vadd.f32 0.0, %v8695
    %v8697 = vpop.f32.mrf.mxu0
    %v8698 = vpop.f32.mrf.mxu0
    %v8699 = vadd.f32 0.0, %v8698
    %v8700 = vpop.f32.mrf.mxu0
    %8701 = vmatprep.mubr.bf16.mxu0 0
    %8702 = vmatmul.mubr.bf16.gmra.mxu0 %v8467
    %v8703 = vpop.f32.mrf.mxu0
    %v8704 = vadd.f32 0.0, %v8703
    %v8705 = vpop.f32.mrf.mxu0
    %v8706 = vpop.f32.mrf.mxu0
    %v8707 = vadd.f32 0.0, %v8706
    %v8708 = vpop.f32.mrf.mxu0
    %8709 = vmatprep.mubr.bf16.mxu0 0
    %8710 = vmatmul.mubr.bf16.gmra.mxu0 %v8468
    %v8711 = vpop.f32.mrf.mxu0
    %v8712 = vadd.f32 0.0, %v8711
    %v8713 = vpop.f32.mrf.mxu0
    %v8714 = vpop.f32.mrf.mxu0
    %v8715 = vadd.f32 0.0, %v8714
    %v8716 = vpop.f32.mrf.mxu0
    %8717 = vmatprep.mubr.bf16.mxu0 0
    %8718 = vmatmul.mubr.bf16.gmra.mxu0 %v8469
    %v8719 = vpop.f32.mrf.mxu0
    %v8720 = vadd.f32 0.0, %v8719
    %v8721 = vpop.f32.mrf.mxu0
    %v8722 = vpop.f32.mrf.mxu0
    %v8723 = vadd.f32 0.0, %v8722
    %v8724 = vpop.f32.mrf.mxu0
    %8725 = vmatprep.mubr.bf16.mxu0 0
    %8726 = vmatmul.mubr.bf16.gmra.mxu0 %v8470
    %v8727 = vpop.f32.mrf.mxu0
    %v8728 = vadd.f32 0.0, %v8727
    %v8729 = vpop.f32.mrf.mxu0
    %v8730 = vpop.f32.mrf.mxu0
    %v8731 = vadd.f32 0.0, %v8730
    %v8732 = vpop.f32.mrf.mxu0
    %8733 = vmatprep.mubr.bf16.mxu0 0
    %8734 = vmatmul.mubr.bf16.gmra.mxu0 %v8471
    %v8735 = vpop.f32.mrf.mxu0
    %v8736 = vadd.f32 0.0, %v8735
    %v8737 = vpop.f32.mrf.mxu0
    %v8738 = vpop.f32.mrf.mxu0
    %v8739 = vadd.f32 0.0, %v8738
    %v8740 = vpop.f32.mrf.mxu0
    %8741 = vmatprep.mubr.bf16.mxu0 0
    %8742 = vmatmul.mubr.bf16.gmra.mxu0 %v8472
    %v8743 = vpop.f32.mrf.mxu0
    %v8744 = vadd.f32 0.0, %v8743
    %v8745 = vpop.f32.mrf.mxu0
    %v8746 = vpop.f32.mrf.mxu0
    %v8747 = vadd.f32 0.0, %v8746
    %v8748 = vpop.f32.mrf.mxu0
    %8749 = vmatprep.mubr.bf16.mxu0 0
    %8750 = vmatmul.mubr.bf16.gmra.mxu0 %v8473
    %v8751 = vpop.f32.mrf.mxu0
    %v8752 = vadd.f32 0.0, %v8751
    %v8753 = vpop.f32.mrf.mxu0
    %v8754 = vpop.f32.mrf.mxu0
    %v8755 = vadd.f32 0.0, %v8754
    %v8756 = vpop.f32.mrf.mxu0
    %8757 = vmatprep.mubr.bf16.mxu0 0
    %8758 = vmatmul.mubr.bf16.gmra.mxu0 %v8474
    %v8759 = vpop.f32.mrf.mxu0
    %v8760 = vadd.f32 0.0, %v8759
    %v8761 = vpop.f32.mrf.mxu0
    %v8762 = vpop.f32.mrf.mxu0
    %v8763 = vadd.f32 0.0, %v8762
    %v8764 = vpop.f32.mrf.mxu0
    %8765 = vmatprep.mubr.bf16.mxu0 0
    %8766 = vmatmul.mubr.bf16.gmra.mxu0 %v8475
    %v8767 = vpop.f32.mrf.mxu0
    %v8768 = vadd.f32 0.0, %v8767
    %v8769 = vpop.f32.mrf.mxu0
    %v8770 = vpop.f32.mrf.mxu0
    %v8771 = vadd.f32 0.0, %v8770
    %v8772 = vpop.f32.mrf.mxu0
    %8773 = vmatprep.mubr.bf16.mxu0 0
    %8774 = vmatmul.mubr.bf16.gmra.mxu0 %v8476
    %v8775 = vpop.f32.mrf.mxu0
    %v8776 = vadd.f32 0.0, %v8775
    %v8777 = vpop.f32.mrf.mxu0
    %v8778 = vpop.f32.mrf.mxu0
    %v8779 = vadd.f32 0.0, %v8778
    %v8780 = vpop.f32.mrf.mxu0
    %8781 = vmatprep.mubr.bf16.mxu0 0
    %8782 = vmatmul.mubr.bf16.gmra.mxu0 %v8477
    %v8783 = vpop.f32.mrf.mxu0
    %v8784 = vadd.f32 0.0, %v8783
    %v8785 = vpop.f32.mrf.mxu0
    %v8786 = vpop.f32.mrf.mxu0
    %v8787 = vadd.f32 0.0, %v8786
    %v8788 = vpop.f32.mrf.mxu0
    %8789 = vmatprep.mubr.bf16.mxu0 0
    %8790 = vmatmul.mubr.bf16.gmra.mxu0 %v8478
    %v8791 = vpop.f32.mrf.mxu0
    %v8792 = vadd.f32 0.0, %v8791
    %v8793 = vpop.f32.mrf.mxu0
    %v8794 = vpop.f32.mrf.mxu0
    %v8795 = vadd.f32 0.0, %v8794
    %v8796 = vpop.f32.mrf.mxu0
    %8797 = vmatprep.mubr.bf16.mxu0 0
    %8798 = vmatmul.mubr.bf16.gmra.mxu0 %v8479
    %v8799 = vpop.f32.mrf.mxu0
    %v8800 = vadd.f32 0.0, %v8799
    %v8801 = vpop.f32.mrf.mxu0
    %v8802 = vpop.f32.mrf.mxu0
    %v8803 = vadd.f32 0.0, %v8802
    %v8804 = vpop.f32.mrf.mxu0
    %8805 = vmatprep.mubr.bf16.mxu0 0
    %8806 = vmatmul.mubr.bf16.gmra.mxu0 %v8480
    %v8807 = vpop.f32.mrf.mxu0
    %v8808 = vadd.f32 0.0, %v8807
    %v8809 = vpop.f32.mrf.mxu0
    %v8810 = vpop.f32.mrf.mxu0
    %v8811 = vadd.f32 0.0, %v8810
    %v8812 = vpop.f32.mrf.mxu0
    %8813 = vmatprep.mubr.bf16.mxu0 0
    %8814 = vmatmul.mubr.bf16.gmra.mxu0 %v8481
    %v8815 = vpop.f32.mrf.mxu0
    %v8816 = vadd.f32 0.0, %v8815
    %v8817 = vpop.f32.mrf.mxu0
    %v8818 = vpop.f32.mrf.mxu0
    %v8819 = vadd.f32 0.0, %v8818
    %v8820 = vpop.f32.mrf.mxu0
    %8821 = vmatprep.mubr.bf16.mxu0 0
    %8822 = vmatmul.mubr.bf16.gmra.mxu0 %v8482
    %v8823 = vpop.f32.mrf.mxu0
    %v8824 = vadd.f32 0.0, %v8823
    %v8825 = vpop.f32.mrf.mxu0
    %v8826 = vpop.f32.mrf.mxu0
    %v8827 = vadd.f32 0.0, %v8826
    %v8828 = vpop.f32.mrf.mxu0
    %8829 = vmatprep.mubr.bf16.mxu0 0
    %8830 = vmatmul.mubr.bf16.gmra.mxu0 %v8483
    %v8831 = vpop.f32.mrf.mxu0
    %v8832 = vadd.f32 0.0, %v8831
    %v8833 = vpop.f32.mrf.mxu0
    %v8834 = vpop.f32.mrf.mxu0
    %v8835 = vadd.f32 0.0, %v8834
    %v8836 = vpop.f32.mrf.mxu0
    %8837 = vdwg.mxu0
    %v8838 = vadd.f32 %v8324, %v8584
    %v8839 = vadd.f32 %v8325, %v8587
    %v8840 = vadd.f32 %v8326, %v8592
    %v8841 = vadd.f32 %v8327, %v8595
    %v8842 = vadd.f32 %v8328, %v8600
    %v8843 = vadd.f32 %v8329, %v8603
    %v8844 = vadd.f32 %v8330, %v8608
    %v8845 = vadd.f32 %v8331, %v8611
    %v8846 = vadd.f32 %v8332, %v8616
    %v8847 = vadd.f32 %v8333, %v8619
    %v8848 = vadd.f32 %v8334, %v8624
    %v8849 = vadd.f32 %v8335, %v8627
    %v8850 = vadd.f32 %v8336, %v8632
    %v8851 = vadd.f32 %v8337, %v8635
    %v8852 = vadd.f32 %v8338, %v8640
    %v8853 = vadd.f32 %v8339, %v8643
    %v8854 = vadd.f32 %v8340, %v8648
    %v8855 = vadd.f32 %v8341, %v8651
    %v8856 = vadd.f32 %v8342, %v8656
    %v8857 = vadd.f32 %v8343, %v8659
    %v8858 = vadd.f32 %v8344, %v8664
    %v8859 = vadd.f32 %v8345, %v8667
    %v8860 = vadd.f32 %v8346, %v8672
    %v8861 = vadd.f32 %v8347, %v8675
    %v8862 = vadd.f32 %v8348, %v8680
    %v8863 = vadd.f32 %v8349, %v8683
    %v8864 = vadd.f32 %v8350, %v8688
    %v8865 = vadd.f32 %v8351, %v8691
    %v8866 = vadd.f32 %v8352, %v8696
    %v8867 = vadd.f32 %v8353, %v8699
    %v8868 = vadd.f32 %v8354, %v8704
    %v8869 = vadd.f32 %v8355, %v8707
    %v8870 = vadd.f32 %v8356, %v8712
    %v8871 = vadd.f32 %v8357, %v8715
    %v8872 = vadd.f32 %v8358, %v8720
    %v8873 = vadd.f32 %v8359, %v8723
    %v8874 = vadd.f32 %v8360, %v8728
    %v8875 = vadd.f32 %v8361, %v8731
    %v8876 = vadd.f32 %v8362, %v8736
    %v8877 = vadd.f32 %v8363, %v8739
    %v8878 = vadd.f32 %v8364, %v8744
    %v8879 = vadd.f32 %v8365, %v8747
    %v8880 = vadd.f32 %v8366, %v8752
    %v8881 = vadd.f32 %v8367, %v8755
    %v8882 = vadd.f32 %v8368, %v8760
    %v8883 = vadd.f32 %v8369, %v8763
    %v8884 = vadd.f32 %v8370, %v8768
    %v8885 = vadd.f32 %v8371, %v8771
    %v8886 = vadd.f32 %v8372, %v8776
    %v8887 = vadd.f32 %v8373, %v8779
    %v8888 = vadd.f32 %v8374, %v8784
    %v8889 = vadd.f32 %v8375, %v8787
    %v8890 = vadd.f32 %v8376, %v8792
    %v8891 = vadd.f32 %v8377, %v8795
    %v8892 = vadd.f32 %v8378, %v8800
    %v8893 = vadd.f32 %v8379, %v8803
    %v8894 = vadd.f32 %v8380, %v8808
    %v8895 = vadd.f32 %v8381, %v8811
    %v8896 = vadd.f32 %v8382, %v8816
    %v8897 = vadd.f32 %v8383, %v8819
    %v8898 = vadd.f32 %v8384, %v8824
    %v8899 = vadd.f32 %v8385, %v8827
    %v8900 = vadd.f32 %v8386, %v8832
    %v8901 = vadd.f32 %v8387, %v8835
    %v8902 = vld [vmem:[#allocation2 + $0x19] sm:$0xff]
    %v8903 = vld [vmem:[#allocation2 + $0x21] sm:$0xff]
    %v8904 = vld [vmem:[#allocation2 + $0x29] sm:$0xff]
    %v8905 = vld [vmem:[#allocation2 + $0x31] sm:$0xff]
    %v8906 = vld [vmem:[#allocation2 + $0x39] sm:$0xff]
    %v8907 = vld [vmem:[#allocation2 + $0x41] sm:$0xff]
    %v8908 = vld [vmem:[#allocation2 + $0x49] sm:$0xff]
    %v8909 = vld [vmem:[#allocation2 + $0x51] sm:$0xff]
    %v8910 = vld [vmem:[#allocation2 + $0x59] sm:$0xff]
    %v8911 = vld [vmem:[#allocation2 + $0x61] sm:$0xff]
    %v8912 = vld [vmem:[#allocation2 + $0x69] sm:$0xff]
    %v8913 = vld [vmem:[#allocation2 + $0x71] sm:$0xff]
    %v8914 = vld [vmem:[#allocation2 + $0x79] sm:$0xff]
    %v8915 = vld [vmem:[#allocation2 + $0x81] sm:$0xff]
    %v8916 = vld [vmem:[#allocation2 + $0x89] sm:$0xff]
    %v8917 = vld [vmem:[#allocation2 + $0x91] sm:$0xff]
    %v8918 = vld [vmem:[#allocation2 + $0x99] sm:$0xff]
    %v8919 = vld [vmem:[#allocation2 + $0xa1] sm:$0xff]
    %v8920 = vld [vmem:[#allocation2 + $0xa9] sm:$0xff]
    %v8921 = vld [vmem:[#allocation2 + $0xb1] sm:$0xff]
    %v8922 = vld [vmem:[#allocation2 + $0xb9] sm:$0xff]
    %v8923 = vld [vmem:[#allocation2 + $0xc1] sm:$0xff]
    %v8924 = vld [vmem:[#allocation2 + $0xc9] sm:$0xff]
    %v8925 = vld [vmem:[#allocation2 + $0xd1] sm:$0xff]
    %v8926 = vld [vmem:[#allocation2 + $0xd9] sm:$0xff]
    %v8927 = vld [vmem:[#allocation2 + $0xe1] sm:$0xff]
    %v8928 = vld [vmem:[#allocation2 + $0xe9] sm:$0xff]
    %v8929 = vld [vmem:[#allocation2 + $0xf1] sm:$0xff]
    %v8930 = vld [vmem:[#allocation2 + $0xf9] sm:$0xff]
    %v8931 = vld [vmem:[#allocation2 + $0x101] sm:$0xff]
    %v8932 = vld [vmem:[#allocation2 + $0x109] sm:$0xff]
    %v8933 = vld [vmem:[#allocation2 + $0x111] sm:$0xff]
    %v8934 = vld [vmem:[#allocation2 + $0x119] sm:$0xff]
    %v8935 = vld [vmem:[#allocation2 + $0x121] sm:$0xff]
    %v8936 = vld [vmem:[#allocation2 + $0x129] sm:$0xff]
    %v8937 = vld [vmem:[#allocation2 + $0x131] sm:$0xff]
    %v8938 = vld [vmem:[#allocation2 + $0x139] sm:$0xff]
    %v8939 = vld [vmem:[#allocation2 + $0x141] sm:$0xff]
    %v8940 = vld [vmem:[#allocation2 + $0x149] sm:$0xff]
    %v8941 = vld [vmem:[#allocation2 + $0x151] sm:$0xff]
    %v8942 = vld [vmem:[#allocation2 + $0x159] sm:$0xff]
    %v8943 = vld [vmem:[#allocation2 + $0x161] sm:$0xff]
    %v8944 = vld [vmem:[#allocation2 + $0x169] sm:$0xff]
    %v8945 = vld [vmem:[#allocation2 + $0x171] sm:$0xff]
    %v8946 = vld [vmem:[#allocation2 + $0x179] sm:$0xff]
    %v8947 = vld [vmem:[#allocation2 + $0x181] sm:$0xff]
    %v8948 = vld [vmem:[#allocation2 + $0x189] sm:$0xff]
    %v8949 = vld [vmem:[#allocation2 + $0x191] sm:$0xff]
    %v8950 = vld [vmem:[#allocation2 + $0x199] sm:$0xff]
    %v8951 = vld [vmem:[#allocation2 + $0x1a1] sm:$0xff]
    %v8952 = vld [vmem:[#allocation2 + $0x1a9] sm:$0xff]
    %v8953 = vld [vmem:[#allocation2 + $0x1b1] sm:$0xff]
    %v8954 = vld [vmem:[#allocation2 + $0x1b9] sm:$0xff]
    %v8955 = vld [vmem:[#allocation2 + $0x1c1] sm:$0xff]
    %v8956 = vld [vmem:[#allocation2 + $0x1c9] sm:$0xff]
    %v8957 = vld [vmem:[#allocation2 + $0x1d1] sm:$0xff]
    %v8958 = vld [vmem:[#allocation2 + $0x1d9] sm:$0xff]
    %v8959 = vld [vmem:[#allocation2 + $0x1e1] sm:$0xff]
    %v8960 = vld [vmem:[#allocation2 + $0x1e9] sm:$0xff]
    %v8961 = vld [vmem:[#allocation2 + $0x1f1] sm:$0xff]
    %v8962 = vld [vmem:[#allocation2 + $0x1f9] sm:$0xff]
    %v8963 = vld [vmem:[#allocation2 + $0x201] sm:$0xff]
    %v8964 = vld [vmem:[#allocation2 + $0x209] sm:$0xff]
    %v8965 = vld [vmem:[#allocation2 + $0x211] sm:$0xff]
    %v8966 = vsel %vm479, %v8902, 0.0
    %v8967 = vsel %vm480, %v8903, 0.0
    %v8968 = vsel %vm481, %v8904, 0.0
    %v8969 = vsel %vm482, %v8905, 0.0
    %v8970 = vsel %vm483, %v8906, 0.0
    %v8971 = vsel %vm484, %v8907, 0.0
    %v8972 = vsel %vm485, %v8908, 0.0
    %v8973 = vsel %vm486, %v8909, 0.0
    %v8974 = vsel %vm487, %v8910, 0.0
    %v8975 = vsel %vm488, %v8911, 0.0
    %v8976 = vsel %vm489, %v8912, 0.0
    %v8977 = vsel %vm490, %v8913, 0.0
    %v8978 = vsel %vm491, %v8914, 0.0
    %v8979 = vsel %vm492, %v8915, 0.0
    %v8980 = vsel %vm493, %v8916, 0.0
    %v8981 = vsel %vm494, %v8917, 0.0
    %v8982 = vsel %vm495, %v8918, 0.0
    %v8983 = vsel %vm496, %v8919, 0.0
    %v8984 = vsel %vm497, %v8920, 0.0
    %v8985 = vsel %vm498, %v8921, 0.0
    %v8986 = vsel %vm499, %v8922, 0.0
    %v8987 = vsel %vm500, %v8923, 0.0
    %v8988 = vsel %vm501, %v8924, 0.0
    %v8989 = vsel %vm502, %v8925, 0.0
    %v8990 = vsel %vm503, %v8926, 0.0
    %v8991 = vsel %vm504, %v8927, 0.0
    %v8992 = vsel %vm505, %v8928, 0.0
    %v8993 = vsel %vm506, %v8929, 0.0
    %v8994 = vsel %vm507, %v8930, 0.0
    %v8995 = vsel %vm508, %v8931, 0.0
    %v8996 = vsel %vm509, %v8932, 0.0
    %v8997 = vsel %vm510, %v8933, 0.0
    %v8998 = vsel %vm511, %v8934, 0.0
    %v8999 = vsel %vm512, %v8935, 0.0
    %v9000 = vsel %vm513, %v8936, 0.0
    %v9001 = vsel %vm514, %v8937, 0.0
    %v9002 = vsel %vm515, %v8938, 0.0
    %v9003 = vsel %vm516, %v8939, 0.0
    %v9004 = vsel %vm517, %v8940, 0.0
    %v9005 = vsel %vm518, %v8941, 0.0
    %v9006 = vsel %vm519, %v8942, 0.0
    %v9007 = vsel %vm520, %v8943, 0.0
    %v9008 = vsel %vm521, %v8944, 0.0
    %v9009 = vsel %vm522, %v8945, 0.0
    %v9010 = vsel %vm523, %v8946, 0.0
    %v9011 = vsel %vm524, %v8947, 0.0
    %v9012 = vsel %vm525, %v8948, 0.0
    %v9013 = vsel %vm526, %v8949, 0.0
    %v9014 = vsel %vm527, %v8950, 0.0
    %v9015 = vsel %vm528, %v8951, 0.0
    %v9016 = vsel %vm529, %v8952, 0.0
    %v9017 = vsel %vm530, %v8953, 0.0
    %v9018 = vsel %vm531, %v8954, 0.0
    %v9019 = vsel %vm532, %v8955, 0.0
    %v9020 = vsel %vm533, %v8956, 0.0
    %v9021 = vsel %vm534, %v8957, 0.0
    %v9022 = vsel %vm535, %v8958, 0.0
    %v9023 = vsel %vm536, %v8959, 0.0
    %v9024 = vsel %vm537, %v8960, 0.0
    %v9025 = vsel %vm538, %v8961, 0.0
    %v9026 = vsel %vm539, %v8962, 0.0
    %v9027 = vsel %vm540, %v8963, 0.0
    %v9028 = vsel %vm541, %v8964, 0.0
    %v9029 = vsel %vm542, %v8965, 0.0
    %v9030 = vpack.c.bf16 %v8967, %v8966
    %v9031 = vpack.c.bf16 %v8969, %v8968
    %v9032 = vpack.c.bf16 %v8971, %v8970
    %v9033 = vpack.c.bf16 %v8973, %v8972
    %v9034 = vpack.c.bf16 %v8975, %v8974
    %v9035 = vpack.c.bf16 %v8977, %v8976
    %v9036 = vpack.c.bf16 %v8979, %v8978
    %v9037 = vpack.c.bf16 %v8981, %v8980
    %v9038 = vpack.c.bf16 %v8983, %v8982
    %v9039 = vpack.c.bf16 %v8985, %v8984
    %v9040 = vpack.c.bf16 %v8987, %v8986
    %v9041 = vpack.c.bf16 %v8989, %v8988
    %v9042 = vpack.c.bf16 %v8991, %v8990
    %v9043 = vpack.c.bf16 %v8993, %v8992
    %v9044 = vpack.c.bf16 %v8995, %v8994
    %v9045 = vpack.c.bf16 %v8997, %v8996
    %v9046 = vpack.c.bf16 %v8999, %v8998
    %v9047 = vpack.c.bf16 %v9001, %v9000
    %v9048 = vpack.c.bf16 %v9003, %v9002
    %v9049 = vpack.c.bf16 %v9005, %v9004
    %v9050 = vpack.c.bf16 %v9007, %v9006
    %v9051 = vpack.c.bf16 %v9009, %v9008
    %v9052 = vpack.c.bf16 %v9011, %v9010
    %v9053 = vpack.c.bf16 %v9013, %v9012
    %v9054 = vpack.c.bf16 %v9015, %v9014
    %v9055 = vpack.c.bf16 %v9017, %v9016
    %v9056 = vpack.c.bf16 %v9019, %v9018
    %v9057 = vpack.c.bf16 %v9021, %v9020
    %v9058 = vpack.c.bf16 %v9023, %v9022
    %v9059 = vpack.c.bf16 %v9025, %v9024
    %v9060 = vpack.c.bf16 %v9027, %v9026
    %v9061 = vpack.c.bf16 %v9029, %v9028
    %s9062 = scalar_lea.vmem %s3, 320
    %v9063 = vld [vmem:[%s9062] sm:$0xf]
    %v9064 = vld [vmem:[%s9062 + $0x4] sm:$0xf]
    %v9065 = vld [vmem:[%s9062 + $0x8] sm:$0xf]
    %v9066 = vld [vmem:[%s9062 + $0xc] sm:$0xf]
    %v9067 = vld [vmem:[%s9062 + $0x10] sm:$0xf]
    %v9068 = vld [vmem:[%s9062 + $0x14] sm:$0xf]
    %v9069 = vld [vmem:[%s9062 + $0x18] sm:$0xf]
    %v9070 = vld [vmem:[%s9062 + $0x1c] sm:$0xf]
    %v9071 = vld [vmem:[%s9062 + $0x20] sm:$0xf]
    %v9072 = vld [vmem:[%s9062 + $0x24] sm:$0xf]
    %v9073 = vld [vmem:[%s9062 + $0x28] sm:$0xf]
    %v9074 = vld [vmem:[%s9062 + $0x2c] sm:$0xf]
    %v9075 = vld [vmem:[%s9062 + $0x30] sm:$0xf]
    %v9076 = vld [vmem:[%s9062 + $0x34] sm:$0xf]
    %v9077 = vld [vmem:[%s9062 + $0x38] sm:$0xf]
    %v9078 = vld [vmem:[%s9062 + $0x3c] sm:$0xf]
    %v9095 = vunpack.c.l.b16 %v9063
    %v9096 = vunpack.c.l.b16 %v9064
    %v9097 = vunpack.c.l.b16 %v9065
    %v9098 = vunpack.c.l.b16 %v9066
    %v9099 = vunpack.c.l.b16 %v9067
    %v9100 = vunpack.c.l.b16 %v9068
    %v9101 = vunpack.c.l.b16 %v9069
    %v9102 = vunpack.c.l.b16 %v9070
    %v9103 = vunpack.c.l.b16 %v9071
    %v9104 = vunpack.c.l.b16 %v9072
    %v9105 = vunpack.c.l.b16 %v9073
    %v9106 = vunpack.c.l.b16 %v9074
    %v9107 = vunpack.c.l.b16 %v9075
    %v9108 = vunpack.c.l.b16 %v9076
    %v9109 = vunpack.c.l.b16 %v9077
    %v9110 = vunpack.c.l.b16 %v9078
    %v9111 = vpack.c.b16 %v9096, %v9095
    %v9112 = vpack.c.b16 %v9098, %v9097
    %v9113 = vpack.c.b16 %v9100, %v9099
    %v9114 = vpack.c.b16 %v9102, %v9101
    %v9115 = vpack.c.b16 %v9104, %v9103
    %v9116 = vpack.c.b16 %v9106, %v9105
    %v9117 = vpack.c.b16 %v9108, %v9107
    %v9118 = vpack.c.b16 %v9110, %v9109
    %9127 = vmatprep.subr.bf16.mxu0 0
    %9128 = vmatpush1.bf16.msra.mxu0 %v9118
    %9129 = vmatprep.subr.bf16.mxu0 0
    %9130 = vmatpush1.bf16.msra.mxu0 %v9117
    %9131 = vmatprep.subr.bf16.mxu0 0
    %9132 = vmatpush1.bf16.msra.mxu0 %v9116
    %9133 = vmatprep.subr.bf16.mxu0 0
    %9134 = vmatpush1.bf16.msra.mxu0 %v9115
    %9135 = vmatprep.subr.bf16.mxu0 0
    %9136 = vmatpush1.bf16.msra.mxu0 %v9114
    %9137 = vmatprep.subr.bf16.mxu0 0
    %9138 = vmatpush1.bf16.msra.mxu0 %v9113
    %9139 = vmatprep.subr.bf16.mxu0 0
    %9140 = vmatpush1.bf16.msra.mxu0 %v9112
    %9141 = vmatprep.subr.bf16.mxu0 0
    %9142 = vmatpush1.bf16.msra.mxu0 %v9111
    %9143 = vmatprep.subr.bf16.mxu0 0
    %9144 = vmatpush2.bf16.msra.mxu0 0
    %9145 = vmatprep.subr.bf16.mxu0 0
    %9146 = vmatpush2.bf16.msra.mxu0 0
    %9147 = vmatprep.subr.bf16.mxu0 0
    %9148 = vmatpush2.bf16.msra.mxu0 0
    %9149 = vmatprep.subr.bf16.mxu0 0
    %9150 = vmatpush2.bf16.msra.mxu0 0
    %9151 = vmatprep.subr.bf16.mxu0 0
    %9152 = vmatpush2.bf16.msra.mxu0 0
    %9153 = vmatprep.subr.bf16.mxu0 0
    %9154 = vmatpush2.bf16.msra.mxu0 0
    %9155 = vmatprep.subr.bf16.mxu0 0
    %9156 = vmatpush2.bf16.msra.mxu0 0
    %9157 = vmatprep.subr.bf16.mxu0 0
    %9158 = vmatpush2.bf16.msra.mxu0 0
    %9159 = vmatprep.mubr.bf16.mxu0 0
    %9160 = vmatmul.mubr.bf16.gmra.mxu0 %v9030
    %v9161 = vpop.f32.mrf.mxu0
    %v9162 = vadd.f32 0.0, %v9161
    %v9163 = vpop.f32.mrf.mxu0
    %v9164 = vpop.f32.mrf.mxu0
    %v9165 = vadd.f32 0.0, %v9164
    %v9166 = vpop.f32.mrf.mxu0
    %9167 = vmatprep.mubr.bf16.mxu0 0
    %9168 = vmatmul.mubr.bf16.gmra.mxu0 %v9031
    %v9169 = vpop.f32.mrf.mxu0
    %v9170 = vadd.f32 0.0, %v9169
    %v9171 = vpop.f32.mrf.mxu0
    %v9172 = vpop.f32.mrf.mxu0
    %v9173 = vadd.f32 0.0, %v9172
    %v9174 = vpop.f32.mrf.mxu0
    %9175 = vmatprep.mubr.bf16.mxu0 0
    %9176 = vmatmul.mubr.bf16.gmra.mxu0 %v9032
    %v9177 = vpop.f32.mrf.mxu0
    %v9178 = vadd.f32 0.0, %v9177
    %v9179 = vpop.f32.mrf.mxu0
    %v9180 = vpop.f32.mrf.mxu0
    %v9181 = vadd.f32 0.0, %v9180
    %v9182 = vpop.f32.mrf.mxu0
    %9183 = vmatprep.mubr.bf16.mxu0 0
    %9184 = vmatmul.mubr.bf16.gmra.mxu0 %v9033
    %v9185 = vpop.f32.mrf.mxu0
    %v9186 = vadd.f32 0.0, %v9185
    %v9187 = vpop.f32.mrf.mxu0
    %v9188 = vpop.f32.mrf.mxu0
    %v9189 = vadd.f32 0.0, %v9188
    %v9190 = vpop.f32.mrf.mxu0
    %9191 = vmatprep.mubr.bf16.mxu0 0
    %9192 = vmatmul.mubr.bf16.gmra.mxu0 %v9034
    %v9193 = vpop.f32.mrf.mxu0
    %v9194 = vadd.f32 0.0, %v9193
    %v9195 = vpop.f32.mrf.mxu0
    %v9196 = vpop.f32.mrf.mxu0
    %v9197 = vadd.f32 0.0, %v9196
    %v9198 = vpop.f32.mrf.mxu0
    %9199 = vmatprep.mubr.bf16.mxu0 0
    %9200 = vmatmul.mubr.bf16.gmra.mxu0 %v9035
    %v9201 = vpop.f32.mrf.mxu0
    %v9202 = vadd.f32 0.0, %v9201
    %v9203 = vpop.f32.mrf.mxu0
    %v9204 = vpop.f32.mrf.mxu0
    %v9205 = vadd.f32 0.0, %v9204
    %v9206 = vpop.f32.mrf.mxu0
    %9207 = vmatprep.mubr.bf16.mxu0 0
    %9208 = vmatmul.mubr.bf16.gmra.mxu0 %v9036
    %v9209 = vpop.f32.mrf.mxu0
    %v9210 = vadd.f32 0.0, %v9209
    %v9211 = vpop.f32.mrf.mxu0
    %v9212 = vpop.f32.mrf.mxu0
    %v9213 = vadd.f32 0.0, %v9212
    %v9214 = vpop.f32.mrf.mxu0
    %9215 = vmatprep.mubr.bf16.mxu0 0
    %9216 = vmatmul.mubr.bf16.gmra.mxu0 %v9037
    %v9217 = vpop.f32.mrf.mxu0
    %v9218 = vadd.f32 0.0, %v9217
    %v9219 = vpop.f32.mrf.mxu0
    %v9220 = vpop.f32.mrf.mxu0
    %v9221 = vadd.f32 0.0, %v9220
    %v9222 = vpop.f32.mrf.mxu0
    %9223 = vmatprep.mubr.bf16.mxu0 0
    %9224 = vmatmul.mubr.bf16.gmra.mxu0 %v9038
    %v9225 = vpop.f32.mrf.mxu0
    %v9226 = vadd.f32 0.0, %v9225
    %v9227 = vpop.f32.mrf.mxu0
    %v9228 = vpop.f32.mrf.mxu0
    %v9229 = vadd.f32 0.0, %v9228
    %v9230 = vpop.f32.mrf.mxu0
    %9231 = vmatprep.mubr.bf16.mxu0 0
    %9232 = vmatmul.mubr.bf16.gmra.mxu0 %v9039
    %v9233 = vpop.f32.mrf.mxu0
    %v9234 = vadd.f32 0.0, %v9233
    %v9235 = vpop.f32.mrf.mxu0
    %v9236 = vpop.f32.mrf.mxu0
    %v9237 = vadd.f32 0.0, %v9236
    %v9238 = vpop.f32.mrf.mxu0
    %9239 = vmatprep.mubr.bf16.mxu0 0
    %9240 = vmatmul.mubr.bf16.gmra.mxu0 %v9040
    %v9241 = vpop.f32.mrf.mxu0
    %v9242 = vadd.f32 0.0, %v9241
    %v9243 = vpop.f32.mrf.mxu0
    %v9244 = vpop.f32.mrf.mxu0
    %v9245 = vadd.f32 0.0, %v9244
    %v9246 = vpop.f32.mrf.mxu0
    %9247 = vmatprep.mubr.bf16.mxu0 0
    %9248 = vmatmul.mubr.bf16.gmra.mxu0 %v9041
    %v9249 = vpop.f32.mrf.mxu0
    %v9250 = vadd.f32 0.0, %v9249
    %v9251 = vpop.f32.mrf.mxu0
    %v9252 = vpop.f32.mrf.mxu0
    %v9253 = vadd.f32 0.0, %v9252
    %v9254 = vpop.f32.mrf.mxu0
    %9255 = vmatprep.mubr.bf16.mxu0 0
    %9256 = vmatmul.mubr.bf16.gmra.mxu0 %v9042
    %v9257 = vpop.f32.mrf.mxu0
    %v9258 = vadd.f32 0.0, %v9257
    %v9259 = vpop.f32.mrf.mxu0
    %v9260 = vpop.f32.mrf.mxu0
    %v9261 = vadd.f32 0.0, %v9260
    %v9262 = vpop.f32.mrf.mxu0
    %9263 = vmatprep.mubr.bf16.mxu0 0
    %9264 = vmatmul.mubr.bf16.gmra.mxu0 %v9043
    %v9265 = vpop.f32.mrf.mxu0
    %v9266 = vadd.f32 0.0, %v9265
    %v9267 = vpop.f32.mrf.mxu0
    %v9268 = vpop.f32.mrf.mxu0
    %v9269 = vadd.f32 0.0, %v9268
    %v9270 = vpop.f32.mrf.mxu0
    %9271 = vmatprep.mubr.bf16.mxu0 0
    %9272 = vmatmul.mubr.bf16.gmra.mxu0 %v9044
    %v9273 = vpop.f32.mrf.mxu0
    %v9274 = vadd.f32 0.0, %v9273
    %v9275 = vpop.f32.mrf.mxu0
    %v9276 = vpop.f32.mrf.mxu0
    %v9277 = vadd.f32 0.0, %v9276
    %v9278 = vpop.f32.mrf.mxu0
    %9279 = vmatprep.mubr.bf16.mxu0 0
    %9280 = vmatmul.mubr.bf16.gmra.mxu0 %v9045
    %v9281 = vpop.f32.mrf.mxu0
    %v9282 = vadd.f32 0.0, %v9281
    %v9283 = vpop.f32.mrf.mxu0
    %v9284 = vpop.f32.mrf.mxu0
    %v9285 = vadd.f32 0.0, %v9284
    %v9286 = vpop.f32.mrf.mxu0
    %9287 = vmatprep.mubr.bf16.mxu0 0
    %9288 = vmatmul.mubr.bf16.gmra.mxu0 %v9046
    %v9289 = vpop.f32.mrf.mxu0
    %v9290 = vadd.f32 0.0, %v9289
    %v9291 = vpop.f32.mrf.mxu0
    %v9292 = vpop.f32.mrf.mxu0
    %v9293 = vadd.f32 0.0, %v9292
    %v9294 = vpop.f32.mrf.mxu0
    %9295 = vmatprep.mubr.bf16.mxu0 0
    %9296 = vmatmul.mubr.bf16.gmra.mxu0 %v9047
    %v9297 = vpop.f32.mrf.mxu0
    %v9298 = vadd.f32 0.0, %v9297
    %v9299 = vpop.f32.mrf.mxu0
    %v9300 = vpop.f32.mrf.mxu0
    %v9301 = vadd.f32 0.0, %v9300
    %v9302 = vpop.f32.mrf.mxu0
    %9303 = vmatprep.mubr.bf16.mxu0 0
    %9304 = vmatmul.mubr.bf16.gmra.mxu0 %v9048
    %v9305 = vpop.f32.mrf.mxu0
    %v9306 = vadd.f32 0.0, %v9305
    %v9307 = vpop.f32.mrf.mxu0
    %v9308 = vpop.f32.mrf.mxu0
    %v9309 = vadd.f32 0.0, %v9308
    %v9310 = vpop.f32.mrf.mxu0
    %9311 = vmatprep.mubr.bf16.mxu0 0
    %9312 = vmatmul.mubr.bf16.gmra.mxu0 %v9049
    %v9313 = vpop.f32.mrf.mxu0
    %v9314 = vadd.f32 0.0, %v9313
    %v9315 = vpop.f32.mrf.mxu0
    %v9316 = vpop.f32.mrf.mxu0
    %v9317 = vadd.f32 0.0, %v9316
    %v9318 = vpop.f32.mrf.mxu0
    %9319 = vmatprep.mubr.bf16.mxu0 0
    %9320 = vmatmul.mubr.bf16.gmra.mxu0 %v9050
    %v9321 = vpop.f32.mrf.mxu0
    %v9322 = vadd.f32 0.0, %v9321
    %v9323 = vpop.f32.mrf.mxu0
    %v9324 = vpop.f32.mrf.mxu0
    %v9325 = vadd.f32 0.0, %v9324
    %v9326 = vpop.f32.mrf.mxu0
    %9327 = vmatprep.mubr.bf16.mxu0 0
    %9328 = vmatmul.mubr.bf16.gmra.mxu0 %v9051
    %v9329 = vpop.f32.mrf.mxu0
    %v9330 = vadd.f32 0.0, %v9329
    %v9331 = vpop.f32.mrf.mxu0
    %v9332 = vpop.f32.mrf.mxu0
    %v9333 = vadd.f32 0.0, %v9332
    %v9334 = vpop.f32.mrf.mxu0
    %9335 = vmatprep.mubr.bf16.mxu0 0
    %9336 = vmatmul.mubr.bf16.gmra.mxu0 %v9052
    %v9337 = vpop.f32.mrf.mxu0
    %v9338 = vadd.f32 0.0, %v9337
    %v9339 = vpop.f32.mrf.mxu0
    %v9340 = vpop.f32.mrf.mxu0
    %v9341 = vadd.f32 0.0, %v9340
    %v9342 = vpop.f32.mrf.mxu0
    %9343 = vmatprep.mubr.bf16.mxu0 0
    %9344 = vmatmul.mubr.bf16.gmra.mxu0 %v9053
    %v9345 = vpop.f32.mrf.mxu0
    %v9346 = vadd.f32 0.0, %v9345
    %v9347 = vpop.f32.mrf.mxu0
    %v9348 = vpop.f32.mrf.mxu0
    %v9349 = vadd.f32 0.0, %v9348
    %v9350 = vpop.f32.mrf.mxu0
    %9351 = vmatprep.mubr.bf16.mxu0 0
    %9352 = vmatmul.mubr.bf16.gmra.mxu0 %v9054
    %v9353 = vpop.f32.mrf.mxu0
    %v9354 = vadd.f32 0.0, %v9353
    %v9355 = vpop.f32.mrf.mxu0
    %v9356 = vpop.f32.mrf.mxu0
    %v9357 = vadd.f32 0.0, %v9356
    %v9358 = vpop.f32.mrf.mxu0
    %9359 = vmatprep.mubr.bf16.mxu0 0
    %9360 = vmatmul.mubr.bf16.gmra.mxu0 %v9055
    %v9361 = vpop.f32.mrf.mxu0
    %v9362 = vadd.f32 0.0, %v9361
    %v9363 = vpop.f32.mrf.mxu0
    %v9364 = vpop.f32.mrf.mxu0
    %v9365 = vadd.f32 0.0, %v9364
    %v9366 = vpop.f32.mrf.mxu0
    %9367 = vmatprep.mubr.bf16.mxu0 0
    %9368 = vmatmul.mubr.bf16.gmra.mxu0 %v9056
    %v9369 = vpop.f32.mrf.mxu0
    %v9370 = vadd.f32 0.0, %v9369
    %v9371 = vpop.f32.mrf.mxu0
    %v9372 = vpop.f32.mrf.mxu0
    %v9373 = vadd.f32 0.0, %v9372
    %v9374 = vpop.f32.mrf.mxu0
    %9375 = vmatprep.mubr.bf16.mxu0 0
    %9376 = vmatmul.mubr.bf16.gmra.mxu0 %v9057
    %v9377 = vpop.f32.mrf.mxu0
    %v9378 = vadd.f32 0.0, %v9377
    %v9379 = vpop.f32.mrf.mxu0
    %v9380 = vpop.f32.mrf.mxu0
    %v9381 = vadd.f32 0.0, %v9380
    %v9382 = vpop.f32.mrf.mxu0
    %9383 = vmatprep.mubr.bf16.mxu0 0
    %9384 = vmatmul.mubr.bf16.gmra.mxu0 %v9058
    %v9385 = vpop.f32.mrf.mxu0
    %v9386 = vadd.f32 0.0, %v9385
    %v9387 = vpop.f32.mrf.mxu0
    %v9388 = vpop.f32.mrf.mxu0
    %v9389 = vadd.f32 0.0, %v9388
    %v9390 = vpop.f32.mrf.mxu0
    %9391 = vmatprep.mubr.bf16.mxu0 0
    %9392 = vmatmul.mubr.bf16.gmra.mxu0 %v9059
    %v9393 = vpop.f32.mrf.mxu0
    %v9394 = vadd.f32 0.0, %v9393
    %v9395 = vpop.f32.mrf.mxu0
    %v9396 = vpop.f32.mrf.mxu0
    %v9397 = vadd.f32 0.0, %v9396
    %v9398 = vpop.f32.mrf.mxu0
    %9399 = vmatprep.mubr.bf16.mxu0 0
    %9400 = vmatmul.mubr.bf16.gmra.mxu0 %v9060
    %v9401 = vpop.f32.mrf.mxu0
    %v9402 = vadd.f32 0.0, %v9401
    %v9403 = vpop.f32.mrf.mxu0
    %v9404 = vpop.f32.mrf.mxu0
    %v9405 = vadd.f32 0.0, %v9404
    %v9406 = vpop.f32.mrf.mxu0
    %9407 = vmatprep.mubr.bf16.mxu0 0
    %9408 = vmatmul.mubr.bf16.gmra.mxu0 %v9061
    %v9409 = vpop.f32.mrf.mxu0
    %v9410 = vadd.f32 0.0, %v9409
    %v9411 = vpop.f32.mrf.mxu0
    %v9412 = vpop.f32.mrf.mxu0
    %v9413 = vadd.f32 0.0, %v9412
    %v9414 = vpop.f32.mrf.mxu0
    %9415 = vdwg.mxu0
    %v9416 = vadd.f32 %v8838, %v9162
    %v9417 = vadd.f32 %v8839, %v9165
    %v9418 = vadd.f32 %v8840, %v9170
    %v9419 = vadd.f32 %v8841, %v9173
    %v9420 = vadd.f32 %v8842, %v9178
    %v9421 = vadd.f32 %v8843, %v9181
    %v9422 = vadd.f32 %v8844, %v9186
    %v9423 = vadd.f32 %v8845, %v9189
    %v9424 = vadd.f32 %v8846, %v9194
    %v9425 = vadd.f32 %v8847, %v9197
    %v9426 = vadd.f32 %v8848, %v9202
    %v9427 = vadd.f32 %v8849, %v9205
    %v9428 = vadd.f32 %v8850, %v9210
    %v9429 = vadd.f32 %v8851, %v9213
    %v9430 = vadd.f32 %v8852, %v9218
    %v9431 = vadd.f32 %v8853, %v9221
    %v9432 = vadd.f32 %v8854, %v9226
    %v9433 = vadd.f32 %v8855, %v9229
    %v9434 = vadd.f32 %v8856, %v9234
    %v9435 = vadd.f32 %v8857, %v9237
    %v9436 = vadd.f32 %v8858, %v9242
    %v9437 = vadd.f32 %v8859, %v9245
    %v9438 = vadd.f32 %v8860, %v9250
    %v9439 = vadd.f32 %v8861, %v9253
    %v9440 = vadd.f32 %v8862, %v9258
    %v9441 = vadd.f32 %v8863, %v9261
    %v9442 = vadd.f32 %v8864, %v9266
    %v9443 = vadd.f32 %v8865, %v9269
    %v9444 = vadd.f32 %v8866, %v9274
    %v9445 = vadd.f32 %v8867, %v9277
    %v9446 = vadd.f32 %v8868, %v9282
    %v9447 = vadd.f32 %v8869, %v9285
    %v9448 = vadd.f32 %v8870, %v9290
    %v9449 = vadd.f32 %v8871, %v9293
    %v9450 = vadd.f32 %v8872, %v9298
    %v9451 = vadd.f32 %v8873, %v9301
    %v9452 = vadd.f32 %v8874, %v9306
    %v9453 = vadd.f32 %v8875, %v9309
    %v9454 = vadd.f32 %v8876, %v9314
    %v9455 = vadd.f32 %v8877, %v9317
    %v9456 = vadd.f32 %v8878, %v9322
    %v9457 = vadd.f32 %v8879, %v9325
    %v9458 = vadd.f32 %v8880, %v9330
    %v9459 = vadd.f32 %v8881, %v9333
    %v9460 = vadd.f32 %v8882, %v9338
    %v9461 = vadd.f32 %v8883, %v9341
    %v9462 = vadd.f32 %v8884, %v9346
    %v9463 = vadd.f32 %v8885, %v9349
    %v9464 = vadd.f32 %v8886, %v9354
    %v9465 = vadd.f32 %v8887, %v9357
    %v9466 = vadd.f32 %v8888, %v9362
    %v9467 = vadd.f32 %v8889, %v9365
    %v9468 = vadd.f32 %v8890, %v9370
    %v9469 = vadd.f32 %v8891, %v9373
    %v9470 = vadd.f32 %v8892, %v9378
    %v9471 = vadd.f32 %v8893, %v9381
    %v9472 = vadd.f32 %v8894, %v9386
    %v9473 = vadd.f32 %v8895, %v9389
    %v9474 = vadd.f32 %v8896, %v9394
    %v9475 = vadd.f32 %v8897, %v9397
    %v9476 = vadd.f32 %v8898, %v9402
    %v9477 = vadd.f32 %v8899, %v9405
    %v9478 = vadd.f32 %v8900, %v9410
    %v9479 = vadd.f32 %v8901, %v9413
    %v9480 = vld [vmem:[#allocation2 + $0x27] sm:$0xff]
    %v9481 = vld [vmem:[#allocation2 + $0x2f] sm:$0xff]
    %v9482 = vld [vmem:[#allocation2 + $0x37] sm:$0xff]
    %v9483 = vld [vmem:[#allocation2 + $0x3f] sm:$0xff]
    %v9484 = vld [vmem:[#allocation2 + $0x47] sm:$0xff]
    %v9485 = vld [vmem:[#allocation2 + $0x4f] sm:$0xff]
    %v9486 = vld [vmem:[#allocation2 + $0x57] sm:$0xff]
    %v9487 = vld [vmem:[#allocation2 + $0x5f] sm:$0xff]
    %v9488 = vld [vmem:[#allocation2 + $0x67] sm:$0xff]
    %v9489 = vld [vmem:[#allocation2 + $0x6f] sm:$0xff]
    %v9490 = vld [vmem:[#allocation2 + $0x77] sm:$0xff]
    %v9491 = vld [vmem:[#allocation2 + $0x7f] sm:$0xff]
    %v9492 = vld [vmem:[#allocation2 + $0x87] sm:$0xff]
    %v9493 = vld [vmem:[#allocation2 + $0x8f] sm:$0xff]
    %v9494 = vld [vmem:[#allocation2 + $0x97] sm:$0xff]
    %v9495 = vld [vmem:[#allocation2 + $0x9f] sm:$0xff]
    %v9496 = vld [vmem:[#allocation2 + $0xa7] sm:$0xff]
    %v9497 = vld [vmem:[#allocation2 + $0xaf] sm:$0xff]
    %v9498 = vld [vmem:[#allocation2 + $0xb7] sm:$0xff]
    %v9499 = vld [vmem:[#allocation2 + $0xbf] sm:$0xff]
    %v9500 = vld [vmem:[#allocation2 + $0xc7] sm:$0xff]
    %v9501 = vld [vmem:[#allocation2 + $0xcf] sm:$0xff]
    %v9502 = vld [vmem:[#allocation2 + $0xd7] sm:$0xff]
    %v9503 = vld [vmem:[#allocation2 + $0xdf] sm:$0xff]
    %v9504 = vld [vmem:[#allocation2 + $0xe7] sm:$0xff]
    %v9505 = vld [vmem:[#allocation2 + $0xef] sm:$0xff]
    %v9506 = vld [vmem:[#allocation2 + $0xf7] sm:$0xff]
    %v9507 = vld [vmem:[#allocation2 + $0xff] sm:$0xff]
    %v9508 = vld [vmem:[#allocation2 + $0x107] sm:$0xff]
    %v9509 = vld [vmem:[#allocation2 + $0x10f] sm:$0xff]
    %v9510 = vld [vmem:[#allocation2 + $0x117] sm:$0xff]
    %v9511 = vld [vmem:[#allocation2 + $0x11f] sm:$0xff]
    %v9512 = vld [vmem:[#allocation2 + $0x127] sm:$0xff]
    %v9513 = vld [vmem:[#allocation2 + $0x12f] sm:$0xff]
    %v9514 = vld [vmem:[#allocation2 + $0x137] sm:$0xff]
    %v9515 = vld [vmem:[#allocation2 + $0x13f] sm:$0xff]
    %v9516 = vld [vmem:[#allocation2 + $0x147] sm:$0xff]
    %v9517 = vld [vmem:[#allocation2 + $0x14f] sm:$0xff]
    %v9518 = vld [vmem:[#allocation2 + $0x157] sm:$0xff]
    %v9519 = vld [vmem:[#allocation2 + $0x15f] sm:$0xff]
    %v9520 = vld [vmem:[#allocation2 + $0x167] sm:$0xff]
    %v9521 = vld [vmem:[#allocation2 + $0x16f] sm:$0xff]
    %v9522 = vld [vmem:[#allocation2 + $0x177] sm:$0xff]
    %v9523 = vld [vmem:[#allocation2 + $0x17f] sm:$0xff]
    %v9524 = vld [vmem:[#allocation2 + $0x187] sm:$0xff]
    %v9525 = vld [vmem:[#allocation2 + $0x18f] sm:$0xff]
    %v9526 = vld [vmem:[#allocation2 + $0x197] sm:$0xff]
    %v9527 = vld [vmem:[#allocation2 + $0x19f] sm:$0xff]
    %v9528 = vld [vmem:[#allocation2 + $0x1a7] sm:$0xff]
    %v9529 = vld [vmem:[#allocation2 + $0x1af] sm:$0xff]
    %v9530 = vld [vmem:[#allocation2 + $0x1b7] sm:$0xff]
    %v9531 = vld [vmem:[#allocation2 + $0x1bf] sm:$0xff]
    %v9532 = vld [vmem:[#allocation2 + $0x1c7] sm:$0xff]
    %v9533 = vld [vmem:[#allocation2 + $0x1cf] sm:$0xff]
    %v9534 = vld [vmem:[#allocation2 + $0x1d7] sm:$0xff]
    %v9535 = vld [vmem:[#allocation2 + $0x1df] sm:$0xff]
    %v9536 = vld [vmem:[#allocation2 + $0x1e7] sm:$0xff]
    %v9537 = vld [vmem:[#allocation2 + $0x1ef] sm:$0xff]
    %v9538 = vld [vmem:[#allocation2 + $0x1f7] sm:$0xff]
    %v9539 = vld [vmem:[#allocation2 + $0x1ff] sm:$0xff]
    %v9540 = vld [vmem:[#allocation2 + $0x207] sm:$0xff]
    %v9541 = vld [vmem:[#allocation2 + $0x20f] sm:$0xff]
    %v9542 = vld [vmem:[#allocation2 + $0x217] sm:$0xff]
    %v9543 = vld [vmem:[#allocation2 + $0x21f] sm:$0xff]
    %v9544 = vsel %vm4208, %v9480, 0.0
    %v9545 = vsel %vm4209, %v9481, 0.0
    %v9546 = vsel %vm4210, %v9482, 0.0
    %v9547 = vsel %vm4211, %v9483, 0.0
    %v9548 = vsel %vm4212, %v9484, 0.0
    %v9549 = vsel %vm4213, %v9485, 0.0
    %v9550 = vsel %vm4214, %v9486, 0.0
    %v9551 = vsel %vm4215, %v9487, 0.0
    %v9552 = vsel %vm4216, %v9488, 0.0
    %v9553 = vsel %vm4217, %v9489, 0.0
    %v9554 = vsel %vm4218, %v9490, 0.0
    %v9555 = vsel %vm4219, %v9491, 0.0
    %v9556 = vsel %vm4220, %v9492, 0.0
    %v9557 = vsel %vm4221, %v9493, 0.0
    %v9558 = vsel %vm4222, %v9494, 0.0
    %v9559 = vsel %vm4223, %v9495, 0.0
    %v9560 = vsel %vm4224, %v9496, 0.0
    %v9561 = vsel %vm4225, %v9497, 0.0
    %v9562 = vsel %vm4226, %v9498, 0.0
    %v9563 = vsel %vm4227, %v9499, 0.0
    %v9564 = vsel %vm4228, %v9500, 0.0
    %v9565 = vsel %vm4229, %v9501, 0.0
    %v9566 = vsel %vm4230, %v9502, 0.0
    %v9567 = vsel %vm4231, %v9503, 0.0
    %v9568 = vsel %vm4232, %v9504, 0.0
    %v9569 = vsel %vm4233, %v9505, 0.0
    %v9570 = vsel %vm4234, %v9506, 0.0
    %v9571 = vsel %vm4235, %v9507, 0.0
    %v9572 = vsel %vm4236, %v9508, 0.0
    %v9573 = vsel %vm4237, %v9509, 0.0
    %v9574 = vsel %vm4238, %v9510, 0.0
    %v9575 = vsel %vm4239, %v9511, 0.0
    %v9576 = vsel %vm4240, %v9512, 0.0
    %v9577 = vsel %vm4241, %v9513, 0.0
    %v9578 = vsel %vm4242, %v9514, 0.0
    %v9579 = vsel %vm4243, %v9515, 0.0
    %v9580 = vsel %vm4244, %v9516, 0.0
    %v9581 = vsel %vm4245, %v9517, 0.0
    %v9582 = vsel %vm4246, %v9518, 0.0
    %v9583 = vsel %vm4247, %v9519, 0.0
    %v9584 = vsel %vm4248, %v9520, 0.0
    %v9585 = vsel %vm4249, %v9521, 0.0
    %v9586 = vsel %vm4250, %v9522, 0.0
    %v9587 = vsel %vm4251, %v9523, 0.0
    %v9588 = vsel %vm4252, %v9524, 0.0
    %v9589 = vsel %vm4253, %v9525, 0.0
    %v9590 = vsel %vm4254, %v9526, 0.0
    %v9591 = vsel %vm4255, %v9527, 0.0
    %v9592 = vsel %vm4256, %v9528, 0.0
    %v9593 = vsel %vm4257, %v9529, 0.0
    %v9594 = vsel %vm4258, %v9530, 0.0
    %v9595 = vsel %vm4259, %v9531, 0.0
    %v9596 = vsel %vm4260, %v9532, 0.0
    %v9597 = vsel %vm4261, %v9533, 0.0
    %v9598 = vsel %vm4262, %v9534, 0.0
    %v9599 = vsel %vm4263, %v9535, 0.0
    %v9600 = vsel %vm4264, %v9536, 0.0
    %v9601 = vsel %vm4265, %v9537, 0.0
    %v9602 = vsel %vm4266, %v9538, 0.0
    %v9603 = vsel %vm4267, %v9539, 0.0
    %v9604 = vsel %vm4268, %v9540, 0.0
    %v9605 = vsel %vm4269, %v9541, 0.0
    %v9606 = vsel %vm4270, %v9542, 0.0
    %v9607 = vsel %vm4271, %v9543, 0.0
    %v9608 = vpack.c.bf16 %v9545, %v9544
    %v9609 = vpack.c.bf16 %v9547, %v9546
    %v9610 = vpack.c.bf16 %v9549, %v9548
    %v9611 = vpack.c.bf16 %v9551, %v9550
    %v9612 = vpack.c.bf16 %v9553, %v9552
    %v9613 = vpack.c.bf16 %v9555, %v9554
    %v9614 = vpack.c.bf16 %v9557, %v9556
    %v9615 = vpack.c.bf16 %v9559, %v9558
    %v9616 = vpack.c.bf16 %v9561, %v9560
    %v9617 = vpack.c.bf16 %v9563, %v9562
    %v9618 = vpack.c.bf16 %v9565, %v9564
    %v9619 = vpack.c.bf16 %v9567, %v9566
    %v9620 = vpack.c.bf16 %v9569, %v9568
    %v9621 = vpack.c.bf16 %v9571, %v9570
    %v9622 = vpack.c.bf16 %v9573, %v9572
    %v9623 = vpack.c.bf16 %v9575, %v9574
    %v9624 = vpack.c.bf16 %v9577, %v9576
    %v9625 = vpack.c.bf16 %v9579, %v9578
    %v9626 = vpack.c.bf16 %v9581, %v9580
    %v9627 = vpack.c.bf16 %v9583, %v9582
    %v9628 = vpack.c.bf16 %v9585, %v9584
    %v9629 = vpack.c.bf16 %v9587, %v9586
    %v9630 = vpack.c.bf16 %v9589, %v9588
    %v9631 = vpack.c.bf16 %v9591, %v9590
    %v9632 = vpack.c.bf16 %v9593, %v9592
    %v9633 = vpack.c.bf16 %v9595, %v9594
    %v9634 = vpack.c.bf16 %v9597, %v9596
    %v9635 = vpack.c.bf16 %v9599, %v9598
    %v9636 = vpack.c.bf16 %v9601, %v9600
    %v9637 = vpack.c.bf16 %v9603, %v9602
    %v9638 = vpack.c.bf16 %v9605, %v9604
    %v9639 = vpack.c.bf16 %v9607, %v9606
    %s9640 = scalar_lea.vmem %s3, 384
    %v9641 = vld [vmem:[%s9640] sm:$0xf]
    %v9642 = vld [vmem:[%s9640 + $0x4] sm:$0xf]
    %v9643 = vld [vmem:[%s9640 + $0x8] sm:$0xf]
    %v9644 = vld [vmem:[%s9640 + $0xc] sm:$0xf]
    %v9645 = vld [vmem:[%s9640 + $0x10] sm:$0xf]
    %v9646 = vld [vmem:[%s9640 + $0x14] sm:$0xf]
    %v9647 = vld [vmem:[%s9640 + $0x18] sm:$0xf]
    %v9648 = vld [vmem:[%s9640 + $0x1c] sm:$0xf]
    %v9649 = vld [vmem:[%s9640 + $0x20] sm:$0xf]
    %v9650 = vld [vmem:[%s9640 + $0x24] sm:$0xf]
    %v9651 = vld [vmem:[%s9640 + $0x28] sm:$0xf]
    %v9652 = vld [vmem:[%s9640 + $0x2c] sm:$0xf]
    %v9653 = vld [vmem:[%s9640 + $0x30] sm:$0xf]
    %v9654 = vld [vmem:[%s9640 + $0x34] sm:$0xf]
    %v9655 = vld [vmem:[%s9640 + $0x38] sm:$0xf]
    %v9656 = vld [vmem:[%s9640 + $0x3c] sm:$0xf]
    %v9673 = vunpack.c.l.b16 %v9641
    %v9674 = vunpack.c.l.b16 %v9642
    %v9675 = vunpack.c.l.b16 %v9643
    %v9676 = vunpack.c.l.b16 %v9644
    %v9677 = vunpack.c.l.b16 %v9645
    %v9678 = vunpack.c.l.b16 %v9646
    %v9679 = vunpack.c.l.b16 %v9647
    %v9680 = vunpack.c.l.b16 %v9648
    %v9681 = vunpack.c.l.b16 %v9649
    %v9682 = vunpack.c.l.b16 %v9650
    %v9683 = vunpack.c.l.b16 %v9651
    %v9684 = vunpack.c.l.b16 %v9652
    %v9685 = vunpack.c.l.b16 %v9653
    %v9686 = vunpack.c.l.b16 %v9654
    %v9687 = vunpack.c.l.b16 %v9655
    %v9688 = vunpack.c.l.b16 %v9656
    %v9689 = vpack.c.b16 %v9674, %v9673
    %v9690 = vpack.c.b16 %v9676, %v9675
    %v9691 = vpack.c.b16 %v9678, %v9677
    %v9692 = vpack.c.b16 %v9680, %v9679
    %v9693 = vpack.c.b16 %v9682, %v9681
    %v9694 = vpack.c.b16 %v9684, %v9683
    %v9695 = vpack.c.b16 %v9686, %v9685
    %v9696 = vpack.c.b16 %v9688, %v9687
    %9705 = vmatprep.subr.bf16.mxu0 0
    %9706 = vmatpush1.bf16.msra.mxu0 %v9696
    %9707 = vmatprep.subr.bf16.mxu0 0
    %9708 = vmatpush1.bf16.msra.mxu0 %v9695
    %9709 = vmatprep.subr.bf16.mxu0 0
    %9710 = vmatpush1.bf16.msra.mxu0 %v9694
    %9711 = vmatprep.subr.bf16.mxu0 0
    %9712 = vmatpush1.bf16.msra.mxu0 %v9693
    %9713 = vmatprep.subr.bf16.mxu0 0
    %9714 = vmatpush1.bf16.msra.mxu0 %v9692
    %9715 = vmatprep.subr.bf16.mxu0 0
    %9716 = vmatpush1.bf16.msra.mxu0 %v9691
    %9717 = vmatprep.subr.bf16.mxu0 0
    %9718 = vmatpush1.bf16.msra.mxu0 %v9690
    %9719 = vmatprep.subr.bf16.mxu0 0
    %9720 = vmatpush1.bf16.msra.mxu0 %v9689
    %9721 = vmatprep.subr.bf16.mxu0 0
    %9722 = vmatpush2.bf16.msra.mxu0 0
    %9723 = vmatprep.subr.bf16.mxu0 0
    %9724 = vmatpush2.bf16.msra.mxu0 0
    %9725 = vmatprep.subr.bf16.mxu0 0
    %9726 = vmatpush2.bf16.msra.mxu0 0
    %9727 = vmatprep.subr.bf16.mxu0 0
    %9728 = vmatpush2.bf16.msra.mxu0 0
    %9729 = vmatprep.subr.bf16.mxu0 0
    %9730 = vmatpush2.bf16.msra.mxu0 0
    %9731 = vmatprep.subr.bf16.mxu0 0
    %9732 = vmatpush2.bf16.msra.mxu0 0
    %9733 = vmatprep.subr.bf16.mxu0 0
    %9734 = vmatpush2.bf16.msra.mxu0 0
    %9735 = vmatprep.subr.bf16.mxu0 0
    %9736 = vmatpush2.bf16.msra.mxu0 0
    %9737 = vmatprep.mubr.bf16.mxu0 0
    %9738 = vmatmul.mubr.bf16.gmra.mxu0 %v9608
    %v9739 = vpop.f32.mrf.mxu0
    %v9740 = vadd.f32 0.0, %v9739
    %v9741 = vpop.f32.mrf.mxu0
    %v9742 = vpop.f32.mrf.mxu0
    %v9743 = vadd.f32 0.0, %v9742
    %v9744 = vpop.f32.mrf.mxu0
    %9745 = vmatprep.mubr.bf16.mxu0 0
    %9746 = vmatmul.mubr.bf16.gmra.mxu0 %v9609
    %v9747 = vpop.f32.mrf.mxu0
    %v9748 = vadd.f32 0.0, %v9747
    %v9749 = vpop.f32.mrf.mxu0
    %v9750 = vpop.f32.mrf.mxu0
    %v9751 = vadd.f32 0.0, %v9750
    %v9752 = vpop.f32.mrf.mxu0
    %9753 = vmatprep.mubr.bf16.mxu0 0
    %9754 = vmatmul.mubr.bf16.gmra.mxu0 %v9610
    %v9755 = vpop.f32.mrf.mxu0
    %v9756 = vadd.f32 0.0, %v9755
    %v9757 = vpop.f32.mrf.mxu0
    %v9758 = vpop.f32.mrf.mxu0
    %v9759 = vadd.f32 0.0, %v9758
    %v9760 = vpop.f32.mrf.mxu0
    %9761 = vmatprep.mubr.bf16.mxu0 0
    %9762 = vmatmul.mubr.bf16.gmra.mxu0 %v9611
    %v9763 = vpop.f32.mrf.mxu0
    %v9764 = vadd.f32 0.0, %v9763
    %v9765 = vpop.f32.mrf.mxu0
    %v9766 = vpop.f32.mrf.mxu0
    %v9767 = vadd.f32 0.0, %v9766
    %v9768 = vpop.f32.mrf.mxu0
    %9769 = vmatprep.mubr.bf16.mxu0 0
    %9770 = vmatmul.mubr.bf16.gmra.mxu0 %v9612
    %v9771 = vpop.f32.mrf.mxu0
    %v9772 = vadd.f32 0.0, %v9771
    %v9773 = vpop.f32.mrf.mxu0
    %v9774 = vpop.f32.mrf.mxu0
    %v9775 = vadd.f32 0.0, %v9774
    %v9776 = vpop.f32.mrf.mxu0
    %9777 = vmatprep.mubr.bf16.mxu0 0
    %9778 = vmatmul.mubr.bf16.gmra.mxu0 %v9613
    %v9779 = vpop.f32.mrf.mxu0
    %v9780 = vadd.f32 0.0, %v9779
    %v9781 = vpop.f32.mrf.mxu0
    %v9782 = vpop.f32.mrf.mxu0
    %v9783 = vadd.f32 0.0, %v9782
    %v9784 = vpop.f32.mrf.mxu0
    %9785 = vmatprep.mubr.bf16.mxu0 0
    %9786 = vmatmul.mubr.bf16.gmra.mxu0 %v9614
    %v9787 = vpop.f32.mrf.mxu0
    %v9788 = vadd.f32 0.0, %v9787
    %v9789 = vpop.f32.mrf.mxu0
    %v9790 = vpop.f32.mrf.mxu0
    %v9791 = vadd.f32 0.0, %v9790
    %v9792 = vpop.f32.mrf.mxu0
    %9793 = vmatprep.mubr.bf16.mxu0 0
    %9794 = vmatmul.mubr.bf16.gmra.mxu0 %v9615
    %v9795 = vpop.f32.mrf.mxu0
    %v9796 = vadd.f32 0.0, %v9795
    %v9797 = vpop.f32.mrf.mxu0
    %v9798 = vpop.f32.mrf.mxu0
    %v9799 = vadd.f32 0.0, %v9798
    %v9800 = vpop.f32.mrf.mxu0
    %9801 = vmatprep.mubr.bf16.mxu0 0
    %9802 = vmatmul.mubr.bf16.gmra.mxu0 %v9616
    %v9803 = vpop.f32.mrf.mxu0
    %v9804 = vadd.f32 0.0, %v9803
    %v9805 = vpop.f32.mrf.mxu0
    %v9806 = vpop.f32.mrf.mxu0
    %v9807 = vadd.f32 0.0, %v9806
    %v9808 = vpop.f32.mrf.mxu0
    %9809 = vmatprep.mubr.bf16.mxu0 0
    %9810 = vmatmul.mubr.bf16.gmra.mxu0 %v9617
    %v9811 = vpop.f32.mrf.mxu0
    %v9812 = vadd.f32 0.0, %v9811
    %v9813 = vpop.f32.mrf.mxu0
    %v9814 = vpop.f32.mrf.mxu0
    %v9815 = vadd.f32 0.0, %v9814
    %v9816 = vpop.f32.mrf.mxu0
    %9817 = vmatprep.mubr.bf16.mxu0 0
    %9818 = vmatmul.mubr.bf16.gmra.mxu0 %v9618
    %v9819 = vpop.f32.mrf.mxu0
    %v9820 = vadd.f32 0.0, %v9819
    %v9821 = vpop.f32.mrf.mxu0
    %v9822 = vpop.f32.mrf.mxu0
    %v9823 = vadd.f32 0.0, %v9822
    %v9824 = vpop.f32.mrf.mxu0
    %9825 = vmatprep.mubr.bf16.mxu0 0
    %9826 = vmatmul.mubr.bf16.gmra.mxu0 %v9619
    %v9827 = vpop.f32.mrf.mxu0
    %v9828 = vadd.f32 0.0, %v9827
    %v9829 = vpop.f32.mrf.mxu0
    %v9830 = vpop.f32.mrf.mxu0
    %v9831 = vadd.f32 0.0, %v9830
    %v9832 = vpop.f32.mrf.mxu0
    %9833 = vmatprep.mubr.bf16.mxu0 0
    %9834 = vmatmul.mubr.bf16.gmra.mxu0 %v9620
    %v9835 = vpop.f32.mrf.mxu0
    %v9836 = vadd.f32 0.0, %v9835
    %v9837 = vpop.f32.mrf.mxu0
    %v9838 = vpop.f32.mrf.mxu0
    %v9839 = vadd.f32 0.0, %v9838
    %v9840 = vpop.f32.mrf.mxu0
    %9841 = vmatprep.mubr.bf16.mxu0 0
    %9842 = vmatmul.mubr.bf16.gmra.mxu0 %v9621
    %v9843 = vpop.f32.mrf.mxu0
    %v9844 = vadd.f32 0.0, %v9843
    %v9845 = vpop.f32.mrf.mxu0
    %v9846 = vpop.f32.mrf.mxu0
    %v9847 = vadd.f32 0.0, %v9846
    %v9848 = vpop.f32.mrf.mxu0
    %9849 = vmatprep.mubr.bf16.mxu0 0
    %9850 = vmatmul.mubr.bf16.gmra.mxu0 %v9622
    %v9851 = vpop.f32.mrf.mxu0
    %v9852 = vadd.f32 0.0, %v9851
    %v9853 = vpop.f32.mrf.mxu0
    %v9854 = vpop.f32.mrf.mxu0
    %v9855 = vadd.f32 0.0, %v9854
    %v9856 = vpop.f32.mrf.mxu0
    %9857 = vmatprep.mubr.bf16.mxu0 0
    %9858 = vmatmul.mubr.bf16.gmra.mxu0 %v9623
    %v9859 = vpop.f32.mrf.mxu0
    %v9860 = vadd.f32 0.0, %v9859
    %v9861 = vpop.f32.mrf.mxu0
    %v9862 = vpop.f32.mrf.mxu0
    %v9863 = vadd.f32 0.0, %v9862
    %v9864 = vpop.f32.mrf.mxu0
    %9865 = vmatprep.mubr.bf16.mxu0 0
    %9866 = vmatmul.mubr.bf16.gmra.mxu0 %v9624
    %v9867 = vpop.f32.mrf.mxu0
    %v9868 = vadd.f32 0.0, %v9867
    %v9869 = vpop.f32.mrf.mxu0
    %v9870 = vpop.f32.mrf.mxu0
    %v9871 = vadd.f32 0.0, %v9870
    %v9872 = vpop.f32.mrf.mxu0
    %9873 = vmatprep.mubr.bf16.mxu0 0
    %9874 = vmatmul.mubr.bf16.gmra.mxu0 %v9625
    %v9875 = vpop.f32.mrf.mxu0
    %v9876 = vadd.f32 0.0, %v9875
    %v9877 = vpop.f32.mrf.mxu0
    %v9878 = vpop.f32.mrf.mxu0
    %v9879 = vadd.f32 0.0, %v9878
    %v9880 = vpop.f32.mrf.mxu0
    %9881 = vmatprep.mubr.bf16.mxu0 0
    %9882 = vmatmul.mubr.bf16.gmra.mxu0 %v9626
    %v9883 = vpop.f32.mrf.mxu0
    %v9884 = vadd.f32 0.0, %v9883
    %v9885 = vpop.f32.mrf.mxu0
    %v9886 = vpop.f32.mrf.mxu0
    %v9887 = vadd.f32 0.0, %v9886
    %v9888 = vpop.f32.mrf.mxu0
    %9889 = vmatprep.mubr.bf16.mxu0 0
    %9890 = vmatmul.mubr.bf16.gmra.mxu0 %v9627
    %v9891 = vpop.f32.mrf.mxu0
    %v9892 = vadd.f32 0.0, %v9891
    %v9893 = vpop.f32.mrf.mxu0
    %v9894 = vpop.f32.mrf.mxu0
    %v9895 = vadd.f32 0.0, %v9894
    %v9896 = vpop.f32.mrf.mxu0
    %9897 = vmatprep.mubr.bf16.mxu0 0
    %9898 = vmatmul.mubr.bf16.gmra.mxu0 %v9628
    %v9899 = vpop.f32.mrf.mxu0
    %v9900 = vadd.f32 0.0, %v9899
    %v9901 = vpop.f32.mrf.mxu0
    %v9902 = vpop.f32.mrf.mxu0
    %v9903 = vadd.f32 0.0, %v9902
    %v9904 = vpop.f32.mrf.mxu0
    %9905 = vmatprep.mubr.bf16.mxu0 0
    %9906 = vmatmul.mubr.bf16.gmra.mxu0 %v9629
    %v9907 = vpop.f32.mrf.mxu0
    %v9908 = vadd.f32 0.0, %v9907
    %v9909 = vpop.f32.mrf.mxu0
    %v9910 = vpop.f32.mrf.mxu0
    %v9911 = vadd.f32 0.0, %v9910
    %v9912 = vpop.f32.mrf.mxu0
    %9913 = vmatprep.mubr.bf16.mxu0 0
    %9914 = vmatmul.mubr.bf16.gmra.mxu0 %v9630
    %v9915 = vpop.f32.mrf.mxu0
    %v9916 = vadd.f32 0.0, %v9915
    %v9917 = vpop.f32.mrf.mxu0
    %v9918 = vpop.f32.mrf.mxu0
    %v9919 = vadd.f32 0.0, %v9918
    %v9920 = vpop.f32.mrf.mxu0
    %9921 = vmatprep.mubr.bf16.mxu0 0
    %9922 = vmatmul.mubr.bf16.gmra.mxu0 %v9631
    %v9923 = vpop.f32.mrf.mxu0
    %v9924 = vadd.f32 0.0, %v9923
    %v9925 = vpop.f32.mrf.mxu0
    %v9926 = vpop.f32.mrf.mxu0
    %v9927 = vadd.f32 0.0, %v9926
    %v9928 = vpop.f32.mrf.mxu0
    %9929 = vmatprep.mubr.bf16.mxu0 0
    %9930 = vmatmul.mubr.bf16.gmra.mxu0 %v9632
    %v9931 = vpop.f32.mrf.mxu0
    %v9932 = vadd.f32 0.0, %v9931
    %v9933 = vpop.f32.mrf.mxu0
    %v9934 = vpop.f32.mrf.mxu0
    %v9935 = vadd.f32 0.0, %v9934
    %v9936 = vpop.f32.mrf.mxu0
    %9937 = vmatprep.mubr.bf16.mxu0 0
    %9938 = vmatmul.mubr.bf16.gmra.mxu0 %v9633
    %v9939 = vpop.f32.mrf.mxu0
    %v9940 = vadd.f32 0.0, %v9939
    %v9941 = vpop.f32.mrf.mxu0
    %v9942 = vpop.f32.mrf.mxu0
    %v9943 = vadd.f32 0.0, %v9942
    %v9944 = vpop.f32.mrf.mxu0
    %9945 = vmatprep.mubr.bf16.mxu0 0
    %9946 = vmatmul.mubr.bf16.gmra.mxu0 %v9634
    %v9947 = vpop.f32.mrf.mxu0
    %v9948 = vadd.f32 0.0, %v9947
    %v9949 = vpop.f32.mrf.mxu0
    %v9950 = vpop.f32.mrf.mxu0
    %v9951 = vadd.f32 0.0, %v9950
    %v9952 = vpop.f32.mrf.mxu0
    %9953 = vmatprep.mubr.bf16.mxu0 0
    %9954 = vmatmul.mubr.bf16.gmra.mxu0 %v9635
    %v9955 = vpop.f32.mrf.mxu0
    %v9956 = vadd.f32 0.0, %v9955
    %v9957 = vpop.f32.mrf.mxu0
    %v9958 = vpop.f32.mrf.mxu0
    %v9959 = vadd.f32 0.0, %v9958
    %v9960 = vpop.f32.mrf.mxu0
    %9961 = vmatprep.mubr.bf16.mxu0 0
    %9962 = vmatmul.mubr.bf16.gmra.mxu0 %v9636
    %v9963 = vpop.f32.mrf.mxu0
    %v9964 = vadd.f32 0.0, %v9963
    %v9965 = vpop.f32.mrf.mxu0
    %v9966 = vpop.f32.mrf.mxu0
    %v9967 = vadd.f32 0.0, %v9966
    %v9968 = vpop.f32.mrf.mxu0
    %9969 = vmatprep.mubr.bf16.mxu0 0
    %9970 = vmatmul.mubr.bf16.gmra.mxu0 %v9637
    %v9971 = vpop.f32.mrf.mxu0
    %v9972 = vadd.f32 0.0, %v9971
    %v9973 = vpop.f32.mrf.mxu0
    %v9974 = vpop.f32.mrf.mxu0
    %v9975 = vadd.f32 0.0, %v9974
    %v9976 = vpop.f32.mrf.mxu0
    %9977 = vmatprep.mubr.bf16.mxu0 0
    %9978 = vmatmul.mubr.bf16.gmra.mxu0 %v9638
    %v9979 = vpop.f32.mrf.mxu0
    %v9980 = vadd.f32 0.0, %v9979
    %v9981 = vpop.f32.mrf.mxu0
    %v9982 = vpop.f32.mrf.mxu0
    %v9983 = vadd.f32 0.0, %v9982
    %v9984 = vpop.f32.mrf.mxu0
    %9985 = vmatprep.mubr.bf16.mxu0 0
    %9986 = vmatmul.mubr.bf16.gmra.mxu0 %v9639
    %v9987 = vpop.f32.mrf.mxu0
    %v9988 = vadd.f32 0.0, %v9987
    %v9989 = vpop.f32.mrf.mxu0
    %v9990 = vpop.f32.mrf.mxu0
    %v9991 = vadd.f32 0.0, %v9990
    %v9992 = vpop.f32.mrf.mxu0
    %9993 = vdwg.mxu0
    %v9994 = vadd.f32 %v9416, %v9740
    %v9995 = vadd.f32 %v9417, %v9743
    %v9996 = vadd.f32 %v9418, %v9748
    %v9997 = vadd.f32 %v9419, %v9751
    %v9998 = vadd.f32 %v9420, %v9756
    %v9999 = vadd.f32 %v9421, %v9759
    %v10000 = vadd.f32 %v9422, %v9764
    %v10001 = vadd.f32 %v9423, %v9767
    %v10002 = vadd.f32 %v9424, %v9772
    %v10003 = vadd.f32 %v9425, %v9775
    %v10004 = vadd.f32 %v9426, %v9780
    %v10005 = vadd.f32 %v9427, %v9783
    %v10006 = vadd.f32 %v9428, %v9788
    %v10007 = vadd.f32 %v9429, %v9791
    %v10008 = vadd.f32 %v9430, %v9796
    %v10009 = vadd.f32 %v9431, %v9799
    %v10010 = vadd.f32 %v9432, %v9804
    %v10011 = vadd.f32 %v9433, %v9807
    %v10012 = vadd.f32 %v9434, %v9812
    %v10013 = vadd.f32 %v9435, %v9815
    %v10014 = vadd.f32 %v9436, %v9820
    %v10015 = vadd.f32 %v9437, %v9823
    %v10016 = vadd.f32 %v9438, %v9828
    %v10017 = vadd.f32 %v9439, %v9831
    %v10018 = vadd.f32 %v9440, %v9836
    %v10019 = vadd.f32 %v9441, %v9839
    %v10020 = vadd.f32 %v9442, %v9844
    %v10021 = vadd.f32 %v9443, %v9847
    %v10022 = vadd.f32 %v9444, %v9852
    %v10023 = vadd.f32 %v9445, %v9855
    %v10024 = vadd.f32 %v9446, %v9860
    %v10025 = vadd.f32 %v9447, %v9863
    %v10026 = vadd.f32 %v9448, %v9868
    %v10027 = vadd.f32 %v9449, %v9871
    %v10028 = vadd.f32 %v9450, %v9876
    %v10029 = vadd.f32 %v9451, %v9879
    %v10030 = vadd.f32 %v9452, %v9884
    %v10031 = vadd.f32 %v9453, %v9887
    %v10032 = vadd.f32 %v9454, %v9892
    %v10033 = vadd.f32 %v9455, %v9895
    %v10034 = vadd.f32 %v9456, %v9900
    %v10035 = vadd.f32 %v9457, %v9903
    %v10036 = vadd.f32 %v9458, %v9908
    %v10037 = vadd.f32 %v9459, %v9911
    %v10038 = vadd.f32 %v9460, %v9916
    %v10039 = vadd.f32 %v9461, %v9919
    %v10040 = vadd.f32 %v9462, %v9924
    %v10041 = vadd.f32 %v9463, %v9927
    %v10042 = vadd.f32 %v9464, %v9932
    %v10043 = vadd.f32 %v9465, %v9935
    %v10044 = vadd.f32 %v9466, %v9940
    %v10045 = vadd.f32 %v9467, %v9943
    %v10046 = vadd.f32 %v9468, %v9948
    %v10047 = vadd.f32 %v9469, %v9951
    %v10048 = vadd.f32 %v9470, %v9956
    %v10049 = vadd.f32 %v9471, %v9959
    %v10050 = vadd.f32 %v9472, %v9964
    %v10051 = vadd.f32 %v9473, %v9967
    %v10052 = vadd.f32 %v9474, %v9972
    %v10053 = vadd.f32 %v9475, %v9975
    %v10054 = vadd.f32 %v9476, %v9980
    %v10055 = vadd.f32 %v9477, %v9983
    %v10056 = vadd.f32 %v9478, %v9988
    %v10057 = vadd.f32 %v9479, %v9991
    %v10058 = vld [vmem:[#allocation2 + $0x28] sm:$0xff]
    %v10059 = vld [vmem:[#allocation2 + $0x30] sm:$0xff]
    %v10060 = vld [vmem:[#allocation2 + $0x38] sm:$0xff]
    %v10061 = vld [vmem:[#allocation2 + $0x40] sm:$0xff]
    %v10062 = vld [vmem:[#allocation2 + $0x48] sm:$0xff]
    %v10063 = vld [vmem:[#allocation2 + $0x50] sm:$0xff]
    %v10064 = vld [vmem:[#allocation2 + $0x58] sm:$0xff]
    %v10065 = vld [vmem:[#allocation2 + $0x60] sm:$0xff]
    %v10066 = vld [vmem:[#allocation2 + $0x68] sm:$0xff]
    %v10067 = vld [vmem:[#allocation2 + $0x70] sm:$0xff]
    %v10068 = vld [vmem:[#allocation2 + $0x78] sm:$0xff]
    %v10069 = vld [vmem:[#allocation2 + $0x80] sm:$0xff]
    %v10070 = vld [vmem:[#allocation2 + $0x88] sm:$0xff]
    %v10071 = vld [vmem:[#allocation2 + $0x90] sm:$0xff]
    %v10072 = vld [vmem:[#allocation2 + $0x98] sm:$0xff]
    %v10073 = vld [vmem:[#allocation2 + $0xa0] sm:$0xff]
    %v10074 = vld [vmem:[#allocation2 + $0xa8] sm:$0xff]
    %v10075 = vld [vmem:[#allocation2 + $0xb0] sm:$0xff]
    %v10076 = vld [vmem:[#allocation2 + $0xb8] sm:$0xff]
    %v10077 = vld [vmem:[#allocation2 + $0xc0] sm:$0xff]
    %v10078 = vld [vmem:[#allocation2 + $0xc8] sm:$0xff]
    %v10079 = vld [vmem:[#allocation2 + $0xd0] sm:$0xff]
    %v10080 = vld [vmem:[#allocation2 + $0xd8] sm:$0xff]
    %v10081 = vld [vmem:[#allocation2 + $0xe0] sm:$0xff]
    %v10082 = vld [vmem:[#allocation2 + $0xe8] sm:$0xff]
    %v10083 = vld [vmem:[#allocation2 + $0xf0] sm:$0xff]
    %v10084 = vld [vmem:[#allocation2 + $0xf8] sm:$0xff]
    %v10085 = vld [vmem:[#allocation2 + $0x100] sm:$0xff]
    %v10086 = vld [vmem:[#allocation2 + $0x108] sm:$0xff]
    %v10087 = vld [vmem:[#allocation2 + $0x110] sm:$0xff]
    %v10088 = vld [vmem:[#allocation2 + $0x118] sm:$0xff]
    %v10089 = vld [vmem:[#allocation2 + $0x120] sm:$0xff]
    %v10090 = vld [vmem:[#allocation2 + $0x128] sm:$0xff]
    %v10091 = vld [vmem:[#allocation2 + $0x130] sm:$0xff]
    %v10092 = vld [vmem:[#allocation2 + $0x138] sm:$0xff]
    %v10093 = vld [vmem:[#allocation2 + $0x140] sm:$0xff]
    %v10094 = vld [vmem:[#allocation2 + $0x148] sm:$0xff]
    %v10095 = vld [vmem:[#allocation2 + $0x150] sm:$0xff]
    %v10096 = vld [vmem:[#allocation2 + $0x158] sm:$0xff]
    %v10097 = vld [vmem:[#allocation2 + $0x160] sm:$0xff]
    %v10098 = vld [vmem:[#allocation2 + $0x168] sm:$0xff]
    %v10099 = vld [vmem:[#allocation2 + $0x170] sm:$0xff]
    %v10100 = vld [vmem:[#allocation2 + $0x178] sm:$0xff]
    %v10101 = vld [vmem:[#allocation2 + $0x180] sm:$0xff]
    %v10102 = vld [vmem:[#allocation2 + $0x188] sm:$0xff]
    %v10103 = vld [vmem:[#allocation2 + $0x190] sm:$0xff]
    %v10104 = vld [vmem:[#allocation2 + $0x198] sm:$0xff]
    %v10105 = vld [vmem:[#allocation2 + $0x1a0] sm:$0xff]
    %v10106 = vld [vmem:[#allocation2 + $0x1a8] sm:$0xff]
    %v10107 = vld [vmem:[#allocation2 + $0x1b0] sm:$0xff]
    %v10108 = vld [vmem:[#allocation2 + $0x1b8] sm:$0xff]
    %v10109 = vld [vmem:[#allocation2 + $0x1c0] sm:$0xff]
    %v10110 = vld [vmem:[#allocation2 + $0x1c8] sm:$0xff]
    %v10111 = vld [vmem:[#allocation2 + $0x1d0] sm:$0xff]
    %v10112 = vld [vmem:[#allocation2 + $0x1d8] sm:$0xff]
    %v10113 = vld [vmem:[#allocation2 + $0x1e0] sm:$0xff]
    %v10114 = vld [vmem:[#allocation2 + $0x1e8] sm:$0xff]
    %v10115 = vld [vmem:[#allocation2 + $0x1f0] sm:$0xff]
    %v10116 = vld [vmem:[#allocation2 + $0x1f8] sm:$0xff]
    %v10117 = vld [vmem:[#allocation2 + $0x200] sm:$0xff]
    %v10118 = vld [vmem:[#allocation2 + $0x208] sm:$0xff]
    %v10119 = vld [vmem:[#allocation2 + $0x210] sm:$0xff]
    %v10120 = vld [vmem:[#allocation2 + $0x218] sm:$0xff]
    %v10121 = vld [vmem:[#allocation2 + $0x220] sm:$0xff]
    %v10122 = vsel %vm351, %v10058, 0.0
    %v10123 = vsel %vm352, %v10059, 0.0
    %v10124 = vsel %vm353, %v10060, 0.0
    %v10125 = vsel %vm354, %v10061, 0.0
    %v10126 = vsel %vm355, %v10062, 0.0
    %v10127 = vsel %vm356, %v10063, 0.0
    %v10128 = vsel %vm357, %v10064, 0.0
    %v10129 = vsel %vm358, %v10065, 0.0
    %v10130 = vsel %vm359, %v10066, 0.0
    %v10131 = vsel %vm360, %v10067, 0.0
    %v10132 = vsel %vm361, %v10068, 0.0
    %v10133 = vsel %vm362, %v10069, 0.0
    %v10134 = vsel %vm363, %v10070, 0.0
    %v10135 = vsel %vm364, %v10071, 0.0
    %v10136 = vsel %vm365, %v10072, 0.0
    %v10137 = vsel %vm366, %v10073, 0.0
    %v10138 = vsel %vm367, %v10074, 0.0
    %v10139 = vsel %vm368, %v10075, 0.0
    %v10140 = vsel %vm369, %v10076, 0.0
    %v10141 = vsel %vm370, %v10077, 0.0
    %v10142 = vsel %vm371, %v10078, 0.0
    %v10143 = vsel %vm372, %v10079, 0.0
    %v10144 = vsel %vm373, %v10080, 0.0
    %v10145 = vsel %vm374, %v10081, 0.0
    %v10146 = vsel %vm375, %v10082, 0.0
    %v10147 = vsel %vm376, %v10083, 0.0
    %v10148 = vsel %vm377, %v10084, 0.0
    %v10149 = vsel %vm378, %v10085, 0.0
    %v10150 = vsel %vm379, %v10086, 0.0
    %v10151 = vsel %vm380, %v10087, 0.0
    %v10152 = vsel %vm381, %v10088, 0.0
    %v10153 = vsel %vm382, %v10089, 0.0
    %v10154 = vsel %vm383, %v10090, 0.0
    %v10155 = vsel %vm384, %v10091, 0.0
    %v10156 = vsel %vm385, %v10092, 0.0
    %v10157 = vsel %vm386, %v10093, 0.0
    %v10158 = vsel %vm387, %v10094, 0.0
    %v10159 = vsel %vm388, %v10095, 0.0
    %v10160 = vsel %vm389, %v10096, 0.0
    %v10161 = vsel %vm390, %v10097, 0.0
    %v10162 = vsel %vm391, %v10098, 0.0
    %v10163 = vsel %vm392, %v10099, 0.0
    %v10164 = vsel %vm393, %v10100, 0.0
    %v10165 = vsel %vm394, %v10101, 0.0
    %v10166 = vsel %vm395, %v10102, 0.0
    %v10167 = vsel %vm396, %v10103, 0.0
    %v10168 = vsel %vm397, %v10104, 0.0
    %v10169 = vsel %vm398, %v10105, 0.0
    %v10170 = vsel %vm399, %v10106, 0.0
    %v10171 = vsel %vm400, %v10107, 0.0
    %v10172 = vsel %vm401, %v10108, 0.0
    %v10173 = vsel %vm402, %v10109, 0.0
    %v10174 = vsel %vm403, %v10110, 0.0
    %v10175 = vsel %vm404, %v10111, 0.0
    %v10176 = vsel %vm405, %v10112, 0.0
    %v10177 = vsel %vm406, %v10113, 0.0
    %v10178 = vsel %vm407, %v10114, 0.0
    %v10179 = vsel %vm408, %v10115, 0.0
    %v10180 = vsel %vm409, %v10116, 0.0
    %v10181 = vsel %vm410, %v10117, 0.0
    %v10182 = vsel %vm411, %v10118, 0.0
    %v10183 = vsel %vm412, %v10119, 0.0
    %v10184 = vsel %vm413, %v10120, 0.0
    %v10185 = vsel %vm414, %v10121, 0.0
    %v10186 = vpack.c.bf16 %v10123, %v10122
    %v10187 = vpack.c.bf16 %v10125, %v10124
    %v10188 = vpack.c.bf16 %v10127, %v10126
    %v10189 = vpack.c.bf16 %v10129, %v10128
    %v10190 = vpack.c.bf16 %v10131, %v10130
    %v10191 = vpack.c.bf16 %v10133, %v10132
    %v10192 = vpack.c.bf16 %v10135, %v10134
    %v10193 = vpack.c.bf16 %v10137, %v10136
    %v10194 = vpack.c.bf16 %v10139, %v10138
    %v10195 = vpack.c.bf16 %v10141, %v10140
    %v10196 = vpack.c.bf16 %v10143, %v10142
    %v10197 = vpack.c.bf16 %v10145, %v10144
    %v10198 = vpack.c.bf16 %v10147, %v10146
    %v10199 = vpack.c.bf16 %v10149, %v10148
    %v10200 = vpack.c.bf16 %v10151, %v10150
    %v10201 = vpack.c.bf16 %v10153, %v10152
    %v10202 = vpack.c.bf16 %v10155, %v10154
    %v10203 = vpack.c.bf16 %v10157, %v10156
    %v10204 = vpack.c.bf16 %v10159, %v10158
    %v10205 = vpack.c.bf16 %v10161, %v10160
    %v10206 = vpack.c.bf16 %v10163, %v10162
    %v10207 = vpack.c.bf16 %v10165, %v10164
    %v10208 = vpack.c.bf16 %v10167, %v10166
    %v10209 = vpack.c.bf16 %v10169, %v10168
    %v10210 = vpack.c.bf16 %v10171, %v10170
    %v10211 = vpack.c.bf16 %v10173, %v10172
    %v10212 = vpack.c.bf16 %v10175, %v10174
    %v10213 = vpack.c.bf16 %v10177, %v10176
    %v10214 = vpack.c.bf16 %v10179, %v10178
    %v10215 = vpack.c.bf16 %v10181, %v10180
    %v10216 = vpack.c.bf16 %v10183, %v10182
    %v10217 = vpack.c.bf16 %v10185, %v10184
    %s10218 = scalar_lea.vmem %s3, 448
    %v10219 = vld [vmem:[%s10218] sm:$0xf]
    %v10220 = vld [vmem:[%s10218 + $0x4] sm:$0xf]
    %v10221 = vld [vmem:[%s10218 + $0x8] sm:$0xf]
    %v10222 = vld [vmem:[%s10218 + $0xc] sm:$0xf]
    %v10223 = vld [vmem:[%s10218 + $0x10] sm:$0xf]
    %v10224 = vld [vmem:[%s10218 + $0x14] sm:$0xf]
    %v10225 = vld [vmem:[%s10218 + $0x18] sm:$0xf]
    %v10226 = vld [vmem:[%s10218 + $0x1c] sm:$0xf]
    %v10227 = vld [vmem:[%s10218 + $0x20] sm:$0xf]
    %v10228 = vld [vmem:[%s10218 + $0x24] sm:$0xf]
    %v10229 = vld [vmem:[%s10218 + $0x28] sm:$0xf]
    %v10230 = vld [vmem:[%s10218 + $0x2c] sm:$0xf]
    %v10231 = vld [vmem:[%s10218 + $0x30] sm:$0xf]
    %v10232 = vld [vmem:[%s10218 + $0x34] sm:$0xf]
    %v10233 = vld [vmem:[%s10218 + $0x38] sm:$0xf]
    %v10234 = vld [vmem:[%s10218 + $0x3c] sm:$0xf]
    %v10251 = vunpack.c.l.b16 %v10219
    %v10252 = vunpack.c.l.b16 %v10220
    %v10253 = vunpack.c.l.b16 %v10221
    %v10254 = vunpack.c.l.b16 %v10222
    %v10255 = vunpack.c.l.b16 %v10223
    %v10256 = vunpack.c.l.b16 %v10224
    %v10257 = vunpack.c.l.b16 %v10225
    %v10258 = vunpack.c.l.b16 %v10226
    %v10259 = vunpack.c.l.b16 %v10227
    %v10260 = vunpack.c.l.b16 %v10228
    %v10261 = vunpack.c.l.b16 %v10229
    %v10262 = vunpack.c.l.b16 %v10230
    %v10263 = vunpack.c.l.b16 %v10231
    %v10264 = vunpack.c.l.b16 %v10232
    %v10265 = vunpack.c.l.b16 %v10233
    %v10266 = vunpack.c.l.b16 %v10234
    %v10267 = vpack.c.b16 %v10252, %v10251
    %v10268 = vpack.c.b16 %v10254, %v10253
    %v10269 = vpack.c.b16 %v10256, %v10255
    %v10270 = vpack.c.b16 %v10258, %v10257
    %v10271 = vpack.c.b16 %v10260, %v10259
    %v10272 = vpack.c.b16 %v10262, %v10261
    %v10273 = vpack.c.b16 %v10264, %v10263
    %v10274 = vpack.c.b16 %v10266, %v10265
    %10283 = vmatprep.subr.bf16.mxu0 0
    %10284 = vmatpush1.bf16.msra.mxu0 %v10274
    %10285 = vmatprep.subr.bf16.mxu0 0
    %10286 = vmatpush1.bf16.msra.mxu0 %v10273
    %10287 = vmatprep.subr.bf16.mxu0 0
    %10288 = vmatpush1.bf16.msra.mxu0 %v10272
    %10289 = vmatprep.subr.bf16.mxu0 0
    %10290 = vmatpush1.bf16.msra.mxu0 %v10271
    %10291 = vmatprep.subr.bf16.mxu0 0
    %10292 = vmatpush1.bf16.msra.mxu0 %v10270
    %10293 = vmatprep.subr.bf16.mxu0 0
    %10294 = vmatpush1.bf16.msra.mxu0 %v10269
    %10295 = vmatprep.subr.bf16.mxu0 0
    %10296 = vmatpush1.bf16.msra.mxu0 %v10268
    %10297 = vmatprep.subr.bf16.mxu0 0
    %10298 = vmatpush1.bf16.msra.mxu0 %v10267
    %10299 = vmatprep.subr.bf16.mxu0 0
    %10300 = vmatpush2.bf16.msra.mxu0 0
    %10301 = vmatprep.subr.bf16.mxu0 0
    %10302 = vmatpush2.bf16.msra.mxu0 0
    %10303 = vmatprep.subr.bf16.mxu0 0
    %10304 = vmatpush2.bf16.msra.mxu0 0
    %10305 = vmatprep.subr.bf16.mxu0 0
    %10306 = vmatpush2.bf16.msra.mxu0 0
    %10307 = vmatprep.subr.bf16.mxu0 0
    %10308 = vmatpush2.bf16.msra.mxu0 0
    %10309 = vmatprep.subr.bf16.mxu0 0
    %10310 = vmatpush2.bf16.msra.mxu0 0
    %10311 = vmatprep.subr.bf16.mxu0 0
    %10312 = vmatpush2.bf16.msra.mxu0 0
    %10313 = vmatprep.subr.bf16.mxu0 0
    %10314 = vmatpush2.bf16.msra.mxu0 0
    %10315 = vmatprep.mubr.bf16.mxu0 0
    %10316 = vmatmul.mubr.bf16.gmra.mxu0 %v10186
    %v10317 = vpop.f32.mrf.mxu0
    %v10318 = vadd.f32 0.0, %v10317
    %v10319 = vpop.f32.mrf.mxu0
    %v10320 = vpop.f32.mrf.mxu0
    %v10321 = vadd.f32 0.0, %v10320
    %v10322 = vpop.f32.mrf.mxu0
    %10323 = vmatprep.mubr.bf16.mxu0 0
    %10324 = vmatmul.mubr.bf16.gmra.mxu0 %v10187
    %v10325 = vpop.f32.mrf.mxu0
    %v10326 = vadd.f32 0.0, %v10325
    %v10327 = vpop.f32.mrf.mxu0
    %v10328 = vpop.f32.mrf.mxu0
    %v10329 = vadd.f32 0.0, %v10328
    %v10330 = vpop.f32.mrf.mxu0
    %10331 = vmatprep.mubr.bf16.mxu0 0
    %10332 = vmatmul.mubr.bf16.gmra.mxu0 %v10188
    %v10333 = vpop.f32.mrf.mxu0
    %v10334 = vadd.f32 0.0, %v10333
    %v10335 = vpop.f32.mrf.mxu0
    %v10336 = vpop.f32.mrf.mxu0
    %v10337 = vadd.f32 0.0, %v10336
    %v10338 = vpop.f32.mrf.mxu0
    %10339 = vmatprep.mubr.bf16.mxu0 0
    %10340 = vmatmul.mubr.bf16.gmra.mxu0 %v10189
    %v10341 = vpop.f32.mrf.mxu0
    %v10342 = vadd.f32 0.0, %v10341
    %v10343 = vpop.f32.mrf.mxu0
    %v10344 = vpop.f32.mrf.mxu0
    %v10345 = vadd.f32 0.0, %v10344
    %v10346 = vpop.f32.mrf.mxu0
    %10347 = vmatprep.mubr.bf16.mxu0 0
    %10348 = vmatmul.mubr.bf16.gmra.mxu0 %v10190
    %v10349 = vpop.f32.mrf.mxu0
    %v10350 = vadd.f32 0.0, %v10349
    %v10351 = vpop.f32.mrf.mxu0
    %v10352 = vpop.f32.mrf.mxu0
    %v10353 = vadd.f32 0.0, %v10352
    %v10354 = vpop.f32.mrf.mxu0
    %10355 = vmatprep.mubr.bf16.mxu0 0
    %10356 = vmatmul.mubr.bf16.gmra.mxu0 %v10191
    %v10357 = vpop.f32.mrf.mxu0
    %v10358 = vadd.f32 0.0, %v10357
    %v10359 = vpop.f32.mrf.mxu0
    %v10360 = vpop.f32.mrf.mxu0
    %v10361 = vadd.f32 0.0, %v10360
    %v10362 = vpop.f32.mrf.mxu0
    %10363 = vmatprep.mubr.bf16.mxu0 0
    %10364 = vmatmul.mubr.bf16.gmra.mxu0 %v10192
    %v10365 = vpop.f32.mrf.mxu0
    %v10366 = vadd.f32 0.0, %v10365
    %v10367 = vpop.f32.mrf.mxu0
    %v10368 = vpop.f32.mrf.mxu0
    %v10369 = vadd.f32 0.0, %v10368
    %v10370 = vpop.f32.mrf.mxu0
    %10371 = vmatprep.mubr.bf16.mxu0 0
    %10372 = vmatmul.mubr.bf16.gmra.mxu0 %v10193
    %v10373 = vpop.f32.mrf.mxu0
    %v10374 = vadd.f32 0.0, %v10373
    %v10375 = vpop.f32.mrf.mxu0
    %v10376 = vpop.f32.mrf.mxu0
    %v10377 = vadd.f32 0.0, %v10376
    %v10378 = vpop.f32.mrf.mxu0
    %10379 = vmatprep.mubr.bf16.mxu0 0
    %10380 = vmatmul.mubr.bf16.gmra.mxu0 %v10194
    %v10381 = vpop.f32.mrf.mxu0
    %v10382 = vadd.f32 0.0, %v10381
    %v10383 = vpop.f32.mrf.mxu0
    %v10384 = vpop.f32.mrf.mxu0
    %v10385 = vadd.f32 0.0, %v10384
    %v10386 = vpop.f32.mrf.mxu0
    %10387 = vmatprep.mubr.bf16.mxu0 0
    %10388 = vmatmul.mubr.bf16.gmra.mxu0 %v10195
    %v10389 = vpop.f32.mrf.mxu0
    %v10390 = vadd.f32 0.0, %v10389
    %v10391 = vpop.f32.mrf.mxu0
    %v10392 = vpop.f32.mrf.mxu0
    %v10393 = vadd.f32 0.0, %v10392
    %v10394 = vpop.f32.mrf.mxu0
    %10395 = vmatprep.mubr.bf16.mxu0 0
    %10396 = vmatmul.mubr.bf16.gmra.mxu0 %v10196
    %v10397 = vpop.f32.mrf.mxu0
    %v10398 = vadd.f32 0.0, %v10397
    %v10399 = vpop.f32.mrf.mxu0
    %v10400 = vpop.f32.mrf.mxu0
    %v10401 = vadd.f32 0.0, %v10400
    %v10402 = vpop.f32.mrf.mxu0
    %10403 = vmatprep.mubr.bf16.mxu0 0
    %10404 = vmatmul.mubr.bf16.gmra.mxu0 %v10197
    %v10405 = vpop.f32.mrf.mxu0
    %v10406 = vadd.f32 0.0, %v10405
    %v10407 = vpop.f32.mrf.mxu0
    %v10408 = vpop.f32.mrf.mxu0
    %v10409 = vadd.f32 0.0, %v10408
    %v10410 = vpop.f32.mrf.mxu0
    %10411 = vmatprep.mubr.bf16.mxu0 0
    %10412 = vmatmul.mubr.bf16.gmra.mxu0 %v10198
    %v10413 = vpop.f32.mrf.mxu0
    %v10414 = vadd.f32 0.0, %v10413
    %v10415 = vpop.f32.mrf.mxu0
    %v10416 = vpop.f32.mrf.mxu0
    %v10417 = vadd.f32 0.0, %v10416
    %v10418 = vpop.f32.mrf.mxu0
    %10419 = vmatprep.mubr.bf16.mxu0 0
    %10420 = vmatmul.mubr.bf16.gmra.mxu0 %v10199
    %v10421 = vpop.f32.mrf.mxu0
    %v10422 = vadd.f32 0.0, %v10421
    %v10423 = vpop.f32.mrf.mxu0
    %v10424 = vpop.f32.mrf.mxu0
    %v10425 = vadd.f32 0.0, %v10424
    %v10426 = vpop.f32.mrf.mxu0
    %10427 = vmatprep.mubr.bf16.mxu0 0
    %10428 = vmatmul.mubr.bf16.gmra.mxu0 %v10200
    %v10429 = vpop.f32.mrf.mxu0
    %v10430 = vadd.f32 0.0, %v10429
    %v10431 = vpop.f32.mrf.mxu0
    %v10432 = vpop.f32.mrf.mxu0
    %v10433 = vadd.f32 0.0, %v10432
    %v10434 = vpop.f32.mrf.mxu0
    %10435 = vmatprep.mubr.bf16.mxu0 0
    %10436 = vmatmul.mubr.bf16.gmra.mxu0 %v10201
    %v10437 = vpop.f32.mrf.mxu0
    %v10438 = vadd.f32 0.0, %v10437
    %v10439 = vpop.f32.mrf.mxu0
    %v10440 = vpop.f32.mrf.mxu0
    %v10441 = vadd.f32 0.0, %v10440
    %v10442 = vpop.f32.mrf.mxu0
    %10443 = vmatprep.mubr.bf16.mxu0 0
    %10444 = vmatmul.mubr.bf16.gmra.mxu0 %v10202
    %v10445 = vpop.f32.mrf.mxu0
    %v10446 = vadd.f32 0.0, %v10445
    %v10447 = vpop.f32.mrf.mxu0
    %v10448 = vpop.f32.mrf.mxu0
    %v10449 = vadd.f32 0.0, %v10448
    %v10450 = vpop.f32.mrf.mxu0
    %10451 = vmatprep.mubr.bf16.mxu0 0
    %10452 = vmatmul.mubr.bf16.gmra.mxu0 %v10203
    %v10453 = vpop.f32.mrf.mxu0
    %v10454 = vadd.f32 0.0, %v10453
    %v10455 = vpop.f32.mrf.mxu0
    %v10456 = vpop.f32.mrf.mxu0
    %v10457 = vadd.f32 0.0, %v10456
    %v10458 = vpop.f32.mrf.mxu0
    %10459 = vmatprep.mubr.bf16.mxu0 0
    %10460 = vmatmul.mubr.bf16.gmra.mxu0 %v10204
    %v10461 = vpop.f32.mrf.mxu0
    %v10462 = vadd.f32 0.0, %v10461
    %v10463 = vpop.f32.mrf.mxu0
    %v10464 = vpop.f32.mrf.mxu0
    %v10465 = vadd.f32 0.0, %v10464
    %v10466 = vpop.f32.mrf.mxu0
    %10467 = vmatprep.mubr.bf16.mxu0 0
    %10468 = vmatmul.mubr.bf16.gmra.mxu0 %v10205
    %v10469 = vpop.f32.mrf.mxu0
    %v10470 = vadd.f32 0.0, %v10469
    %v10471 = vpop.f32.mrf.mxu0
    %v10472 = vpop.f32.mrf.mxu0
    %v10473 = vadd.f32 0.0, %v10472
    %v10474 = vpop.f32.mrf.mxu0
    %10475 = vmatprep.mubr.bf16.mxu0 0
    %10476 = vmatmul.mubr.bf16.gmra.mxu0 %v10206
    %v10477 = vpop.f32.mrf.mxu0
    %v10478 = vadd.f32 0.0, %v10477
    %v10479 = vpop.f32.mrf.mxu0
    %v10480 = vpop.f32.mrf.mxu0
    %v10481 = vadd.f32 0.0, %v10480
    %v10482 = vpop.f32.mrf.mxu0
    %10483 = vmatprep.mubr.bf16.mxu0 0
    %10484 = vmatmul.mubr.bf16.gmra.mxu0 %v10207
    %v10485 = vpop.f32.mrf.mxu0
    %v10486 = vadd.f32 0.0, %v10485
    %v10487 = vpop.f32.mrf.mxu0
    %v10488 = vpop.f32.mrf.mxu0
    %v10489 = vadd.f32 0.0, %v10488
    %v10490 = vpop.f32.mrf.mxu0
    %10491 = vmatprep.mubr.bf16.mxu0 0
    %10492 = vmatmul.mubr.bf16.gmra.mxu0 %v10208
    %v10493 = vpop.f32.mrf.mxu0
    %v10494 = vadd.f32 0.0, %v10493
    %v10495 = vpop.f32.mrf.mxu0
    %v10496 = vpop.f32.mrf.mxu0
    %v10497 = vadd.f32 0.0, %v10496
    %v10498 = vpop.f32.mrf.mxu0
    %10499 = vmatprep.mubr.bf16.mxu0 0
    %10500 = vmatmul.mubr.bf16.gmra.mxu0 %v10209
    %v10501 = vpop.f32.mrf.mxu0
    %v10502 = vadd.f32 0.0, %v10501
    %v10503 = vpop.f32.mrf.mxu0
    %v10504 = vpop.f32.mrf.mxu0
    %v10505 = vadd.f32 0.0, %v10504
    %v10506 = vpop.f32.mrf.mxu0
    %10507 = vmatprep.mubr.bf16.mxu0 0
    %10508 = vmatmul.mubr.bf16.gmra.mxu0 %v10210
    %v10509 = vpop.f32.mrf.mxu0
    %v10510 = vadd.f32 0.0, %v10509
    %v10511 = vpop.f32.mrf.mxu0
    %v10512 = vpop.f32.mrf.mxu0
    %v10513 = vadd.f32 0.0, %v10512
    %v10514 = vpop.f32.mrf.mxu0
    %10515 = vmatprep.mubr.bf16.mxu0 0
    %10516 = vmatmul.mubr.bf16.gmra.mxu0 %v10211
    %v10517 = vpop.f32.mrf.mxu0
    %v10518 = vadd.f32 0.0, %v10517
    %v10519 = vpop.f32.mrf.mxu0
    %v10520 = vpop.f32.mrf.mxu0
    %v10521 = vadd.f32 0.0, %v10520
    %v10522 = vpop.f32.mrf.mxu0
    %10523 = vmatprep.mubr.bf16.mxu0 0
    %10524 = vmatmul.mubr.bf16.gmra.mxu0 %v10212
    %v10525 = vpop.f32.mrf.mxu0
    %v10526 = vadd.f32 0.0, %v10525
    %v10527 = vpop.f32.mrf.mxu0
    %v10528 = vpop.f32.mrf.mxu0
    %v10529 = vadd.f32 0.0, %v10528
    %v10530 = vpop.f32.mrf.mxu0
    %10531 = vmatprep.mubr.bf16.mxu0 0
    %10532 = vmatmul.mubr.bf16.gmra.mxu0 %v10213
    %v10533 = vpop.f32.mrf.mxu0
    %v10534 = vadd.f32 0.0, %v10533
    %v10535 = vpop.f32.mrf.mxu0
    %v10536 = vpop.f32.mrf.mxu0
    %v10537 = vadd.f32 0.0, %v10536
    %v10538 = vpop.f32.mrf.mxu0
    %10539 = vmatprep.mubr.bf16.mxu0 0
    %10540 = vmatmul.mubr.bf16.gmra.mxu0 %v10214
    %v10541 = vpop.f32.mrf.mxu0
    %v10542 = vadd.f32 0.0, %v10541
    %v10543 = vpop.f32.mrf.mxu0
    %v10544 = vpop.f32.mrf.mxu0
    %v10545 = vadd.f32 0.0, %v10544
    %v10546 = vpop.f32.mrf.mxu0
    %10547 = vmatprep.mubr.bf16.mxu0 0
    %10548 = vmatmul.mubr.bf16.gmra.mxu0 %v10215
    %v10549 = vpop.f32.mrf.mxu0
    %v10550 = vadd.f32 0.0, %v10549
    %v10551 = vpop.f32.mrf.mxu0
    %v10552 = vpop.f32.mrf.mxu0
    %v10553 = vadd.f32 0.0, %v10552
    %v10554 = vpop.f32.mrf.mxu0
    %10555 = vmatprep.mubr.bf16.mxu0 0
    %10556 = vmatmul.mubr.bf16.gmra.mxu0 %v10216
    %v10557 = vpop.f32.mrf.mxu0
    %v10558 = vadd.f32 0.0, %v10557
    %v10559 = vpop.f32.mrf.mxu0
    %v10560 = vpop.f32.mrf.mxu0
    %v10561 = vadd.f32 0.0, %v10560
    %v10562 = vpop.f32.mrf.mxu0
    %10563 = vmatprep.mubr.bf16.mxu0 0
    %10564 = vmatmul.mubr.bf16.gmra.mxu0 %v10217
    %v10565 = vpop.f32.mrf.mxu0
    %v10566 = vadd.f32 0.0, %v10565
    %v10567 = vpop.f32.mrf.mxu0
    %v10568 = vpop.f32.mrf.mxu0
    %v10569 = vadd.f32 0.0, %v10568
    %v10570 = vpop.f32.mrf.mxu0
    %10571 = vdwg.mxu0
    %v10572 = vadd.f32 %v9994, %v10318
    %v10573 = vadd.f32 %v9995, %v10321
    %v10574 = vadd.f32 %v9996, %v10326
    %v10575 = vadd.f32 %v9997, %v10329
    %v10576 = vadd.f32 %v9998, %v10334
    %v10577 = vadd.f32 %v9999, %v10337
    %v10578 = vadd.f32 %v10000, %v10342
    %v10579 = vadd.f32 %v10001, %v10345
    %v10580 = vadd.f32 %v10002, %v10350
    %v10581 = vadd.f32 %v10003, %v10353
    %v10582 = vadd.f32 %v10004, %v10358
    %v10583 = vadd.f32 %v10005, %v10361
    %v10584 = vadd.f32 %v10006, %v10366
    %v10585 = vadd.f32 %v10007, %v10369
    %v10586 = vadd.f32 %v10008, %v10374
    %v10587 = vadd.f32 %v10009, %v10377
    %v10588 = vadd.f32 %v10010, %v10382
    %v10589 = vadd.f32 %v10011, %v10385
    %v10590 = vadd.f32 %v10012, %v10390
    %v10591 = vadd.f32 %v10013, %v10393
    %v10592 = vadd.f32 %v10014, %v10398
    %v10593 = vadd.f32 %v10015, %v10401
    %v10594 = vadd.f32 %v10016, %v10406
    %v10595 = vadd.f32 %v10017, %v10409
    %v10596 = vadd.f32 %v10018, %v10414
    %v10597 = vadd.f32 %v10019, %v10417
    %v10598 = vadd.f32 %v10020, %v10422
    %v10599 = vadd.f32 %v10021, %v10425
    %v10600 = vadd.f32 %v10022, %v10430
    %v10601 = vadd.f32 %v10023, %v10433
    %v10602 = vadd.f32 %v10024, %v10438
    %v10603 = vadd.f32 %v10025, %v10441
    %v10604 = vadd.f32 %v10026, %v10446
    %v10605 = vadd.f32 %v10027, %v10449
    %v10606 = vadd.f32 %v10028, %v10454
    %v10607 = vadd.f32 %v10029, %v10457
    %v10608 = vadd.f32 %v10030, %v10462
    %v10609 = vadd.f32 %v10031, %v10465
    %v10610 = vadd.f32 %v10032, %v10470
    %v10611 = vadd.f32 %v10033, %v10473
    %v10612 = vadd.f32 %v10034, %v10478
    %v10613 = vadd.f32 %v10035, %v10481
    %v10614 = vadd.f32 %v10036, %v10486
    %v10615 = vadd.f32 %v10037, %v10489
    %v10616 = vadd.f32 %v10038, %v10494
    %v10617 = vadd.f32 %v10039, %v10497
    %v10618 = vadd.f32 %v10040, %v10502
    %v10619 = vadd.f32 %v10041, %v10505
    %v10620 = vadd.f32 %v10042, %v10510
    %v10621 = vadd.f32 %v10043, %v10513
    %v10622 = vadd.f32 %v10044, %v10518
    %v10623 = vadd.f32 %v10045, %v10521
    %v10624 = vadd.f32 %v10046, %v10526
    %v10625 = vadd.f32 %v10047, %v10529
    %v10626 = vadd.f32 %v10048, %v10534
    %v10627 = vadd.f32 %v10049, %v10537
    %v10628 = vadd.f32 %v10050, %v10542
    %v10629 = vadd.f32 %v10051, %v10545
    %v10630 = vadd.f32 %v10052, %v10550
    %v10631 = vadd.f32 %v10053, %v10553
    %v10632 = vadd.f32 %v10054, %v10558
    %v10633 = vadd.f32 %v10055, %v10561
    %v10634 = vadd.f32 %v10056, %v10566
    %v10635 = vadd.f32 %v10057, %v10569
    %v10636 = vld [vmem:[#allocation2 + $0x29] sm:$0xff]
    %v10637 = vld [vmem:[#allocation2 + $0x31] sm:$0xff]
    %v10638 = vld [vmem:[#allocation2 + $0x39] sm:$0xff]
    %v10639 = vld [vmem:[#allocation2 + $0x41] sm:$0xff]
    %v10640 = vld [vmem:[#allocation2 + $0x49] sm:$0xff]
    %v10641 = vld [vmem:[#allocation2 + $0x51] sm:$0xff]
    %v10642 = vld [vmem:[#allocation2 + $0x59] sm:$0xff]
    %v10643 = vld [vmem:[#allocation2 + $0x61] sm:$0xff]
    %v10644 = vld [vmem:[#allocation2 + $0x69] sm:$0xff]
    %v10645 = vld [vmem:[#allocation2 + $0x71] sm:$0xff]
    %v10646 = vld [vmem:[#allocation2 + $0x79] sm:$0xff]
    %v10647 = vld [vmem:[#allocation2 + $0x81] sm:$0xff]
    %v10648 = vld [vmem:[#allocation2 + $0x89] sm:$0xff]
    %v10649 = vld [vmem:[#allocation2 + $0x91] sm:$0xff]
    %v10650 = vld [vmem:[#allocation2 + $0x99] sm:$0xff]
    %v10651 = vld [vmem:[#allocation2 + $0xa1] sm:$0xff]
    %v10652 = vld [vmem:[#allocation2 + $0xa9] sm:$0xff]
    %v10653 = vld [vmem:[#allocation2 + $0xb1] sm:$0xff]
    %v10654 = vld [vmem:[#allocation2 + $0xb9] sm:$0xff]
    %v10655 = vld [vmem:[#allocation2 + $0xc1] sm:$0xff]
    %v10656 = vld [vmem:[#allocation2 + $0xc9] sm:$0xff]
    %v10657 = vld [vmem:[#allocation2 + $0xd1] sm:$0xff]
    %v10658 = vld [vmem:[#allocation2 + $0xd9] sm:$0xff]
    %v10659 = vld [vmem:[#allocation2 + $0xe1] sm:$0xff]
    %v10660 = vld [vmem:[#allocation2 + $0xe9] sm:$0xff]
    %v10661 = vld [vmem:[#allocation2 + $0xf1] sm:$0xff]
    %v10662 = vld [vmem:[#allocation2 + $0xf9] sm:$0xff]
    %v10663 = vld [vmem:[#allocation2 + $0x101] sm:$0xff]
    %v10664 = vld [vmem:[#allocation2 + $0x109] sm:$0xff]
    %v10665 = vld [vmem:[#allocation2 + $0x111] sm:$0xff]
    %v10666 = vld [vmem:[#allocation2 + $0x119] sm:$0xff]
    %v10667 = vld [vmem:[#allocation2 + $0x121] sm:$0xff]
    %v10668 = vld [vmem:[#allocation2 + $0x129] sm:$0xff]
    %v10669 = vld [vmem:[#allocation2 + $0x131] sm:$0xff]
    %v10670 = vld [vmem:[#allocation2 + $0x139] sm:$0xff]
    %v10671 = vld [vmem:[#allocation2 + $0x141] sm:$0xff]
    %v10672 = vld [vmem:[#allocation2 + $0x149] sm:$0xff]
    %v10673 = vld [vmem:[#allocation2 + $0x151] sm:$0xff]
    %v10674 = vld [vmem:[#allocation2 + $0x159] sm:$0xff]
    %v10675 = vld [vmem:[#allocation2 + $0x161] sm:$0xff]
    %v10676 = vld [vmem:[#allocation2 + $0x169] sm:$0xff]
    %v10677 = vld [vmem:[#allocation2 + $0x171] sm:$0xff]
    %v10678 = vld [vmem:[#allocation2 + $0x179] sm:$0xff]
    %v10679 = vld [vmem:[#allocation2 + $0x181] sm:$0xff]
    %v10680 = vld [vmem:[#allocation2 + $0x189] sm:$0xff]
    %v10681 = vld [vmem:[#allocation2 + $0x191] sm:$0xff]
    %v10682 = vld [vmem:[#allocation2 + $0x199] sm:$0xff]
    %v10683 = vld [vmem:[#allocation2 + $0x1a1] sm:$0xff]
    %v10684 = vld [vmem:[#allocation2 + $0x1a9] sm:$0xff]
    %v10685 = vld [vmem:[#allocation2 + $0x1b1] sm:$0xff]
    %v10686 = vld [vmem:[#allocation2 + $0x1b9] sm:$0xff]
    %v10687 = vld [vmem:[#allocation2 + $0x1c1] sm:$0xff]
    %v10688 = vld [vmem:[#allocation2 + $0x1c9] sm:$0xff]
    %v10689 = vld [vmem:[#allocation2 + $0x1d1] sm:$0xff]
    %v10690 = vld [vmem:[#allocation2 + $0x1d9] sm:$0xff]
    %v10691 = vld [vmem:[#allocation2 + $0x1e1] sm:$0xff]
    %v10692 = vld [vmem:[#allocation2 + $0x1e9] sm:$0xff]
    %v10693 = vld [vmem:[#allocation2 + $0x1f1] sm:$0xff]
    %v10694 = vld [vmem:[#allocation2 + $0x1f9] sm:$0xff]
    %v10695 = vld [vmem:[#allocation2 + $0x201] sm:$0xff]
    %v10696 = vld [vmem:[#allocation2 + $0x209] sm:$0xff]
    %v10697 = vld [vmem:[#allocation2 + $0x211] sm:$0xff]
    %v10698 = vld [vmem:[#allocation2 + $0x219] sm:$0xff]
    %v10699 = vld [vmem:[#allocation2 + $0x221] sm:$0xff]
    %v10700 = vsel %vm5428, %v10636, 0.0
    %v10701 = vsel %vm5429, %v10637, 0.0
    %v10702 = vsel %vm5430, %v10638, 0.0
    %v10703 = vsel %vm5431, %v10639, 0.0
    %v10704 = vsel %vm5432, %v10640, 0.0
    %v10705 = vsel %vm5433, %v10641, 0.0
    %v10706 = vsel %vm5434, %v10642, 0.0
    %v10707 = vsel %vm5435, %v10643, 0.0
    %v10708 = vsel %vm5436, %v10644, 0.0
    %v10709 = vsel %vm5437, %v10645, 0.0
    %v10710 = vsel %vm5438, %v10646, 0.0
    %v10711 = vsel %vm5439, %v10647, 0.0
    %v10712 = vsel %vm5440, %v10648, 0.0
    %v10713 = vsel %vm5441, %v10649, 0.0
    %v10714 = vsel %vm5442, %v10650, 0.0
    %v10715 = vsel %vm5443, %v10651, 0.0
    %v10716 = vsel %vm5444, %v10652, 0.0
    %v10717 = vsel %vm5445, %v10653, 0.0
    %v10718 = vsel %vm5446, %v10654, 0.0
    %v10719 = vsel %vm5447, %v10655, 0.0
    %v10720 = vsel %vm5448, %v10656, 0.0
    %v10721 = vsel %vm5449, %v10657, 0.0
    %v10722 = vsel %vm5450, %v10658, 0.0
    %v10723 = vsel %vm5451, %v10659, 0.0
    %v10724 = vsel %vm5452, %v10660, 0.0
    %v10725 = vsel %vm5453, %v10661, 0.0
    %v10726 = vsel %vm5454, %v10662, 0.0
    %v10727 = vsel %vm5455, %v10663, 0.0
    %v10728 = vsel %vm5456, %v10664, 0.0
    %v10729 = vsel %vm5457, %v10665, 0.0
    %v10730 = vsel %vm5458, %v10666, 0.0
    %v10731 = vsel %vm5459, %v10667, 0.0
    %v10732 = vsel %vm5460, %v10668, 0.0
    %v10733 = vsel %vm5461, %v10669, 0.0
    %v10734 = vsel %vm5462, %v10670, 0.0
    %v10735 = vsel %vm5463, %v10671, 0.0
    %v10736 = vsel %vm5464, %v10672, 0.0
    %v10737 = vsel %vm5465, %v10673, 0.0
    %v10738 = vsel %vm5466, %v10674, 0.0
    %v10739 = vsel %vm5467, %v10675, 0.0
    %v10740 = vsel %vm5468, %v10676, 0.0
    %v10741 = vsel %vm5469, %v10677, 0.0
    %v10742 = vsel %vm5470, %v10678, 0.0
    %v10743 = vsel %vm5471, %v10679, 0.0
    %v10744 = vsel %vm5472, %v10680, 0.0
    %v10745 = vsel %vm5473, %v10681, 0.0
    %v10746 = vsel %vm5474, %v10682, 0.0
    %v10747 = vsel %vm5475, %v10683, 0.0
    %v10748 = vsel %vm5476, %v10684, 0.0
    %v10749 = vsel %vm5477, %v10685, 0.0
    %v10750 = vsel %vm5478, %v10686, 0.0
    %v10751 = vsel %vm5479, %v10687, 0.0
    %v10752 = vsel %vm5480, %v10688, 0.0
    %v10753 = vsel %vm5481, %v10689, 0.0
    %v10754 = vsel %vm5482, %v10690, 0.0
    %v10755 = vsel %vm5483, %v10691, 0.0
    %v10756 = vsel %vm5484, %v10692, 0.0
    %v10757 = vsel %vm5485, %v10693, 0.0
    %v10758 = vsel %vm5486, %v10694, 0.0
    %v10759 = vsel %vm5487, %v10695, 0.0
    %v10760 = vsel %vm5488, %v10696, 0.0
    %v10761 = vsel %vm5489, %v10697, 0.0
    %v10762 = vsel %vm5490, %v10698, 0.0
    %v10763 = vsel %vm5491, %v10699, 0.0
    %v10764 = vpack.c.bf16 %v10701, %v10700
    %v10765 = vpack.c.bf16 %v10703, %v10702
    %v10766 = vpack.c.bf16 %v10705, %v10704
    %v10767 = vpack.c.bf16 %v10707, %v10706
    %v10768 = vpack.c.bf16 %v10709, %v10708
    %v10769 = vpack.c.bf16 %v10711, %v10710
    %v10770 = vpack.c.bf16 %v10713, %v10712
    %v10771 = vpack.c.bf16 %v10715, %v10714
    %v10772 = vpack.c.bf16 %v10717, %v10716
    %v10773 = vpack.c.bf16 %v10719, %v10718
    %v10774 = vpack.c.bf16 %v10721, %v10720
    %v10775 = vpack.c.bf16 %v10723, %v10722
    %v10776 = vpack.c.bf16 %v10725, %v10724
    %v10777 = vpack.c.bf16 %v10727, %v10726
    %v10778 = vpack.c.bf16 %v10729, %v10728
    %v10779 = vpack.c.bf16 %v10731, %v10730
    %v10780 = vpack.c.bf16 %v10733, %v10732
    %v10781 = vpack.c.bf16 %v10735, %v10734
    %v10782 = vpack.c.bf16 %v10737, %v10736
    %v10783 = vpack.c.bf16 %v10739, %v10738
    %v10784 = vpack.c.bf16 %v10741, %v10740
    %v10785 = vpack.c.bf16 %v10743, %v10742
    %v10786 = vpack.c.bf16 %v10745, %v10744
    %v10787 = vpack.c.bf16 %v10747, %v10746
    %v10788 = vpack.c.bf16 %v10749, %v10748
    %v10789 = vpack.c.bf16 %v10751, %v10750
    %v10790 = vpack.c.bf16 %v10753, %v10752
    %v10791 = vpack.c.bf16 %v10755, %v10754
    %v10792 = vpack.c.bf16 %v10757, %v10756
    %v10793 = vpack.c.bf16 %v10759, %v10758
    %v10794 = vpack.c.bf16 %v10761, %v10760
    %v10795 = vpack.c.bf16 %v10763, %v10762
    %s10796 = scalar_lea.vmem %s3, 512
    %v10797 = vld [vmem:[%s10796] sm:$0xf]
    %v10798 = vld [vmem:[%s10796 + $0x4] sm:$0xf]
    %v10799 = vld [vmem:[%s10796 + $0x8] sm:$0xf]
    %v10800 = vld [vmem:[%s10796 + $0xc] sm:$0xf]
    %v10801 = vld [vmem:[%s10796 + $0x10] sm:$0xf]
    %v10802 = vld [vmem:[%s10796 + $0x14] sm:$0xf]
    %v10803 = vld [vmem:[%s10796 + $0x18] sm:$0xf]
    %v10804 = vld [vmem:[%s10796 + $0x1c] sm:$0xf]
    %v10805 = vld [vmem:[%s10796 + $0x20] sm:$0xf]
    %v10806 = vld [vmem:[%s10796 + $0x24] sm:$0xf]
    %v10807 = vld [vmem:[%s10796 + $0x28] sm:$0xf]
    %v10808 = vld [vmem:[%s10796 + $0x2c] sm:$0xf]
    %v10809 = vld [vmem:[%s10796 + $0x30] sm:$0xf]
    %v10810 = vld [vmem:[%s10796 + $0x34] sm:$0xf]
    %v10811 = vld [vmem:[%s10796 + $0x38] sm:$0xf]
    %v10812 = vld [vmem:[%s10796 + $0x3c] sm:$0xf]
    %v10829 = vunpack.c.l.b16 %v10797
    %v10830 = vunpack.c.l.b16 %v10798
    %v10831 = vunpack.c.l.b16 %v10799
    %v10832 = vunpack.c.l.b16 %v10800
    %v10833 = vunpack.c.l.b16 %v10801
    %v10834 = vunpack.c.l.b16 %v10802
    %v10835 = vunpack.c.l.b16 %v10803
    %v10836 = vunpack.c.l.b16 %v10804
    %v10837 = vunpack.c.l.b16 %v10805
    %v10838 = vunpack.c.l.b16 %v10806
    %v10839 = vunpack.c.l.b16 %v10807
    %v10840 = vunpack.c.l.b16 %v10808
    %v10841 = vunpack.c.l.b16 %v10809
    %v10842 = vunpack.c.l.b16 %v10810
    %v10843 = vunpack.c.l.b16 %v10811
    %v10844 = vunpack.c.l.b16 %v10812
    %v10845 = vpack.c.b16 %v10830, %v10829
    %v10846 = vpack.c.b16 %v10832, %v10831
    %v10847 = vpack.c.b16 %v10834, %v10833
    %v10848 = vpack.c.b16 %v10836, %v10835
    %v10849 = vpack.c.b16 %v10838, %v10837
    %v10850 = vpack.c.b16 %v10840, %v10839
    %v10851 = vpack.c.b16 %v10842, %v10841
    %v10852 = vpack.c.b16 %v10844, %v10843
    %10861 = vmatprep.subr.bf16.mxu0 0
    %10862 = vmatpush1.bf16.msra.mxu0 %v10852
    %10863 = vmatprep.subr.bf16.mxu0 0
    %10864 = vmatpush1.bf16.msra.mxu0 %v10851
    %10865 = vmatprep.subr.bf16.mxu0 0
    %10866 = vmatpush1.bf16.msra.mxu0 %v10850
    %10867 = vmatprep.subr.bf16.mxu0 0
    %10868 = vmatpush1.bf16.msra.mxu0 %v10849
    %10869 = vmatprep.subr.bf16.mxu0 0
    %10870 = vmatpush1.bf16.msra.mxu0 %v10848
    %10871 = vmatprep.subr.bf16.mxu0 0
    %10872 = vmatpush1.bf16.msra.mxu0 %v10847
    %10873 = vmatprep.subr.bf16.mxu0 0
    %10874 = vmatpush1.bf16.msra.mxu0 %v10846
    %10875 = vmatprep.subr.bf16.mxu0 0
    %10876 = vmatpush1.bf16.msra.mxu0 %v10845
    %10877 = vmatprep.subr.bf16.mxu0 0
    %10878 = vmatpush2.bf16.msra.mxu0 0
    %10879 = vmatprep.subr.bf16.mxu0 0
    %10880 = vmatpush2.bf16.msra.mxu0 0
    %10881 = vmatprep.subr.bf16.mxu0 0
    %10882 = vmatpush2.bf16.msra.mxu0 0
    %10883 = vmatprep.subr.bf16.mxu0 0
    %10884 = vmatpush2.bf16.msra.mxu0 0
    %10885 = vmatprep.subr.bf16.mxu0 0
    %10886 = vmatpush2.bf16.msra.mxu0 0
    %10887 = vmatprep.subr.bf16.mxu0 0
    %10888 = vmatpush2.bf16.msra.mxu0 0
    %10889 = vmatprep.subr.bf16.mxu0 0
    %10890 = vmatpush2.bf16.msra.mxu0 0
    %10891 = vmatprep.subr.bf16.mxu0 0
    %10892 = vmatpush2.bf16.msra.mxu0 0
    %10893 = vmatprep.mubr.bf16.mxu0 0
    %10894 = vmatmul.mubr.bf16.gmra.mxu0 %v10764
    %v10895 = vpop.f32.mrf.mxu0
    %v10896 = vadd.f32 0.0, %v10895
    %v10897 = vpop.f32.mrf.mxu0
    %v10898 = vpop.f32.mrf.mxu0
    %v10899 = vadd.f32 0.0, %v10898
    %v10900 = vpop.f32.mrf.mxu0
    %10901 = vmatprep.mubr.bf16.mxu0 0
    %10902 = vmatmul.mubr.bf16.gmra.mxu0 %v10765
    %v10903 = vpop.f32.mrf.mxu0
    %v10904 = vadd.f32 0.0, %v10903
    %v10905 = vpop.f32.mrf.mxu0
    %v10906 = vpop.f32.mrf.mxu0
    %v10907 = vadd.f32 0.0, %v10906
    %v10908 = vpop.f32.mrf.mxu0
    %10909 = vmatprep.mubr.bf16.mxu0 0
    %10910 = vmatmul.mubr.bf16.gmra.mxu0 %v10766
    %v10911 = vpop.f32.mrf.mxu0
    %v10912 = vadd.f32 0.0, %v10911
    %v10913 = vpop.f32.mrf.mxu0
    %v10914 = vpop.f32.mrf.mxu0
    %v10915 = vadd.f32 0.0, %v10914
    %v10916 = vpop.f32.mrf.mxu0
    %10917 = vmatprep.mubr.bf16.mxu0 0
    %10918 = vmatmul.mubr.bf16.gmra.mxu0 %v10767
    %v10919 = vpop.f32.mrf.mxu0
    %v10920 = vadd.f32 0.0, %v10919
    %v10921 = vpop.f32.mrf.mxu0
    %v10922 = vpop.f32.mrf.mxu0
    %v10923 = vadd.f32 0.0, %v10922
    %v10924 = vpop.f32.mrf.mxu0
    %10925 = vmatprep.mubr.bf16.mxu0 0
    %10926 = vmatmul.mubr.bf16.gmra.mxu0 %v10768
    %v10927 = vpop.f32.mrf.mxu0
    %v10928 = vadd.f32 0.0, %v10927
    %v10929 = vpop.f32.mrf.mxu0
    %v10930 = vpop.f32.mrf.mxu0
    %v10931 = vadd.f32 0.0, %v10930
    %v10932 = vpop.f32.mrf.mxu0
    %10933 = vmatprep.mubr.bf16.mxu0 0
    %10934 = vmatmul.mubr.bf16.gmra.mxu0 %v10769
    %v10935 = vpop.f32.mrf.mxu0
    %v10936 = vadd.f32 0.0, %v10935
    %v10937 = vpop.f32.mrf.mxu0
    %v10938 = vpop.f32.mrf.mxu0
    %v10939 = vadd.f32 0.0, %v10938
    %v10940 = vpop.f32.mrf.mxu0
    %10941 = vmatprep.mubr.bf16.mxu0 0
    %10942 = vmatmul.mubr.bf16.gmra.mxu0 %v10770
    %v10943 = vpop.f32.mrf.mxu0
    %v10944 = vadd.f32 0.0, %v10943
    %v10945 = vpop.f32.mrf.mxu0
    %v10946 = vpop.f32.mrf.mxu0
    %v10947 = vadd.f32 0.0, %v10946
    %v10948 = vpop.f32.mrf.mxu0
    %10949 = vmatprep.mubr.bf16.mxu0 0
    %10950 = vmatmul.mubr.bf16.gmra.mxu0 %v10771
    %v10951 = vpop.f32.mrf.mxu0
    %v10952 = vadd.f32 0.0, %v10951
    %v10953 = vpop.f32.mrf.mxu0
    %v10954 = vpop.f32.mrf.mxu0
    %v10955 = vadd.f32 0.0, %v10954
    %v10956 = vpop.f32.mrf.mxu0
    %10957 = vmatprep.mubr.bf16.mxu0 0
    %10958 = vmatmul.mubr.bf16.gmra.mxu0 %v10772
    %v10959 = vpop.f32.mrf.mxu0
    %v10960 = vadd.f32 0.0, %v10959
    %v10961 = vpop.f32.mrf.mxu0
    %v10962 = vpop.f32.mrf.mxu0
    %v10963 = vadd.f32 0.0, %v10962
    %v10964 = vpop.f32.mrf.mxu0
    %10965 = vmatprep.mubr.bf16.mxu0 0
    %10966 = vmatmul.mubr.bf16.gmra.mxu0 %v10773
    %v10967 = vpop.f32.mrf.mxu0
    %v10968 = vadd.f32 0.0, %v10967
    %v10969 = vpop.f32.mrf.mxu0
    %v10970 = vpop.f32.mrf.mxu0
    %v10971 = vadd.f32 0.0, %v10970
    %v10972 = vpop.f32.mrf.mxu0
    %10973 = vmatprep.mubr.bf16.mxu0 0
    %10974 = vmatmul.mubr.bf16.gmra.mxu0 %v10774
    %v10975 = vpop.f32.mrf.mxu0
    %v10976 = vadd.f32 0.0, %v10975
    %v10977 = vpop.f32.mrf.mxu0
    %v10978 = vpop.f32.mrf.mxu0
    %v10979 = vadd.f32 0.0, %v10978
    %v10980 = vpop.f32.mrf.mxu0
    %10981 = vmatprep.mubr.bf16.mxu0 0
    %10982 = vmatmul.mubr.bf16.gmra.mxu0 %v10775
    %v10983 = vpop.f32.mrf.mxu0
    %v10984 = vadd.f32 0.0, %v10983
    %v10985 = vpop.f32.mrf.mxu0
    %v10986 = vpop.f32.mrf.mxu0
    %v10987 = vadd.f32 0.0, %v10986
    %v10988 = vpop.f32.mrf.mxu0
    %10989 = vmatprep.mubr.bf16.mxu0 0
    %10990 = vmatmul.mubr.bf16.gmra.mxu0 %v10776
    %v10991 = vpop.f32.mrf.mxu0
    %v10992 = vadd.f32 0.0, %v10991
    %v10993 = vpop.f32.mrf.mxu0
    %v10994 = vpop.f32.mrf.mxu0
    %v10995 = vadd.f32 0.0, %v10994
    %v10996 = vpop.f32.mrf.mxu0
    %10997 = vmatprep.mubr.bf16.mxu0 0
    %10998 = vmatmul.mubr.bf16.gmra.mxu0 %v10777
    %v10999 = vpop.f32.mrf.mxu0
    %v11000 = vadd.f32 0.0, %v10999
    %v11001 = vpop.f32.mrf.mxu0
    %v11002 = vpop.f32.mrf.mxu0
    %v11003 = vadd.f32 0.0, %v11002
    %v11004 = vpop.f32.mrf.mxu0
    %11005 = vmatprep.mubr.bf16.mxu0 0
    %11006 = vmatmul.mubr.bf16.gmra.mxu0 %v10778
    %v11007 = vpop.f32.mrf.mxu0
    %v11008 = vadd.f32 0.0, %v11007
    %v11009 = vpop.f32.mrf.mxu0
    %v11010 = vpop.f32.mrf.mxu0
    %v11011 = vadd.f32 0.0, %v11010
    %v11012 = vpop.f32.mrf.mxu0
    %11013 = vmatprep.mubr.bf16.mxu0 0
    %11014 = vmatmul.mubr.bf16.gmra.mxu0 %v10779
    %v11015 = vpop.f32.mrf.mxu0
    %v11016 = vadd.f32 0.0, %v11015
    %v11017 = vpop.f32.mrf.mxu0
    %v11018 = vpop.f32.mrf.mxu0
    %v11019 = vadd.f32 0.0, %v11018
    %v11020 = vpop.f32.mrf.mxu0
    %11021 = vmatprep.mubr.bf16.mxu0 0
    %11022 = vmatmul.mubr.bf16.gmra.mxu0 %v10780
    %v11023 = vpop.f32.mrf.mxu0
    %v11024 = vadd.f32 0.0, %v11023
    %v11025 = vpop.f32.mrf.mxu0
    %v11026 = vpop.f32.mrf.mxu0
    %v11027 = vadd.f32 0.0, %v11026
    %v11028 = vpop.f32.mrf.mxu0
    %11029 = vmatprep.mubr.bf16.mxu0 0
    %11030 = vmatmul.mubr.bf16.gmra.mxu0 %v10781
    %v11031 = vpop.f32.mrf.mxu0
    %v11032 = vadd.f32 0.0, %v11031
    %v11033 = vpop.f32.mrf.mxu0
    %v11034 = vpop.f32.mrf.mxu0
    %v11035 = vadd.f32 0.0, %v11034
    %v11036 = vpop.f32.mrf.mxu0
    %11037 = vmatprep.mubr.bf16.mxu0 0
    %11038 = vmatmul.mubr.bf16.gmra.mxu0 %v10782
    %v11039 = vpop.f32.mrf.mxu0
    %v11040 = vadd.f32 0.0, %v11039
    %v11041 = vpop.f32.mrf.mxu0
    %v11042 = vpop.f32.mrf.mxu0
    %v11043 = vadd.f32 0.0, %v11042
    %v11044 = vpop.f32.mrf.mxu0
    %11045 = vmatprep.mubr.bf16.mxu0 0
    %11046 = vmatmul.mubr.bf16.gmra.mxu0 %v10783
    %v11047 = vpop.f32.mrf.mxu0
    %v11048 = vadd.f32 0.0, %v11047
    %v11049 = vpop.f32.mrf.mxu0
    %v11050 = vpop.f32.mrf.mxu0
    %v11051 = vadd.f32 0.0, %v11050
    %v11052 = vpop.f32.mrf.mxu0
    %11053 = vmatprep.mubr.bf16.mxu0 0
    %11054 = vmatmul.mubr.bf16.gmra.mxu0 %v10784
    %v11055 = vpop.f32.mrf.mxu0
    %v11056 = vadd.f32 0.0, %v11055
    %v11057 = vpop.f32.mrf.mxu0
    %v11058 = vpop.f32.mrf.mxu0
    %v11059 = vadd.f32 0.0, %v11058
    %v11060 = vpop.f32.mrf.mxu0
    %11061 = vmatprep.mubr.bf16.mxu0 0
    %11062 = vmatmul.mubr.bf16.gmra.mxu0 %v10785
    %v11063 = vpop.f32.mrf.mxu0
    %v11064 = vadd.f32 0.0, %v11063
    %v11065 = vpop.f32.mrf.mxu0
    %v11066 = vpop.f32.mrf.mxu0
    %v11067 = vadd.f32 0.0, %v11066
    %v11068 = vpop.f32.mrf.mxu0
    %11069 = vmatprep.mubr.bf16.mxu0 0
    %11070 = vmatmul.mubr.bf16.gmra.mxu0 %v10786
    %v11071 = vpop.f32.mrf.mxu0
    %v11072 = vadd.f32 0.0, %v11071
    %v11073 = vpop.f32.mrf.mxu0
    %v11074 = vpop.f32.mrf.mxu0
    %v11075 = vadd.f32 0.0, %v11074
    %v11076 = vpop.f32.mrf.mxu0
    %11077 = vmatprep.mubr.bf16.mxu0 0
    %11078 = vmatmul.mubr.bf16.gmra.mxu0 %v10787
    %v11079 = vpop.f32.mrf.mxu0
    %v11080 = vadd.f32 0.0, %v11079
    %v11081 = vpop.f32.mrf.mxu0
    %v11082 = vpop.f32.mrf.mxu0
    %v11083 = vadd.f32 0.0, %v11082
    %v11084 = vpop.f32.mrf.mxu0
    %11085 = vmatprep.mubr.bf16.mxu0 0
    %11086 = vmatmul.mubr.bf16.gmra.mxu0 %v10788
    %v11087 = vpop.f32.mrf.mxu0
    %v11088 = vadd.f32 0.0, %v11087
    %v11089 = vpop.f32.mrf.mxu0
    %v11090 = vpop.f32.mrf.mxu0
    %v11091 = vadd.f32 0.0, %v11090
    %v11092 = vpop.f32.mrf.mxu0
    %11093 = vmatprep.mubr.bf16.mxu0 0
    %11094 = vmatmul.mubr.bf16.gmra.mxu0 %v10789
    %v11095 = vpop.f32.mrf.mxu0
    %v11096 = vadd.f32 0.0, %v11095
    %v11097 = vpop.f32.mrf.mxu0
    %v11098 = vpop.f32.mrf.mxu0
    %v11099 = vadd.f32 0.0, %v11098
    %v11100 = vpop.f32.mrf.mxu0
    %11101 = vmatprep.mubr.bf16.mxu0 0
    %11102 = vmatmul.mubr.bf16.gmra.mxu0 %v10790
    %v11103 = vpop.f32.mrf.mxu0
    %v11104 = vadd.f32 0.0, %v11103
    %v11105 = vpop.f32.mrf.mxu0
    %v11106 = vpop.f32.mrf.mxu0
    %v11107 = vadd.f32 0.0, %v11106
    %v11108 = vpop.f32.mrf.mxu0
    %11109 = vmatprep.mubr.bf16.mxu0 0
    %11110 = vmatmul.mubr.bf16.gmra.mxu0 %v10791
    %v11111 = vpop.f32.mrf.mxu0
    %v11112 = vadd.f32 0.0, %v11111
    %v11113 = vpop.f32.mrf.mxu0
    %v11114 = vpop.f32.mrf.mxu0
    %v11115 = vadd.f32 0.0, %v11114
    %v11116 = vpop.f32.mrf.mxu0
    %11117 = vmatprep.mubr.bf16.mxu0 0
    %11118 = vmatmul.mubr.bf16.gmra.mxu0 %v10792
    %v11119 = vpop.f32.mrf.mxu0
    %v11120 = vadd.f32 0.0, %v11119
    %v11121 = vpop.f32.mrf.mxu0
    %v11122 = vpop.f32.mrf.mxu0
    %v11123 = vadd.f32 0.0, %v11122
    %v11124 = vpop.f32.mrf.mxu0
    %11125 = vmatprep.mubr.bf16.mxu0 0
    %11126 = vmatmul.mubr.bf16.gmra.mxu0 %v10793
    %v11127 = vpop.f32.mrf.mxu0
    %v11128 = vadd.f32 0.0, %v11127
    %v11129 = vpop.f32.mrf.mxu0
    %v11130 = vpop.f32.mrf.mxu0
    %v11131 = vadd.f32 0.0, %v11130
    %v11132 = vpop.f32.mrf.mxu0
    %11133 = vmatprep.mubr.bf16.mxu0 0
    %11134 = vmatmul.mubr.bf16.gmra.mxu0 %v10794
    %v11135 = vpop.f32.mrf.mxu0
    %v11136 = vadd.f32 0.0, %v11135
    %v11137 = vpop.f32.mrf.mxu0
    %v11138 = vpop.f32.mrf.mxu0
    %v11139 = vadd.f32 0.0, %v11138
    %v11140 = vpop.f32.mrf.mxu0
    %11141 = vmatprep.mubr.bf16.mxu0 0
    %11142 = vmatmul.mubr.bf16.gmra.mxu0 %v10795
    %v11143 = vpop.f32.mrf.mxu0
    %v11144 = vadd.f32 0.0, %v11143
    %v11145 = vpop.f32.mrf.mxu0
    %v11146 = vpop.f32.mrf.mxu0
    %v11147 = vadd.f32 0.0, %v11146
    %v11148 = vpop.f32.mrf.mxu0
    %11149 = vdwg.mxu0
    %v11150 = vadd.f32 %v10572, %v10896
    %v11151 = vadd.f32 %v10573, %v10899
    %v11152 = vadd.f32 %v10574, %v10904
    %v11153 = vadd.f32 %v10575, %v10907
    %v11154 = vadd.f32 %v10576, %v10912
    %v11155 = vadd.f32 %v10577, %v10915
    %v11156 = vadd.f32 %v10578, %v10920
    %v11157 = vadd.f32 %v10579, %v10923
    %v11158 = vadd.f32 %v10580, %v10928
    %v11159 = vadd.f32 %v10581, %v10931
    %v11160 = vadd.f32 %v10582, %v10936
    %v11161 = vadd.f32 %v10583, %v10939
    %v11162 = vadd.f32 %v10584, %v10944
    %v11163 = vadd.f32 %v10585, %v10947
    %v11164 = vadd.f32 %v10586, %v10952
    %v11165 = vadd.f32 %v10587, %v10955
    %v11166 = vadd.f32 %v10588, %v10960
    %v11167 = vadd.f32 %v10589, %v10963
    %v11168 = vadd.f32 %v10590, %v10968
    %v11169 = vadd.f32 %v10591, %v10971
    %v11170 = vadd.f32 %v10592, %v10976
    %v11171 = vadd.f32 %v10593, %v10979
    %v11172 = vadd.f32 %v10594, %v10984
    %v11173 = vadd.f32 %v10595, %v10987
    %v11174 = vadd.f32 %v10596, %v10992
    %v11175 = vadd.f32 %v10597, %v10995
    %v11176 = vadd.f32 %v10598, %v11000
    %v11177 = vadd.f32 %v10599, %v11003
    %v11178 = vadd.f32 %v10600, %v11008
    %v11179 = vadd.f32 %v10601, %v11011
    %v11180 = vadd.f32 %v10602, %v11016
    %v11181 = vadd.f32 %v10603, %v11019
    %v11182 = vadd.f32 %v10604, %v11024
    %v11183 = vadd.f32 %v10605, %v11027
    %v11184 = vadd.f32 %v10606, %v11032
    %v11185 = vadd.f32 %v10607, %v11035
    %v11186 = vadd.f32 %v10608, %v11040
    %v11187 = vadd.f32 %v10609, %v11043
    %v11188 = vadd.f32 %v10610, %v11048
    %v11189 = vadd.f32 %v10611, %v11051
    %v11190 = vadd.f32 %v10612, %v11056
    %v11191 = vadd.f32 %v10613, %v11059
    %v11192 = vadd.f32 %v10614, %v11064
    %v11193 = vadd.f32 %v10615, %v11067
    %v11194 = vadd.f32 %v10616, %v11072
    %v11195 = vadd.f32 %v10617, %v11075
    %v11196 = vadd.f32 %v10618, %v11080
    %v11197 = vadd.f32 %v10619, %v11083
    %v11198 = vadd.f32 %v10620, %v11088
    %v11199 = vadd.f32 %v10621, %v11091
    %v11200 = vadd.f32 %v10622, %v11096
    %v11201 = vadd.f32 %v10623, %v11099
    %v11202 = vadd.f32 %v10624, %v11104
    %v11203 = vadd.f32 %v10625, %v11107
    %v11204 = vadd.f32 %v10626, %v11112
    %v11205 = vadd.f32 %v10627, %v11115
    %v11206 = vadd.f32 %v10628, %v11120
    %v11207 = vadd.f32 %v10629, %v11123
    %v11208 = vadd.f32 %v10630, %v11128
    %v11209 = vadd.f32 %v10631, %v11131
    %v11210 = vadd.f32 %v10632, %v11136
    %v11211 = vadd.f32 %v10633, %v11139
    %v11212 = vadd.f32 %v10634, %v11144
    %v11213 = vadd.f32 %v10635, %v11147
    %v11214 = vld [vmem:[%s4] sm:$0x1]
    %v11216 = vlaneseq
    %v11217 = vshrl.u32 %v11216, 7
    %v11218 = vsub.s32 0, %v11217
    %v11219 = vrot.slane %v11214, %v11218
    %v11221 = vadd.f32 %v11150, %v11219
    %v11222 = vadd.f32 %v11151, %v11219
    %v11223 = vadd.f32 %v11152, %v11219
    %v11224 = vadd.f32 %v11153, %v11219
    %v11225 = vadd.f32 %v11154, %v11219
    %v11226 = vadd.f32 %v11155, %v11219
    %v11227 = vadd.f32 %v11156, %v11219
    %v11228 = vadd.f32 %v11157, %v11219
    %v11229 = vadd.f32 %v11158, %v11219
    %v11230 = vadd.f32 %v11159, %v11219
    %v11231 = vadd.f32 %v11160, %v11219
    %v11232 = vadd.f32 %v11161, %v11219
    %v11233 = vadd.f32 %v11162, %v11219
    %v11234 = vadd.f32 %v11163, %v11219
    %v11235 = vadd.f32 %v11164, %v11219
    %v11236 = vadd.f32 %v11165, %v11219
    %v11237 = vadd.f32 %v11166, %v11219
    %v11238 = vadd.f32 %v11167, %v11219
    %v11239 = vadd.f32 %v11168, %v11219
    %v11240 = vadd.f32 %v11169, %v11219
    %v11241 = vadd.f32 %v11170, %v11219
    %v11242 = vadd.f32 %v11171, %v11219
    %v11243 = vadd.f32 %v11172, %v11219
    %v11244 = vadd.f32 %v11173, %v11219
    %v11245 = vadd.f32 %v11174, %v11219
    %v11246 = vadd.f32 %v11175, %v11219
    %v11247 = vadd.f32 %v11176, %v11219
    %v11248 = vadd.f32 %v11177, %v11219
    %v11249 = vadd.f32 %v11178, %v11219
    %v11250 = vadd.f32 %v11179, %v11219
    %v11251 = vadd.f32 %v11180, %v11219
    %v11252 = vadd.f32 %v11181, %v11219
    %v11253 = vadd.f32 %v11182, %v11219
    %v11254 = vadd.f32 %v11183, %v11219
    %v11255 = vadd.f32 %v11184, %v11219
    %v11256 = vadd.f32 %v11185, %v11219
    %v11257 = vadd.f32 %v11186, %v11219
    %v11258 = vadd.f32 %v11187, %v11219
    %v11259 = vadd.f32 %v11188, %v11219
    %v11260 = vadd.f32 %v11189, %v11219
    %v11261 = vadd.f32 %v11190, %v11219
    %v11262 = vadd.f32 %v11191, %v11219
    %v11263 = vadd.f32 %v11192, %v11219
    %v11264 = vadd.f32 %v11193, %v11219
    %v11265 = vadd.f32 %v11194, %v11219
    %v11266 = vadd.f32 %v11195, %v11219
    %v11267 = vadd.f32 %v11196, %v11219
    %v11268 = vadd.f32 %v11197, %v11219
    %v11269 = vadd.f32 %v11198, %v11219
    %v11270 = vadd.f32 %v11199, %v11219
    %v11271 = vadd.f32 %v11200, %v11219
    %v11272 = vadd.f32 %v11201, %v11219
    %v11273 = vadd.f32 %v11202, %v11219
    %v11274 = vadd.f32 %v11203, %v11219
    %v11275 = vadd.f32 %v11204, %v11219
    %v11276 = vadd.f32 %v11205, %v11219
    %v11277 = vadd.f32 %v11206, %v11219
    %v11278 = vadd.f32 %v11207, %v11219
    %v11279 = vadd.f32 %v11208, %v11219
    %v11280 = vadd.f32 %v11209, %v11219
    %v11281 = vadd.f32 %v11210, %v11219
    %v11282 = vadd.f32 %v11211, %v11219
    %v11283 = vadd.f32 %v11212, %v11219
    %v11284 = vadd.f32 %v11213, %v11219
    %v11285 = vadd.f32 %v11221, %v6077
    %v11286 = vadd.f32 %v11222, %v6078
    %v11287 = vadd.f32 %v11223, %v6079
    %v11288 = vadd.f32 %v11224, %v6080
    %v11289 = vadd.f32 %v11225, %v6081
    %v11290 = vadd.f32 %v11226, %v6082
    %v11291 = vadd.f32 %v11227, %v6083
    %v11292 = vadd.f32 %v11228, %v6084
    %v11293 = vadd.f32 %v11229, %v6085
    %v11294 = vadd.f32 %v11230, %v6086
    %v11295 = vadd.f32 %v11231, %v6087
    %v11296 = vadd.f32 %v11232, %v6088
    %v11297 = vadd.f32 %v11233, %v6089
    %v11298 = vadd.f32 %v11234, %v6090
    %v11299 = vadd.f32 %v11235, %v6091
    %v11300 = vadd.f32 %v11236, %v6092
    %v11301 = vadd.f32 %v11237, %v6093
    %v11302 = vadd.f32 %v11238, %v6094
    %v11303 = vadd.f32 %v11239, %v6095
    %v11304 = vadd.f32 %v11240, %v6096
    %v11305 = vadd.f32 %v11241, %v6097
    %v11306 = vadd.f32 %v11242, %v6098
    %v11307 = vadd.f32 %v11243, %v6099
    %v11308 = vadd.f32 %v11244, %v6100
    %v11309 = vadd.f32 %v11245, %v6101
    %v11310 = vadd.f32 %v11246, %v6102
    %v11311 = vadd.f32 %v11247, %v6103
    %v11312 = vadd.f32 %v11248, %v6104
    %v11313 = vadd.f32 %v11249, %v6105
    %v11314 = vadd.f32 %v11250, %v6106
    %v11315 = vadd.f32 %v11251, %v6107
    %v11316 = vadd.f32 %v11252, %v6108
    %v11317 = vadd.f32 %v11253, %v6109
    %v11318 = vadd.f32 %v11254, %v6110
    %v11319 = vadd.f32 %v11255, %v6111
    %v11320 = vadd.f32 %v11256, %v6112
    %v11321 = vadd.f32 %v11257, %v6113
    %v11322 = vadd.f32 %v11258, %v6114
    %v11323 = vadd.f32 %v11259, %v6115
    %v11324 = vadd.f32 %v11260, %v6116
    %v11325 = vadd.f32 %v11261, %v6117
    %v11326 = vadd.f32 %v11262, %v6118
    %v11327 = vadd.f32 %v11263, %v6119
    %v11328 = vadd.f32 %v11264, %v6120
    %v11329 = vadd.f32 %v11265, %v6121
    %v11330 = vadd.f32 %v11266, %v6122
    %v11331 = vadd.f32 %v11267, %v6123
    %v11332 = vadd.f32 %v11268, %v6124
    %v11333 = vadd.f32 %v11269, %v6125
    %v11334 = vadd.f32 %v11270, %v6126
    %v11335 = vadd.f32 %v11271, %v6127
    %v11336 = vadd.f32 %v11272, %v6128
    %v11337 = vadd.f32 %v11273, %v6129
    %v11338 = vadd.f32 %v11274, %v6130
    %v11339 = vadd.f32 %v11275, %v6131
    %v11340 = vadd.f32 %v11276, %v6132
    %v11341 = vadd.f32 %v11277, %v6133
    %v11342 = vadd.f32 %v11278, %v6134
    %v11343 = vadd.f32 %v11279, %v6135
    %v11344 = vadd.f32 %v11280, %v6136
    %v11345 = vadd.f32 %v11281, %v6137
    %v11346 = vadd.f32 %v11282, %v6138
    %v11347 = vadd.f32 %v11283, %v6139
    %v11348 = vadd.f32 %v11284, %v6140
    %v11349 = vmax.f32 %v11285, 0.0
    %v11350 = vmax.f32 %v11286, 0.0
    %v11351 = vmax.f32 %v11287, 0.0
    %v11352 = vmax.f32 %v11288, 0.0
    %v11353 = vmax.f32 %v11289, 0.0
    %v11354 = vmax.f32 %v11290, 0.0
    %v11355 = vmax.f32 %v11291, 0.0
    %v11356 = vmax.f32 %v11292, 0.0
    %v11357 = vmax.f32 %v11293, 0.0
    %v11358 = vmax.f32 %v11294, 0.0
    %v11359 = vmax.f32 %v11295, 0.0
    %v11360 = vmax.f32 %v11296, 0.0
    %v11361 = vmax.f32 %v11297, 0.0
    %v11362 = vmax.f32 %v11298, 0.0
    %v11363 = vmax.f32 %v11299, 0.0
    %v11364 = vmax.f32 %v11300, 0.0
    %v11365 = vmax.f32 %v11301, 0.0
    %v11366 = vmax.f32 %v11302, 0.0
    %v11367 = vmax.f32 %v11303, 0.0
    %v11368 = vmax.f32 %v11304, 0.0
    %v11369 = vmax.f32 %v11305, 0.0
    %v11370 = vmax.f32 %v11306, 0.0
    %v11371 = vmax.f32 %v11307, 0.0
    %v11372 = vmax.f32 %v11308, 0.0
    %v11373 = vmax.f32 %v11309, 0.0
    %v11374 = vmax.f32 %v11310, 0.0
    %v11375 = vmax.f32 %v11311, 0.0
    %v11376 = vmax.f32 %v11312, 0.0
    %v11377 = vmax.f32 %v11313, 0.0
    %v11378 = vmax.f32 %v11314, 0.0
    %v11379 = vmax.f32 %v11315, 0.0
    %v11380 = vmax.f32 %v11316, 0.0
    %v11381 = vmax.f32 %v11317, 0.0
    %v11382 = vmax.f32 %v11318, 0.0
    %v11383 = vmax.f32 %v11319, 0.0
    %v11384 = vmax.f32 %v11320, 0.0
    %v11385 = vmax.f32 %v11321, 0.0
    %v11386 = vmax.f32 %v11322, 0.0
    %v11387 = vmax.f32 %v11323, 0.0
    %v11388 = vmax.f32 %v11324, 0.0
    %v11389 = vmax.f32 %v11325, 0.0
    %v11390 = vmax.f32 %v11326, 0.0
    %v11391 = vmax.f32 %v11327, 0.0
    %v11392 = vmax.f32 %v11328, 0.0
    %v11393 = vmax.f32 %v11329, 0.0
    %v11394 = vmax.f32 %v11330, 0.0
    %v11395 = vmax.f32 %v11331, 0.0
    %v11396 = vmax.f32 %v11332, 0.0
    %v11397 = vmax.f32 %v11333, 0.0
    %v11398 = vmax.f32 %v11334, 0.0
    %v11399 = vmax.f32 %v11335, 0.0
    %v11400 = vmax.f32 %v11336, 0.0
    %v11401 = vmax.f32 %v11337, 0.0
    %v11402 = vmax.f32 %v11338, 0.0
    %v11403 = vmax.f32 %v11339, 0.0
    %v11404 = vmax.f32 %v11340, 0.0
    %v11405 = vmax.f32 %v11341, 0.0
    %v11406 = vmax.f32 %v11342, 0.0
    %v11407 = vmax.f32 %v11343, 0.0
    %v11408 = vmax.f32 %v11344, 0.0
    %v11409 = vmax.f32 %v11345, 0.0
    %v11410 = vmax.f32 %v11346, 0.0
    %v11411 = vmax.f32 %v11347, 0.0
    %v11412 = vmax.f32 %v11348, 0.0
    %11413 = vst [vmem:[%s7] sm:$0xff] %v11349
    %11414 = vst [vmem:[%s7 + $0x8] sm:$0xff] %v11350
    %11415 = vst [vmem:[%s7 + $0x10] sm:$0xff] %v11351
    %11416 = vst [vmem:[%s7 + $0x18] sm:$0xff] %v11352
    %11417 = vst [vmem:[%s7 + $0x20] sm:$0xff] %v11353
    %11418 = vst [vmem:[%s7 + $0x28] sm:$0xff] %v11354
    %11419 = vst [vmem:[%s7 + $0x30] sm:$0xff] %v11355
    %11420 = vst [vmem:[%s7 + $0x38] sm:$0xff] %v11356
    %11421 = vst [vmem:[%s7 + $0x40] sm:$0xff] %v11357
    %11422 = vst [vmem:[%s7 + $0x48] sm:$0xff] %v11358
    %11423 = vst [vmem:[%s7 + $0x50] sm:$0xff] %v11359
    %11424 = vst [vmem:[%s7 + $0x58] sm:$0xff] %v11360
    %11425 = vst [vmem:[%s7 + $0x60] sm:$0xff] %v11361
    %11426 = vst [vmem:[%s7 + $0x68] sm:$0xff] %v11362
    %11427 = vst [vmem:[%s7 + $0x70] sm:$0xff] %v11363
    %11428 = vst [vmem:[%s7 + $0x78] sm:$0xff] %v11364
    %11429 = vst [vmem:[%s7 + $0x80] sm:$0xff] %v11365
    %11430 = vst [vmem:[%s7 + $0x88] sm:$0xff] %v11366
    %11431 = vst [vmem:[%s7 + $0x90] sm:$0xff] %v11367
    %11432 = vst [vmem:[%s7 + $0x98] sm:$0xff] %v11368
    %11433 = vst [vmem:[%s7 + $0xa0] sm:$0xff] %v11369
    %11434 = vst [vmem:[%s7 + $0xa8] sm:$0xff] %v11370
    %11435 = vst [vmem:[%s7 + $0xb0] sm:$0xff] %v11371
    %11436 = vst [vmem:[%s7 + $0xb8] sm:$0xff] %v11372
    %11437 = vst [vmem:[%s7 + $0xc0] sm:$0xff] %v11373
    %11438 = vst [vmem:[%s7 + $0xc8] sm:$0xff] %v11374
    %11439 = vst [vmem:[%s7 + $0xd0] sm:$0xff] %v11375
    %11440 = vst [vmem:[%s7 + $0xd8] sm:$0xff] %v11376
    %11441 = vst [vmem:[%s7 + $0xe0] sm:$0xff] %v11377
    %11442 = vst [vmem:[%s7 + $0xe8] sm:$0xff] %v11378
    %11443 = vst [vmem:[%s7 + $0xf0] sm:$0xff] %v11379
    %11444 = vst [vmem:[%s7 + $0xf8] sm:$0xff] %v11380
    %11445 = vst [vmem:[%s7 + $0x100] sm:$0xff] %v11381
    %11446 = vst [vmem:[%s7 + $0x108] sm:$0xff] %v11382
    %11447 = vst [vmem:[%s7 + $0x110] sm:$0xff] %v11383
    %11448 = vst [vmem:[%s7 + $0x118] sm:$0xff] %v11384
    %11449 = vst [vmem:[%s7 + $0x120] sm:$0xff] %v11385
    %11450 = vst [vmem:[%s7 + $0x128] sm:$0xff] %v11386
    %11451 = vst [vmem:[%s7 + $0x130] sm:$0xff] %v11387
    %11452 = vst [vmem:[%s7 + $0x138] sm:$0xff] %v11388
    %11453 = vst [vmem:[%s7 + $0x140] sm:$0xff] %v11389
    %11454 = vst [vmem:[%s7 + $0x148] sm:$0xff] %v11390
    %11455 = vst [vmem:[%s7 + $0x150] sm:$0xff] %v11391
    %11456 = vst [vmem:[%s7 + $0x158] sm:$0xff] %v11392
    %11457 = vst [vmem:[%s7 + $0x160] sm:$0xff] %v11393
    %11458 = vst [vmem:[%s7 + $0x168] sm:$0xff] %v11394
    %11459 = vst [vmem:[%s7 + $0x170] sm:$0xff] %v11395
    %11460 = vst [vmem:[%s7 + $0x178] sm:$0xff] %v11396
    %11461 = vst [vmem:[%s7 + $0x180] sm:$0xff] %v11397
    %11462 = vst [vmem:[%s7 + $0x188] sm:$0xff] %v11398
    %11463 = vst [vmem:[%s7 + $0x190] sm:$0xff] %v11399
    %11464 = vst [vmem:[%s7 + $0x198] sm:$0xff] %v11400
    %11465 = vst [vmem:[%s7 + $0x1a0] sm:$0xff] %v11401
    %11466 = vst [vmem:[%s7 + $0x1a8] sm:$0xff] %v11402
    %11467 = vst [vmem:[%s7 + $0x1b0] sm:$0xff] %v11403
    %11468 = vst [vmem:[%s7 + $0x1b8] sm:$0xff] %v11404
    %11469 = vst [vmem:[%s7 + $0x1c0] sm:$0xff] %v11405
    %11470 = vst [vmem:[%s7 + $0x1c8] sm:$0xff] %v11406
    %11471 = vst [vmem:[%s7 + $0x1d0] sm:$0xff] %v11407
    %11472 = vst [vmem:[%s7 + $0x1d8] sm:$0xff] %v11408
    %11473 = vst [vmem:[%s7 + $0x1e0] sm:$0xff] %v11409
    %11474 = vst [vmem:[%s7 + $0x1e8] sm:$0xff] %v11410
    %11475 = vst [vmem:[%s7 + $0x1f0] sm:$0xff] %v11411
    %11476 = vst [vmem:[%s7 + $0x1f8] sm:$0xff] %v11412
    %v11477 = vadd.f32 %v11349, %v11350
    %v11478 = vadd.f32 %v11477, %v11351
    %v11479 = vadd.f32 %v11478, %v11352
    %v11480 = vadd.f32 %v11479, %v11353
    %v11481 = vadd.f32 %v11480, %v11354
    %v11482 = vadd.f32 %v11481, %v11355
    %v11483 = vadd.f32 %v11482, %v11356
    %v11484 = vadd.f32 %v11483, %v11357
    %v11485 = vadd.f32 %v11484, %v11358
    %v11486 = vadd.f32 %v11485, %v11359
    %v11487 = vadd.f32 %v11486, %v11360
    %v11488 = vadd.f32 %v11487, %v11361
    %v11489 = vadd.f32 %v11488, %v11362
    %v11490 = vadd.f32 %v11489, %v11363
    %v11491 = vadd.f32 %v11490, %v11364
    %v11492 = vadd.f32 %v11491, %v11365
    %v11493 = vadd.f32 %v11492, %v11366
    %v11494 = vadd.f32 %v11493, %v11367
    %v11495 = vadd.f32 %v11494, %v11368
    %v11496 = vadd.f32 %v11495, %v11369
    %v11497 = vadd.f32 %v11496, %v11370
    %v11498 = vadd.f32 %v11497, %v11371
    %v11499 = vadd.f32 %v11498, %v11372
    %v11500 = vadd.f32 %v11499, %v11373
    %v11501 = vadd.f32 %v11500, %v11374
    %v11502 = vadd.f32 %v11501, %v11375
    %v11503 = vadd.f32 %v11502, %v11376
    %v11504 = vadd.f32 %v11503, %v11377
    %v11505 = vadd.f32 %v11504, %v11378
    %v11506 = vadd.f32 %v11505, %v11379
    %v11507 = vadd.f32 %v11506, %v11380
    %v11508 = vrot.slane %v11507, 4
    %v11509 = vadd.f32 %v11507, %v11508
    %v11510 = vrot.slane %v11509, 2
    %v11511 = vadd.f32 %v11509, %v11510
    %v11512 = vrot.slane %v11511, 1
    %v11513 = vadd.f32 %v11511, %v11512
    %v11514 = vadd.f32 %v11381, %v11382
    %v11515 = vadd.f32 %v11514, %v11383
    %v11516 = vadd.f32 %v11515, %v11384
    %v11517 = vadd.f32 %v11516, %v11385
    %v11518 = vadd.f32 %v11517, %v11386
    %v11519 = vadd.f32 %v11518, %v11387
    %v11520 = vadd.f32 %v11519, %v11388
    %v11521 = vadd.f32 %v11520, %v11389
    %v11522 = vadd.f32 %v11521, %v11390
    %v11523 = vadd.f32 %v11522, %v11391
    %v11524 = vadd.f32 %v11523, %v11392
    %v11525 = vadd.f32 %v11524, %v11393
    %v11526 = vadd.f32 %v11525, %v11394
    %v11527 = vadd.f32 %v11526, %v11395
    %v11528 = vadd.f32 %v11527, %v11396
    %v11529 = vadd.f32 %v11528, %v11397
    %v11530 = vadd.f32 %v11529, %v11398
    %v11531 = vadd.f32 %v11530, %v11399
    %v11532 = vadd.f32 %v11531, %v11400
    %v11533 = vadd.f32 %v11532, %v11401
    %v11534 = vadd.f32 %v11533, %v11402
    %v11535 = vadd.f32 %v11534, %v11403
    %v11536 = vadd.f32 %v11535, %v11404
    %v11537 = vadd.f32 %v11536, %v11405
    %v11538 = vadd.f32 %v11537, %v11406
    %v11539 = vadd.f32 %v11538, %v11407
    %v11540 = vadd.f32 %v11539, %v11408
    %v11541 = vadd.f32 %v11540, %v11409
    %v11542 = vadd.f32 %v11541, %v11410
    %v11543 = vadd.f32 %v11542, %v11411
    %v11544 = vadd.f32 %v11543, %v11412
    %v11545 = vrot.slane %v11544, 4
    %v11546 = vadd.f32 %v11544, %v11545
    %v11547 = vrot.slane %v11546, 2
    %v11548 = vadd.f32 %v11546, %v11547
    %v11549 = vrot.slane %v11548, 1
    %v11550 = vadd.f32 %v11548, %v11549
    %vm11551 = vcmask 1040384
    %v11552 = vsel %vm11551, %v11513, %v11550
    %v11553 = vmul.f32 %v11552, 0.00390625
    %v11554 = vpack.c.bf16 %v11553, %v11553
    %v11555 = vld [vmem:[%s5] sm:$0xf]
    %v11556 = vld [vmem:[%s5 + $0x4] sm:$0xf]
    %v11557 = vld [vmem:[%s5 + $0x8] sm:$0xf]
    %v11558 = vld [vmem:[%s5 + $0xc] sm:$0xf]
    %v11559 = vld [vmem:[%s5 + $0x10] sm:$0xf]
    %v11560 = vld [vmem:[%s5 + $0x14] sm:$0xf]
    %v11561 = vld [vmem:[%s5 + $0x18] sm:$0xf]
    %v11562 = vld [vmem:[%s5 + $0x1c] sm:$0xf]
    %v11563 = vld [vmem:[%s5 + $0x20] sm:$0xf]
    %v11564 = vld [vmem:[%s5 + $0x24] sm:$0xf]
    %v11565 = vld [vmem:[%s5 + $0x28] sm:$0xf]
    %v11566 = vld [vmem:[%s5 + $0x2c] sm:$0xf]
    %v11567 = vld [vmem:[%s5 + $0x30] sm:$0xf]
    %v11568 = vld [vmem:[%s5 + $0x34] sm:$0xf]
    %v11569 = vld [vmem:[%s5 + $0x38] sm:$0xf]
    %v11570 = vld [vmem:[%s5 + $0x3c] sm:$0xf]
    %v11571 = vld [vmem:[%s6] sm:$0x1]
    %v11573 = vlaneseq
    %v11574 = vshrl.u32 %v11573, 7
    %v11575 = vsub.s32 0, %v11574
    %v11576 = vrot.slane %v11571, %v11575
    %v11594 = vunpack.c.l.b16 %v11555
    %v11595 = vunpack.c.l.b16 %v11556
    %v11596 = vunpack.c.l.b16 %v11557
    %v11597 = vunpack.c.l.b16 %v11558
    %v11598 = vunpack.c.l.b16 %v11559
    %v11599 = vunpack.c.l.b16 %v11560
    %v11600 = vunpack.c.l.b16 %v11561
    %v11601 = vunpack.c.l.b16 %v11562
    %v11602 = vunpack.c.l.b16 %v11563
    %v11603 = vunpack.c.l.b16 %v11564
    %v11604 = vunpack.c.l.b16 %v11565
    %v11605 = vunpack.c.l.b16 %v11566
    %v11606 = vunpack.c.l.b16 %v11567
    %v11607 = vunpack.c.l.b16 %v11568
    %v11608 = vunpack.c.l.b16 %v11569
    %v11609 = vunpack.c.l.b16 %v11570
    %v11610 = vpack.c.b16 %v11595, %v11594
    %v11611 = vpack.c.b16 %v11597, %v11596
    %v11612 = vpack.c.b16 %v11599, %v11598
    %v11613 = vpack.c.b16 %v11601, %v11600
    %v11614 = vpack.c.b16 %v11603, %v11602
    %v11615 = vpack.c.b16 %v11605, %v11604
    %v11616 = vpack.c.b16 %v11607, %v11606
    %v11617 = vpack.c.b16 %v11609, %v11608
    %11626 = vmatprep.subr.bf16.mxu0 0
    %11627 = vmatpush1.bf16.msra.mxu0 %v11617
    %11628 = vmatprep.subr.bf16.mxu0 0
    %11629 = vmatpush1.bf16.msra.mxu0 %v11616
    %11630 = vmatprep.subr.bf16.mxu0 0
    %11631 = vmatpush1.bf16.msra.mxu0 %v11615
    %11632 = vmatprep.subr.bf16.mxu0 0
    %11633 = vmatpush1.bf16.msra.mxu0 %v11614
    %11634 = vmatprep.subr.bf16.mxu0 0
    %11635 = vmatpush1.bf16.msra.mxu0 %v11613
    %11636 = vmatprep.subr.bf16.mxu0 0
    %11637 = vmatpush1.bf16.msra.mxu0 %v11612
    %11638 = vmatprep.subr.bf16.mxu0 0
    %11639 = vmatpush1.bf16.msra.mxu0 %v11611
    %11640 = vmatprep.subr.bf16.mxu0 0
    %11641 = vmatpush1.bf16.msra.mxu0 %v11610
    %11642 = vmatprep.subr.bf16.mxu0 0
    %11643 = vmatpush2.bf16.msra.mxu0 0
    %11644 = vmatprep.subr.bf16.mxu0 0
    %11645 = vmatpush2.bf16.msra.mxu0 0
    %11646 = vmatprep.subr.bf16.mxu0 0
    %11647 = vmatpush2.bf16.msra.mxu0 0
    %11648 = vmatprep.subr.bf16.mxu0 0
    %11649 = vmatpush2.bf16.msra.mxu0 0
    %11650 = vmatprep.subr.bf16.mxu0 0
    %11651 = vmatpush2.bf16.msra.mxu0 0
    %11652 = vmatprep.subr.bf16.mxu0 0
    %11653 = vmatpush2.bf16.msra.mxu0 0
    %11654 = vmatprep.subr.bf16.mxu0 0
    %11655 = vmatpush2.bf16.msra.mxu0 0
    %11656 = vmatprep.subr.bf16.mxu0 0
    %11657 = vmatpush2.bf16.msra.mxu0 0
    %11658 = vmatprep.mubr.bf16.mxu0 0
    %11659 = vmatmul.mubr.bf16.gmra.mxu0 %v11554
    %v11660 = vpop.f32.mrf.mxu0
    %v11661 = vadd.f32 %v11576, %v11660
    %v11662 = vpop.f32.mrf.mxu0
    %v11663 = vpop.f32.mrf.mxu0
    %v11664 = vpop.f32.mrf.mxu0
    %11665 = vdwg.mxu0
    %v11666 = vlaneseq
    %v11667 = vand.u32 %v11666, 127
    %v11668 = vmul.u32 %v31, 10
    %v11669 = vadd.s32 %v11668, %v11667
    %vm11670 = vcmask 1041408
    %v11671 = vsel %vm11670, %v11661, -inf
    %11672 = vmax.xlane.f32.xlu0 %v11671
    %v11673 = vpop.xlane.xlu0 %11672
    %v11674 = vrot.slane %v11673, 4
    %v11675 = vmax.f32 %v11673, %v11674
    %v11676 = vrot.slane %v11675, 2
    %v11677 = vmax.f32 %v11675, %v11676
    %v11678 = vrot.slane %v11677, 1
    %v11679 = vmax.f32 %v11677, %v11678
    %s11680 = vtos %v11679
    %v11681 = vstv %s11680
    %vm11682 = vcmp.ge.f32.partialorder %v11661, %v11681
    %vm11683 = vcmp.lt.s32.totalorder %v11667, 10
    %vm11684 = vmand %vm11682, %vm11683
    %v11685 = vsel %vm11684, %v11669, 20
    %v11686 = vsel %vm11670, %v11685, 2147483647
    %v11687 = vand.u32 %v11686, 65535
    %v11688 = vshra.s32 %v11686, 16
    %v11689 = vcvt.s32.f32 %v11687
    %v11690 = vcvt.s32.f32 %v11688
    %11691 = vmin.xlane.f32.xlu0 %v11690
    %v11692 = vpop.xlane.xlu0 %11691
    %vm11693 = vcmp.eq.f32.partialorder %v11690, %v11692
    %v11694 = vsel %vm11693, %v11689, inf
    %11695 = vmin.xlane.f32.xlu0 %v11694
    %v11696 = vpop.xlane.xlu0 %11695
    %v11697 = vcvt.f32.s32 %v11696
    %v11698 = vcvt.f32.s32 %v11692
    %v11699 = vshll.u32 %v11698, 16
    %v11700 = vadd.s32 %v11699, %v11697
    %v11701 = vrot.slane %v11700, 4
    %vm11702 = vcmp.lt.s32.totalorder %v11700, %v11701
    %v11703 = vsel %vm11702, %v11700, %v11701
    %v11704 = vrot.slane %v11703, 2
    %vm11705 = vcmp.lt.s32.totalorder %v11703, %v11704
    %v11706 = vsel %vm11705, %v11703, %v11704
    %v11707 = vrot.slane %v11706, 1
    %vm11708 = vcmp.lt.s32.totalorder %v11706, %v11707
    %v11709 = vsel %vm11708, %v11706, %v11707
    %s11710 = vtos %v11709
    %s11711 = scalar_lea.smem [#allocation3], 0
    %11712 = sst [smem:[%s11711]] %s11710
    // Predicated region
    $region30: #{forward.1} parent=1 // pred_check
      _
    $region31: #{forward.1} parent=1 // pred_check_branch
      %11714 = sbr.rel (0) target = $region33
    $region32: #{forward.1} parent=1 // pred_region
      _
    $region33: #{forward.1} parent=1 // pred_fallthru
      _
    // Predicated region
    $region34: #{forward.1} parent=1 // pred_check
      _
    $region35: #{forward.1} parent=1 // pred_check_branch
      %11716 = sbr.rel (0) target = $region37
    $region36: #{forward.1} parent=1 // pred_region
      %s11718 = ssub.s32 16, 16
      %11719 = vsyncadd [#allocation4], %s11718
      %11722 = dma.smem_to_hbm [#allocation3], 16, %s8, [#allocation4]
    $region37: #{forward.1} parent=1 // pred_fallthru
      _
    // Predicated region
    $region38: #{forward.1} parent=1 // pred_check
      _
    $region39: #{forward.1} parent=1 // pred_check_branch
      %11724 = sbr.rel (0) target = $region41
    $region40: #{forward.1} parent=1 // pred_region
      _
    $region41: #{forward.1} parent=1 // pred_fallthru
      _
    // Predicated region
    $region42: #{forward.1} parent=1 // pred_check
      _
    $region43: #{forward.1} parent=1 // pred_check_branch
      %11726 = sbr.rel (0) target = $region45
    $region44: #{forward.1} parent=1 // pred_region
      %11727 = dma.done [#allocation4], 16
    $region45: #{forward.1} parent=1 // pred_fallthru
      _
    %11728 = sfence
    %11729 = vsyncpa [#allocation4], 1

</llo_original>
